<compile_context>
chip_gen: v6e
topology: v6e:2x2x1
jax: 0.10.0
libtpu: 0.0.40
codegen_flags: <defaults>
</compile_context>

<pallas_src>
import math

import jax
import jax.numpy as jnp
import numpy as np
from jax.experimental import pallas as pl
from jax.experimental.pallas import tpu as pltpu

# ------------------------- type constants (match torch file) ----------------
U_TYPE = 0
D_TYPE = 1
Q_TYPE = 2
K_TYPE = 3

# ------------------------- small synthetic sizes ----------------------------
N_TOTAL = 256    # graph nodes per forward (batched per review)
TILE_N = 64      # nodes per grid step  -> grid = (4,), "parallel"
S = 8            # token sequence length
E = 128          # encoder_dim (BERT hidden) -- lane-aligned stand-in for 768
NODE_DIM = 128   # node_dim                  -- lane-aligned stand-in for 256
FFN = 4 * E      # BERT intermediate size
VOCAB = 512
USER_SIZE = 64
DOMAIN_SIZE = 32


# ------------------------- math helpers -------------------------------------
def _layer_norm(x, g, b, eps=1e-12):
    # single-pass LN: E[x] and E[x^2] computed together (one dependency chain)
    mu = jnp.mean(x, axis=-1, keepdims=True)
    ms = jnp.mean(x * x, axis=-1, keepdims=True)
    var = ms - mu * mu
    return (x - mu) * jax.lax.rsqrt(var + eps) * g + b


def _layer_norm_ref(x, g, b, eps=1e-12):
    mu = jnp.mean(x, axis=-1, keepdims=True)
    var = jnp.mean((x - mu) ** 2, axis=-1, keepdims=True)
    return (x - mu) * jax.lax.rsqrt(var + eps) * g + b


def _gelu(x):
    # tanh approximation (BERT-style gelu)
    return 0.5 * x * (1.0 + jnp.tanh(0.7978845608028654 * (x + 0.044715 * x * x * x)))


# =============================================================================
# Fused kernel: embedding-LN + 1-layer BERT encoder (CLS path) + type-routed
# projection.  One grid step processes TILE_N sequences; weights are resident.
# =============================================================================
def node_encoder_kernel(x_ref, bias_ref,
                        wq_ref, bq_ref, wkv_ref, bkv_ref,
                        wo_ref, bo_ref, w1_ref, b1_ref, w2_ref, b2_ref,
                        ln_ref, fud_ref, wud_ref, wqp_ref, selq_ref, bsel_ref,
                        out_ref):
    n, s, e = x_ref.shape                          # static Python ints
    bf16 = jnp.bfloat16
    x_raw = x_ref[...]                             # (TN, S, E) f32

    # ---- embedding LayerNorm in-kernel (f32); CLS rows recomputed (cheap) ----
    x_tok = _layer_norm(x_raw.reshape(n * s, e), ln_ref[0], ln_ref[1])   # (TN*S, E)
    x_cls = _layer_norm(x_raw[:, 0, :], ln_ref[0], ln_ref[1])            # (TN, E)

    # ---- K/V for all tokens, Q only for CLS rows (bf16 operands, f32 acc) ----
    kv = jnp.dot(x_tok.astype(bf16), wkv_ref[...],
                 preferred_element_type=jnp.float32) + bkv_ref[0]        # (TN*S, 2E)
    kv = kv.reshape(n, s, 2 * e)
    k = kv[:, :, :e]                               # (TN, S, E)
    v = kv[:, :, e:]                               # (TN, S, E)
    q_cls = jnp.dot(x_cls.astype(bf16), wq_ref[...],
                    preferred_element_type=jnp.float32) + bq_ref[0]      # (TN, E)

    # ---- CLS-row attention in VPU/XLU form (no degenerate M=1 MXU matmuls) --
    scale = 1.0 / math.sqrt(e)
    bias2 = bias_ref[...]                          # (TN, S) additive mask bias
    s_cols = [jnp.sum(q_cls * k[:, j, :], axis=-1, keepdims=True) * scale
              + bias2[:, j:j + 1] for j in range(s)]          # S x (TN, 1)
    m = s_cols[0]
    for j in range(1, s):
        m = jnp.maximum(m, s_cols[j])
    p_cols = [jnp.exp(sc - m) for sc in s_cols]
    denom = p_cols[0]
    for j in range(1, s):
        denom = denom + p_cols[j]
    ctx = p_cols[0] * v[:, 0, :]
    for j in range(1, s):
        ctx = ctx + p_cols[j] * v[:, j, :]
    ctx = ctx * pl.reciprocal(denom, approx=True)              # (TN, E) f32

    # ---- post-attention path on the dense (TN, E) CLS slab (f32 LN/GELU) ----
    attn_out = jnp.dot(ctx.astype(bf16), wo_ref[...],
                       preferred_element_type=jnp.float32) + bo_ref[0]
    h = _layer_norm(x_cls + attn_out, ln_ref[2], ln_ref[3])
    ff = _gelu(jnp.dot(h.astype(bf16), w1_ref[...],
                       preferred_element_type=jnp.float32) + b1_ref[0])
    ff = jnp.dot(ff.astype(bf16), w2_ref[...],
                 preferred_element_type=jnp.float32) + b2_ref[0]
    cls = _layer_norm(h + ff, ln_ref[4], ln_ref[5])            # (TN, E)

    # ---- type-routed projection fused into the epilogue ----
    #   user/domain : pre-masked concat feature (TN,2E) @ [w_u; w_d] (2E,D)
    #   q/k (shared): (cls * sel_q) @ w_q     (sel_q lane-dense)
    #   bias        : per-node selected bias precomputed on the host side
    h1 = jnp.dot(fud_ref[...], wud_ref[...], preferred_element_type=jnp.float32)
    h1 = h1 + jnp.dot((cls * selq_ref[...]).astype(bf16), wqp_ref[...],
                      preferred_element_type=jnp.float32)
    out_ref[...] = h1 + bsel_ref[...]              # unmasked (TN, D) store


def node_encoder_forward(p, nodes, masks, segments, types):
    """Pallas-backed equivalent of NodeEncoder.forward. Returns h1: (N, NODE_DIM)."""
    n, s = nodes.shape
    assert n % TILE_N == 0
    f32, bf16 = jnp.float32, jnp.bfloat16
    ids0 = nodes[:, 0]

    sel_u = (types == U_TYPE).astype(f32)[:, None]                     # (N,1)
    sel_d = (types == D_TYPE).astype(f32)[:, None]
    sel_q = ((types == Q_TYPE) | (types == K_TYPE)).astype(f32)[:, None]

    # embedding gathers (glue; rows of other types are zeroed by the selector)
    feat_u = p["user_emb"][jnp.where(types == U_TYPE, ids0, 0)] * sel_u
    feat_d = p["domain_emb"][jnp.where(types == D_TYPE, ids0, 0)] * sel_d
    feat_ud = jnp.concatenate([feat_u, feat_d], axis=-1).astype(bf16)  # (N, 2E)
    w_ud = jnp.concatenate([p["w_u"], p["w_d"]], axis=0).astype(bf16)  # (2E, D)
    bias_sel = sel_u * p["b_u"] + sel_q * p["b_q"] + sel_d * p["b_d"]  # (N, D)
    sel_q_lane = jnp.broadcast_to(sel_q, (n, E)).astype(f32)           # lane-dense

    # text path: raw embedding sum only; embedding LayerNorm runs in-kernel
    x_raw = (p["word_emb"][nodes]
             + p["pos_emb"][None, :s]
             + p["tok_type_emb"][segments]).astype(f32)                # (N, S, E)

    # additive attention bias, dense 2-D: 0 for real tokens, -1e9 for padding
    attn_bias = (masks.astype(f32) - 1.0) * 1e9                        # (N, S)

    # bf16 weights (matmul operands); biases / LN params stay f32
    w_q_attn = p["w_qkv"][:, :E].astype(bf16)
    w_kv = p["w_qkv"][:, E:].astype(bf16)
    b_q_attn = p["b_qkv"][:, :E]
    b_kv = p["b_qkv"][:, E:]
    ln = jnp.stack([p["emb_ln_g"], p["emb_ln_b"],
                    p["ln"][0], p["ln"][1], p["ln"][2], p["ln"][3]]).astype(f32)

    def tile(*shape):                              # per-node-tile blocks
        nd = len(shape)
        return pl.BlockSpec(shape, lambda i, _nd=nd: (i,) + (0,) * (_nd - 1))

    def const(*shape):                             # VMEM-resident weights
        nd = len(shape)
        return pl.BlockSpec(shape, lambda i, _nd=nd: (0,) * _nd)

    h1 = pl.pallas_call(
        node_encoder_kernel,
        out_shape=jax.ShapeDtypeStruct((n, NODE_DIM), jnp.float32),
        grid_spec=pltpu.PrefetchScalarGridSpec(
            num_scalar_prefetch=0,
            grid=(n // TILE_N,),
            in_specs=[
                tile(TILE_N, s, E),                 # x_raw (embedding sum)
                tile(TILE_N, s),                    # additive attention bias
                const(E, E),                        # W_q (attention)      bf16
                const(1, E),                        # b_q
                const(E, 2 * E),                    # fused W_kv           bf16
                const(1, 2 * E),                    # fused b_kv
                const(E, E),                        # W_o                  bf16
                const(1, E),                        # b_o
                const(E, FFN),                      # W_ffn1               bf16
                const(1, FFN),                      # b_ffn1
                const(FFN, E),                      # W_ffn2               bf16
                const(1, E),                        # b_ffn2
                const(6, E),                        # LN params (emb,attn,out)
                tile(TILE_N, 2 * E),                # masked [user|domain] bf16
                const(2 * E, NODE_DIM),             # [w_u ; w_d]          bf16
                const(E, NODE_DIM),                 # w_q projection (q/k) bf16
                tile(TILE_N, E),                    # sel_q (lane-dense)
                tile(TILE_N, NODE_DIM),             # per-node selected bias
            ],
            out_specs=pl.BlockSpec((TILE_N, NODE_DIM), lambda i: (i, 0)),
        ),
        compiler_params=pltpu.CompilerParams(
            dimension_semantics=("parallel",)),     # node tiles independent
    )(x_raw, attn_bias,
      w_q_attn, b_q_attn, w_kv, b_kv,
      p["w_o"].astype(bf16), p["b_o"],
      p["w_ffn1"].astype(bf16), p["b_ffn1"],
      p["w_ffn2"].astype(bf16), p["b_ffn2"],
      ln, feat_ud, w_ud, p["w_q"].astype(bf16), sel_q_lane, bias_sel)
    return h1


# =============================================================================
# Deterministic parameter initialization (synthetic; no checkpoint loading)
# =============================================================================
def init_params(key):
    ks = jax.random.split(key, 16)
    s = 0.02
    return {
        "user_emb": jax.random.normal(ks[0], (USER_SIZE, E), jnp.float32) * s,
        "domain_emb": jax.random.normal(ks[1], (DOMAIN_SIZE, E), jnp.float32) * s,
        "word_emb": jax.random.normal(ks[2], (VOCAB, E), jnp.float32) * s,
        "pos_emb": jax.random.normal(ks[3], (S, E), jnp.float32) * s,
        "tok_type_emb": jax.random.normal(ks[4], (2, E), jnp.float32) * s,
        "emb_ln_g": jnp.ones((E,), jnp.float32),
        "emb_ln_b": jnp.zeros((E,), jnp.float32),
        # fused Wq|Wk|Wv along the output axis
        "w_qkv": jax.random.normal(ks[5], (E, 3 * E), jnp.float32) * s,
        "b_qkv": jnp.zeros((1, 3 * E), jnp.float32),
        "w_o": jax.random.normal(ks[6], (E, E), jnp.float32) * s,
        "b_o": jnp.zeros((1, E), jnp.float32),
        "w_ffn1": jax.random.normal(ks[7], (E, FFN), jnp.float32) * s,
        "b_ffn1": jnp.zeros((1, FFN), jnp.float32),
        "w_ffn2": jax.random.normal(ks[8], (FFN, E), jnp.float32) * s,
        "b_ffn2": jnp.zeros((1, E), jnp.float32),
        "ln": jnp.stack([jnp.ones((E,)), jnp.zeros((E,)),
                         jnp.ones((E,)), jnp.zeros((E,))]).astype(jnp.float32),
        # projections, stored as [E, NODE_DIM] (PyTorch weight.T); q and k share.
        "w_u": jax.random.normal(ks[9], (E, NODE_DIM), jnp.float32) * s,
        "b_u": jax.random.normal(ks[10], (NODE_DIM,), jnp.float32) * s,
        "w_q": jax.random.normal(ks[11], (E, NODE_DIM), jnp.float32) * s,
        "b_q": jax.random.normal(ks[12], (NODE_DIM,), jnp.float32) * s,
        "w_d": jax.random.normal(ks[13], (E, NODE_DIM), jnp.float32) * s,
        "b_d": jax.random.normal(ks[14], (NODE_DIM,), jnp.float32) * s,
    }


# ------------------------- pure-JAX f32 reference (sanity check) ------------
def _bert_cls_ref(p, x, mask):
    qkv = x @ p["w_qkv"] + p["b_qkv"][0]
    q, k, v = jnp.split(qkv, 3, axis=-1)
    scores = jnp.einsum("nqe,nke->nqk", q, k) / math.sqrt(E)
    scores = scores + (mask[:, None, :].astype(jnp.float32) - 1.0) * 1e9
    probs = jax.nn.softmax(scores, axis=-1)
    ctx = jnp.einsum("nqk,nke->nqe", probs, v)
    attn = ctx @ p["w_o"] + p["b_o"][0]
    h = _layer_norm_ref(x + attn, p["ln"][0], p["ln"][1])
    ff = _gelu(h @ p["w_ffn1"] + p["b_ffn1"][0]) @ p["w_ffn2"] + p["b_ffn2"][0]
    h2 = _layer_norm_ref(h + ff, p["ln"][2], p["ln"][3])
    return h2[:, 0, :]


def reference_forward(p, nodes, masks, segments, types):
    n = nodes.shape[0]
    ids0 = nodes[:, 0]
    u_h = p["user_emb"][jnp.where(types == U_TYPE, ids0, 0)] @ p["w_u"] + p["b_u"]
    d_h = p["domain_emb"][jnp.where(types == D_TYPE, ids0, 0)] @ p["w_d"] + p["b_d"]
    x_emb = (p["word_emb"][nodes] + p["pos_emb"][None, :nodes.shape[1]]
             + p["tok_type_emb"][segments])
    x_emb = _layer_norm_ref(x_emb, p["emb_ln_g"], p["emb_ln_b"])
    cls = _bert_cls_ref(p, x_emb, masks)
    qk_h = cls @ p["w_q"] + p["b_q"]
    h1 = jnp.zeros((n, NODE_DIM), jnp.float32)
    h1 = jnp.where((types == U_TYPE)[:, None], u_h, h1)
    h1 = jnp.where(((types == Q_TYPE) | (types == K_TYPE))[:, None], qk_h, h1)
    h1 = jnp.where((types == D_TYPE)[:, None], d_h, h1)
    return h1


# =============================================================================
if __name__ == "__main__":
    key = jax.random.PRNGKey(0)
    k_nodes, k_mask, k_seg, k_params = jax.random.split(key, 4)

    params = init_params(k_params)

    # cycles through U, D, Q, K types across all nodes
    types = (jnp.arange(N_TOTAL) % 4).astype(jnp.int32)

    nodes = jax.random.randint(k_nodes, (N_TOTAL, S), 0, VOCAB, dtype=jnp.int32)
    ids0 = nodes[:, 0]
    ids0 = jnp.where(types == U_TYPE, ids0 % USER_SIZE, ids0)
    ids0 = jnp.where(types == D_TYPE, ids0 % DOMAIN_SIZE, ids0)
    nodes = nodes.at[:, 0].set(ids0)

    masks = (jax.random.uniform(k_mask, (N_TOTAL, S)) > 0.3).astype(jnp.int32)
    masks = masks.at[:, 0].set(1)                  # [CLS] always attended
    segments = jax.random.randint(k_seg, (N_TOTAL, S), 0, 2, dtype=jnp.int32)

    h1 = node_encoder_forward(params, nodes, masks, segments, types)
    h1 = jax.block_until_ready(h1)

    h1_ref = reference_forward(params, nodes, masks, segments, types)
    np.testing.assert_allclose(np.asarray(h1), np.asarray(h1_ref),
                               rtol=1e-2, atol=1e-2)

    print("KERNEL_OK")
</pallas_src>

<mosaic_0001>
module attributes {stable_mosaic.version = 11 : i64} {
  func.func @node_encoder_kernel(%arg0: i32, %arg1: memref<64x8x128xf32, #tpu.memory_space<vmem>>, %arg2: memref<64x8xf32, #tpu.memory_space<vmem>>, %arg3: memref<128x128xbf16, #tpu.memory_space<vmem>>, %arg4: memref<1x128xf32, #tpu.memory_space<vmem>>, %arg5: memref<128x256xbf16, #tpu.memory_space<vmem>>, %arg6: memref<1x256xf32, #tpu.memory_space<vmem>>, %arg7: memref<128x128xbf16, #tpu.memory_space<vmem>>, %arg8: memref<1x128xf32, #tpu.memory_space<vmem>>, %arg9: memref<128x512xbf16, #tpu.memory_space<vmem>>, %arg10: memref<1x512xf32, #tpu.memory_space<vmem>>, %arg11: memref<512x128xbf16, #tpu.memory_space<vmem>>, %arg12: memref<1x128xf32, #tpu.memory_space<vmem>>, %arg13: memref<6x128xf32, #tpu.memory_space<vmem>>, %arg14: memref<64x256xbf16, #tpu.memory_space<vmem>>, %arg15: memref<256x128xbf16, #tpu.memory_space<vmem>>, %arg16: memref<128x128xbf16, #tpu.memory_space<vmem>>, %arg17: memref<64x128xf32, #tpu.memory_space<vmem>>, %arg18: memref<64x128xf32, #tpu.memory_space<vmem>>, %arg19: memref<64x128xf32, #tpu.memory_space<vmem>>) attributes {dimension_semantics = [#tpu.dimension_semantics<parallel>], iteration_bounds = array<i64: 4>, scalar_prefetch = 0 : i64, scratch_operands = 0 : i64, tpu.core_type = #tpu.core_type<tc>, window_params = [{transform_indices = @transform_0, window_bounds = array<i64: 64, 8, 128>}, {transform_indices = @transform_1, window_bounds = array<i64: 64, 8>}, {pipeline_mode = #tpu.pipeline_mode<synchronous>, transform_indices = @transform_2, window_bounds = array<i64: 128, 128>}, {pipeline_mode = #tpu.pipeline_mode<synchronous>, transform_indices = @transform_3, window_bounds = array<i64: 1, 128>}, {pipeline_mode = #tpu.pipeline_mode<synchronous>, transform_indices = @transform_4, window_bounds = array<i64: 128, 256>}, {pipeline_mode = #tpu.pipeline_mode<synchronous>, transform_indices = @transform_5, window_bounds = array<i64: 1, 256>}, {pipeline_mode = #tpu.pipeline_mode<synchronous>, transform_indices = @transform_6, window_bounds = array<i64: 128, 128>}, {pipeline_mode = #tpu.pipeline_mode<synchronous>, transform_indices = @transform_7, window_bounds = array<i64: 1, 128>}, {pipeline_mode = #tpu.pipeline_mode<synchronous>, transform_indices = @transform_8, window_bounds = array<i64: 128, 512>}, {pipeline_mode = #tpu.pipeline_mode<synchronous>, transform_indices = @transform_9, window_bounds = array<i64: 1, 512>}, {pipeline_mode = #tpu.pipeline_mode<synchronous>, transform_indices = @transform_10, window_bounds = array<i64: 512, 128>}, {pipeline_mode = #tpu.pipeline_mode<synchronous>, transform_indices = @transform_11, window_bounds = array<i64: 1, 128>}, {pipeline_mode = #tpu.pipeline_mode<synchronous>, transform_indices = @transform_12, window_bounds = array<i64: 6, 128>}, {transform_indices = @transform_13, window_bounds = array<i64: 64, 256>}, {pipeline_mode = #tpu.pipeline_mode<synchronous>, transform_indices = @transform_14, window_bounds = array<i64: 256, 128>}, {pipeline_mode = #tpu.pipeline_mode<synchronous>, transform_indices = @transform_15, window_bounds = array<i64: 128, 128>}, {transform_indices = @transform_16, window_bounds = array<i64: 64, 128>}, {transform_indices = @transform_17, window_bounds = array<i64: 64, 128>}, {transform_indices = @transform_18, window_bounds = array<i64: 64, 128>}]} {
    %c0 = arith.constant 0 : index
    %c0_0 = arith.constant 0 : index
    %c0_1 = arith.constant 0 : index
    %0 = vector.load %arg1[%c0, %c0_0, %c0_1] : memref<64x8x128xf32, #tpu.memory_space<vmem>>, vector<64x8x128xf32>
    %1 = vector.shape_cast %0 : vector<64x8x128xf32> to vector<512x128xf32>
    %c0_2 = arith.constant 0 : index
    %c0_3 = arith.constant 0 : index
    %2 = vector.load %arg13[%c0_2, %c0_3] : memref<6x128xf32, #tpu.memory_space<vmem>>, vector<1x128xf32>
    %3 = vector.shape_cast %2 : vector<1x128xf32> to vector<128xf32>
    %c1 = arith.constant 1 : index
    %c0_4 = arith.constant 0 : index
    %4 = vector.load %arg13[%c1, %c0_4] : memref<6x128xf32, #tpu.memory_space<vmem>>, vector<1x128xf32>
    %5 = vector.shape_cast %4 : vector<1x128xf32> to vector<128xf32>
    %cst = arith.constant dense<0.000000e+00> : vector<512xf32>
    %6 = vector.multi_reduction <add>, %1, %cst [1] : vector<512x128xf32> to vector<512xf32>
    %7 = vector.shape_cast %6 : vector<512xf32> to vector<512x1xf32>
    %cst_5 = arith.constant 1.280000e+02 : f32
    %8 = vector.broadcast %cst_5 : f32 to vector<512x1xf32>
    %9 = arith.divf %7, %8 : vector<512x1xf32>
    %10 = arith.mulf %1, %1 : vector<512x128xf32>
    %cst_6 = arith.constant dense<0.000000e+00> : vector<512xf32>
    %11 = vector.multi_reduction <add>, %10, %cst_6 [1] : vector<512x128xf32> to vector<512xf32>
    %12 = vector.shape_cast %11 : vector<512xf32> to vector<512x1xf32>
    %cst_7 = arith.constant 1.280000e+02 : f32
    %13 = vector.broadcast %cst_7 : f32 to vector<512x1xf32>
    %14 = arith.divf %12, %13 : vector<512x1xf32>
    %15 = arith.mulf %9, %9 : vector<512x1xf32>
    %16 = arith.subf %14, %15 : vector<512x1xf32>
    %17 = vector.broadcast %9 : vector<512x1xf32> to vector<512x128xf32>
    %18 = arith.subf %1, %17 : vector<512x128xf32>
    %cst_8 = arith.constant 9.99999996E-13 : f32
    %19 = vector.broadcast %cst_8 : f32 to vector<512x1xf32>
    %20 = arith.addf %16, %19 : vector<512x1xf32>
    %21 = math.rsqrt %20 : vector<512x1xf32>
    %22 = vector.broadcast %21 : vector<512x1xf32> to vector<512x128xf32>
    %23 = arith.mulf %18, %22 : vector<512x128xf32>
    %24 = vector.shape_cast %3 : vector<128xf32> to vector<1x128xf32>
    %25 = vector.broadcast %24 : vector<1x128xf32> to vector<512x128xf32>
    %26 = arith.mulf %23, %25 : vector<512x128xf32>
    %27 = vector.shape_cast %5 : vector<128xf32> to vector<1x128xf32>
    %28 = vector.broadcast %27 : vector<1x128xf32> to vector<512x128xf32>
    %29 = arith.addf %26, %28 : vector<512x128xf32>
    %30 = vector.extract_strided_slice %0 {offsets = [0, 0, 0], sizes = [64, 1, 128], strides = [1, 1, 1]} : vector<64x8x128xf32> to vector<64x1x128xf32>
    %31 = vector.shape_cast %30 : vector<64x1x128xf32> to vector<64x128xf32>
    %c0_9 = arith.constant 0 : index
    %c0_10 = arith.constant 0 : index
    %32 = vector.load %arg13[%c0_9, %c0_10] : memref<6x128xf32, #tpu.memory_space<vmem>>, vector<1x128xf32>
    %33 = vector.shape_cast %32 : vector<1x128xf32> to vector<128xf32>
    %c1_11 = arith.constant 1 : index
    %c0_12 = arith.constant 0 : index
    %34 = vector.load %arg13[%c1_11, %c0_12] : memref<6x128xf32, #tpu.memory_space<vmem>>, vector<1x128xf32>
    %35 = vector.shape_cast %34 : vector<1x128xf32> to vector<128xf32>
    %cst_13 = arith.constant dense<0.000000e+00> : vector<64xf32>
    %36 = vector.multi_reduction <add>, %31, %cst_13 [1] : vector<64x128xf32> to vector<64xf32>
    %37 = vector.shape_cast %36 : vector<64xf32> to vector<64x1xf32>
    %cst_14 = arith.constant 1.280000e+02 : f32
    %38 = vector.broadcast %cst_14 : f32 to vector<64x1xf32>
    %39 = arith.divf %37, %38 : vector<64x1xf32>
    %40 = arith.mulf %31, %31 : vector<64x128xf32>
    %cst_15 = arith.constant dense<0.000000e+00> : vector<64xf32>
    %41 = vector.multi_reduction <add>, %40, %cst_15 [1] : vector<64x128xf32> to vector<64xf32>
    %42 = vector.shape_cast %41 : vector<64xf32> to vector<64x1xf32>
    %cst_16 = arith.constant 1.280000e+02 : f32
    %43 = vector.broadcast %cst_16 : f32 to vector<64x1xf32>
    %44 = arith.divf %42, %43 : vector<64x1xf32>
    %45 = arith.mulf %39, %39 : vector<64x1xf32>
    %46 = arith.subf %44, %45 : vector<64x1xf32>
    %47 = vector.broadcast %39 : vector<64x1xf32> to vector<64x128xf32>
    %48 = arith.subf %31, %47 : vector<64x128xf32>
    %cst_17 = arith.constant 9.99999996E-13 : f32
    %49 = vector.broadcast %cst_17 : f32 to vector<64x1xf32>
    %50 = arith.addf %46, %49 : vector<64x1xf32>
    %51 = math.rsqrt %50 : vector<64x1xf32>
    %52 = vector.broadcast %51 : vector<64x1xf32> to vector<64x128xf32>
    %53 = arith.mulf %48, %52 : vector<64x128xf32>
    %54 = vector.shape_cast %33 : vector<128xf32> to vector<1x128xf32>
    %55 = vector.broadcast %54 : vector<1x128xf32> to vector<64x128xf32>
    %56 = arith.mulf %53, %55 : vector<64x128xf32>
    %57 = vector.shape_cast %35 : vector<128xf32> to vector<1x128xf32>
    %58 = vector.broadcast %57 : vector<1x128xf32> to vector<64x128xf32>
    %59 = arith.addf %56, %58 : vector<64x128xf32>
    %60 = arith.truncf %29 : vector<512x128xf32> to vector<512x128xbf16>
    %c0_18 = arith.constant 0 : index
    %c0_19 = arith.constant 0 : index
    %61 = vector.load %arg5[%c0_18, %c0_19] : memref<128x256xbf16, #tpu.memory_space<vmem>>, vector<128x256xbf16>
    %cst_20 = arith.constant dense<0.000000e+00> : vector<512x256xf32>
    %62 = tpu.matmul %60, %61, %cst_20 {dimension_numbers = #tpu.dot_dimension_numbers<[1], [0], [0], [1], [0, 0, 1, 1], [], []>} : vector<512x128xbf16>, vector<128x256xbf16>, vector<512x256xf32> -> vector<512x256xf32>
    %c0_21 = arith.constant 0 : index
    %c0_22 = arith.constant 0 : index
    %63 = vector.load %arg6[%c0_21, %c0_22] : memref<1x256xf32, #tpu.memory_space<vmem>>, vector<1x256xf32>
    %64 = vector.shape_cast %63 : vector<1x256xf32> to vector<256xf32>
    %65 = vector.shape_cast %64 : vector<256xf32> to vector<1x256xf32>
    %66 = vector.broadcast %65 : vector<1x256xf32> to vector<512x256xf32>
    %67 = arith.addf %62, %66 : vector<512x256xf32>
    %68 = vector.shape_cast %67 : vector<512x256xf32> to vector<64x8x256xf32>
    %69 = vector.extract_strided_slice %68 {offsets = [0, 0, 0], sizes = [64, 8, 128], strides = [1, 1, 1]} : vector<64x8x256xf32> to vector<64x8x128xf32>
    %70 = vector.extract_strided_slice %68 {offsets = [0, 0, 128], sizes = [64, 8, 128], strides = [1, 1, 1]} : vector<64x8x256xf32> to vector<64x8x128xf32>
    %71 = arith.truncf %59 : vector<64x128xf32> to vector<64x128xbf16>
    %c0_23 = arith.constant 0 : index
    %c0_24 = arith.constant 0 : index
    %72 = vector.load %arg3[%c0_23, %c0_24] : memref<128x128xbf16, #tpu.memory_space<vmem>>, vector<128x128xbf16>
    %cst_25 = arith.constant dense<0.000000e+00> : vector<64x128xf32>
    %73 = tpu.matmul %71, %72, %cst_25 {dimension_numbers = #tpu.dot_dimension_numbers<[1], [0], [0], [1], [0, 0, 1, 1], [], []>} : vector<64x128xbf16>, vector<128x128xbf16>, vector<64x128xf32> -> vector<64x128xf32>
    %c0_26 = arith.constant 0 : index
    %c0_27 = arith.constant 0 : index
    %74 = vector.load %arg4[%c0_26, %c0_27] : memref<1x128xf32, #tpu.memory_space<vmem>>, vector<1x128xf32>
    %75 = vector.shape_cast %74 : vector<1x128xf32> to vector<128xf32>
    %76 = vector.shape_cast %75 : vector<128xf32> to vector<1x128xf32>
    %77 = vector.broadcast %76 : vector<1x128xf32> to vector<64x128xf32>
    %78 = arith.addf %73, %77 : vector<64x128xf32>
    %c0_28 = arith.constant 0 : index
    %c0_29 = arith.constant 0 : index
    %79 = vector.load %arg2[%c0_28, %c0_29] : memref<64x8xf32, #tpu.memory_space<vmem>>, vector<64x8xf32>
    %80 = vector.extract_strided_slice %69 {offsets = [0, 0, 0], sizes = [64, 1, 128], strides = [1, 1, 1]} : vector<64x8x128xf32> to vector<64x1x128xf32>
    %81 = vector.shape_cast %80 : vector<64x1x128xf32> to vector<64x128xf32>
    %82 = arith.mulf %78, %81 : vector<64x128xf32>
    %cst_30 = arith.constant dense<0.000000e+00> : vector<64xf32>
    %83 = vector.multi_reduction <add>, %82, %cst_30 [1] : vector<64x128xf32> to vector<64xf32>
    %84 = vector.shape_cast %83 : vector<64xf32> to vector<64x1xf32>
    %cst_31 = arith.constant 0.0883883461 : f32
    %85 = vector.broadcast %cst_31 : f32 to vector<64x1xf32>
    %86 = arith.mulf %84, %85 : vector<64x1xf32>
    %87 = vector.extract_strided_slice %79 {offsets = [0, 0], sizes = [64, 1], strides = [1, 1]} : vector<64x8xf32> to vector<64x1xf32>
    %88 = arith.addf %86, %87 : vector<64x1xf32>
    %89 = vector.extract_strided_slice %69 {offsets = [0, 1, 0], sizes = [64, 1, 128], strides = [1, 1, 1]} : vector<64x8x128xf32> to vector<64x1x128xf32>
    %90 = vector.shape_cast %89 : vector<64x1x128xf32> to vector<64x128xf32>
    %91 = arith.mulf %78, %90 : vector<64x128xf32>
    %cst_32 = arith.constant dense<0.000000e+00> : vector<64xf32>
    %92 = vector.multi_reduction <add>, %91, %cst_32 [1] : vector<64x128xf32> to vector<64xf32>
    %93 = vector.shape_cast %92 : vector<64xf32> to vector<64x1xf32>
    %cst_33 = arith.constant 0.0883883461 : f32
    %94 = vector.broadcast %cst_33 : f32 to vector<64x1xf32>
    %95 = arith.mulf %93, %94 : vector<64x1xf32>
    %96 = vector.extract_strided_slice %79 {offsets = [0, 1], sizes = [64, 1], strides = [1, 1]} : vector<64x8xf32> to vector<64x1xf32>
    %97 = arith.addf %95, %96 : vector<64x1xf32>
    %98 = vector.extract_strided_slice %69 {offsets = [0, 2, 0], sizes = [64, 1, 128], strides = [1, 1, 1]} : vector<64x8x128xf32> to vector<64x1x128xf32>
    %99 = vector.shape_cast %98 : vector<64x1x128xf32> to vector<64x128xf32>
    %100 = arith.mulf %78, %99 : vector<64x128xf32>
    %cst_34 = arith.constant dense<0.000000e+00> : vector<64xf32>
    %101 = vector.multi_reduction <add>, %100, %cst_34 [1] : vector<64x128xf32> to vector<64xf32>
    %102 = vector.shape_cast %101 : vector<64xf32> to vector<64x1xf32>
    %cst_35 = arith.constant 0.0883883461 : f32
    %103 = vector.broadcast %cst_35 : f32 to vector<64x1xf32>
    %104 = arith.mulf %102, %103 : vector<64x1xf32>
    %105 = vector.extract_strided_slice %79 {offsets = [0, 2], sizes = [64, 1], strides = [1, 1]} : vector<64x8xf32> to vector<64x1xf32>
    %106 = arith.addf %104, %105 : vector<64x1xf32>
    %107 = vector.extract_strided_slice %69 {offsets = [0, 3, 0], sizes = [64, 1, 128], strides = [1, 1, 1]} : vector<64x8x128xf32> to vector<64x1x128xf32>
    %108 = vector.shape_cast %107 : vector<64x1x128xf32> to vector<64x128xf32>
    %109 = arith.mulf %78, %108 : vector<64x128xf32>
    %cst_36 = arith.constant dense<0.000000e+00> : vector<64xf32>
    %110 = vector.multi_reduction <add>, %109, %cst_36 [1] : vector<64x128xf32> to vector<64xf32>
    %111 = vector.shape_cast %110 : vector<64xf32> to vector<64x1xf32>
    %cst_37 = arith.constant 0.0883883461 : f32
    %112 = vector.broadcast %cst_37 : f32 to vector<64x1xf32>
    %113 = arith.mulf %111, %112 : vector<64x1xf32>
    %114 = vector.extract_strided_slice %79 {offsets = [0, 3], sizes = [64, 1], strides = [1, 1]} : vector<64x8xf32> to vector<64x1xf32>
    %115 = arith.addf %113, %114 : vector<64x1xf32>
    %116 = vector.extract_strided_slice %69 {offsets = [0, 4, 0], sizes = [64, 1, 128], strides = [1, 1, 1]} : vector<64x8x128xf32> to vector<64x1x128xf32>
    %117 = vector.shape_cast %116 : vector<64x1x128xf32> to vector<64x128xf32>
    %118 = arith.mulf %78, %117 : vector<64x128xf32>
    %cst_38 = arith.constant dense<0.000000e+00> : vector<64xf32>
    %119 = vector.multi_reduction <add>, %118, %cst_38 [1] : vector<64x128xf32> to vector<64xf32>
    %120 = vector.shape_cast %119 : vector<64xf32> to vector<64x1xf32>
    %cst_39 = arith.constant 0.0883883461 : f32
    %121 = vector.broadcast %cst_39 : f32 to vector<64x1xf32>
    %122 = arith.mulf %120, %121 : vector<64x1xf32>
    %123 = vector.extract_strided_slice %79 {offsets = [0, 4], sizes = [64, 1], strides = [1, 1]} : vector<64x8xf32> to vector<64x1xf32>
    %124 = arith.addf %122, %123 : vector<64x1xf32>
    %125 = vector.extract_strided_slice %69 {offsets = [0, 5, 0], sizes = [64, 1, 128], strides = [1, 1, 1]} : vector<64x8x128xf32> to vector<64x1x128xf32>
    %126 = vector.shape_cast %125 : vector<64x1x128xf32> to vector<64x128xf32>
    %127 = arith.mulf %78, %126 : vector<64x128xf32>
    %cst_40 = arith.constant dense<0.000000e+00> : vector<64xf32>
    %128 = vector.multi_reduction <add>, %127, %cst_40 [1] : vector<64x128xf32> to vector<64xf32>
    %129 = vector.shape_cast %128 : vector<64xf32> to vector<64x1xf32>
    %cst_41 = arith.constant 0.0883883461 : f32
    %130 = vector.broadcast %cst_41 : f32 to vector<64x1xf32>
    %131 = arith.mulf %129, %130 : vector<64x1xf32>
    %132 = vector.extract_strided_slice %79 {offsets = [0, 5], sizes = [64, 1], strides = [1, 1]} : vector<64x8xf32> to vector<64x1xf32>
    %133 = arith.addf %131, %132 : vector<64x1xf32>
    %134 = vector.extract_strided_slice %69 {offsets = [0, 6, 0], sizes = [64, 1, 128], strides = [1, 1, 1]} : vector<64x8x128xf32> to vector<64x1x128xf32>
    %135 = vector.shape_cast %134 : vector<64x1x128xf32> to vector<64x128xf32>
    %136 = arith.mulf %78, %135 : vector<64x128xf32>
    %cst_42 = arith.constant dense<0.000000e+00> : vector<64xf32>
    %137 = vector.multi_reduction <add>, %136, %cst_42 [1] : vector<64x128xf32> to vector<64xf32>
    %138 = vector.shape_cast %137 : vector<64xf32> to vector<64x1xf32>
    %cst_43 = arith.constant 0.0883883461 : f32
    %139 = vector.broadcast %cst_43 : f32 to vector<64x1xf32>
    %140 = arith.mulf %138, %139 : vector<64x1xf32>
    %141 = vector.extract_strided_slice %79 {offsets = [0, 6], sizes = [64, 1], strides = [1, 1]} : vector<64x8xf32> to vector<64x1xf32>
    %142 = arith.addf %140, %141 : vector<64x1xf32>
    %143 = vector.extract_strided_slice %69 {offsets = [0, 7, 0], sizes = [64, 1, 128], strides = [1, 1, 1]} : vector<64x8x128xf32> to vector<64x1x128xf32>
    %144 = vector.shape_cast %143 : vector<64x1x128xf32> to vector<64x128xf32>
    %145 = arith.mulf %78, %144 : vector<64x128xf32>
    %cst_44 = arith.constant dense<0.000000e+00> : vector<64xf32>
    %146 = vector.multi_reduction <add>, %145, %cst_44 [1] : vector<64x128xf32> to vector<64xf32>
    %147 = vector.shape_cast %146 : vector<64xf32> to vector<64x1xf32>
    %cst_45 = arith.constant 0.0883883461 : f32
    %148 = vector.broadcast %cst_45 : f32 to vector<64x1xf32>
    %149 = arith.mulf %147, %148 : vector<64x1xf32>
    %150 = vector.extract_strided_slice %79 {offsets = [0, 7], sizes = [64, 1], strides = [1, 1]} : vector<64x8xf32> to vector<64x1xf32>
    %151 = arith.addf %149, %150 : vector<64x1xf32>
    %152 = arith.maximumf %88, %97 : vector<64x1xf32>
    %153 = arith.maximumf %152, %106 : vector<64x1xf32>
    %154 = arith.maximumf %153, %115 : vector<64x1xf32>
    %155 = arith.maximumf %154, %124 : vector<64x1xf32>
    %156 = arith.maximumf %155, %133 : vector<64x1xf32>
    %157 = arith.maximumf %156, %142 : vector<64x1xf32>
    %158 = arith.maximumf %157, %151 : vector<64x1xf32>
    %159 = arith.subf %88, %158 : vector<64x1xf32>
    %160 = math.exp %159 : vector<64x1xf32>
    %161 = arith.subf %97, %158 : vector<64x1xf32>
    %162 = math.exp %161 : vector<64x1xf32>
    %163 = arith.subf %106, %158 : vector<64x1xf32>
    %164 = math.exp %163 : vector<64x1xf32>
    %165 = arith.subf %115, %158 : vector<64x1xf32>
    %166 = math.exp %165 : vector<64x1xf32>
    %167 = arith.subf %124, %158 : vector<64x1xf32>
    %168 = math.exp %167 : vector<64x1xf32>
    %169 = arith.subf %133, %158 : vector<64x1xf32>
    %170 = math.exp %169 : vector<64x1xf32>
    %171 = arith.subf %142, %158 : vector<64x1xf32>
    %172 = math.exp %171 : vector<64x1xf32>
    %173 = arith.subf %151, %158 : vector<64x1xf32>
    %174 = math.exp %173 : vector<64x1xf32>
    %175 = arith.addf %160, %162 : vector<64x1xf32>
    %176 = arith.addf %175, %164 : vector<64x1xf32>
    %177 = arith.addf %176, %166 : vector<64x1xf32>
    %178 = arith.addf %177, %168 : vector<64x1xf32>
    %179 = arith.addf %178, %170 : vector<64x1xf32>
    %180 = arith.addf %179, %172 : vector<64x1xf32>
    %181 = arith.addf %180, %174 : vector<64x1xf32>
    %182 = vector.extract_strided_slice %70 {offsets = [0, 0, 0], sizes = [64, 1, 128], strides = [1, 1, 1]} : vector<64x8x128xf32> to vector<64x1x128xf32>
    %183 = vector.shape_cast %182 : vector<64x1x128xf32> to vector<64x128xf32>
    %184 = vector.broadcast %160 : vector<64x1xf32> to vector<64x128xf32>
    %185 = arith.mulf %184, %183 : vector<64x128xf32>
    %186 = vector.extract_strided_slice %70 {offsets = [0, 1, 0], sizes = [64, 1, 128], strides = [1, 1, 1]} : vector<64x8x128xf32> to vector<64x1x128xf32>
    %187 = vector.shape_cast %186 : vector<64x1x128xf32> to vector<64x128xf32>
    %188 = vector.broadcast %162 : vector<64x1xf32> to vector<64x128xf32>
    %189 = arith.mulf %188, %187 : vector<64x128xf32>
    %190 = arith.addf %185, %189 : vector<64x128xf32>
    %191 = vector.extract_strided_slice %70 {offsets = [0, 2, 0], sizes = [64, 1, 128], strides = [1, 1, 1]} : vector<64x8x128xf32> to vector<64x1x128xf32>
    %192 = vector.shape_cast %191 : vector<64x1x128xf32> to vector<64x128xf32>
    %193 = vector.broadcast %164 : vector<64x1xf32> to vector<64x128xf32>
    %194 = arith.mulf %193, %192 : vector<64x128xf32>
    %195 = arith.addf %190, %194 : vector<64x128xf32>
    %196 = vector.extract_strided_slice %70 {offsets = [0, 3, 0], sizes = [64, 1, 128], strides = [1, 1, 1]} : vector<64x8x128xf32> to vector<64x1x128xf32>
    %197 = vector.shape_cast %196 : vector<64x1x128xf32> to vector<64x128xf32>
    %198 = vector.broadcast %166 : vector<64x1xf32> to vector<64x128xf32>
    %199 = arith.mulf %198, %197 : vector<64x128xf32>
    %200 = arith.addf %195, %199 : vector<64x128xf32>
    %201 = vector.extract_strided_slice %70 {offsets = [0, 4, 0], sizes = [64, 1, 128], strides = [1, 1, 1]} : vector<64x8x128xf32> to vector<64x1x128xf32>
    %202 = vector.shape_cast %201 : vector<64x1x128xf32> to vector<64x128xf32>
    %203 = vector.broadcast %168 : vector<64x1xf32> to vector<64x128xf32>
    %204 = arith.mulf %203, %202 : vector<64x128xf32>
    %205 = arith.addf %200, %204 : vector<64x128xf32>
    %206 = vector.extract_strided_slice %70 {offsets = [0, 5, 0], sizes = [64, 1, 128], strides = [1, 1, 1]} : vector<64x8x128xf32> to vector<64x1x128xf32>
    %207 = vector.shape_cast %206 : vector<64x1x128xf32> to vector<64x128xf32>
    %208 = vector.broadcast %170 : vector<64x1xf32> to vector<64x128xf32>
    %209 = arith.mulf %208, %207 : vector<64x128xf32>
    %210 = arith.addf %205, %209 : vector<64x128xf32>
    %211 = vector.extract_strided_slice %70 {offsets = [0, 6, 0], sizes = [64, 1, 128], strides = [1, 1, 1]} : vector<64x8x128xf32> to vector<64x1x128xf32>
    %212 = vector.shape_cast %211 : vector<64x1x128xf32> to vector<64x128xf32>
    %213 = vector.broadcast %172 : vector<64x1xf32> to vector<64x128xf32>
    %214 = arith.mulf %213, %212 : vector<64x128xf32>
    %215 = arith.addf %210, %214 : vector<64x128xf32>
    %216 = vector.extract_strided_slice %70 {offsets = [0, 7, 0], sizes = [64, 1, 128], strides = [1, 1, 1]} : vector<64x8x128xf32> to vector<64x1x128xf32>
    %217 = vector.shape_cast %216 : vector<64x1x128xf32> to vector<64x128xf32>
    %218 = vector.broadcast %174 : vector<64x1xf32> to vector<64x128xf32>
    %219 = arith.mulf %218, %217 : vector<64x128xf32>
    %220 = arith.addf %215, %219 : vector<64x128xf32>
    %221 = tpu.reciprocal %181 {approx = true} : vector<64x1xf32> -> vector<64x1xf32>
    %222 = vector.broadcast %221 : vector<64x1xf32> to vector<64x128xf32>
    %223 = arith.mulf %220, %222 : vector<64x128xf32>
    %224 = arith.truncf %223 : vector<64x128xf32> to vector<64x128xbf16>
    %c0_46 = arith.constant 0 : index
    %c0_47 = arith.constant 0 : index
    %225 = vector.load %arg7[%c0_46, %c0_47] : memref<128x128xbf16, #tpu.memory_space<vmem>>, vector<128x128xbf16>
    %cst_48 = arith.constant dense<0.000000e+00> : vector<64x128xf32>
    %226 = tpu.matmul %224, %225, %cst_48 {dimension_numbers = #tpu.dot_dimension_numbers<[1], [0], [0], [1], [0, 0, 1, 1], [], []>} : vector<64x128xbf16>, vector<128x128xbf16>, vector<64x128xf32> -> vector<64x128xf32>
    %c0_49 = arith.constant 0 : index
    %c0_50 = arith.constant 0 : index
    %227 = vector.load %arg8[%c0_49, %c0_50] : memref<1x128xf32, #tpu.memory_space<vmem>>, vector<1x128xf32>
    %228 = vector.shape_cast %227 : vector<1x128xf32> to vector<128xf32>
    %229 = vector.shape_cast %228 : vector<128xf32> to vector<1x128xf32>
    %230 = vector.broadcast %229 : vector<1x128xf32> to vector<64x128xf32>
    %231 = arith.addf %226, %230 : vector<64x128xf32>
    %232 = arith.addf %59, %231 : vector<64x128xf32>
    %c2 = arith.constant 2 : index
    %c0_51 = arith.constant 0 : index
    %233 = vector.load %arg13[%c2, %c0_51] : memref<6x128xf32, #tpu.memory_space<vmem>>, vector<1x128xf32>
    %234 = vector.shape_cast %233 : vector<1x128xf32> to vector<128xf32>
    %c3 = arith.constant 3 : index
    %c0_52 = arith.constant 0 : index
    %235 = vector.load %arg13[%c3, %c0_52] : memref<6x128xf32, #tpu.memory_space<vmem>>, vector<1x128xf32>
    %236 = vector.shape_cast %235 : vector<1x128xf32> to vector<128xf32>
    %cst_53 = arith.constant dense<0.000000e+00> : vector<64xf32>
    %237 = vector.multi_reduction <add>, %232, %cst_53 [1] : vector<64x128xf32> to vector<64xf32>
    %238 = vector.shape_cast %237 : vector<64xf32> to vector<64x1xf32>
    %cst_54 = arith.constant 1.280000e+02 : f32
    %239 = vector.broadcast %cst_54 : f32 to vector<64x1xf32>
    %240 = arith.divf %238, %239 : vector<64x1xf32>
    %241 = arith.mulf %232, %232 : vector<64x128xf32>
    %cst_55 = arith.constant dense<0.000000e+00> : vector<64xf32>
    %242 = vector.multi_reduction <add>, %241, %cst_55 [1] : vector<64x128xf32> to vector<64xf32>
    %243 = vector.shape_cast %242 : vector<64xf32> to vector<64x1xf32>
    %cst_56 = arith.constant 1.280000e+02 : f32
    %244 = vector.broadcast %cst_56 : f32 to vector<64x1xf32>
    %245 = arith.divf %243, %244 : vector<64x1xf32>
    %246 = arith.mulf %240, %240 : vector<64x1xf32>
    %247 = arith.subf %245, %246 : vector<64x1xf32>
    %248 = vector.broadcast %240 : vector<64x1xf32> to vector<64x128xf32>
    %249 = arith.subf %232, %248 : vector<64x128xf32>
    %cst_57 = arith.constant 9.99999996E-13 : f32
    %250 = vector.broadcast %cst_57 : f32 to vector<64x1xf32>
    %251 = arith.addf %247, %250 : vector<64x1xf32>
    %252 = math.rsqrt %251 : vector<64x1xf32>
    %253 = vector.broadcast %252 : vector<64x1xf32> to vector<64x128xf32>
    %254 = arith.mulf %249, %253 : vector<64x128xf32>
    %255 = vector.shape_cast %234 : vector<128xf32> to vector<1x128xf32>
    %256 = vector.broadcast %255 : vector<1x128xf32> to vector<64x128xf32>
    %257 = arith.mulf %254, %256 : vector<64x128xf32>
    %258 = vector.shape_cast %236 : vector<128xf32> to vector<1x128xf32>
    %259 = vector.broadcast %258 : vector<1x128xf32> to vector<64x128xf32>
    %260 = arith.addf %257, %259 : vector<64x128xf32>
    %261 = arith.truncf %260 : vector<64x128xf32> to vector<64x128xbf16>
    %c0_58 = arith.constant 0 : index
    %c0_59 = arith.constant 0 : index
    %262 = vector.load %arg9[%c0_58, %c0_59] : memref<128x512xbf16, #tpu.memory_space<vmem>>, vector<128x512xbf16>
    %cst_60 = arith.constant dense<0.000000e+00> : vector<64x512xf32>
    %263 = tpu.matmul %261, %262, %cst_60 {dimension_numbers = #tpu.dot_dimension_numbers<[1], [0], [0], [1], [0, 0, 1, 1], [], []>} : vector<64x128xbf16>, vector<128x512xbf16>, vector<64x512xf32> -> vector<64x512xf32>
    %c0_61 = arith.constant 0 : index
    %c0_62 = arith.constant 0 : index
    %264 = vector.load %arg10[%c0_61, %c0_62] : memref<1x512xf32, #tpu.memory_space<vmem>>, vector<1x512xf32>
    %265 = vector.shape_cast %264 : vector<1x512xf32> to vector<512xf32>
    %266 = vector.shape_cast %265 : vector<512xf32> to vector<1x512xf32>
    %267 = vector.broadcast %266 : vector<1x512xf32> to vector<64x512xf32>
    %268 = arith.addf %263, %267 : vector<64x512xf32>
    %cst_63 = arith.constant 5.000000e-01 : f32
    %269 = vector.broadcast %cst_63 : f32 to vector<64x512xf32>
    %270 = arith.mulf %269, %268 : vector<64x512xf32>
    %cst_64 = arith.constant 4.471500e-02 : f32
    %271 = vector.broadcast %cst_64 : f32 to vector<64x512xf32>
    %272 = arith.mulf %271, %268 : vector<64x512xf32>
    %273 = arith.mulf %272, %268 : vector<64x512xf32>
    %274 = arith.mulf %273, %268 : vector<64x512xf32>
    %275 = arith.addf %268, %274 : vector<64x512xf32>
    %cst_65 = arith.constant 0.797884583 : f32
    %276 = vector.broadcast %cst_65 : f32 to vector<64x512xf32>
    %277 = arith.mulf %276, %275 : vector<64x512xf32>
    %278 = math.tanh %277 : vector<64x512xf32>
    %cst_66 = arith.constant 1.000000e+00 : f32
    %279 = vector.broadcast %cst_66 : f32 to vector<64x512xf32>
    %280 = arith.addf %279, %278 : vector<64x512xf32>
    %281 = arith.mulf %270, %280 : vector<64x512xf32>
    %282 = arith.truncf %281 : vector<64x512xf32> to vector<64x512xbf16>
    %c0_67 = arith.constant 0 : index
    %c0_68 = arith.constant 0 : index
    %283 = vector.load %arg11[%c0_67, %c0_68] : memref<512x128xbf16, #tpu.memory_space<vmem>>, vector<512x128xbf16>
    %cst_69 = arith.constant dense<0.000000e+00> : vector<64x128xf32>
    %284 = tpu.matmul %282, %283, %cst_69 {dimension_numbers = #tpu.dot_dimension_numbers<[1], [0], [0], [1], [0, 0, 1, 1], [], []>} : vector<64x512xbf16>, vector<512x128xbf16>, vector<64x128xf32> -> vector<64x128xf32>
    %c0_70 = arith.constant 0 : index
    %c0_71 = arith.constant 0 : index
    %285 = vector.load %arg12[%c0_70, %c0_71] : memref<1x128xf32, #tpu.memory_space<vmem>>, vector<1x128xf32>
    %286 = vector.shape_cast %285 : vector<1x128xf32> to vector<128xf32>
    %287 = vector.shape_cast %286 : vector<128xf32> to vector<1x128xf32>
    %288 = vector.broadcast %287 : vector<1x128xf32> to vector<64x128xf32>
    %289 = arith.addf %284, %288 : vector<64x128xf32>
    %290 = arith.addf %260, %289 : vector<64x128xf32>
    %c4 = arith.constant 4 : index
    %c0_72 = arith.constant 0 : index
    %291 = vector.load %arg13[%c4, %c0_72] : memref<6x128xf32, #tpu.memory_space<vmem>>, vector<1x128xf32>
    %292 = vector.shape_cast %291 : vector<1x128xf32> to vector<128xf32>
    %c5 = arith.constant 5 : index
    %c0_73 = arith.constant 0 : index
    %293 = vector.load %arg13[%c5, %c0_73] : memref<6x128xf32, #tpu.memory_space<vmem>>, vector<1x128xf32>
    %294 = vector.shape_cast %293 : vector<1x128xf32> to vector<128xf32>
    %cst_74 = arith.constant dense<0.000000e+00> : vector<64xf32>
    %295 = vector.multi_reduction <add>, %290, %cst_74 [1] : vector<64x128xf32> to vector<64xf32>
    %296 = vector.shape_cast %295 : vector<64xf32> to vector<64x1xf32>
    %cst_75 = arith.constant 1.280000e+02 : f32
    %297 = vector.broadcast %cst_75 : f32 to vector<64x1xf32>
    %298 = arith.divf %296, %297 : vector<64x1xf32>
    %299 = arith.mulf %290, %290 : vector<64x128xf32>
    %cst_76 = arith.constant dense<0.000000e+00> : vector<64xf32>
    %300 = vector.multi_reduction <add>, %299, %cst_76 [1] : vector<64x128xf32> to vector<64xf32>
    %301 = vector.shape_cast %300 : vector<64xf32> to vector<64x1xf32>
    %cst_77 = arith.constant 1.280000e+02 : f32
    %302 = vector.broadcast %cst_77 : f32 to vector<64x1xf32>
    %303 = arith.divf %301, %302 : vector<64x1xf32>
    %304 = arith.mulf %298, %298 : vector<64x1xf32>
    %305 = arith.subf %303, %304 : vector<64x1xf32>
    %306 = vector.broadcast %298 : vector<64x1xf32> to vector<64x128xf32>
    %307 = arith.subf %290, %306 : vector<64x128xf32>
    %cst_78 = arith.constant 9.99999996E-13 : f32
    %308 = vector.broadcast %cst_78 : f32 to vector<64x1xf32>
    %309 = arith.addf %305, %308 : vector<64x1xf32>
    %310 = math.rsqrt %309 : vector<64x1xf32>
    %311 = vector.broadcast %310 : vector<64x1xf32> to vector<64x128xf32>
    %312 = arith.mulf %307, %311 : vector<64x128xf32>
    %313 = vector.shape_cast %292 : vector<128xf32> to vector<1x128xf32>
    %314 = vector.broadcast %313 : vector<1x128xf32> to vector<64x128xf32>
    %315 = arith.mulf %312, %314 : vector<64x128xf32>
    %316 = vector.shape_cast %294 : vector<128xf32> to vector<1x128xf32>
    %317 = vector.broadcast %316 : vector<1x128xf32> to vector<64x128xf32>
    %318 = arith.addf %315, %317 : vector<64x128xf32>
    %c0_79 = arith.constant 0 : index
    %c0_80 = arith.constant 0 : index
    %319 = vector.load %arg14[%c0_79, %c0_80] : memref<64x256xbf16, #tpu.memory_space<vmem>>, vector<64x256xbf16>
    %c0_81 = arith.constant 0 : index
    %c0_82 = arith.constant 0 : index
    %320 = vector.load %arg15[%c0_81, %c0_82] : memref<256x128xbf16, #tpu.memory_space<vmem>>, vector<256x128xbf16>
    %cst_83 = arith.constant dense<0.000000e+00> : vector<64x128xf32>
    %321 = tpu.matmul %319, %320, %cst_83 {dimension_numbers = #tpu.dot_dimension_numbers<[1], [0], [0], [1], [0, 0, 1, 1], [], []>} : vector<64x256xbf16>, vector<256x128xbf16>, vector<64x128xf32> -> vector<64x128xf32>
    %c0_84 = arith.constant 0 : index
    %c0_85 = arith.constant 0 : index
    %322 = vector.load %arg17[%c0_84, %c0_85] : memref<64x128xf32, #tpu.memory_space<vmem>>, vector<64x128xf32>
    %323 = arith.mulf %318, %322 : vector<64x128xf32>
    %324 = arith.truncf %323 : vector<64x128xf32> to vector<64x128xbf16>
    %c0_86 = arith.constant 0 : index
    %c0_87 = arith.constant 0 : index
    %325 = vector.load %arg16[%c0_86, %c0_87] : memref<128x128xbf16, #tpu.memory_space<vmem>>, vector<128x128xbf16>
    %cst_88 = arith.constant dense<0.000000e+00> : vector<64x128xf32>
    %326 = tpu.matmul %324, %325, %cst_88 {dimension_numbers = #tpu.dot_dimension_numbers<[1], [0], [0], [1], [0, 0, 1, 1], [], []>} : vector<64x128xbf16>, vector<128x128xbf16>, vector<64x128xf32> -> vector<64x128xf32>
    %327 = arith.addf %321, %326 : vector<64x128xf32>
    %c0_89 = arith.constant 0 : index
    %c0_90 = arith.constant 0 : index
    %328 = vector.load %arg18[%c0_89, %c0_90] : memref<64x128xf32, #tpu.memory_space<vmem>>, vector<64x128xf32>
    %329 = arith.addf %327, %328 : vector<64x128xf32>
    %c0_91 = arith.constant 0 : index
    %c0_92 = arith.constant 0 : index
    %330 = vector.load %arg19[%c0_91, %c0_92] : memref<64x128xf32, #tpu.memory_space<vmem>>, vector<64x128xf32>
    tpu.vector_store %arg19[%c0_91, %c0_92], %329 {strides = array<i32>} : memref<64x128xf32, #tpu.memory_space<vmem>>, vector<64x128xf32>,
    return
  }
  func.func @transform_0(%arg0: i32) -> (i32, i32, i32) {
    %c0_i32 = arith.constant 0 : i32
    %c0_i32_0 = arith.constant 0 : i32
    %c0_i32_1 = arith.constant 0 : i32
    return %arg0, %c0_i32, %c0_i32_0 : i32, i32, i32
  }
  func.func @transform_1(%arg0: i32) -> (i32, i32) {
    %c0_i32 = arith.constant 0 : i32
    %c0_i32_0 = arith.constant 0 : i32
    return %arg0, %c0_i32 : i32, i32
  }
  func.func @transform_2(%arg0: i32) -> (i32, i32) {
    %c0_i32 = arith.constant 0 : i32
    %c0_i32_0 = arith.constant 0 : i32
    %c0_i32_1 = arith.constant 0 : i32
    return %c0_i32, %c0_i32_0 : i32, i32
  }
  func.func @transform_3(%arg0: i32) -> (i32, i32) {
    %c0_i32 = arith.constant 0 : i32
    %c0_i32_0 = arith.constant 0 : i32
    %c0_i32_1 = arith.constant 0 : i32
    return %c0_i32, %c0_i32_0 : i32, i32
  }
  func.func @transform_4(%arg0: i32) -> (i32, i32) {
    %c0_i32 = arith.constant 0 : i32
    %c0_i32_0 = arith.constant 0 : i32
    %c0_i32_1 = arith.constant 0 : i32
    return %c0_i32, %c0_i32_0 : i32, i32
  }
  func.func @transform_5(%arg0: i32) -> (i32, i32) {
    %c0_i32 = arith.constant 0 : i32
    %c0_i32_0 = arith.constant 0 : i32
    %c0_i32_1 = arith.constant 0 : i32
    return %c0_i32, %c0_i32_0 : i32, i32
  }
  func.func @transform_6(%arg0: i32) -> (i32, i32) {
    %c0_i32 = arith.constant 0 : i32
    %c0_i32_0 = arith.constant 0 : i32
    %c0_i32_1 = arith.constant 0 : i32
    return %c0_i32, %c0_i32_0 : i32, i32
  }
  func.func @transform_7(%arg0: i32) -> (i32, i32) {
    %c0_i32 = arith.constant 0 : i32
    %c0_i32_0 = arith.constant 0 : i32
    %c0_i32_1 = arith.constant 0 : i32
    return %c0_i32, %c0_i32_0 : i32, i32
  }
  func.func @transform_8(%arg0: i32) -> (i32, i32) {
    %c0_i32 = arith.constant 0 : i32
    %c0_i32_0 = arith.constant 0 : i32
    %c0_i32_1 = arith.constant 0 : i32
    return %c0_i32, %c0_i32_0 : i32, i32
  }
  func.func @transform_9(%arg0: i32) -> (i32, i32) {
    %c0_i32 = arith.constant 0 : i32
    %c0_i32_0 = arith.constant 0 : i32
    %c0_i32_1 = arith.constant 0 : i32
    return %c0_i32, %c0_i32_0 : i32, i32
  }
  func.func @transform_10(%arg0: i32) -> (i32, i32) {
    %c0_i32 = arith.constant 0 : i32
    %c0_i32_0 = arith.constant 0 : i32
    %c0_i32_1 = arith.constant 0 : i32
    return %c0_i32, %c0_i32_0 : i32, i32
  }
  func.func @transform_11(%arg0: i32) -> (i32, i32) {
    %c0_i32 = arith.constant 0 : i32
    %c0_i32_0 = arith.constant 0 : i32
    %c0_i32_1 = arith.constant 0 : i32
    return %c0_i32, %c0_i32_0 : i32, i32
  }
  func.func @transform_12(%arg0: i32) -> (i32, i32) {
    %c0_i32 = arith.constant 0 : i32
    %c0_i32_0 = arith.constant 0 : i32
    %c0_i32_1 = arith.constant 0 : i32
    return %c0_i32, %c0_i32_0 : i32, i32
  }
  func.func @transform_13(%arg0: i32) -> (i32, i32) {
    %c0_i32 = arith.constant 0 : i32
    %c0_i32_0 = arith.constant 0 : i32
    return %arg0, %c0_i32 : i32, i32
  }
  func.func @transform_14(%arg0: i32) -> (i32, i32) {
    %c0_i32 = arith.constant 0 : i32
    %c0_i32_0 = arith.constant 0 : i32
    %c0_i32_1 = arith.constant 0 : i32
    return %c0_i32, %c0_i32_0 : i32, i32
  }
  func.func @transform_15(%arg0: i32) -> (i32, i32) {
    %c0_i32 = arith.constant 0 : i32
    %c0_i32_0 = arith.constant 0 : i32
    %c0_i32_1 = arith.constant 0 : i32
    return %c0_i32, %c0_i32_0 : i32, i32
  }
  func.func @transform_16(%arg0: i32) -> (i32, i32) {
    %c0_i32 = arith.constant 0 : i32
    %c0_i32_0 = arith.constant 0 : i32
    return %arg0, %c0_i32 : i32, i32
  }
  func.func @transform_17(%arg0: i32) -> (i32, i32) {
    %c0_i32 = arith.constant 0 : i32
    %c0_i32_0 = arith.constant 0 : i32
    return %arg0, %c0_i32 : i32, i32
  }
  func.func @transform_18(%arg0: i32) -> (i32, i32) {
    %c0_i32 = arith.constant 0 : i32
    %c0_i32_0 = arith.constant 0 : i32
    return %arg0, %c0_i32 : i32, i32
  }
}

</mosaic_0001>

<llo_original>
// kernel: tpu_custom_call.1
$region0: #{tpu_custom_call.1}
  #allocation0 [shape = 'u32[]', space=smem, size = 0x4, offset = 0x4, fixed_abs, tag = 'smem constant byte address 0x4 - core index']
  #allocation1 [shape = 'u32[144,128]{1,0:T(1,128)}', space=vmem, size = 0x12000, scoped, tag = 'internal scratch']
  %s0 = inlined_call_operand.hbm [shape: f32[256,8,128], index: 0, kind: input, shape index: {}]
  %s1 = inlined_call_operand.vmem [shape: f32[256,8], index: 1, kind: input, shape index: {}]
  %s2 = inlined_call_operand.hbm [shape: bf16[128,128], index: 2, kind: input, shape index: {}]
  %s3 = inlined_call_operand.vmem [shape: f32[1,128], index: 3, kind: input, shape index: {}]
  %s4 = inlined_call_operand.hbm [shape: bf16[128,256], index: 4, kind: input, shape index: {}]
  %s5 = inlined_call_operand.vmem [shape: f32[1,256], index: 5, kind: input, shape index: {}]
  %s6 = inlined_call_operand.hbm [shape: bf16[128,128], index: 6, kind: input, shape index: {}]
  %s7 = inlined_call_operand.vmem [shape: f32[1,128], index: 7, kind: input, shape index: {}]
  %s8 = inlined_call_operand.vmem [shape: bf16[128,512], index: 8, kind: input, shape index: {}]
  %s9 = inlined_call_operand.vmem [shape: f32[1,512], index: 9, kind: input, shape index: {}]
  %s10 = inlined_call_operand.hbm [shape: bf16[512,128], index: 10, kind: input, shape index: {}]
  %s11 = inlined_call_operand.vmem [shape: f32[1,128], index: 11, kind: input, shape index: {}]
  %s12 = inlined_call_operand.vmem [shape: f32[6,128], index: 12, kind: input, shape index: {}]
  %s13 = inlined_call_operand.hbm [shape: bf16[256,256], index: 13, kind: input, shape index: {}]
  %s14 = inlined_call_operand.hbm [shape: bf16[256,128], index: 14, kind: input, shape index: {}]
  %s15 = inlined_call_operand.hbm [shape: bf16[128,128], index: 15, kind: input, shape index: {}]
  %s16 = inlined_call_operand.hbm [shape: f32[256,128], index: 16, kind: input, shape index: {}]
  %s17 = inlined_call_operand.hbm [shape: f32[256,128], index: 17, kind: input, shape index: {}]
  %s18 = inlined_call_operand.hbm [shape: f32[256,128], index: 18, kind: output, shape index: {}]
  %s19 = sld [smem:[#allocation0]]
  $region145: #{tpu_custom_call.1} parent=0
    _
  %s21 = ssub.s32 1, %s19
  %s22 = scalar_select 0, %s21, %s19
  $region1: #{tpu_custom_call.1} parent=0
    #allocation2 [shape = 'u8[524288]{0}', space=vmem, size = 0x80000, scoped, tag = 'input window, operand 0']
    #allocation3 [shape = 's32[2]{0}', space=sflag, size = 0x8, scoped, tag = 'scoped memory for tpu_custom_call.1']
    #allocation4 [shape = 's32[2]{0}', space=sflag, size = 0x8, scoped, tag = 'scoped memory for tpu_custom_call.1']
    #allocation5 [shape = 'u8[32768]{0}', space=vmem, size = 0x8000, scoped, tag = 'input window, operand 2, single buffered']
    #allocation6 [shape = 's32[1]{0}', space=sflag, size = 0x4, scoped, tag = 'scoped memory for tpu_custom_call.1']
    #allocation7 [shape = 'u8[65536]{0}', space=vmem, size = 0x10000, scoped, tag = 'input window, operand 4, single buffered']
    #allocation8 [shape = 'u8[32768]{0}', space=vmem, size = 0x8000, scoped, tag = 'input window, operand 6, single buffered']
    #allocation9 [shape = 's32[1]{0}', space=sflag, size = 0x4, scoped, tag = 'scoped memory for tpu_custom_call.1']
    #allocation10 [shape = 'u8[131072]{0}', space=vmem, size = 0x20000, scoped, tag = 'input window, operand 10, single buffered']
    #allocation11 [shape = 'u8[65536]{0}', space=vmem, size = 0x10000, scoped, tag = 'input window, operand 13']
    #allocation12 [shape = 's32[2]{0}', space=sflag, size = 0x8, scoped, tag = 'scoped memory for tpu_custom_call.1']
    #allocation13 [shape = 'u8[65536]{0}', space=vmem, size = 0x10000, scoped, tag = 'input window, operand 14, single buffered']
    #allocation14 [shape = 'u8[32768]{0}', space=vmem, size = 0x8000, scoped, tag = 'input window, operand 15, single buffered']
    #allocation15 [shape = 's32[1]{0}', space=sflag, size = 0x4, scoped, tag = 'scoped memory for tpu_custom_call.1']
    #allocation16 [shape = 'u8[65536]{0}', space=vmem, size = 0x10000, scoped, tag = 'input window, operand 16']
    #allocation17 [shape = 'u8[65536]{0}', space=vmem, size = 0x10000, scoped, tag = 'input window, operand 17']
    #allocation18 [shape = 'u8[65536]{0}', space=vmem, size = 0x10000, scoped, tag = 'output window, operand 0']
    %23 = vsyncpa [#allocation3], 0
    %s24 = scalar_lea.sflag [#allocation3], 1
    %25 = vsyncpa %s24, 0
    %26 = vsyncpa [#allocation6], 0
    %27 = vsyncpa [#allocation9], 0
    %28 = vsyncpa [#allocation12], 0
    %s29 = scalar_lea.sflag [#allocation12], 1
    %30 = vsyncpa %s29, 0
    %31 = vsyncpa [#allocation15], 0
    %32 = vsyncpa [#allocation4], 0
    %s33 = scalar_lea.sflag [#allocation4], 1
    %34 = vsyncpa %s33, 0
    loop: start=0, step=1, limit=6
    $region2: #{tpu_custom_call.1} parent=1 // loop_pre_header
      _
    $region3: #{tpu_custom_call.1} parent=1 // loop_header
      %s36 = sphi 0, %s40
      %p37 = scmp.ge.s32.totalorder %s36, 6
      %s46 = sphi 0, %s48
      %s49 = sphi 0, %s46
      %s50 = sphi 0, %s49
      %s66 = sphi 0, %s50
      %s72 = sphi 0, %s74
      %s75 = sphi 0, %s72
      %s76 = sphi 0, %s75
      %s92 = sphi 0, %s76
      %s96 = sphi 0, %s96
      %s98 = sphi 0, %s96
      %s99 = sphi 0, %s98
      %s113 = sphi 0, %s99
      %s117 = sphi 0, %s117
      %s119 = sphi 0, %s117
      %s120 = sphi 0, %s119
      %s134 = sphi 0, %s120
      %s138 = sphi 0, %s138
      %s140 = sphi 0, %s138
      %s141 = sphi 0, %s140
      %s155 = sphi 0, %s141
      %s159 = sphi 0, %s159
      %s161 = sphi 0, %s159
      %s162 = sphi 0, %s161
      %s176 = sphi 0, %s162
      %s180 = sphi 0, %s180
      %s182 = sphi 0, %s180
      %s183 = sphi 0, %s182
      %s197 = sphi 0, %s183
      %s201 = sphi 0, %s201
      %s203 = sphi 0, %s201
      %s204 = sphi 0, %s203
      %s218 = sphi 0, %s204
      %s222 = sphi 0, %s222
      %s224 = sphi 0, %s222
      %s225 = sphi 0, %s224
      %s239 = sphi 0, %s225
      %s243 = sphi 0, %s243
      %s245 = sphi 0, %s243
      %s246 = sphi 0, %s245
      %s260 = sphi 0, %s246
      %s264 = sphi 0, %s264
      %s266 = sphi 0, %s264
      %s267 = sphi 0, %s266
      %s281 = sphi 0, %s267
      %s285 = sphi 0, %s285
      %s287 = sphi 0, %s285
      %s288 = sphi 0, %s287
      %s302 = sphi 0, %s288
      %s306 = sphi 0, %s306
      %s308 = sphi 0, %s306
      %s309 = sphi 0, %s308
      %s323 = sphi 0, %s309
      %s329 = sphi 0, %s331
      %s332 = sphi 0, %s329
      %s333 = sphi 0, %s332
      %s349 = sphi 0, %s333
      %s353 = sphi 0, %s353
      %s355 = sphi 0, %s353
      %s356 = sphi 0, %s355
      %s370 = sphi 0, %s356
      %s374 = sphi 0, %s374
      %s376 = sphi 0, %s374
      %s377 = sphi 0, %s376
      %s391 = sphi 0, %s377
      %s397 = sphi 0, %s399
      %s400 = sphi 0, %s397
      %s401 = sphi 0, %s400
      %s417 = sphi 0, %s401
      %s423 = sphi 0, %s425
      %s426 = sphi 0, %s423
      %s427 = sphi 0, %s426
      %s443 = sphi 0, %s427
      %s449 = sphi 0, %s451
      %s452 = sphi 0, %s449
      %s453 = sphi 0, %s452
      %s469 = sphi 0, %s453
    $region4: #{tpu_custom_call.1} parent=1 // loop_header_branch
      %39 = sbr.rel (%p37) target = $region8
    $region5: #{tpu_custom_call.1} parent=1 // loop_body
      %s41 = ssub.s32 %s36, 1
      %s42 = ssub.s32 %s36, 2
      %s43 = sadd.s32 %s36, 1
      %s44 = ssub.s32 %s36, %s43
      %p45 = scmp.eq.s32.totalorder %s44, 0
      %s47 = sadd.s32 %s46, 1
      %s48 = scalar_select %p45, %s46, %s47
      %p51 = pneg %p45
      %p52 = scmp.eq.s32.totalorder %s36, 3
      %p53 = por %p51, %p52
      %p54 = scmp.ne.s32.totalorder %s46, %s49
      %p55 = scmp.eq.s32.totalorder %s36, 0
      %p56 = por %p54, %p55
      %p57 = scmp.ne.s32.totalorder %s46, %s49
      %p58 = scmp.eq.s32.totalorder %s41, 3
      %p59 = por %p57, %p58
      %p60 = scmp.ne.s32.totalorder %s49, %s50
      %p61 = scmp.eq.s32.totalorder %s41, 0
      %p62 = por %p60, %p61
      %p63 = scmp.ne.s32.totalorder %s49, %s50
      %p64 = scmp.eq.s32.totalorder %s42, 3
      %p65 = por %p63, %p64
      %p67 = scmp.ne.s32.totalorder %s50, %s66
      %p68 = scmp.eq.s32.totalorder %s42, 0
      %p69 = por %p67, %p68
      %s70 = ssub.s32 %s36, %s43
      %p71 = scmp.eq.s32.totalorder %s70, 0
      %s73 = sadd.s32 %s72, 1
      %s74 = scalar_select %p71, %s72, %s73
      %p77 = pneg %p71
      %p78 = scmp.eq.s32.totalorder %s36, 3
      %p79 = por %p77, %p78
      %p80 = scmp.ne.s32.totalorder %s72, %s75
      %p81 = scmp.eq.s32.totalorder %s36, 0
      %p82 = por %p80, %p81
      %p83 = scmp.ne.s32.totalorder %s72, %s75
      %p84 = scmp.eq.s32.totalorder %s41, 3
      %p85 = por %p83, %p84
      %p86 = scmp.ne.s32.totalorder %s75, %s76
      %p87 = scmp.eq.s32.totalorder %s41, 0
      %p88 = por %p86, %p87
      %p89 = scmp.ne.s32.totalorder %s75, %s76
      %p90 = scmp.eq.s32.totalorder %s42, 3
      %p91 = por %p89, %p90
      %p93 = scmp.ne.s32.totalorder %s76, %s92
      %p94 = scmp.eq.s32.totalorder %s42, 0
      %p95 = por %p93, %p94
      %s97 = sadd.s32 %s96, 1
      %p100 = scmp.eq.s32.totalorder %s36, 3
      %p101 = scmp.ne.s32.totalorder %s96, %s98
      %p102 = scmp.eq.s32.totalorder %s36, 0
      %p103 = por %p101, %p102
      %p104 = scmp.ne.s32.totalorder %s96, %s98
      %p105 = scmp.eq.s32.totalorder %s41, 3
      %p106 = por %p104, %p105
      %p107 = scmp.ne.s32.totalorder %s98, %s99
      %p108 = scmp.eq.s32.totalorder %s41, 0
      %p109 = por %p107, %p108
      %p110 = scmp.ne.s32.totalorder %s98, %s99
      %p111 = scmp.eq.s32.totalorder %s42, 3
      %p112 = por %p110, %p111
      %p114 = scmp.ne.s32.totalorder %s99, %s113
      %p115 = scmp.eq.s32.totalorder %s42, 0
      %p116 = por %p114, %p115
      %s118 = sadd.s32 %s117, 1
      %p121 = scmp.eq.s32.totalorder %s36, 3
      %p122 = scmp.ne.s32.totalorder %s117, %s119
      %p123 = scmp.eq.s32.totalorder %s36, 0
      %p124 = por %p122, %p123
      %p125 = scmp.ne.s32.totalorder %s117, %s119
      %p126 = scmp.eq.s32.totalorder %s41, 3
      %p127 = por %p125, %p126
      %p128 = scmp.ne.s32.totalorder %s119, %s120
      %p129 = scmp.eq.s32.totalorder %s41, 0
      %p130 = por %p128, %p129
      %p131 = scmp.ne.s32.totalorder %s119, %s120
      %p132 = scmp.eq.s32.totalorder %s42, 3
      %p133 = por %p131, %p132
      %p135 = scmp.ne.s32.totalorder %s120, %s134
      %p136 = scmp.eq.s32.totalorder %s42, 0
      %p137 = por %p135, %p136
      %s139 = sadd.s32 %s138, 1
      %p142 = scmp.eq.s32.totalorder %s36, 3
      %p143 = scmp.ne.s32.totalorder %s138, %s140
      %p144 = scmp.eq.s32.totalorder %s36, 0
      %p145 = por %p143, %p144
      %p146 = scmp.ne.s32.totalorder %s138, %s140
      %p147 = scmp.eq.s32.totalorder %s41, 3
      %p148 = por %p146, %p147
      %p149 = scmp.ne.s32.totalorder %s140, %s141
      %p150 = scmp.eq.s32.totalorder %s41, 0
      %p151 = por %p149, %p150
      %p152 = scmp.ne.s32.totalorder %s140, %s141
      %p153 = scmp.eq.s32.totalorder %s42, 3
      %p154 = por %p152, %p153
      %p156 = scmp.ne.s32.totalorder %s141, %s155
      %p157 = scmp.eq.s32.totalorder %s42, 0
      %p158 = por %p156, %p157
      %s160 = sadd.s32 %s159, 1
      %p163 = scmp.eq.s32.totalorder %s36, 3
      %p164 = scmp.ne.s32.totalorder %s159, %s161
      %p165 = scmp.eq.s32.totalorder %s36, 0
      %p166 = por %p164, %p165
      %p167 = scmp.ne.s32.totalorder %s159, %s161
      %p168 = scmp.eq.s32.totalorder %s41, 3
      %p169 = por %p167, %p168
      %p170 = scmp.ne.s32.totalorder %s161, %s162
      %p171 = scmp.eq.s32.totalorder %s41, 0
      %p172 = por %p170, %p171
      %p173 = scmp.ne.s32.totalorder %s161, %s162
      %p174 = scmp.eq.s32.totalorder %s42, 3
      %p175 = por %p173, %p174
      %p177 = scmp.ne.s32.totalorder %s162, %s176
      %p178 = scmp.eq.s32.totalorder %s42, 0
      %p179 = por %p177, %p178
      %s181 = sadd.s32 %s180, 1
      %p184 = scmp.eq.s32.totalorder %s36, 3
      %p185 = scmp.ne.s32.totalorder %s180, %s182
      %p186 = scmp.eq.s32.totalorder %s36, 0
      %p187 = por %p185, %p186
      %p188 = scmp.ne.s32.totalorder %s180, %s182
      %p189 = scmp.eq.s32.totalorder %s41, 3
      %p190 = por %p188, %p189
      %p191 = scmp.ne.s32.totalorder %s182, %s183
      %p192 = scmp.eq.s32.totalorder %s41, 0
      %p193 = por %p191, %p192
      %p194 = scmp.ne.s32.totalorder %s182, %s183
      %p195 = scmp.eq.s32.totalorder %s42, 3
      %p196 = por %p194, %p195
      %p198 = scmp.ne.s32.totalorder %s183, %s197
      %p199 = scmp.eq.s32.totalorder %s42, 0
      %p200 = por %p198, %p199
      %s202 = sadd.s32 %s201, 1
      %p205 = scmp.eq.s32.totalorder %s36, 3
      %p206 = scmp.ne.s32.totalorder %s201, %s203
      %p207 = scmp.eq.s32.totalorder %s36, 0
      %p208 = por %p206, %p207
      %p209 = scmp.ne.s32.totalorder %s201, %s203
      %p210 = scmp.eq.s32.totalorder %s41, 3
      %p211 = por %p209, %p210
      %p212 = scmp.ne.s32.totalorder %s203, %s204
      %p213 = scmp.eq.s32.totalorder %s41, 0
      %p214 = por %p212, %p213
      %p215 = scmp.ne.s32.totalorder %s203, %s204
      %p216 = scmp.eq.s32.totalorder %s42, 3
      %p217 = por %p215, %p216
      %p219 = scmp.ne.s32.totalorder %s204, %s218
      %p220 = scmp.eq.s32.totalorder %s42, 0
      %p221 = por %p219, %p220
      %s223 = sadd.s32 %s222, 1
      %p226 = scmp.eq.s32.totalorder %s36, 3
      %p227 = scmp.ne.s32.totalorder %s222, %s224
      %p228 = scmp.eq.s32.totalorder %s36, 0
      %p229 = por %p227, %p228
      %p230 = scmp.ne.s32.totalorder %s222, %s224
      %p231 = scmp.eq.s32.totalorder %s41, 3
      %p232 = por %p230, %p231
      %p233 = scmp.ne.s32.totalorder %s224, %s225
      %p234 = scmp.eq.s32.totalorder %s41, 0
      %p235 = por %p233, %p234
      %p236 = scmp.ne.s32.totalorder %s224, %s225
      %p237 = scmp.eq.s32.totalorder %s42, 3
      %p238 = por %p236, %p237
      %p240 = scmp.ne.s32.totalorder %s225, %s239
      %p241 = scmp.eq.s32.totalorder %s42, 0
      %p242 = por %p240, %p241
      %s244 = sadd.s32 %s243, 1
      %p247 = scmp.eq.s32.totalorder %s36, 3
      %p248 = scmp.ne.s32.totalorder %s243, %s245
      %p249 = scmp.eq.s32.totalorder %s36, 0
      %p250 = por %p248, %p249
      %p251 = scmp.ne.s32.totalorder %s243, %s245
      %p252 = scmp.eq.s32.totalorder %s41, 3
      %p253 = por %p251, %p252
      %p254 = scmp.ne.s32.totalorder %s245, %s246
      %p255 = scmp.eq.s32.totalorder %s41, 0
      %p256 = por %p254, %p255
      %p257 = scmp.ne.s32.totalorder %s245, %s246
      %p258 = scmp.eq.s32.totalorder %s42, 3
      %p259 = por %p257, %p258
      %p261 = scmp.ne.s32.totalorder %s246, %s260
      %p262 = scmp.eq.s32.totalorder %s42, 0
      %p263 = por %p261, %p262
      %s265 = sadd.s32 %s264, 1
      %p268 = scmp.eq.s32.totalorder %s36, 3
      %p269 = scmp.ne.s32.totalorder %s264, %s266
      %p270 = scmp.eq.s32.totalorder %s36, 0
      %p271 = por %p269, %p270
      %p272 = scmp.ne.s32.totalorder %s264, %s266
      %p273 = scmp.eq.s32.totalorder %s41, 3
      %p274 = por %p272, %p273
      %p275 = scmp.ne.s32.totalorder %s266, %s267
      %p276 = scmp.eq.s32.totalorder %s41, 0
      %p277 = por %p275, %p276
      %p278 = scmp.ne.s32.totalorder %s266, %s267
      %p279 = scmp.eq.s32.totalorder %s42, 3
      %p280 = por %p278, %p279
      %p282 = scmp.ne.s32.totalorder %s267, %s281
      %p283 = scmp.eq.s32.totalorder %s42, 0
      %p284 = por %p282, %p283
      %s286 = sadd.s32 %s285, 1
      %p289 = scmp.eq.s32.totalorder %s36, 3
      %p290 = scmp.ne.s32.totalorder %s285, %s287
      %p291 = scmp.eq.s32.totalorder %s36, 0
      %p292 = por %p290, %p291
      %p293 = scmp.ne.s32.totalorder %s285, %s287
      %p294 = scmp.eq.s32.totalorder %s41, 3
      %p295 = por %p293, %p294
      %p296 = scmp.ne.s32.totalorder %s287, %s288
      %p297 = scmp.eq.s32.totalorder %s41, 0
      %p298 = por %p296, %p297
      %p299 = scmp.ne.s32.totalorder %s287, %s288
      %p300 = scmp.eq.s32.totalorder %s42, 3
      %p301 = por %p299, %p300
      %p303 = scmp.ne.s32.totalorder %s288, %s302
      %p304 = scmp.eq.s32.totalorder %s42, 0
      %p305 = por %p303, %p304
      %s307 = sadd.s32 %s306, 1
      %p310 = scmp.eq.s32.totalorder %s36, 3
      %p311 = scmp.ne.s32.totalorder %s306, %s308
      %p312 = scmp.eq.s32.totalorder %s36, 0
      %p313 = por %p311, %p312
      %p314 = scmp.ne.s32.totalorder %s306, %s308
      %p315 = scmp.eq.s32.totalorder %s41, 3
      %p316 = por %p314, %p315
      %p317 = scmp.ne.s32.totalorder %s308, %s309
      %p318 = scmp.eq.s32.totalorder %s41, 0
      %p319 = por %p317, %p318
      %p320 = scmp.ne.s32.totalorder %s308, %s309
      %p321 = scmp.eq.s32.totalorder %s42, 3
      %p322 = por %p320, %p321
      %p324 = scmp.ne.s32.totalorder %s309, %s323
      %p325 = scmp.eq.s32.totalorder %s42, 0
      %p326 = por %p324, %p325
      %s327 = ssub.s32 %s36, %s43
      %p328 = scmp.eq.s32.totalorder %s327, 0
      %s330 = sadd.s32 %s329, 1
      %s331 = scalar_select %p328, %s329, %s330
      %p334 = pneg %p328
      %p335 = scmp.eq.s32.totalorder %s36, 3
      %p336 = por %p334, %p335
      %p337 = scmp.ne.s32.totalorder %s329, %s332
      %p338 = scmp.eq.s32.totalorder %s36, 0
      %p339 = por %p337, %p338
      %p340 = scmp.ne.s32.totalorder %s329, %s332
      %p341 = scmp.eq.s32.totalorder %s41, 3
      %p342 = por %p340, %p341
      %p343 = scmp.ne.s32.totalorder %s332, %s333
      %p344 = scmp.eq.s32.totalorder %s41, 0
      %p345 = por %p343, %p344
      %p346 = scmp.ne.s32.totalorder %s332, %s333
      %p347 = scmp.eq.s32.totalorder %s42, 3
      %p348 = por %p346, %p347
      %p350 = scmp.ne.s32.totalorder %s333, %s349
      %p351 = scmp.eq.s32.totalorder %s42, 0
      %p352 = por %p350, %p351
      %s354 = sadd.s32 %s353, 1
      %p357 = scmp.eq.s32.totalorder %s36, 3
      %p358 = scmp.ne.s32.totalorder %s353, %s355
      %p359 = scmp.eq.s32.totalorder %s36, 0
      %p360 = por %p358, %p359
      %p361 = scmp.ne.s32.totalorder %s353, %s355
      %p362 = scmp.eq.s32.totalorder %s41, 3
      %p363 = por %p361, %p362
      %p364 = scmp.ne.s32.totalorder %s355, %s356
      %p365 = scmp.eq.s32.totalorder %s41, 0
      %p366 = por %p364, %p365
      %p367 = scmp.ne.s32.totalorder %s355, %s356
      %p368 = scmp.eq.s32.totalorder %s42, 3
      %p369 = por %p367, %p368
      %p371 = scmp.ne.s32.totalorder %s356, %s370
      %p372 = scmp.eq.s32.totalorder %s42, 0
      %p373 = por %p371, %p372
      %s375 = sadd.s32 %s374, 1
      %p378 = scmp.eq.s32.totalorder %s36, 3
      %p379 = scmp.ne.s32.totalorder %s374, %s376
      %p380 = scmp.eq.s32.totalorder %s36, 0
      %p381 = por %p379, %p380
      %p382 = scmp.ne.s32.totalorder %s374, %s376
      %p383 = scmp.eq.s32.totalorder %s41, 3
      %p384 = por %p382, %p383
      %p385 = scmp.ne.s32.totalorder %s376, %s377
      %p386 = scmp.eq.s32.totalorder %s41, 0
      %p387 = por %p385, %p386
      %p388 = scmp.ne.s32.totalorder %s376, %s377
      %p389 = scmp.eq.s32.totalorder %s42, 3
      %p390 = por %p388, %p389
      %p392 = scmp.ne.s32.totalorder %s377, %s391
      %p393 = scmp.eq.s32.totalorder %s42, 0
      %p394 = por %p392, %p393
      %s395 = ssub.s32 %s36, %s43
      %p396 = scmp.eq.s32.totalorder %s395, 0
      %s398 = sadd.s32 %s397, 1
      %s399 = scalar_select %p396, %s397, %s398
      %p402 = pneg %p396
      %p403 = scmp.eq.s32.totalorder %s36, 3
      %p404 = por %p402, %p403
      %p405 = scmp.ne.s32.totalorder %s397, %s400
      %p406 = scmp.eq.s32.totalorder %s36, 0
      %p407 = por %p405, %p406
      %p408 = scmp.ne.s32.totalorder %s397, %s400
      %p409 = scmp.eq.s32.totalorder %s41, 3
      %p410 = por %p408, %p409
      %p411 = scmp.ne.s32.totalorder %s400, %s401
      %p412 = scmp.eq.s32.totalorder %s41, 0
      %p413 = por %p411, %p412
      %p414 = scmp.ne.s32.totalorder %s400, %s401
      %p415 = scmp.eq.s32.totalorder %s42, 3
      %p416 = por %p414, %p415
      %p418 = scmp.ne.s32.totalorder %s401, %s417
      %p419 = scmp.eq.s32.totalorder %s42, 0
      %p420 = por %p418, %p419
      %s421 = ssub.s32 %s36, %s43
      %p422 = scmp.eq.s32.totalorder %s421, 0
      %s424 = sadd.s32 %s423, 1
      %s425 = scalar_select %p422, %s423, %s424
      %p428 = pneg %p422
      %p429 = scmp.eq.s32.totalorder %s36, 3
      %p430 = por %p428, %p429
      %p431 = scmp.ne.s32.totalorder %s423, %s426
      %p432 = scmp.eq.s32.totalorder %s36, 0
      %p433 = por %p431, %p432
      %p434 = scmp.ne.s32.totalorder %s423, %s426
      %p435 = scmp.eq.s32.totalorder %s41, 3
      %p436 = por %p434, %p435
      %p437 = scmp.ne.s32.totalorder %s426, %s427
      %p438 = scmp.eq.s32.totalorder %s41, 0
      %p439 = por %p437, %p438
      %p440 = scmp.ne.s32.totalorder %s426, %s427
      %p441 = scmp.eq.s32.totalorder %s42, 3
      %p442 = por %p440, %p441
      %p444 = scmp.ne.s32.totalorder %s427, %s443
      %p445 = scmp.eq.s32.totalorder %s42, 0
      %p446 = por %p444, %p445
      %s447 = ssub.s32 %s36, %s43
      %p448 = scmp.eq.s32.totalorder %s447, 0
      %s450 = sadd.s32 %s449, 1
      %s451 = scalar_select %p448, %s449, %s450
      %p454 = pneg %p448
      %p455 = scmp.eq.s32.totalorder %s36, 3
      %p456 = por %p454, %p455
      %p457 = scmp.ne.s32.totalorder %s449, %s452
      %p458 = scmp.eq.s32.totalorder %s36, 0
      %p459 = por %p457, %p458
      %p460 = scmp.ne.s32.totalorder %s449, %s452
      %p461 = scmp.eq.s32.totalorder %s41, 3
      %p462 = por %p460, %p461
      %p463 = scmp.ne.s32.totalorder %s452, %s453
      %p464 = scmp.eq.s32.totalorder %s41, 0
      %p465 = por %p463, %p464
      %p466 = scmp.ne.s32.totalorder %s452, %s453
      %p467 = scmp.eq.s32.totalorder %s42, 3
      %p468 = por %p466, %p467
      %p470 = scmp.ne.s32.totalorder %s453, %s469
      %p471 = scmp.eq.s32.totalorder %s42, 0
      %p472 = por %p470, %p471
      %p473 = scmp.le.s32.totalorder 1, %s36
      %p474 = scmp.lt.s32.totalorder %s36, 5
      %p475 = pnand %p473, %p474
      %p476 = pneg %p475
      // Predicated region
      $region9: #{tpu_custom_call.1} parent=5 // pred_check
        _
      $region10: #{tpu_custom_call.1} parent=5 // pred_check_branch
        %478 = sbr.rel (%p475) target = $region12
      $region11: #{tpu_custom_call.1} parent=5 // pred_region
        %s479 = ssub.s32 %s36, 1
        // Predicated region
        $region13: #{tpu_custom_call.1} parent=11 // pred_check
          %p480 = pneg %p109
        $region14: #{tpu_custom_call.1} parent=11 // pred_check_branch
          %482 = sbr.rel (%p480) target = $region16
        $region15: #{tpu_custom_call.1} parent=11 // pred_region
          %s484 = ssub.s32 1024, 1024
          %485 = vsyncadd [#allocation6], %s484
          %s486 = sshll.u32 [#allocation5], 4
          %s487 = int_to_ptr.vmem [resolvable:$true] %s486
          %492 = dma.hbm_to_vmem [thread:$0]  %s2, 1024, %s487, [#allocation6], 64, 64, 4
        $region16: #{tpu_custom_call.1} parent=11 // pred_fallthru
          _
        // Predicated region
        $region17: #{tpu_custom_call.1} parent=11 // pred_check
          %p493 = pneg %p130
        $region18: #{tpu_custom_call.1} parent=11 // pred_check_branch
          %495 = sbr.rel (%p493) target = $region20
        $region19: #{tpu_custom_call.1} parent=11 // pred_region
          _
        $region20: #{tpu_custom_call.1} parent=11 // pred_fallthru
          _
        // Predicated region
        $region21: #{tpu_custom_call.1} parent=11 // pred_check
          %p496 = pneg %p151
        $region22: #{tpu_custom_call.1} parent=11 // pred_check_branch
          %498 = sbr.rel (%p496) target = $region24
        $region23: #{tpu_custom_call.1} parent=11 // pred_region
          %s500 = ssub.s32 2048, 2048
          %501 = vsyncadd [#allocation6], %s500
          %s502 = sshll.u32 [#allocation7], 4
          %s503 = int_to_ptr.vmem [resolvable:$true] %s502
          %508 = dma.hbm_to_vmem [thread:$0]  %s4, 2048, %s503, [#allocation6], 128, 128, 8
        $region24: #{tpu_custom_call.1} parent=11 // pred_fallthru
          _
        // Predicated region
        $region25: #{tpu_custom_call.1} parent=11 // pred_check
          %p509 = pneg %p172
        $region26: #{tpu_custom_call.1} parent=11 // pred_check_branch
          %511 = sbr.rel (%p509) target = $region28
        $region27: #{tpu_custom_call.1} parent=11 // pred_region
          _
        $region28: #{tpu_custom_call.1} parent=11 // pred_fallthru
          _
        // Predicated region
        $region29: #{tpu_custom_call.1} parent=11 // pred_check
          %p512 = pneg %p193
        $region30: #{tpu_custom_call.1} parent=11 // pred_check_branch
          %514 = sbr.rel (%p512) target = $region32
        $region31: #{tpu_custom_call.1} parent=11 // pred_region
          %s516 = ssub.s32 1024, 1024
          %517 = vsyncadd [#allocation9], %s516
          %s518 = sshll.u32 [#allocation8], 4
          %s519 = int_to_ptr.vmem [resolvable:$true] %s518
          %524 = dma.hbm_to_vmem [thread:$0]  %s6, 1024, %s519, [#allocation9], 64, 64, 4
        $region32: #{tpu_custom_call.1} parent=11 // pred_fallthru
          _
        // Predicated region
        $region33: #{tpu_custom_call.1} parent=11 // pred_check
          %p525 = pneg %p214
        $region34: #{tpu_custom_call.1} parent=11 // pred_check_branch
          %527 = sbr.rel (%p525) target = $region36
        $region35: #{tpu_custom_call.1} parent=11 // pred_region
          _
        $region36: #{tpu_custom_call.1} parent=11 // pred_fallthru
          _
        // Predicated region
        $region37: #{tpu_custom_call.1} parent=11 // pred_check
          %p528 = pneg %p235
        $region38: #{tpu_custom_call.1} parent=11 // pred_check_branch
          %530 = sbr.rel (%p528) target = $region40
        $region39: #{tpu_custom_call.1} parent=11 // pred_region
          _
        $region40: #{tpu_custom_call.1} parent=11 // pred_fallthru
          _
        // Predicated region
        $region41: #{tpu_custom_call.1} parent=11 // pred_check
          %p531 = pneg %p256
        $region42: #{tpu_custom_call.1} parent=11 // pred_check_branch
          %533 = sbr.rel (%p531) target = $region44
        $region43: #{tpu_custom_call.1} parent=11 // pred_region
          _
        $region44: #{tpu_custom_call.1} parent=11 // pred_fallthru
          _
        // Predicated region
        $region45: #{tpu_custom_call.1} parent=11 // pred_check
          %p534 = pneg %p277
        $region46: #{tpu_custom_call.1} parent=11 // pred_check_branch
          %536 = sbr.rel (%p534) target = $region48
        $region47: #{tpu_custom_call.1} parent=11 // pred_region
          %s538 = ssub.s32 4096, 4096
          %539 = vsyncadd [#allocation9], %s538
          %s540 = sshll.u32 [#allocation10], 4
          %s541 = int_to_ptr.vmem [resolvable:$true] %s540
          %546 = dma.hbm_to_vmem [thread:$0]  %s10, 4096, %s541, [#allocation9], 64, 64, 4
        $region48: #{tpu_custom_call.1} parent=11 // pred_fallthru
          _
        // Predicated region
        $region49: #{tpu_custom_call.1} parent=11 // pred_check
          %p547 = pneg %p298
        $region50: #{tpu_custom_call.1} parent=11 // pred_check_branch
          %549 = sbr.rel (%p547) target = $region52
        $region51: #{tpu_custom_call.1} parent=11 // pred_region
          _
        $region52: #{tpu_custom_call.1} parent=11 // pred_fallthru
          _
        // Predicated region
        $region53: #{tpu_custom_call.1} parent=11 // pred_check
          %p550 = pneg %p319
        $region54: #{tpu_custom_call.1} parent=11 // pred_check_branch
          %552 = sbr.rel (%p550) target = $region56
        $region55: #{tpu_custom_call.1} parent=11 // pred_region
          _
        $region56: #{tpu_custom_call.1} parent=11 // pred_fallthru
          _
        // Predicated region
        $region57: #{tpu_custom_call.1} parent=11 // pred_check
          %p553 = pneg %p366
        $region58: #{tpu_custom_call.1} parent=11 // pred_check_branch
          %555 = sbr.rel (%p553) target = $region60
        $region59: #{tpu_custom_call.1} parent=11 // pred_region
          %s557 = ssub.s32 2048, 2048
          %558 = vsyncadd [#allocation12], %s557
          %s559 = sshll.u32 [#allocation13], 4
          %s560 = int_to_ptr.vmem [resolvable:$true] %s559
          %565 = dma.hbm_to_vmem [thread:$0]  %s14, 2048, %s560, [#allocation12], 64, 64, 4
        $region60: #{tpu_custom_call.1} parent=11 // pred_fallthru
          _
        // Predicated region
        $region61: #{tpu_custom_call.1} parent=11 // pred_check
          %p566 = pneg %p387
        $region62: #{tpu_custom_call.1} parent=11 // pred_check_branch
          %568 = sbr.rel (%p566) target = $region64
        $region63: #{tpu_custom_call.1} parent=11 // pred_region
          %s570 = ssub.s32 1024, 1024
          %571 = vsyncadd [#allocation15], %s570
          %s572 = sshll.u32 [#allocation14], 4
          %s573 = int_to_ptr.vmem [resolvable:$true] %s572
          %578 = dma.hbm_to_vmem [thread:$0]  %s15, 1024, %s573, [#allocation15], 64, 64, 4
        $region64: #{tpu_custom_call.1} parent=11 // pred_fallthru
          _
      $region12: #{tpu_custom_call.1} parent=5 // pred_fallthru
        _
      %p579 = scmp.lt.s32.totalorder %s36, 4
      // Predicated region
      $region65: #{tpu_custom_call.1} parent=5 // pred_check
        %p580 = pneg %p579
      $region66: #{tpu_custom_call.1} parent=5 // pred_check_branch
        %582 = sbr.rel (%p580) target = $region68
      $region67: #{tpu_custom_call.1} parent=5 // pred_region
        // Predicated region
        $region69: #{tpu_custom_call.1} parent=67 // pred_check
          %p583 = pneg %p56
        $region70: #{tpu_custom_call.1} parent=67 // pred_check_branch
          %585 = sbr.rel (%p583) target = $region72
        $region71: #{tpu_custom_call.1} parent=67 // pred_region
          %s586 = sand.u32 %s36, 1
          %s587 = scalar_lea.sflag [#allocation3], %s586
          %s588 = sand.u32 %s46, 1
          %s589 = smul.addr %s588, 512
          %s590 = scalar_lea.vmem [#allocation2], %s589
          %s591 = smul.u32 64, %s36
          %s593 = ssub.s32 8192, 8192
          %594 = vsyncadd %s587, %s593
          %s595 = smul.addr %s591, 128
          %s596 = scalar_lea.hbm %s0, %s595
          %s597 = sshll.u32 %s590, 4
          %s598 = int_to_ptr.vmem [resolvable:$true] %s597
          %603 = dma.hbm_to_vmem [thread:$0]  %s596, 8192, %s598, %s587, 128, 128, 8
        $region72: #{tpu_custom_call.1} parent=67 // pred_fallthru
          _
        // Predicated region
        $region73: #{tpu_custom_call.1} parent=67 // pred_check
          %p604 = pneg %p82
        $region74: #{tpu_custom_call.1} parent=67 // pred_check_branch
          %606 = sbr.rel (%p604) target = $region76
        $region75: #{tpu_custom_call.1} parent=67 // pred_region
          %s607 = smul.u32 8, %s36
          %p608 = scmp.lt.s32.totalorder %s607, 31
          %s609 = scalar_select %p608, %s607, 31
          %s610 = smul.addr %s609, 8
          %s611 = scalar_lea.vmem %s1, %s610
          %s612 = smul.u32 8, %s36
        $region76: #{tpu_custom_call.1} parent=67 // pred_fallthru
          _
        // Predicated region
        $region77: #{tpu_custom_call.1} parent=67 // pred_check
          %p613 = pneg %p339
        $region78: #{tpu_custom_call.1} parent=67 // pred_check_branch
          %615 = sbr.rel (%p613) target = $region80
        $region79: #{tpu_custom_call.1} parent=67 // pred_region
          %s616 = sand.u32 %s36, 1
          %s617 = scalar_lea.sflag [#allocation12], %s616
          %s618 = sand.u32 %s329, 1
          %s619 = smul.addr %s618, 64
          %s620 = scalar_lea.vmem [#allocation11], %s619
          %s621 = smul.u32 8, %s36
          %s623 = ssub.s32 1024, 1024
          %624 = vsyncadd %s617, %s623
          %s625 = smul.addr %s621, 2
          %s626 = smul.addr %s625, 64
          %s627 = scalar_lea.hbm %s13, %s626
          %s628 = sshll.u32 %s620, 4
          %s629 = int_to_ptr.vmem [resolvable:$true] %s628
          %634 = dma.hbm_to_vmem [thread:$0]  %s627, 1024, %s629, %s617, 128, 128, 8
        $region80: #{tpu_custom_call.1} parent=67 // pred_fallthru
          _
        // Predicated region
        $region81: #{tpu_custom_call.1} parent=67 // pred_check
          %p635 = pneg %p407
        $region82: #{tpu_custom_call.1} parent=67 // pred_check_branch
          %637 = sbr.rel (%p635) target = $region84
        $region83: #{tpu_custom_call.1} parent=67 // pred_region
          %s638 = sand.u32 %s36, 1
          %s639 = scalar_lea.sflag [#allocation3], %s638
          %s640 = sand.u32 %s397, 1
          %s641 = smul.addr %s640, 64
          %s642 = scalar_lea.vmem [#allocation16], %s641
          %s643 = smul.u32 8, %s36
          %s645 = ssub.s32 1024, 1024
          %646 = vsyncadd %s639, %s645
          %s647 = smul.addr %s643, 128
          %s648 = scalar_lea.hbm %s16, %s647
          %s649 = sshll.u32 %s642, 4
          %s650 = int_to_ptr.vmem [resolvable:$true] %s649
          %655 = dma.hbm_to_vmem [thread:$0]  %s648, 1024, %s650, %s639, 128, 128, 8
        $region84: #{tpu_custom_call.1} parent=67 // pred_fallthru
          _
        // Predicated region
        $region85: #{tpu_custom_call.1} parent=67 // pred_check
          %p656 = pneg %p433
        $region86: #{tpu_custom_call.1} parent=67 // pred_check_branch
          %658 = sbr.rel (%p656) target = $region88
        $region87: #{tpu_custom_call.1} parent=67 // pred_region
          %s659 = sand.u32 %s36, 1
          %s660 = scalar_lea.sflag [#allocation12], %s659
          %s661 = sand.u32 %s423, 1
          %s662 = smul.addr %s661, 64
          %s663 = scalar_lea.vmem [#allocation17], %s662
          %s664 = smul.u32 8, %s36
          %s666 = ssub.s32 1024, 1024
          %667 = vsyncadd %s660, %s666
          %s668 = smul.addr %s664, 128
          %s669 = scalar_lea.hbm %s17, %s668
          %s670 = sshll.u32 %s663, 4
          %s671 = int_to_ptr.vmem [resolvable:$true] %s670
          %676 = dma.hbm_to_vmem [thread:$0]  %s669, 1024, %s671, %s660, 128, 128, 8
        $region88: #{tpu_custom_call.1} parent=67 // pred_fallthru
          _
      $region68: #{tpu_custom_call.1} parent=5 // pred_fallthru
        _
      %p677 = scmp.le.s32.totalorder 1, %s36
      %p678 = scmp.lt.s32.totalorder %s36, 5
      %p679 = pnand %p677, %p678
      %p680 = pneg %p679
      // Predicated region
      $region89: #{tpu_custom_call.1} parent=5 // pred_check
        _
      $region90: #{tpu_custom_call.1} parent=5 // pred_check_branch
        %682 = sbr.rel (%p679) target = $region92
      $region91: #{tpu_custom_call.1} parent=5 // pred_region
        %s683 = ssub.s32 %s36, 1
        %s684 = sand.u32 %s41, 1
        %s685 = scalar_lea.sflag [#allocation3], %s684
        %s686 = sand.u32 %s49, 1
        %s687 = smul.addr %s686, 512
        %s688 = scalar_lea.vmem [#allocation2], %s687
        // Predicated region
        $region93: #{tpu_custom_call.1} parent=91 // pred_check
          %p689 = pneg %p62
        $region94: #{tpu_custom_call.1} parent=91 // pred_check_branch
          %691 = sbr.rel (%p689) target = $region96
        $region95: #{tpu_custom_call.1} parent=91 // pred_region
          %692 = dma.done %s685, 8192
        $region96: #{tpu_custom_call.1} parent=91 // pred_fallthru
          _
        // Predicated region
        $region97: #{tpu_custom_call.1} parent=91 // pred_check
          %p693 = pneg %p109
        $region98: #{tpu_custom_call.1} parent=91 // pred_check_branch
          %695 = sbr.rel (%p693) target = $region100
        $region99: #{tpu_custom_call.1} parent=91 // pred_region
          %696 = dma.done [#allocation6], 1024
        $region100: #{tpu_custom_call.1} parent=91 // pred_fallthru
          _
        // Predicated region
        $region101: #{tpu_custom_call.1} parent=91 // pred_check
          %p697 = pneg %p151
        $region102: #{tpu_custom_call.1} parent=91 // pred_check_branch
          %699 = sbr.rel (%p697) target = $region104
        $region103: #{tpu_custom_call.1} parent=91 // pred_region
          %700 = dma.done [#allocation6], 2048
        $region104: #{tpu_custom_call.1} parent=91 // pred_fallthru
          _
        // Predicated region
        $region105: #{tpu_custom_call.1} parent=91 // pred_check
          %p701 = pneg %p193
        $region106: #{tpu_custom_call.1} parent=91 // pred_check_branch
          %703 = sbr.rel (%p701) target = $region108
        $region107: #{tpu_custom_call.1} parent=91 // pred_region
          %704 = dma.done [#allocation9], 1024
        $region108: #{tpu_custom_call.1} parent=91 // pred_fallthru
          _
        // Predicated region
        $region109: #{tpu_custom_call.1} parent=91 // pred_check
          %p705 = pneg %p277
        $region110: #{tpu_custom_call.1} parent=91 // pred_check_branch
          %707 = sbr.rel (%p705) target = $region112
        $region111: #{tpu_custom_call.1} parent=91 // pred_region
          %708 = dma.done [#allocation9], 4096
        $region112: #{tpu_custom_call.1} parent=91 // pred_fallthru
          _
        %s709 = sand.u32 %s41, 1
        %s710 = scalar_lea.sflag [#allocation12], %s709
        %s711 = sand.u32 %s332, 1
        %s712 = smul.addr %s711, 64
        %s713 = scalar_lea.vmem [#allocation11], %s712
        // Predicated region
        $region113: #{tpu_custom_call.1} parent=91 // pred_check
          %p714 = pneg %p345
        $region114: #{tpu_custom_call.1} parent=91 // pred_check_branch
          %716 = sbr.rel (%p714) target = $region116
        $region115: #{tpu_custom_call.1} parent=91 // pred_region
          %717 = dma.done %s710, 1024
        $region116: #{tpu_custom_call.1} parent=91 // pred_fallthru
          _
        // Predicated region
        $region117: #{tpu_custom_call.1} parent=91 // pred_check
          %p718 = pneg %p366
        $region118: #{tpu_custom_call.1} parent=91 // pred_check_branch
          %720 = sbr.rel (%p718) target = $region120
        $region119: #{tpu_custom_call.1} parent=91 // pred_region
          %721 = dma.done [#allocation12], 2048
        $region120: #{tpu_custom_call.1} parent=91 // pred_fallthru
          _
        // Predicated region
        $region121: #{tpu_custom_call.1} parent=91 // pred_check
          %p722 = pneg %p387
        $region122: #{tpu_custom_call.1} parent=91 // pred_check_branch
          %724 = sbr.rel (%p722) target = $region124
        $region123: #{tpu_custom_call.1} parent=91 // pred_region
          %725 = dma.done [#allocation15], 1024
        $region124: #{tpu_custom_call.1} parent=91 // pred_fallthru
          _
        %s726 = sand.u32 %s41, 1
        %s727 = scalar_lea.sflag [#allocation3], %s726
        %s728 = sand.u32 %s400, 1
        %s729 = smul.addr %s728, 64
        %s730 = scalar_lea.vmem [#allocation16], %s729
        // Predicated region
        $region125: #{tpu_custom_call.1} parent=91 // pred_check
          %p731 = pneg %p413
        $region126: #{tpu_custom_call.1} parent=91 // pred_check_branch
          %733 = sbr.rel (%p731) target = $region128
        $region127: #{tpu_custom_call.1} parent=91 // pred_region
          %734 = dma.done %s727, 1024
        $region128: #{tpu_custom_call.1} parent=91 // pred_fallthru
          _
        %s735 = sand.u32 %s41, 1
        %s736 = scalar_lea.sflag [#allocation12], %s735
        %s737 = sand.u32 %s426, 1
        %s738 = smul.addr %s737, 64
        %s739 = scalar_lea.vmem [#allocation17], %s738
        // Predicated region
        $region129: #{tpu_custom_call.1} parent=91 // pred_check
          %p740 = pneg %p439
        $region130: #{tpu_custom_call.1} parent=91 // pred_check_branch
          %742 = sbr.rel (%p740) target = $region132
        $region131: #{tpu_custom_call.1} parent=91 // pred_region
          %743 = dma.done %s736, 1024
        $region132: #{tpu_custom_call.1} parent=91 // pred_fallthru
          _
        %s744 = sand.u32 %s41, 1
        %s745 = scalar_lea.sflag [#allocation3], %s744
        %s746 = sand.u32 %s49, 1
        %s747 = smul.addr %s746, 512
        %s748 = scalar_lea.vmem [#allocation2], %s747
        %p749 = pneg %p62
        %p750 = pneg %p59
        %s751 = smul.u32 8, %s41
        %p752 = scmp.lt.s32.totalorder %s751, 31
        %s753 = scalar_select %p752, %s751, 31
        %s754 = smul.addr %s753, 8
        %s755 = scalar_lea.vmem %s1, %s754
        %p756 = pneg %p88
        %p757 = pneg %p85
        %p758 = pneg %p109
        %p759 = pneg %p106
        %p760 = pneg %p130
        %p761 = pneg %p127
        %p762 = pneg %p151
        %p763 = pneg %p148
        %p764 = pneg %p172
        %p765 = pneg %p169
        %p766 = pneg %p193
        %p767 = pneg %p190
        %p768 = pneg %p214
        %p769 = pneg %p211
        %p770 = pneg %p235
        %p771 = pneg %p232
        %p772 = pneg %p256
        %p773 = pneg %p253
        %p774 = pneg %p277
        %p775 = pneg %p274
        %p776 = pneg %p298
        %p777 = pneg %p295
        %p778 = pneg %p319
        %p779 = pneg %p316
        %s780 = sand.u32 %s41, 1
        %s781 = scalar_lea.sflag [#allocation12], %s780
        %s782 = sand.u32 %s332, 1
        %s783 = smul.addr %s782, 64
        %s784 = scalar_lea.vmem [#allocation11], %s783
        %p785 = pneg %p345
        %p786 = pneg %p342
        %p787 = pneg %p366
        %p788 = pneg %p363
        %p789 = pneg %p387
        %p790 = pneg %p384
        %s791 = sand.u32 %s41, 1
        %s792 = scalar_lea.sflag [#allocation3], %s791
        %s793 = sand.u32 %s400, 1
        %s794 = smul.addr %s793, 64
        %s795 = scalar_lea.vmem [#allocation16], %s794
        %p796 = pneg %p413
        %p797 = pneg %p410
        %s798 = sand.u32 %s41, 1
        %s799 = scalar_lea.sflag [#allocation12], %s798
        %s800 = sand.u32 %s426, 1
        %s801 = smul.addr %s800, 64
        %s802 = scalar_lea.vmem [#allocation17], %s801
        %p803 = pneg %p439
        %p804 = pneg %p436
        %p805 = pneg %p465
        %p806 = pneg %p462
        %s807 = sand.u32 %s452, 1
        %s808 = scalar_lea.sflag [#allocation4], %s807
        %s809 = sand.u32 %s452, 1
        %s810 = smul.addr %s809, 64
        %s811 = scalar_lea.vmem [#allocation18], %s810
        %s812 = smul.u32 64, %s41
        %s813 = smul.u32 8, %s41
        %p814 = scmp.lt.s32.totalorder %s813, 31
        %s815 = scalar_select %p814, %s813, 31
        %s816 = smul.addr %s815, 8
        %s817 = scalar_lea.vmem %s1, %s816
        %s818 = smul.u32 8, %s41
        %s819 = smul.u32 8, %s41
        %s820 = smul.u32 8, %s41
        %s821 = smul.u32 8, %s41
        %s822 = smul.u32 8, %s41
        %v824 = vld [vmem:[%s688] sm:$0xff]
        %v825 = vld [vmem:[%s688 + $0x8] sm:$0xff]
        %v826 = vld [vmem:[%s688 + $0x10] sm:$0xff]
        %v827 = vld [vmem:[%s688 + $0x18] sm:$0xff]
        %v828 = vld [vmem:[%s688 + $0x20] sm:$0xff]
        %v829 = vld [vmem:[%s688 + $0x28] sm:$0xff]
        %v830 = vld [vmem:[%s688 + $0x30] sm:$0xff]
        %v831 = vld [vmem:[%s688 + $0x38] sm:$0xff]
        %v832 = vld [vmem:[%s688 + $0x40] sm:$0xff]
        %v833 = vld [vmem:[%s688 + $0x48] sm:$0xff]
        %v834 = vld [vmem:[%s688 + $0x50] sm:$0xff]
        %v835 = vld [vmem:[%s688 + $0x58] sm:$0xff]
        %v836 = vld [vmem:[%s688 + $0x60] sm:$0xff]
        %v837 = vld [vmem:[%s688 + $0x68] sm:$0xff]
        %v838 = vld [vmem:[%s688 + $0x70] sm:$0xff]
        %v839 = vld [vmem:[%s688 + $0x78] sm:$0xff]
        %v840 = vld [vmem:[%s688 + $0x80] sm:$0xff]
        %v841 = vld [vmem:[%s688 + $0x88] sm:$0xff]
        %v842 = vld [vmem:[%s688 + $0x90] sm:$0xff]
        %v843 = vld [vmem:[%s688 + $0x98] sm:$0xff]
        %v844 = vld [vmem:[%s688 + $0xa0] sm:$0xff]
        %v845 = vld [vmem:[%s688 + $0xa8] sm:$0xff]
        %v846 = vld [vmem:[%s688 + $0xb0] sm:$0xff]
        %v847 = vld [vmem:[%s688 + $0xb8] sm:$0xff]
        %v848 = vld [vmem:[%s688 + $0xc0] sm:$0xff]
        %v849 = vld [vmem:[%s688 + $0xc8] sm:$0xff]
        %v850 = vld [vmem:[%s688 + $0xd0] sm:$0xff]
        %v851 = vld [vmem:[%s688 + $0xd8] sm:$0xff]
        %v852 = vld [vmem:[%s688 + $0xe0] sm:$0xff]
        %v853 = vld [vmem:[%s688 + $0xe8] sm:$0xff]
        %v854 = vld [vmem:[%s688 + $0xf0] sm:$0xff]
        %v855 = vld [vmem:[%s688 + $0xf8] sm:$0xff]
        %v856 = vld [vmem:[%s688 + $0x100] sm:$0xff]
        %v857 = vld [vmem:[%s688 + $0x108] sm:$0xff]
        %v858 = vld [vmem:[%s688 + $0x110] sm:$0xff]
        %v859 = vld [vmem:[%s688 + $0x118] sm:$0xff]
        %v860 = vld [vmem:[%s688 + $0x120] sm:$0xff]
        %v861 = vld [vmem:[%s688 + $0x128] sm:$0xff]
        %v862 = vld [vmem:[%s688 + $0x130] sm:$0xff]
        %v863 = vld [vmem:[%s688 + $0x138] sm:$0xff]
        %v864 = vld [vmem:[%s688 + $0x140] sm:$0xff]
        %v865 = vld [vmem:[%s688 + $0x148] sm:$0xff]
        %v866 = vld [vmem:[%s688 + $0x150] sm:$0xff]
        %v867 = vld [vmem:[%s688 + $0x158] sm:$0xff]
        %v868 = vld [vmem:[%s688 + $0x160] sm:$0xff]
        %v869 = vld [vmem:[%s688 + $0x168] sm:$0xff]
        %v870 = vld [vmem:[%s688 + $0x170] sm:$0xff]
        %v871 = vld [vmem:[%s688 + $0x178] sm:$0xff]
        %v872 = vld [vmem:[%s688 + $0x180] sm:$0xff]
        %v873 = vld [vmem:[%s688 + $0x188] sm:$0xff]
        %v874 = vld [vmem:[%s688 + $0x190] sm:$0xff]
        %v875 = vld [vmem:[%s688 + $0x198] sm:$0xff]
        %v876 = vld [vmem:[%s688 + $0x1a0] sm:$0xff]
        %v877 = vld [vmem:[%s688 + $0x1a8] sm:$0xff]
        %v878 = vld [vmem:[%s688 + $0x1b0] sm:$0xff]
        %v879 = vld [vmem:[%s688 + $0x1b8] sm:$0xff]
        %v880 = vld [vmem:[%s688 + $0x1c0] sm:$0xff]
        %v881 = vld [vmem:[%s688 + $0x1c8] sm:$0xff]
        %v882 = vld [vmem:[%s688 + $0x1d0] sm:$0xff]
        %v883 = vld [vmem:[%s688 + $0x1d8] sm:$0xff]
        %v884 = vld [vmem:[%s688 + $0x1e0] sm:$0xff]
        %v885 = vld [vmem:[%s688 + $0x1e8] sm:$0xff]
        %v886 = vld [vmem:[%s688 + $0x1f0] sm:$0xff]
        %v887 = vld [vmem:[%s688 + $0x1f8] sm:$0xff]
        %v888 = vld [vmem:[%s12] sm:$0x1]
        %v889 = vld [vmem:[%s12 + $0x1] sm:$0x1]
        %890 = vadd.xlane.f32.xlu0 %v824
        %v891 = vpop.xlane.xlu0 %890
        %892 = vadd.xlane.f32.xlu0 %v825
        %v893 = vpop.xlane.xlu0 %892
        %894 = vadd.xlane.f32.xlu0 %v826
        %v895 = vpop.xlane.xlu0 %894
        %896 = vadd.xlane.f32.xlu0 %v827
        %v897 = vpop.xlane.xlu0 %896
        %898 = vadd.xlane.f32.xlu0 %v828
        %v899 = vpop.xlane.xlu0 %898
        %900 = vadd.xlane.f32.xlu0 %v829
        %v901 = vpop.xlane.xlu0 %900
        %902 = vadd.xlane.f32.xlu0 %v830
        %v903 = vpop.xlane.xlu0 %902
        %904 = vadd.xlane.f32.xlu0 %v831
        %v905 = vpop.xlane.xlu0 %904
        %906 = vadd.xlane.f32.xlu0 %v832
        %v907 = vpop.xlane.xlu0 %906
        %908 = vadd.xlane.f32.xlu0 %v833
        %v909 = vpop.xlane.xlu0 %908
        %910 = vadd.xlane.f32.xlu0 %v834
        %v911 = vpop.xlane.xlu0 %910
        %912 = vadd.xlane.f32.xlu0 %v835
        %v913 = vpop.xlane.xlu0 %912
        %914 = vadd.xlane.f32.xlu0 %v836
        %v915 = vpop.xlane.xlu0 %914
        %916 = vadd.xlane.f32.xlu0 %v837
        %v917 = vpop.xlane.xlu0 %916
        %918 = vadd.xlane.f32.xlu0 %v838
        %v919 = vpop.xlane.xlu0 %918
        %920 = vadd.xlane.f32.xlu0 %v839
        %v921 = vpop.xlane.xlu0 %920
        %922 = vadd.xlane.f32.xlu0 %v840
        %v923 = vpop.xlane.xlu0 %922
        %924 = vadd.xlane.f32.xlu0 %v841
        %v925 = vpop.xlane.xlu0 %924
        %926 = vadd.xlane.f32.xlu0 %v842
        %v927 = vpop.xlane.xlu0 %926
        %928 = vadd.xlane.f32.xlu0 %v843
        %v929 = vpop.xlane.xlu0 %928
        %930 = vadd.xlane.f32.xlu0 %v844
        %v931 = vpop.xlane.xlu0 %930
        %932 = vadd.xlane.f32.xlu0 %v845
        %v933 = vpop.xlane.xlu0 %932
        %934 = vadd.xlane.f32.xlu0 %v846
        %v935 = vpop.xlane.xlu0 %934
        %936 = vadd.xlane.f32.xlu0 %v847
        %v937 = vpop.xlane.xlu0 %936
        %938 = vadd.xlane.f32.xlu0 %v848
        %v939 = vpop.xlane.xlu0 %938
        %940 = vadd.xlane.f32.xlu0 %v849
        %v941 = vpop.xlane.xlu0 %940
        %942 = vadd.xlane.f32.xlu0 %v850
        %v943 = vpop.xlane.xlu0 %942
        %944 = vadd.xlane.f32.xlu0 %v851
        %v945 = vpop.xlane.xlu0 %944
        %946 = vadd.xlane.f32.xlu0 %v852
        %v947 = vpop.xlane.xlu0 %946
        %948 = vadd.xlane.f32.xlu0 %v853
        %v949 = vpop.xlane.xlu0 %948
        %950 = vadd.xlane.f32.xlu0 %v854
        %v951 = vpop.xlane.xlu0 %950
        %952 = vadd.xlane.f32.xlu0 %v855
        %v953 = vpop.xlane.xlu0 %952
        %954 = vadd.xlane.f32.xlu0 %v856
        %v955 = vpop.xlane.xlu0 %954
        %956 = vadd.xlane.f32.xlu0 %v857
        %v957 = vpop.xlane.xlu0 %956
        %958 = vadd.xlane.f32.xlu0 %v858
        %v959 = vpop.xlane.xlu0 %958
        %960 = vadd.xlane.f32.xlu0 %v859
        %v961 = vpop.xlane.xlu0 %960
        %962 = vadd.xlane.f32.xlu0 %v860
        %v963 = vpop.xlane.xlu0 %962
        %964 = vadd.xlane.f32.xlu0 %v861
        %v965 = vpop.xlane.xlu0 %964
        %966 = vadd.xlane.f32.xlu0 %v862
        %v967 = vpop.xlane.xlu0 %966
        %968 = vadd.xlane.f32.xlu0 %v863
        %v969 = vpop.xlane.xlu0 %968
        %970 = vadd.xlane.f32.xlu0 %v864
        %v971 = vpop.xlane.xlu0 %970
        %972 = vadd.xlane.f32.xlu0 %v865
        %v973 = vpop.xlane.xlu0 %972
        %974 = vadd.xlane.f32.xlu0 %v866
        %v975 = vpop.xlane.xlu0 %974
        %976 = vadd.xlane.f32.xlu0 %v867
        %v977 = vpop.xlane.xlu0 %976
        %978 = vadd.xlane.f32.xlu0 %v868
        %v979 = vpop.xlane.xlu0 %978
        %980 = vadd.xlane.f32.xlu0 %v869
        %v981 = vpop.xlane.xlu0 %980
        %982 = vadd.xlane.f32.xlu0 %v870
        %v983 = vpop.xlane.xlu0 %982
        %984 = vadd.xlane.f32.xlu0 %v871
        %v985 = vpop.xlane.xlu0 %984
        %986 = vadd.xlane.f32.xlu0 %v872
        %v987 = vpop.xlane.xlu0 %986
        %988 = vadd.xlane.f32.xlu0 %v873
        %v989 = vpop.xlane.xlu0 %988
        %990 = vadd.xlane.f32.xlu0 %v874
        %v991 = vpop.xlane.xlu0 %990
        %992 = vadd.xlane.f32.xlu0 %v875
        %v993 = vpop.xlane.xlu0 %992
        %994 = vadd.xlane.f32.xlu0 %v876
        %v995 = vpop.xlane.xlu0 %994
        %996 = vadd.xlane.f32.xlu0 %v877
        %v997 = vpop.xlane.xlu0 %996
        %998 = vadd.xlane.f32.xlu0 %v878
        %v999 = vpop.xlane.xlu0 %998
        %1000 = vadd.xlane.f32.xlu0 %v879
        %v1001 = vpop.xlane.xlu0 %1000
        %1002 = vadd.xlane.f32.xlu0 %v880
        %v1003 = vpop.xlane.xlu0 %1002
        %1004 = vadd.xlane.f32.xlu0 %v881
        %v1005 = vpop.xlane.xlu0 %1004
        %1006 = vadd.xlane.f32.xlu0 %v882
        %v1007 = vpop.xlane.xlu0 %1006
        %1008 = vadd.xlane.f32.xlu0 %v883
        %v1009 = vpop.xlane.xlu0 %1008
        %1010 = vadd.xlane.f32.xlu0 %v884
        %v1011 = vpop.xlane.xlu0 %1010
        %1012 = vadd.xlane.f32.xlu0 %v885
        %v1013 = vpop.xlane.xlu0 %1012
        %1014 = vadd.xlane.f32.xlu0 %v886
        %v1015 = vpop.xlane.xlu0 %1014
        %1016 = vadd.xlane.f32.xlu0 %v887
        %v1017 = vpop.xlane.xlu0 %1016
        %v1018 = vrcp.pop 128.0
        %v1019 = vmul.f32 %v891, %v1018
        %v1020 = vmul.f32 %v893, %v1018
        %v1021 = vmul.f32 %v895, %v1018
        %v1022 = vmul.f32 %v897, %v1018
        %v1023 = vmul.f32 %v899, %v1018
        %v1024 = vmul.f32 %v901, %v1018
        %v1025 = vmul.f32 %v903, %v1018
        %v1026 = vmul.f32 %v905, %v1018
        %v1027 = vmul.f32 %v907, %v1018
        %v1028 = vmul.f32 %v909, %v1018
        %v1029 = vmul.f32 %v911, %v1018
        %v1030 = vmul.f32 %v913, %v1018
        %v1031 = vmul.f32 %v915, %v1018
        %v1032 = vmul.f32 %v917, %v1018
        %v1033 = vmul.f32 %v919, %v1018
        %v1034 = vmul.f32 %v921, %v1018
        %v1035 = vmul.f32 %v923, %v1018
        %v1036 = vmul.f32 %v925, %v1018
        %v1037 = vmul.f32 %v927, %v1018
        %v1038 = vmul.f32 %v929, %v1018
        %v1039 = vmul.f32 %v931, %v1018
        %v1040 = vmul.f32 %v933, %v1018
        %v1041 = vmul.f32 %v935, %v1018
        %v1042 = vmul.f32 %v937, %v1018
        %v1043 = vmul.f32 %v939, %v1018
        %v1044 = vmul.f32 %v941, %v1018
        %v1045 = vmul.f32 %v943, %v1018
        %v1046 = vmul.f32 %v945, %v1018
        %v1047 = vmul.f32 %v947, %v1018
        %v1048 = vmul.f32 %v949, %v1018
        %v1049 = vmul.f32 %v951, %v1018
        %v1050 = vmul.f32 %v953, %v1018
        %v1051 = vmul.f32 %v955, %v1018
        %v1052 = vmul.f32 %v957, %v1018
        %v1053 = vmul.f32 %v959, %v1018
        %v1054 = vmul.f32 %v961, %v1018
        %v1055 = vmul.f32 %v963, %v1018
        %v1056 = vmul.f32 %v965, %v1018
        %v1057 = vmul.f32 %v967, %v1018
        %v1058 = vmul.f32 %v969, %v1018
        %v1059 = vmul.f32 %v971, %v1018
        %v1060 = vmul.f32 %v973, %v1018
        %v1061 = vmul.f32 %v975, %v1018
        %v1062 = vmul.f32 %v977, %v1018
        %v1063 = vmul.f32 %v979, %v1018
        %v1064 = vmul.f32 %v981, %v1018
        %v1065 = vmul.f32 %v983, %v1018
        %v1066 = vmul.f32 %v985, %v1018
        %v1067 = vmul.f32 %v987, %v1018
        %v1068 = vmul.f32 %v989, %v1018
        %v1069 = vmul.f32 %v991, %v1018
        %v1070 = vmul.f32 %v993, %v1018
        %v1071 = vmul.f32 %v995, %v1018
        %v1072 = vmul.f32 %v997, %v1018
        %v1073 = vmul.f32 %v999, %v1018
        %v1074 = vmul.f32 %v1001, %v1018
        %v1075 = vmul.f32 %v1003, %v1018
        %v1076 = vmul.f32 %v1005, %v1018
        %v1077 = vmul.f32 %v1007, %v1018
        %v1078 = vmul.f32 %v1009, %v1018
        %v1079 = vmul.f32 %v1011, %v1018
        %v1080 = vmul.f32 %v1013, %v1018
        %v1081 = vmul.f32 %v1015, %v1018
        %v1082 = vmul.f32 %v1017, %v1018
        %v1083 = vmul.f32 %v824, %v824
        %v1084 = vmul.f32 %v825, %v825
        %v1085 = vmul.f32 %v826, %v826
        %v1086 = vmul.f32 %v827, %v827
        %v1087 = vmul.f32 %v828, %v828
        %v1088 = vmul.f32 %v829, %v829
        %v1089 = vmul.f32 %v830, %v830
        %v1090 = vmul.f32 %v831, %v831
        %v1091 = vmul.f32 %v832, %v832
        %v1092 = vmul.f32 %v833, %v833
        %v1093 = vmul.f32 %v834, %v834
        %v1094 = vmul.f32 %v835, %v835
        %v1095 = vmul.f32 %v836, %v836
        %v1096 = vmul.f32 %v837, %v837
        %v1097 = vmul.f32 %v838, %v838
        %v1098 = vmul.f32 %v839, %v839
        %v1099 = vmul.f32 %v840, %v840
        %v1100 = vmul.f32 %v841, %v841
        %v1101 = vmul.f32 %v842, %v842
        %v1102 = vmul.f32 %v843, %v843
        %v1103 = vmul.f32 %v844, %v844
        %v1104 = vmul.f32 %v845, %v845
        %v1105 = vmul.f32 %v846, %v846
        %v1106 = vmul.f32 %v847, %v847
        %v1107 = vmul.f32 %v848, %v848
        %v1108 = vmul.f32 %v849, %v849
        %v1109 = vmul.f32 %v850, %v850
        %v1110 = vmul.f32 %v851, %v851
        %v1111 = vmul.f32 %v852, %v852
        %v1112 = vmul.f32 %v853, %v853
        %v1113 = vmul.f32 %v854, %v854
        %v1114 = vmul.f32 %v855, %v855
        %v1115 = vmul.f32 %v856, %v856
        %v1116 = vmul.f32 %v857, %v857
        %v1117 = vmul.f32 %v858, %v858
        %v1118 = vmul.f32 %v859, %v859
        %v1119 = vmul.f32 %v860, %v860
        %v1120 = vmul.f32 %v861, %v861
        %v1121 = vmul.f32 %v862, %v862
        %v1122 = vmul.f32 %v863, %v863
        %v1123 = vmul.f32 %v864, %v864
        %v1124 = vmul.f32 %v865, %v865
        %v1125 = vmul.f32 %v866, %v866
        %v1126 = vmul.f32 %v867, %v867
        %v1127 = vmul.f32 %v868, %v868
        %v1128 = vmul.f32 %v869, %v869
        %v1129 = vmul.f32 %v870, %v870
        %v1130 = vmul.f32 %v871, %v871
        %v1131 = vmul.f32 %v872, %v872
        %v1132 = vmul.f32 %v873, %v873
        %v1133 = vmul.f32 %v874, %v874
        %v1134 = vmul.f32 %v875, %v875
        %v1135 = vmul.f32 %v876, %v876
        %v1136 = vmul.f32 %v877, %v877
        %v1137 = vmul.f32 %v878, %v878
        %v1138 = vmul.f32 %v879, %v879
        %v1139 = vmul.f32 %v880, %v880
        %v1140 = vmul.f32 %v881, %v881
        %v1141 = vmul.f32 %v882, %v882
        %v1142 = vmul.f32 %v883, %v883
        %v1143 = vmul.f32 %v884, %v884
        %v1144 = vmul.f32 %v885, %v885
        %v1145 = vmul.f32 %v886, %v886
        %v1146 = vmul.f32 %v887, %v887
        %1147 = vadd.xlane.f32.xlu0 %v1083
        %v1148 = vpop.xlane.xlu0 %1147
        %1149 = vadd.xlane.f32.xlu0 %v1084
        %v1150 = vpop.xlane.xlu0 %1149
        %1151 = vadd.xlane.f32.xlu0 %v1085
        %v1152 = vpop.xlane.xlu0 %1151
        %1153 = vadd.xlane.f32.xlu0 %v1086
        %v1154 = vpop.xlane.xlu0 %1153
        %1155 = vadd.xlane.f32.xlu0 %v1087
        %v1156 = vpop.xlane.xlu0 %1155
        %1157 = vadd.xlane.f32.xlu0 %v1088
        %v1158 = vpop.xlane.xlu0 %1157
        %1159 = vadd.xlane.f32.xlu0 %v1089
        %v1160 = vpop.xlane.xlu0 %1159
        %1161 = vadd.xlane.f32.xlu0 %v1090
        %v1162 = vpop.xlane.xlu0 %1161
        %1163 = vadd.xlane.f32.xlu0 %v1091
        %v1164 = vpop.xlane.xlu0 %1163
        %1165 = vadd.xlane.f32.xlu0 %v1092
        %v1166 = vpop.xlane.xlu0 %1165
        %1167 = vadd.xlane.f32.xlu0 %v1093
        %v1168 = vpop.xlane.xlu0 %1167
        %1169 = vadd.xlane.f32.xlu0 %v1094
        %v1170 = vpop.xlane.xlu0 %1169
        %1171 = vadd.xlane.f32.xlu0 %v1095
        %v1172 = vpop.xlane.xlu0 %1171
        %1173 = vadd.xlane.f32.xlu0 %v1096
        %v1174 = vpop.xlane.xlu0 %1173
        %1175 = vadd.xlane.f32.xlu0 %v1097
        %v1176 = vpop.xlane.xlu0 %1175
        %1177 = vadd.xlane.f32.xlu0 %v1098
        %v1178 = vpop.xlane.xlu0 %1177
        %1179 = vadd.xlane.f32.xlu0 %v1099
        %v1180 = vpop.xlane.xlu0 %1179
        %1181 = vadd.xlane.f32.xlu0 %v1100
        %v1182 = vpop.xlane.xlu0 %1181
        %1183 = vadd.xlane.f32.xlu0 %v1101
        %v1184 = vpop.xlane.xlu0 %1183
        %1185 = vadd.xlane.f32.xlu0 %v1102
        %v1186 = vpop.xlane.xlu0 %1185
        %1187 = vadd.xlane.f32.xlu0 %v1103
        %v1188 = vpop.xlane.xlu0 %1187
        %1189 = vadd.xlane.f32.xlu0 %v1104
        %v1190 = vpop.xlane.xlu0 %1189
        %1191 = vadd.xlane.f32.xlu0 %v1105
        %v1192 = vpop.xlane.xlu0 %1191
        %1193 = vadd.xlane.f32.xlu0 %v1106
        %v1194 = vpop.xlane.xlu0 %1193
        %1195 = vadd.xlane.f32.xlu0 %v1107
        %v1196 = vpop.xlane.xlu0 %1195
        %1197 = vadd.xlane.f32.xlu0 %v1108
        %v1198 = vpop.xlane.xlu0 %1197
        %1199 = vadd.xlane.f32.xlu0 %v1109
        %v1200 = vpop.xlane.xlu0 %1199
        %1201 = vadd.xlane.f32.xlu0 %v1110
        %v1202 = vpop.xlane.xlu0 %1201
        %1203 = vadd.xlane.f32.xlu0 %v1111
        %v1204 = vpop.xlane.xlu0 %1203
        %1205 = vadd.xlane.f32.xlu0 %v1112
        %v1206 = vpop.xlane.xlu0 %1205
        %1207 = vadd.xlane.f32.xlu0 %v1113
        %v1208 = vpop.xlane.xlu0 %1207
        %1209 = vadd.xlane.f32.xlu0 %v1114
        %v1210 = vpop.xlane.xlu0 %1209
        %1211 = vadd.xlane.f32.xlu0 %v1115
        %v1212 = vpop.xlane.xlu0 %1211
        %1213 = vadd.xlane.f32.xlu0 %v1116
        %v1214 = vpop.xlane.xlu0 %1213
        %1215 = vadd.xlane.f32.xlu0 %v1117
        %v1216 = vpop.xlane.xlu0 %1215
        %1217 = vadd.xlane.f32.xlu0 %v1118
        %v1218 = vpop.xlane.xlu0 %1217
        %1219 = vadd.xlane.f32.xlu0 %v1119
        %v1220 = vpop.xlane.xlu0 %1219
        %1221 = vadd.xlane.f32.xlu0 %v1120
        %v1222 = vpop.xlane.xlu0 %1221
        %1223 = vadd.xlane.f32.xlu0 %v1121
        %v1224 = vpop.xlane.xlu0 %1223
        %1225 = vadd.xlane.f32.xlu0 %v1122
        %v1226 = vpop.xlane.xlu0 %1225
        %1227 = vadd.xlane.f32.xlu0 %v1123
        %v1228 = vpop.xlane.xlu0 %1227
        %1229 = vadd.xlane.f32.xlu0 %v1124
        %v1230 = vpop.xlane.xlu0 %1229
        %1231 = vadd.xlane.f32.xlu0 %v1125
        %v1232 = vpop.xlane.xlu0 %1231
        %1233 = vadd.xlane.f32.xlu0 %v1126
        %v1234 = vpop.xlane.xlu0 %1233
        %1235 = vadd.xlane.f32.xlu0 %v1127
        %v1236 = vpop.xlane.xlu0 %1235
        %1237 = vadd.xlane.f32.xlu0 %v1128
        %v1238 = vpop.xlane.xlu0 %1237
        %1239 = vadd.xlane.f32.xlu0 %v1129
        %v1240 = vpop.xlane.xlu0 %1239
        %1241 = vadd.xlane.f32.xlu0 %v1130
        %v1242 = vpop.xlane.xlu0 %1241
        %1243 = vadd.xlane.f32.xlu0 %v1131
        %v1244 = vpop.xlane.xlu0 %1243
        %1245 = vadd.xlane.f32.xlu0 %v1132
        %v1246 = vpop.xlane.xlu0 %1245
        %1247 = vadd.xlane.f32.xlu0 %v1133
        %v1248 = vpop.xlane.xlu0 %1247
        %1249 = vadd.xlane.f32.xlu0 %v1134
        %v1250 = vpop.xlane.xlu0 %1249
        %1251 = vadd.xlane.f32.xlu0 %v1135
        %v1252 = vpop.xlane.xlu0 %1251
        %1253 = vadd.xlane.f32.xlu0 %v1136
        %v1254 = vpop.xlane.xlu0 %1253
        %1255 = vadd.xlane.f32.xlu0 %v1137
        %v1256 = vpop.xlane.xlu0 %1255
        %1257 = vadd.xlane.f32.xlu0 %v1138
        %v1258 = vpop.xlane.xlu0 %1257
        %1259 = vadd.xlane.f32.xlu0 %v1139
        %v1260 = vpop.xlane.xlu0 %1259
        %1261 = vadd.xlane.f32.xlu0 %v1140
        %v1262 = vpop.xlane.xlu0 %1261
        %1263 = vadd.xlane.f32.xlu0 %v1141
        %v1264 = vpop.xlane.xlu0 %1263
        %1265 = vadd.xlane.f32.xlu0 %v1142
        %v1266 = vpop.xlane.xlu0 %1265
        %1267 = vadd.xlane.f32.xlu0 %v1143
        %v1268 = vpop.xlane.xlu0 %1267
        %1269 = vadd.xlane.f32.xlu0 %v1144
        %v1270 = vpop.xlane.xlu0 %1269
        %1271 = vadd.xlane.f32.xlu0 %v1145
        %v1272 = vpop.xlane.xlu0 %1271
        %1273 = vadd.xlane.f32.xlu0 %v1146
        %v1274 = vpop.xlane.xlu0 %1273
        %v1275 = vmul.f32 %v1148, %v1018
        %v1276 = vmul.f32 %v1150, %v1018
        %v1277 = vmul.f32 %v1152, %v1018
        %v1278 = vmul.f32 %v1154, %v1018
        %v1279 = vmul.f32 %v1156, %v1018
        %v1280 = vmul.f32 %v1158, %v1018
        %v1281 = vmul.f32 %v1160, %v1018
        %v1282 = vmul.f32 %v1162, %v1018
        %v1283 = vmul.f32 %v1164, %v1018
        %v1284 = vmul.f32 %v1166, %v1018
        %v1285 = vmul.f32 %v1168, %v1018
        %v1286 = vmul.f32 %v1170, %v1018
        %v1287 = vmul.f32 %v1172, %v1018
        %v1288 = vmul.f32 %v1174, %v1018
        %v1289 = vmul.f32 %v1176, %v1018
        %v1290 = vmul.f32 %v1178, %v1018
        %v1291 = vmul.f32 %v1180, %v1018
        %v1292 = vmul.f32 %v1182, %v1018
        %v1293 = vmul.f32 %v1184, %v1018
        %v1294 = vmul.f32 %v1186, %v1018
        %v1295 = vmul.f32 %v1188, %v1018
        %v1296 = vmul.f32 %v1190, %v1018
        %v1297 = vmul.f32 %v1192, %v1018
        %v1298 = vmul.f32 %v1194, %v1018
        %v1299 = vmul.f32 %v1196, %v1018
        %v1300 = vmul.f32 %v1198, %v1018
        %v1301 = vmul.f32 %v1200, %v1018
        %v1302 = vmul.f32 %v1202, %v1018
        %v1303 = vmul.f32 %v1204, %v1018
        %v1304 = vmul.f32 %v1206, %v1018
        %v1305 = vmul.f32 %v1208, %v1018
        %v1306 = vmul.f32 %v1210, %v1018
        %v1307 = vmul.f32 %v1212, %v1018
        %v1308 = vmul.f32 %v1214, %v1018
        %v1309 = vmul.f32 %v1216, %v1018
        %v1310 = vmul.f32 %v1218, %v1018
        %v1311 = vmul.f32 %v1220, %v1018
        %v1312 = vmul.f32 %v1222, %v1018
        %v1313 = vmul.f32 %v1224, %v1018
        %v1314 = vmul.f32 %v1226, %v1018
        %v1315 = vmul.f32 %v1228, %v1018
        %v1316 = vmul.f32 %v1230, %v1018
        %v1317 = vmul.f32 %v1232, %v1018
        %v1318 = vmul.f32 %v1234, %v1018
        %v1319 = vmul.f32 %v1236, %v1018
        %v1320 = vmul.f32 %v1238, %v1018
        %v1321 = vmul.f32 %v1240, %v1018
        %v1322 = vmul.f32 %v1242, %v1018
        %v1323 = vmul.f32 %v1244, %v1018
        %v1324 = vmul.f32 %v1246, %v1018
        %v1325 = vmul.f32 %v1248, %v1018
        %v1326 = vmul.f32 %v1250, %v1018
        %v1327 = vmul.f32 %v1252, %v1018
        %v1328 = vmul.f32 %v1254, %v1018
        %v1329 = vmul.f32 %v1256, %v1018
        %v1330 = vmul.f32 %v1258, %v1018
        %v1331 = vmul.f32 %v1260, %v1018
        %v1332 = vmul.f32 %v1262, %v1018
        %v1333 = vmul.f32 %v1264, %v1018
        %v1334 = vmul.f32 %v1266, %v1018
        %v1335 = vmul.f32 %v1268, %v1018
        %v1336 = vmul.f32 %v1270, %v1018
        %v1337 = vmul.f32 %v1272, %v1018
        %v1338 = vmul.f32 %v1274, %v1018
        %v1339 = vmul.f32 %v1019, %v1019
        %v1340 = vmul.f32 %v1020, %v1020
        %v1341 = vmul.f32 %v1021, %v1021
        %v1342 = vmul.f32 %v1022, %v1022
        %v1343 = vmul.f32 %v1023, %v1023
        %v1344 = vmul.f32 %v1024, %v1024
        %v1345 = vmul.f32 %v1025, %v1025
        %v1346 = vmul.f32 %v1026, %v1026
        %v1347 = vmul.f32 %v1027, %v1027
        %v1348 = vmul.f32 %v1028, %v1028
        %v1349 = vmul.f32 %v1029, %v1029
        %v1350 = vmul.f32 %v1030, %v1030
        %v1351 = vmul.f32 %v1031, %v1031
        %v1352 = vmul.f32 %v1032, %v1032
        %v1353 = vmul.f32 %v1033, %v1033
        %v1354 = vmul.f32 %v1034, %v1034
        %v1355 = vmul.f32 %v1035, %v1035
        %v1356 = vmul.f32 %v1036, %v1036
        %v1357 = vmul.f32 %v1037, %v1037
        %v1358 = vmul.f32 %v1038, %v1038
        %v1359 = vmul.f32 %v1039, %v1039
        %v1360 = vmul.f32 %v1040, %v1040
        %v1361 = vmul.f32 %v1041, %v1041
        %v1362 = vmul.f32 %v1042, %v1042
        %v1363 = vmul.f32 %v1043, %v1043
        %v1364 = vmul.f32 %v1044, %v1044
        %v1365 = vmul.f32 %v1045, %v1045
        %v1366 = vmul.f32 %v1046, %v1046
        %v1367 = vmul.f32 %v1047, %v1047
        %v1368 = vmul.f32 %v1048, %v1048
        %v1369 = vmul.f32 %v1049, %v1049
        %v1370 = vmul.f32 %v1050, %v1050
        %v1371 = vmul.f32 %v1051, %v1051
        %v1372 = vmul.f32 %v1052, %v1052
        %v1373 = vmul.f32 %v1053, %v1053
        %v1374 = vmul.f32 %v1054, %v1054
        %v1375 = vmul.f32 %v1055, %v1055
        %v1376 = vmul.f32 %v1056, %v1056
        %v1377 = vmul.f32 %v1057, %v1057
        %v1378 = vmul.f32 %v1058, %v1058
        %v1379 = vmul.f32 %v1059, %v1059
        %v1380 = vmul.f32 %v1060, %v1060
        %v1381 = vmul.f32 %v1061, %v1061
        %v1382 = vmul.f32 %v1062, %v1062
        %v1383 = vmul.f32 %v1063, %v1063
        %v1384 = vmul.f32 %v1064, %v1064
        %v1385 = vmul.f32 %v1065, %v1065
        %v1386 = vmul.f32 %v1066, %v1066
        %v1387 = vmul.f32 %v1067, %v1067
        %v1388 = vmul.f32 %v1068, %v1068
        %v1389 = vmul.f32 %v1069, %v1069
        %v1390 = vmul.f32 %v1070, %v1070
        %v1391 = vmul.f32 %v1071, %v1071
        %v1392 = vmul.f32 %v1072, %v1072
        %v1393 = vmul.f32 %v1073, %v1073
        %v1394 = vmul.f32 %v1074, %v1074
        %v1395 = vmul.f32 %v1075, %v1075
        %v1396 = vmul.f32 %v1076, %v1076
        %v1397 = vmul.f32 %v1077, %v1077
        %v1398 = vmul.f32 %v1078, %v1078
        %v1399 = vmul.f32 %v1079, %v1079
        %v1400 = vmul.f32 %v1080, %v1080
        %v1401 = vmul.f32 %v1081, %v1081
        %v1402 = vmul.f32 %v1082, %v1082
        %v1403 = vsub.f32 %v1275, %v1339
        %v1404 = vsub.f32 %v1276, %v1340
        %v1405 = vsub.f32 %v1277, %v1341
        %v1406 = vsub.f32 %v1278, %v1342
        %v1407 = vsub.f32 %v1279, %v1343
        %v1408 = vsub.f32 %v1280, %v1344
        %v1409 = vsub.f32 %v1281, %v1345
        %v1410 = vsub.f32 %v1282, %v1346
        %v1411 = vsub.f32 %v1283, %v1347
        %v1412 = vsub.f32 %v1284, %v1348
        %v1413 = vsub.f32 %v1285, %v1349
        %v1414 = vsub.f32 %v1286, %v1350
        %v1415 = vsub.f32 %v1287, %v1351
        %v1416 = vsub.f32 %v1288, %v1352
        %v1417 = vsub.f32 %v1289, %v1353
        %v1418 = vsub.f32 %v1290, %v1354
        %v1419 = vsub.f32 %v1291, %v1355
        %v1420 = vsub.f32 %v1292, %v1356
        %v1421 = vsub.f32 %v1293, %v1357
        %v1422 = vsub.f32 %v1294, %v1358
        %v1423 = vsub.f32 %v1295, %v1359
        %v1424 = vsub.f32 %v1296, %v1360
        %v1425 = vsub.f32 %v1297, %v1361
        %v1426 = vsub.f32 %v1298, %v1362
        %v1427 = vsub.f32 %v1299, %v1363
        %v1428 = vsub.f32 %v1300, %v1364
        %v1429 = vsub.f32 %v1301, %v1365
        %v1430 = vsub.f32 %v1302, %v1366
        %v1431 = vsub.f32 %v1303, %v1367
        %v1432 = vsub.f32 %v1304, %v1368
        %v1433 = vsub.f32 %v1305, %v1369
        %v1434 = vsub.f32 %v1306, %v1370
        %v1435 = vsub.f32 %v1307, %v1371
        %v1436 = vsub.f32 %v1308, %v1372
        %v1437 = vsub.f32 %v1309, %v1373
        %v1438 = vsub.f32 %v1310, %v1374
        %v1439 = vsub.f32 %v1311, %v1375
        %v1440 = vsub.f32 %v1312, %v1376
        %v1441 = vsub.f32 %v1313, %v1377
        %v1442 = vsub.f32 %v1314, %v1378
        %v1443 = vsub.f32 %v1315, %v1379
        %v1444 = vsub.f32 %v1316, %v1380
        %v1445 = vsub.f32 %v1317, %v1381
        %v1446 = vsub.f32 %v1318, %v1382
        %v1447 = vsub.f32 %v1319, %v1383
        %v1448 = vsub.f32 %v1320, %v1384
        %v1449 = vsub.f32 %v1321, %v1385
        %v1450 = vsub.f32 %v1322, %v1386
        %v1451 = vsub.f32 %v1323, %v1387
        %v1452 = vsub.f32 %v1324, %v1388
        %v1453 = vsub.f32 %v1325, %v1389
        %v1454 = vsub.f32 %v1326, %v1390
        %v1455 = vsub.f32 %v1327, %v1391
        %v1456 = vsub.f32 %v1328, %v1392
        %v1457 = vsub.f32 %v1329, %v1393
        %v1458 = vsub.f32 %v1330, %v1394
        %v1459 = vsub.f32 %v1331, %v1395
        %v1460 = vsub.f32 %v1332, %v1396
        %v1461 = vsub.f32 %v1333, %v1397
        %v1462 = vsub.f32 %v1334, %v1398
        %v1463 = vsub.f32 %v1335, %v1399
        %v1464 = vsub.f32 %v1336, %v1400
        %v1465 = vsub.f32 %v1337, %v1401
        %v1466 = vsub.f32 %v1338, %v1402
        %v1467 = vsub.f32 %v824, %v1019
        %v1468 = vsub.f32 %v825, %v1020
        %v1469 = vsub.f32 %v826, %v1021
        %v1470 = vsub.f32 %v827, %v1022
        %v1471 = vsub.f32 %v828, %v1023
        %v1472 = vsub.f32 %v829, %v1024
        %v1473 = vsub.f32 %v830, %v1025
        %v1474 = vsub.f32 %v831, %v1026
        %v1475 = vsub.f32 %v832, %v1027
        %v1476 = vsub.f32 %v833, %v1028
        %v1477 = vsub.f32 %v834, %v1029
        %v1478 = vsub.f32 %v835, %v1030
        %v1479 = vsub.f32 %v836, %v1031
        %v1480 = vsub.f32 %v837, %v1032
        %v1481 = vsub.f32 %v838, %v1033
        %v1482 = vsub.f32 %v839, %v1034
        %v1483 = vsub.f32 %v840, %v1035
        %v1484 = vsub.f32 %v841, %v1036
        %v1485 = vsub.f32 %v842, %v1037
        %v1486 = vsub.f32 %v843, %v1038
        %v1487 = vsub.f32 %v844, %v1039
        %v1488 = vsub.f32 %v845, %v1040
        %v1489 = vsub.f32 %v846, %v1041
        %v1490 = vsub.f32 %v847, %v1042
        %v1491 = vsub.f32 %v848, %v1043
        %v1492 = vsub.f32 %v849, %v1044
        %v1493 = vsub.f32 %v850, %v1045
        %v1494 = vsub.f32 %v851, %v1046
        %v1495 = vsub.f32 %v852, %v1047
        %v1496 = vsub.f32 %v853, %v1048
        %v1497 = vsub.f32 %v854, %v1049
        %v1498 = vsub.f32 %v855, %v1050
        %v1499 = vsub.f32 %v856, %v1051
        %v1500 = vsub.f32 %v857, %v1052
        %v1501 = vsub.f32 %v858, %v1053
        %v1502 = vsub.f32 %v859, %v1054
        %v1503 = vsub.f32 %v860, %v1055
        %v1504 = vsub.f32 %v861, %v1056
        %v1505 = vsub.f32 %v862, %v1057
        %v1506 = vsub.f32 %v863, %v1058
        %v1507 = vsub.f32 %v864, %v1059
        %v1508 = vsub.f32 %v865, %v1060
        %v1509 = vsub.f32 %v866, %v1061
        %v1510 = vsub.f32 %v867, %v1062
        %v1511 = vsub.f32 %v868, %v1063
        %v1512 = vsub.f32 %v869, %v1064
        %v1513 = vsub.f32 %v870, %v1065
        %v1514 = vsub.f32 %v871, %v1066
        %v1515 = vsub.f32 %v872, %v1067
        %v1516 = vsub.f32 %v873, %v1068
        %v1517 = vsub.f32 %v874, %v1069
        %v1518 = vsub.f32 %v875, %v1070
        %v1519 = vsub.f32 %v876, %v1071
        %v1520 = vsub.f32 %v877, %v1072
        %v1521 = vsub.f32 %v878, %v1073
        %v1522 = vsub.f32 %v879, %v1074
        %v1523 = vsub.f32 %v880, %v1075
        %v1524 = vsub.f32 %v881, %v1076
        %v1525 = vsub.f32 %v882, %v1077
        %v1526 = vsub.f32 %v883, %v1078
        %v1527 = vsub.f32 %v884, %v1079
        %v1528 = vsub.f32 %v885, %v1080
        %v1529 = vsub.f32 %v886, %v1081
        %v1530 = vsub.f32 %v887, %v1082
        %v1531 = vadd.f32 %v1403, 1e-12
        %v1532 = vadd.f32 %v1404, 1e-12
        %v1533 = vadd.f32 %v1405, 1e-12
        %v1534 = vadd.f32 %v1406, 1e-12
        %v1535 = vadd.f32 %v1407, 1e-12
        %v1536 = vadd.f32 %v1408, 1e-12
        %v1537 = vadd.f32 %v1409, 1e-12
        %v1538 = vadd.f32 %v1410, 1e-12
        %v1539 = vadd.f32 %v1411, 1e-12
        %v1540 = vadd.f32 %v1412, 1e-12
        %v1541 = vadd.f32 %v1413, 1e-12
        %v1542 = vadd.f32 %v1414, 1e-12
        %v1543 = vadd.f32 %v1415, 1e-12
        %v1544 = vadd.f32 %v1416, 1e-12
        %v1545 = vadd.f32 %v1417, 1e-12
        %v1546 = vadd.f32 %v1418, 1e-12
        %v1547 = vadd.f32 %v1419, 1e-12
        %v1548 = vadd.f32 %v1420, 1e-12
        %v1549 = vadd.f32 %v1421, 1e-12
        %v1550 = vadd.f32 %v1422, 1e-12
        %v1551 = vadd.f32 %v1423, 1e-12
        %v1552 = vadd.f32 %v1424, 1e-12
        %v1553 = vadd.f32 %v1425, 1e-12
        %v1554 = vadd.f32 %v1426, 1e-12
        %v1555 = vadd.f32 %v1427, 1e-12
        %v1556 = vadd.f32 %v1428, 1e-12
        %v1557 = vadd.f32 %v1429, 1e-12
        %v1558 = vadd.f32 %v1430, 1e-12
        %v1559 = vadd.f32 %v1431, 1e-12
        %v1560 = vadd.f32 %v1432, 1e-12
        %v1561 = vadd.f32 %v1433, 1e-12
        %v1562 = vadd.f32 %v1434, 1e-12
        %v1563 = vadd.f32 %v1435, 1e-12
        %v1564 = vadd.f32 %v1436, 1e-12
        %v1565 = vadd.f32 %v1437, 1e-12
        %v1566 = vadd.f32 %v1438, 1e-12
        %v1567 = vadd.f32 %v1439, 1e-12
        %v1568 = vadd.f32 %v1440, 1e-12
        %v1569 = vadd.f32 %v1441, 1e-12
        %v1570 = vadd.f32 %v1442, 1e-12
        %v1571 = vadd.f32 %v1443, 1e-12
        %v1572 = vadd.f32 %v1444, 1e-12
        %v1573 = vadd.f32 %v1445, 1e-12
        %v1574 = vadd.f32 %v1446, 1e-12
        %v1575 = vadd.f32 %v1447, 1e-12
        %v1576 = vadd.f32 %v1448, 1e-12
        %v1577 = vadd.f32 %v1449, 1e-12
        %v1578 = vadd.f32 %v1450, 1e-12
        %v1579 = vadd.f32 %v1451, 1e-12
        %v1580 = vadd.f32 %v1452, 1e-12
        %v1581 = vadd.f32 %v1453, 1e-12
        %v1582 = vadd.f32 %v1454, 1e-12
        %v1583 = vadd.f32 %v1455, 1e-12
        %v1584 = vadd.f32 %v1456, 1e-12
        %v1585 = vadd.f32 %v1457, 1e-12
        %v1586 = vadd.f32 %v1458, 1e-12
        %v1587 = vadd.f32 %v1459, 1e-12
        %v1588 = vadd.f32 %v1460, 1e-12
        %v1589 = vadd.f32 %v1461, 1e-12
        %v1590 = vadd.f32 %v1462, 1e-12
        %v1591 = vadd.f32 %v1463, 1e-12
        %v1592 = vadd.f32 %v1464, 1e-12
        %v1593 = vadd.f32 %v1465, 1e-12
        %v1594 = vadd.f32 %v1466, 1e-12
        %v1595 = vrsqrt.pop %v1531
        %v1596 = vrsqrt.pop %v1532
        %v1597 = vrsqrt.pop %v1533
        %v1598 = vrsqrt.pop %v1534
        %v1599 = vrsqrt.pop %v1535
        %v1600 = vrsqrt.pop %v1536
        %v1601 = vrsqrt.pop %v1537
        %v1602 = vrsqrt.pop %v1538
        %v1603 = vrsqrt.pop %v1539
        %v1604 = vrsqrt.pop %v1540
        %v1605 = vrsqrt.pop %v1541
        %v1606 = vrsqrt.pop %v1542
        %v1607 = vrsqrt.pop %v1543
        %v1608 = vrsqrt.pop %v1544
        %v1609 = vrsqrt.pop %v1545
        %v1610 = vrsqrt.pop %v1546
        %v1611 = vrsqrt.pop %v1547
        %v1612 = vrsqrt.pop %v1548
        %v1613 = vrsqrt.pop %v1549
        %v1614 = vrsqrt.pop %v1550
        %v1615 = vrsqrt.pop %v1551
        %v1616 = vrsqrt.pop %v1552
        %v1617 = vrsqrt.pop %v1553
        %v1618 = vrsqrt.pop %v1554
        %v1619 = vrsqrt.pop %v1555
        %v1620 = vrsqrt.pop %v1556
        %v1621 = vrsqrt.pop %v1557
        %v1622 = vrsqrt.pop %v1558
        %v1623 = vrsqrt.pop %v1559
        %v1624 = vrsqrt.pop %v1560
        %v1625 = vrsqrt.pop %v1561
        %v1626 = vrsqrt.pop %v1562
        %v1627 = vrsqrt.pop %v1563
        %v1628 = vrsqrt.pop %v1564
        %v1629 = vrsqrt.pop %v1565
        %v1630 = vrsqrt.pop %v1566
        %v1631 = vrsqrt.pop %v1567
        %v1632 = vrsqrt.pop %v1568
        %v1633 = vrsqrt.pop %v1569
        %v1634 = vrsqrt.pop %v1570
        %v1635 = vrsqrt.pop %v1571
        %v1636 = vrsqrt.pop %v1572
        %v1637 = vrsqrt.pop %v1573
        %v1638 = vrsqrt.pop %v1574
        %v1639 = vrsqrt.pop %v1575
        %v1640 = vrsqrt.pop %v1576
        %v1641 = vrsqrt.pop %v1577
        %v1642 = vrsqrt.pop %v1578
        %v1643 = vrsqrt.pop %v1579
        %v1644 = vrsqrt.pop %v1580
        %v1645 = vrsqrt.pop %v1581
        %v1646 = vrsqrt.pop %v1582
        %v1647 = vrsqrt.pop %v1583
        %v1648 = vrsqrt.pop %v1584
        %v1649 = vrsqrt.pop %v1585
        %v1650 = vrsqrt.pop %v1586
        %v1651 = vrsqrt.pop %v1587
        %v1652 = vrsqrt.pop %v1588
        %v1653 = vrsqrt.pop %v1589
        %v1654 = vrsqrt.pop %v1590
        %v1655 = vrsqrt.pop %v1591
        %v1656 = vrsqrt.pop %v1592
        %v1657 = vrsqrt.pop %v1593
        %v1658 = vrsqrt.pop %v1594
        %v1659 = vmul.f32 %v1467, %v1595
        %v1660 = vmul.f32 %v1468, %v1596
        %v1661 = vmul.f32 %v1469, %v1597
        %v1662 = vmul.f32 %v1470, %v1598
        %v1663 = vmul.f32 %v1471, %v1599
        %v1664 = vmul.f32 %v1472, %v1600
        %v1665 = vmul.f32 %v1473, %v1601
        %v1666 = vmul.f32 %v1474, %v1602
        %v1667 = vmul.f32 %v1475, %v1603
        %v1668 = vmul.f32 %v1476, %v1604
        %v1669 = vmul.f32 %v1477, %v1605
        %v1670 = vmul.f32 %v1478, %v1606
        %v1671 = vmul.f32 %v1479, %v1607
        %v1672 = vmul.f32 %v1480, %v1608
        %v1673 = vmul.f32 %v1481, %v1609
        %v1674 = vmul.f32 %v1482, %v1610
        %v1675 = vmul.f32 %v1483, %v1611
        %v1676 = vmul.f32 %v1484, %v1612
        %v1677 = vmul.f32 %v1485, %v1613
        %v1678 = vmul.f32 %v1486, %v1614
        %v1679 = vmul.f32 %v1487, %v1615
        %v1680 = vmul.f32 %v1488, %v1616
        %v1681 = vmul.f32 %v1489, %v1617
        %v1682 = vmul.f32 %v1490, %v1618
        %v1683 = vmul.f32 %v1491, %v1619
        %v1684 = vmul.f32 %v1492, %v1620
        %v1685 = vmul.f32 %v1493, %v1621
        %v1686 = vmul.f32 %v1494, %v1622
        %v1687 = vmul.f32 %v1495, %v1623
        %v1688 = vmul.f32 %v1496, %v1624
        %v1689 = vmul.f32 %v1497, %v1625
        %v1690 = vmul.f32 %v1498, %v1626
        %v1691 = vmul.f32 %v1499, %v1627
        %v1692 = vmul.f32 %v1500, %v1628
        %v1693 = vmul.f32 %v1501, %v1629
        %v1694 = vmul.f32 %v1502, %v1630
        %v1695 = vmul.f32 %v1503, %v1631
        %v1696 = vmul.f32 %v1504, %v1632
        %v1697 = vmul.f32 %v1505, %v1633
        %v1698 = vmul.f32 %v1506, %v1634
        %v1699 = vmul.f32 %v1507, %v1635
        %v1700 = vmul.f32 %v1508, %v1636
        %v1701 = vmul.f32 %v1509, %v1637
        %v1702 = vmul.f32 %v1510, %v1638
        %v1703 = vmul.f32 %v1511, %v1639
        %v1704 = vmul.f32 %v1512, %v1640
        %v1705 = vmul.f32 %v1513, %v1641
        %v1706 = vmul.f32 %v1514, %v1642
        %v1707 = vmul.f32 %v1515, %v1643
        %v1708 = vmul.f32 %v1516, %v1644
        %v1709 = vmul.f32 %v1517, %v1645
        %v1710 = vmul.f32 %v1518, %v1646
        %v1711 = vmul.f32 %v1519, %v1647
        %v1712 = vmul.f32 %v1520, %v1648
        %v1713 = vmul.f32 %v1521, %v1649
        %v1714 = vmul.f32 %v1522, %v1650
        %v1715 = vmul.f32 %v1523, %v1651
        %v1716 = vmul.f32 %v1524, %v1652
        %v1717 = vmul.f32 %v1525, %v1653
        %v1718 = vmul.f32 %v1526, %v1654
        %v1719 = vmul.f32 %v1527, %v1655
        %v1720 = vmul.f32 %v1528, %v1656
        %v1721 = vmul.f32 %v1529, %v1657
        %v1722 = vmul.f32 %v1530, %v1658
        %v1723 = vlaneseq
        %v1724 = vshrl.u32 %v1723, 7
        %v1725 = vsub.s32 0, %v1724
        %v1726 = vrot.slane %v888, %v1725
        %v1727 = vmul.f32 %v1659, %v1726
        %v1728 = vmul.f32 %v1660, %v1726
        %v1729 = vmul.f32 %v1661, %v1726
        %v1730 = vmul.f32 %v1662, %v1726
        %v1731 = vmul.f32 %v1663, %v1726
        %v1732 = vmul.f32 %v1664, %v1726
        %v1733 = vmul.f32 %v1665, %v1726
        %v1734 = vmul.f32 %v1666, %v1726
        %v1735 = vmul.f32 %v1667, %v1726
        %v1736 = vmul.f32 %v1668, %v1726
        %v1737 = vmul.f32 %v1669, %v1726
        %v1738 = vmul.f32 %v1670, %v1726
        %v1739 = vmul.f32 %v1671, %v1726
        %v1740 = vmul.f32 %v1672, %v1726
        %v1741 = vmul.f32 %v1673, %v1726
        %v1742 = vmul.f32 %v1674, %v1726
        %v1743 = vmul.f32 %v1675, %v1726
        %v1744 = vmul.f32 %v1676, %v1726
        %v1745 = vmul.f32 %v1677, %v1726
        %v1746 = vmul.f32 %v1678, %v1726
        %v1747 = vmul.f32 %v1679, %v1726
        %v1748 = vmul.f32 %v1680, %v1726
        %v1749 = vmul.f32 %v1681, %v1726
        %v1750 = vmul.f32 %v1682, %v1726
        %v1751 = vmul.f32 %v1683, %v1726
        %v1752 = vmul.f32 %v1684, %v1726
        %v1753 = vmul.f32 %v1685, %v1726
        %v1754 = vmul.f32 %v1686, %v1726
        %v1755 = vmul.f32 %v1687, %v1726
        %v1756 = vmul.f32 %v1688, %v1726
        %v1757 = vmul.f32 %v1689, %v1726
        %v1758 = vmul.f32 %v1690, %v1726
        %v1759 = vmul.f32 %v1691, %v1726
        %v1760 = vmul.f32 %v1692, %v1726
        %v1761 = vmul.f32 %v1693, %v1726
        %v1762 = vmul.f32 %v1694, %v1726
        %v1763 = vmul.f32 %v1695, %v1726
        %v1764 = vmul.f32 %v1696, %v1726
        %v1765 = vmul.f32 %v1697, %v1726
        %v1766 = vmul.f32 %v1698, %v1726
        %v1767 = vmul.f32 %v1699, %v1726
        %v1768 = vmul.f32 %v1700, %v1726
        %v1769 = vmul.f32 %v1701, %v1726
        %v1770 = vmul.f32 %v1702, %v1726
        %v1771 = vmul.f32 %v1703, %v1726
        %v1772 = vmul.f32 %v1704, %v1726
        %v1773 = vmul.f32 %v1705, %v1726
        %v1774 = vmul.f32 %v1706, %v1726
        %v1775 = vmul.f32 %v1707, %v1726
        %v1776 = vmul.f32 %v1708, %v1726
        %v1777 = vmul.f32 %v1709, %v1726
        %v1778 = vmul.f32 %v1710, %v1726
        %v1779 = vmul.f32 %v1711, %v1726
        %v1780 = vmul.f32 %v1712, %v1726
        %v1781 = vmul.f32 %v1713, %v1726
        %v1782 = vmul.f32 %v1714, %v1726
        %v1783 = vmul.f32 %v1715, %v1726
        %v1784 = vmul.f32 %v1716, %v1726
        %v1785 = vmul.f32 %v1717, %v1726
        %v1786 = vmul.f32 %v1718, %v1726
        %v1787 = vmul.f32 %v1719, %v1726
        %v1788 = vmul.f32 %v1720, %v1726
        %v1789 = vmul.f32 %v1721, %v1726
        %v1790 = vmul.f32 %v1722, %v1726
        %v1791 = vlaneseq
        %v1792 = vshrl.u32 %v1791, 7
        %v1793 = vsub.s32 0, %v1792
        %v1794 = vrot.slane %v889, %v1793
        %v1795 = vadd.f32 %v1727, %v1794
        %v1796 = vadd.f32 %v1728, %v1794
        %v1797 = vadd.f32 %v1729, %v1794
        %v1798 = vadd.f32 %v1730, %v1794
        %v1799 = vadd.f32 %v1731, %v1794
        %v1800 = vadd.f32 %v1732, %v1794
        %v1801 = vadd.f32 %v1733, %v1794
        %v1802 = vadd.f32 %v1734, %v1794
        %v1803 = vadd.f32 %v1735, %v1794
        %v1804 = vadd.f32 %v1736, %v1794
        %v1805 = vadd.f32 %v1737, %v1794
        %v1806 = vadd.f32 %v1738, %v1794
        %v1807 = vadd.f32 %v1739, %v1794
        %v1808 = vadd.f32 %v1740, %v1794
        %v1809 = vadd.f32 %v1741, %v1794
        %v1810 = vadd.f32 %v1742, %v1794
        %v1811 = vadd.f32 %v1743, %v1794
        %v1812 = vadd.f32 %v1744, %v1794
        %v1813 = vadd.f32 %v1745, %v1794
        %v1814 = vadd.f32 %v1746, %v1794
        %v1815 = vadd.f32 %v1747, %v1794
        %v1816 = vadd.f32 %v1748, %v1794
        %v1817 = vadd.f32 %v1749, %v1794
        %v1818 = vadd.f32 %v1750, %v1794
        %v1819 = vadd.f32 %v1751, %v1794
        %v1820 = vadd.f32 %v1752, %v1794
        %v1821 = vadd.f32 %v1753, %v1794
        %v1822 = vadd.f32 %v1754, %v1794
        %v1823 = vadd.f32 %v1755, %v1794
        %v1824 = vadd.f32 %v1756, %v1794
        %v1825 = vadd.f32 %v1757, %v1794
        %v1826 = vadd.f32 %v1758, %v1794
        %v1827 = vadd.f32 %v1759, %v1794
        %v1828 = vadd.f32 %v1760, %v1794
        %v1829 = vadd.f32 %v1761, %v1794
        %v1830 = vadd.f32 %v1762, %v1794
        %v1831 = vadd.f32 %v1763, %v1794
        %v1832 = vadd.f32 %v1764, %v1794
        %v1833 = vadd.f32 %v1765, %v1794
        %v1834 = vadd.f32 %v1766, %v1794
        %v1835 = vadd.f32 %v1767, %v1794
        %v1836 = vadd.f32 %v1768, %v1794
        %v1837 = vadd.f32 %v1769, %v1794
        %v1838 = vadd.f32 %v1770, %v1794
        %v1839 = vadd.f32 %v1771, %v1794
        %v1840 = vadd.f32 %v1772, %v1794
        %v1841 = vadd.f32 %v1773, %v1794
        %v1842 = vadd.f32 %v1774, %v1794
        %v1843 = vadd.f32 %v1775, %v1794
        %v1844 = vadd.f32 %v1776, %v1794
        %v1845 = vadd.f32 %v1777, %v1794
        %v1846 = vadd.f32 %v1778, %v1794
        %v1847 = vadd.f32 %v1779, %v1794
        %v1848 = vadd.f32 %v1780, %v1794
        %v1849 = vadd.f32 %v1781, %v1794
        %v1850 = vadd.f32 %v1782, %v1794
        %v1851 = vadd.f32 %v1783, %v1794
        %v1852 = vadd.f32 %v1784, %v1794
        %v1853 = vadd.f32 %v1785, %v1794
        %v1854 = vadd.f32 %v1786, %v1794
        %v1855 = vadd.f32 %v1787, %v1794
        %v1856 = vadd.f32 %v1788, %v1794
        %v1857 = vadd.f32 %v1789, %v1794
        %v1858 = vadd.f32 %v1790, %v1794
        %v1923 = vrot.slane %v825, 7
        %vm1924 = vcmask 1041409
        %v1925 = vsel %vm1924, %v1923, %v824
        %v1926 = vrot.slane %v826, 6
        %vm1927 = vcmask 1042434
        %v1928 = vsel %vm1927, %v1926, %v1925
        %v1929 = vrot.slane %v827, 5
        %vm1930 = vcmask 1043459
        %v1931 = vsel %vm1930, %v1929, %v1928
        %v1932 = vrot.slane %v828, 4
        %vm1933 = vcmask 1044484
        %v1934 = vsel %vm1933, %v1932, %v1931
        %v1935 = vrot.slane %v829, 3
        %vm1936 = vcmask 1045509
        %v1937 = vsel %vm1936, %v1935, %v1934
        %v1938 = vrot.slane %v830, 2
        %vm1939 = vcmask 1046534
        %v1940 = vsel %vm1939, %v1938, %v1937
        %v1941 = vrot.slane %v831, 1
        %vm1942 = vcmask 1047559
        %v1943 = vsel %vm1942, %v1941, %v1940
        %v1944 = vrot.slane %v833, 7
        %v1945 = vsel %vm1924, %v1944, %v832
        %v1946 = vrot.slane %v834, 6
        %v1947 = vsel %vm1927, %v1946, %v1945
        %v1948 = vrot.slane %v835, 5
        %v1949 = vsel %vm1930, %v1948, %v1947
        %v1950 = vrot.slane %v836, 4
        %v1951 = vsel %vm1933, %v1950, %v1949
        %v1952 = vrot.slane %v837, 3
        %v1953 = vsel %vm1936, %v1952, %v1951
        %v1954 = vrot.slane %v838, 2
        %v1955 = vsel %vm1939, %v1954, %v1953
        %v1956 = vrot.slane %v839, 1
        %v1957 = vsel %vm1942, %v1956, %v1955
        %v1958 = vrot.slane %v841, 7
        %v1959 = vsel %vm1924, %v1958, %v840
        %v1960 = vrot.slane %v842, 6
        %v1961 = vsel %vm1927, %v1960, %v1959
        %v1962 = vrot.slane %v843, 5
        %v1963 = vsel %vm1930, %v1962, %v1961
        %v1964 = vrot.slane %v844, 4
        %v1965 = vsel %vm1933, %v1964, %v1963
        %v1966 = vrot.slane %v845, 3
        %v1967 = vsel %vm1936, %v1966, %v1965
        %v1968 = vrot.slane %v846, 2
        %v1969 = vsel %vm1939, %v1968, %v1967
        %v1970 = vrot.slane %v847, 1
        %v1971 = vsel %vm1942, %v1970, %v1969
        %v1972 = vrot.slane %v849, 7
        %v1973 = vsel %vm1924, %v1972, %v848
        %v1974 = vrot.slane %v850, 6
        %v1975 = vsel %vm1927, %v1974, %v1973
        %v1976 = vrot.slane %v851, 5
        %v1977 = vsel %vm1930, %v1976, %v1975
        %v1978 = vrot.slane %v852, 4
        %v1979 = vsel %vm1933, %v1978, %v1977
        %v1980 = vrot.slane %v853, 3
        %v1981 = vsel %vm1936, %v1980, %v1979
        %v1982 = vrot.slane %v854, 2
        %v1983 = vsel %vm1939, %v1982, %v1981
        %v1984 = vrot.slane %v855, 1
        %v1985 = vsel %vm1942, %v1984, %v1983
        %v1986 = vrot.slane %v857, 7
        %v1987 = vsel %vm1924, %v1986, %v856
        %v1988 = vrot.slane %v858, 6
        %v1989 = vsel %vm1927, %v1988, %v1987
        %v1990 = vrot.slane %v859, 5
        %v1991 = vsel %vm1930, %v1990, %v1989
        %v1992 = vrot.slane %v860, 4
        %v1993 = vsel %vm1933, %v1992, %v1991
        %v1994 = vrot.slane %v861, 3
        %v1995 = vsel %vm1936, %v1994, %v1993
        %v1996 = vrot.slane %v862, 2
        %v1997 = vsel %vm1939, %v1996, %v1995
        %v1998 = vrot.slane %v863, 1
        %v1999 = vsel %vm1942, %v1998, %v1997
        %v2000 = vrot.slane %v865, 7
        %v2001 = vsel %vm1924, %v2000, %v864
        %v2002 = vrot.slane %v866, 6
        %v2003 = vsel %vm1927, %v2002, %v2001
        %v2004 = vrot.slane %v867, 5
        %v2005 = vsel %vm1930, %v2004, %v2003
        %v2006 = vrot.slane %v868, 4
        %v2007 = vsel %vm1933, %v2006, %v2005
        %v2008 = vrot.slane %v869, 3
        %v2009 = vsel %vm1936, %v2008, %v2007
        %v2010 = vrot.slane %v870, 2
        %v2011 = vsel %vm1939, %v2010, %v2009
        %v2012 = vrot.slane %v871, 1
        %v2013 = vsel %vm1942, %v2012, %v2011
        %v2014 = vrot.slane %v873, 7
        %v2015 = vsel %vm1924, %v2014, %v872
        %v2016 = vrot.slane %v874, 6
        %v2017 = vsel %vm1927, %v2016, %v2015
        %v2018 = vrot.slane %v875, 5
        %v2019 = vsel %vm1930, %v2018, %v2017
        %v2020 = vrot.slane %v876, 4
        %v2021 = vsel %vm1933, %v2020, %v2019
        %v2022 = vrot.slane %v877, 3
        %v2023 = vsel %vm1936, %v2022, %v2021
        %v2024 = vrot.slane %v878, 2
        %v2025 = vsel %vm1939, %v2024, %v2023
        %v2026 = vrot.slane %v879, 1
        %v2027 = vsel %vm1942, %v2026, %v2025
        %v2028 = vrot.slane %v881, 7
        %v2029 = vsel %vm1924, %v2028, %v880
        %v2030 = vrot.slane %v882, 6
        %v2031 = vsel %vm1927, %v2030, %v2029
        %v2032 = vrot.slane %v883, 5
        %v2033 = vsel %vm1930, %v2032, %v2031
        %v2034 = vrot.slane %v884, 4
        %v2035 = vsel %vm1933, %v2034, %v2033
        %v2036 = vrot.slane %v885, 3
        %v2037 = vsel %vm1936, %v2036, %v2035
        %v2038 = vrot.slane %v886, 2
        %v2039 = vsel %vm1939, %v2038, %v2037
        %v2040 = vrot.slane %v887, 1
        %v2041 = vsel %vm1942, %v2040, %v2039
        %2050 = vadd.xlane.f32.xlu0 %v1943
        %v2051 = vpop.xlane.xlu0 %2050
        %2052 = vadd.xlane.f32.xlu0 %v1957
        %v2053 = vpop.xlane.xlu0 %2052
        %2054 = vadd.xlane.f32.xlu0 %v1971
        %v2055 = vpop.xlane.xlu0 %2054
        %2056 = vadd.xlane.f32.xlu0 %v1985
        %v2057 = vpop.xlane.xlu0 %2056
        %2058 = vadd.xlane.f32.xlu0 %v1999
        %v2059 = vpop.xlane.xlu0 %2058
        %2060 = vadd.xlane.f32.xlu0 %v2013
        %v2061 = vpop.xlane.xlu0 %2060
        %2062 = vadd.xlane.f32.xlu0 %v2027
        %v2063 = vpop.xlane.xlu0 %2062
        %2064 = vadd.xlane.f32.xlu0 %v2041
        %v2065 = vpop.xlane.xlu0 %2064
        %v2066 = vmul.f32 %v2051, %v1018
        %v2067 = vmul.f32 %v2053, %v1018
        %v2068 = vmul.f32 %v2055, %v1018
        %v2069 = vmul.f32 %v2057, %v1018
        %v2070 = vmul.f32 %v2059, %v1018
        %v2071 = vmul.f32 %v2061, %v1018
        %v2072 = vmul.f32 %v2063, %v1018
        %v2073 = vmul.f32 %v2065, %v1018
        %v2138 = vrot.slane %v1084, 7
        %v2139 = vsel %vm1924, %v2138, %v1083
        %v2140 = vrot.slane %v1085, 6
        %v2141 = vsel %vm1927, %v2140, %v2139
        %v2142 = vrot.slane %v1086, 5
        %v2143 = vsel %vm1930, %v2142, %v2141
        %v2144 = vrot.slane %v1087, 4
        %v2145 = vsel %vm1933, %v2144, %v2143
        %v2146 = vrot.slane %v1088, 3
        %v2147 = vsel %vm1936, %v2146, %v2145
        %v2148 = vrot.slane %v1089, 2
        %v2149 = vsel %vm1939, %v2148, %v2147
        %v2150 = vrot.slane %v1090, 1
        %v2151 = vsel %vm1942, %v2150, %v2149
        %v2152 = vrot.slane %v1092, 7
        %v2153 = vsel %vm1924, %v2152, %v1091
        %v2154 = vrot.slane %v1093, 6
        %v2155 = vsel %vm1927, %v2154, %v2153
        %v2156 = vrot.slane %v1094, 5
        %v2157 = vsel %vm1930, %v2156, %v2155
        %v2158 = vrot.slane %v1095, 4
        %v2159 = vsel %vm1933, %v2158, %v2157
        %v2160 = vrot.slane %v1096, 3
        %v2161 = vsel %vm1936, %v2160, %v2159
        %v2162 = vrot.slane %v1097, 2
        %v2163 = vsel %vm1939, %v2162, %v2161
        %v2164 = vrot.slane %v1098, 1
        %v2165 = vsel %vm1942, %v2164, %v2163
        %v2166 = vrot.slane %v1100, 7
        %v2167 = vsel %vm1924, %v2166, %v1099
        %v2168 = vrot.slane %v1101, 6
        %v2169 = vsel %vm1927, %v2168, %v2167
        %v2170 = vrot.slane %v1102, 5
        %v2171 = vsel %vm1930, %v2170, %v2169
        %v2172 = vrot.slane %v1103, 4
        %v2173 = vsel %vm1933, %v2172, %v2171
        %v2174 = vrot.slane %v1104, 3
        %v2175 = vsel %vm1936, %v2174, %v2173
        %v2176 = vrot.slane %v1105, 2
        %v2177 = vsel %vm1939, %v2176, %v2175
        %v2178 = vrot.slane %v1106, 1
        %v2179 = vsel %vm1942, %v2178, %v2177
        %v2180 = vrot.slane %v1108, 7
        %v2181 = vsel %vm1924, %v2180, %v1107
        %v2182 = vrot.slane %v1109, 6
        %v2183 = vsel %vm1927, %v2182, %v2181
        %v2184 = vrot.slane %v1110, 5
        %v2185 = vsel %vm1930, %v2184, %v2183
        %v2186 = vrot.slane %v1111, 4
        %v2187 = vsel %vm1933, %v2186, %v2185
        %v2188 = vrot.slane %v1112, 3
        %v2189 = vsel %vm1936, %v2188, %v2187
        %v2190 = vrot.slane %v1113, 2
        %v2191 = vsel %vm1939, %v2190, %v2189
        %v2192 = vrot.slane %v1114, 1
        %v2193 = vsel %vm1942, %v2192, %v2191
        %v2194 = vrot.slane %v1116, 7
        %v2195 = vsel %vm1924, %v2194, %v1115
        %v2196 = vrot.slane %v1117, 6
        %v2197 = vsel %vm1927, %v2196, %v2195
        %v2198 = vrot.slane %v1118, 5
        %v2199 = vsel %vm1930, %v2198, %v2197
        %v2200 = vrot.slane %v1119, 4
        %v2201 = vsel %vm1933, %v2200, %v2199
        %v2202 = vrot.slane %v1120, 3
        %v2203 = vsel %vm1936, %v2202, %v2201
        %v2204 = vrot.slane %v1121, 2
        %v2205 = vsel %vm1939, %v2204, %v2203
        %v2206 = vrot.slane %v1122, 1
        %v2207 = vsel %vm1942, %v2206, %v2205
        %v2208 = vrot.slane %v1124, 7
        %v2209 = vsel %vm1924, %v2208, %v1123
        %v2210 = vrot.slane %v1125, 6
        %v2211 = vsel %vm1927, %v2210, %v2209
        %v2212 = vrot.slane %v1126, 5
        %v2213 = vsel %vm1930, %v2212, %v2211
        %v2214 = vrot.slane %v1127, 4
        %v2215 = vsel %vm1933, %v2214, %v2213
        %v2216 = vrot.slane %v1128, 3
        %v2217 = vsel %vm1936, %v2216, %v2215
        %v2218 = vrot.slane %v1129, 2
        %v2219 = vsel %vm1939, %v2218, %v2217
        %v2220 = vrot.slane %v1130, 1
        %v2221 = vsel %vm1942, %v2220, %v2219
        %v2222 = vrot.slane %v1132, 7
        %v2223 = vsel %vm1924, %v2222, %v1131
        %v2224 = vrot.slane %v1133, 6
        %v2225 = vsel %vm1927, %v2224, %v2223
        %v2226 = vrot.slane %v1134, 5
        %v2227 = vsel %vm1930, %v2226, %v2225
        %v2228 = vrot.slane %v1135, 4
        %v2229 = vsel %vm1933, %v2228, %v2227
        %v2230 = vrot.slane %v1136, 3
        %v2231 = vsel %vm1936, %v2230, %v2229
        %v2232 = vrot.slane %v1137, 2
        %v2233 = vsel %vm1939, %v2232, %v2231
        %v2234 = vrot.slane %v1138, 1
        %v2235 = vsel %vm1942, %v2234, %v2233
        %v2236 = vrot.slane %v1140, 7
        %v2237 = vsel %vm1924, %v2236, %v1139
        %v2238 = vrot.slane %v1141, 6
        %v2239 = vsel %vm1927, %v2238, %v2237
        %v2240 = vrot.slane %v1142, 5
        %v2241 = vsel %vm1930, %v2240, %v2239
        %v2242 = vrot.slane %v1143, 4
        %v2243 = vsel %vm1933, %v2242, %v2241
        %v2244 = vrot.slane %v1144, 3
        %v2245 = vsel %vm1936, %v2244, %v2243
        %v2246 = vrot.slane %v1145, 2
        %v2247 = vsel %vm1939, %v2246, %v2245
        %v2248 = vrot.slane %v1146, 1
        %v2249 = vsel %vm1942, %v2248, %v2247
        %2258 = vadd.xlane.f32.xlu0 %v2151
        %v2259 = vpop.xlane.xlu0 %2258
        %2260 = vadd.xlane.f32.xlu0 %v2165
        %v2261 = vpop.xlane.xlu0 %2260
        %2262 = vadd.xlane.f32.xlu0 %v2179
        %v2263 = vpop.xlane.xlu0 %2262
        %2264 = vadd.xlane.f32.xlu0 %v2193
        %v2265 = vpop.xlane.xlu0 %2264
        %2266 = vadd.xlane.f32.xlu0 %v2207
        %v2267 = vpop.xlane.xlu0 %2266
        %2268 = vadd.xlane.f32.xlu0 %v2221
        %v2269 = vpop.xlane.xlu0 %2268
        %2270 = vadd.xlane.f32.xlu0 %v2235
        %v2271 = vpop.xlane.xlu0 %2270
        %2272 = vadd.xlane.f32.xlu0 %v2249
        %v2273 = vpop.xlane.xlu0 %2272
        %v2274 = vmul.f32 %v2259, %v1018
        %v2275 = vmul.f32 %v2261, %v1018
        %v2276 = vmul.f32 %v2263, %v1018
        %v2277 = vmul.f32 %v2265, %v1018
        %v2278 = vmul.f32 %v2267, %v1018
        %v2279 = vmul.f32 %v2269, %v1018
        %v2280 = vmul.f32 %v2271, %v1018
        %v2281 = vmul.f32 %v2273, %v1018
        %v2282 = vmul.f32 %v2066, %v2066
        %v2283 = vmul.f32 %v2067, %v2067
        %v2284 = vmul.f32 %v2068, %v2068
        %v2285 = vmul.f32 %v2069, %v2069
        %v2286 = vmul.f32 %v2070, %v2070
        %v2287 = vmul.f32 %v2071, %v2071
        %v2288 = vmul.f32 %v2072, %v2072
        %v2289 = vmul.f32 %v2073, %v2073
        %v2290 = vsub.f32 %v2274, %v2282
        %v2291 = vsub.f32 %v2275, %v2283
        %v2292 = vsub.f32 %v2276, %v2284
        %v2293 = vsub.f32 %v2277, %v2285
        %v2294 = vsub.f32 %v2278, %v2286
        %v2295 = vsub.f32 %v2279, %v2287
        %v2296 = vsub.f32 %v2280, %v2288
        %v2297 = vsub.f32 %v2281, %v2289
        %v2306 = vrot.slane %v2066, 1
        %v2307 = vrot.slane %v2066, 2
        %v2308 = vrot.slane %v2066, 3
        %v2309 = vrot.slane %v2066, 4
        %v2310 = vrot.slane %v2066, 5
        %v2311 = vrot.slane %v2066, 6
        %v2312 = vrot.slane %v2066, 7
        %v2313 = vrot.slane %v2067, 1
        %v2314 = vrot.slane %v2067, 2
        %v2315 = vrot.slane %v2067, 3
        %v2316 = vrot.slane %v2067, 4
        %v2317 = vrot.slane %v2067, 5
        %v2318 = vrot.slane %v2067, 6
        %v2319 = vrot.slane %v2067, 7
        %v2320 = vrot.slane %v2068, 1
        %v2321 = vrot.slane %v2068, 2
        %v2322 = vrot.slane %v2068, 3
        %v2323 = vrot.slane %v2068, 4
        %v2324 = vrot.slane %v2068, 5
        %v2325 = vrot.slane %v2068, 6
        %v2326 = vrot.slane %v2068, 7
        %v2327 = vrot.slane %v2069, 1
        %v2328 = vrot.slane %v2069, 2
        %v2329 = vrot.slane %v2069, 3
        %v2330 = vrot.slane %v2069, 4
        %v2331 = vrot.slane %v2069, 5
        %v2332 = vrot.slane %v2069, 6
        %v2333 = vrot.slane %v2069, 7
        %v2334 = vrot.slane %v2070, 1
        %v2335 = vrot.slane %v2070, 2
        %v2336 = vrot.slane %v2070, 3
        %v2337 = vrot.slane %v2070, 4
        %v2338 = vrot.slane %v2070, 5
        %v2339 = vrot.slane %v2070, 6
        %v2340 = vrot.slane %v2070, 7
        %v2341 = vrot.slane %v2071, 1
        %v2342 = vrot.slane %v2071, 2
        %v2343 = vrot.slane %v2071, 3
        %v2344 = vrot.slane %v2071, 4
        %v2345 = vrot.slane %v2071, 5
        %v2346 = vrot.slane %v2071, 6
        %v2347 = vrot.slane %v2071, 7
        %v2348 = vrot.slane %v2072, 1
        %v2349 = vrot.slane %v2072, 2
        %v2350 = vrot.slane %v2072, 3
        %v2351 = vrot.slane %v2072, 4
        %v2352 = vrot.slane %v2072, 5
        %v2353 = vrot.slane %v2072, 6
        %v2354 = vrot.slane %v2072, 7
        %v2355 = vrot.slane %v2073, 1
        %v2356 = vrot.slane %v2073, 2
        %v2357 = vrot.slane %v2073, 3
        %v2358 = vrot.slane %v2073, 4
        %v2359 = vrot.slane %v2073, 5
        %v2360 = vrot.slane %v2073, 6
        %v2361 = vrot.slane %v2073, 7
        %v2426 = vsub.f32 %v824, %v2066
        %v2427 = vsub.f32 %v825, %v2306
        %v2428 = vsub.f32 %v826, %v2307
        %v2429 = vsub.f32 %v827, %v2308
        %v2430 = vsub.f32 %v828, %v2309
        %v2431 = vsub.f32 %v829, %v2310
        %v2432 = vsub.f32 %v830, %v2311
        %v2433 = vsub.f32 %v831, %v2312
        %v2434 = vsub.f32 %v832, %v2067
        %v2435 = vsub.f32 %v833, %v2313
        %v2436 = vsub.f32 %v834, %v2314
        %v2437 = vsub.f32 %v835, %v2315
        %v2438 = vsub.f32 %v836, %v2316
        %v2439 = vsub.f32 %v837, %v2317
        %v2440 = vsub.f32 %v838, %v2318
        %v2441 = vsub.f32 %v839, %v2319
        %v2442 = vsub.f32 %v840, %v2068
        %v2443 = vsub.f32 %v841, %v2320
        %v2444 = vsub.f32 %v842, %v2321
        %v2445 = vsub.f32 %v843, %v2322
        %v2446 = vsub.f32 %v844, %v2323
        %v2447 = vsub.f32 %v845, %v2324
        %v2448 = vsub.f32 %v846, %v2325
        %v2449 = vsub.f32 %v847, %v2326
        %v2450 = vsub.f32 %v848, %v2069
        %v2451 = vsub.f32 %v849, %v2327
        %v2452 = vsub.f32 %v850, %v2328
        %v2453 = vsub.f32 %v851, %v2329
        %v2454 = vsub.f32 %v852, %v2330
        %v2455 = vsub.f32 %v853, %v2331
        %v2456 = vsub.f32 %v854, %v2332
        %v2457 = vsub.f32 %v855, %v2333
        %v2458 = vsub.f32 %v856, %v2070
        %v2459 = vsub.f32 %v857, %v2334
        %v2460 = vsub.f32 %v858, %v2335
        %v2461 = vsub.f32 %v859, %v2336
        %v2462 = vsub.f32 %v860, %v2337
        %v2463 = vsub.f32 %v861, %v2338
        %v2464 = vsub.f32 %v862, %v2339
        %v2465 = vsub.f32 %v863, %v2340
        %v2466 = vsub.f32 %v864, %v2071
        %v2467 = vsub.f32 %v865, %v2341
        %v2468 = vsub.f32 %v866, %v2342
        %v2469 = vsub.f32 %v867, %v2343
        %v2470 = vsub.f32 %v868, %v2344
        %v2471 = vsub.f32 %v869, %v2345
        %v2472 = vsub.f32 %v870, %v2346
        %v2473 = vsub.f32 %v871, %v2347
        %v2474 = vsub.f32 %v872, %v2072
        %v2475 = vsub.f32 %v873, %v2348
        %v2476 = vsub.f32 %v874, %v2349
        %v2477 = vsub.f32 %v875, %v2350
        %v2478 = vsub.f32 %v876, %v2351
        %v2479 = vsub.f32 %v877, %v2352
        %v2480 = vsub.f32 %v878, %v2353
        %v2481 = vsub.f32 %v879, %v2354
        %v2482 = vsub.f32 %v880, %v2073
        %v2483 = vsub.f32 %v881, %v2355
        %v2484 = vsub.f32 %v882, %v2356
        %v2485 = vsub.f32 %v883, %v2357
        %v2486 = vsub.f32 %v884, %v2358
        %v2487 = vsub.f32 %v885, %v2359
        %v2488 = vsub.f32 %v886, %v2360
        %v2489 = vsub.f32 %v887, %v2361
        %v2490 = vadd.f32 %v2290, 1e-12
        %v2491 = vadd.f32 %v2291, 1e-12
        %v2492 = vadd.f32 %v2292, 1e-12
        %v2493 = vadd.f32 %v2293, 1e-12
        %v2494 = vadd.f32 %v2294, 1e-12
        %v2495 = vadd.f32 %v2295, 1e-12
        %v2496 = vadd.f32 %v2296, 1e-12
        %v2497 = vadd.f32 %v2297, 1e-12
        %v2498 = vrsqrt.pop %v2490
        %v2499 = vrsqrt.pop %v2491
        %v2500 = vrsqrt.pop %v2492
        %v2501 = vrsqrt.pop %v2493
        %v2502 = vrsqrt.pop %v2494
        %v2503 = vrsqrt.pop %v2495
        %v2504 = vrsqrt.pop %v2496
        %v2505 = vrsqrt.pop %v2497
        %v2514 = vrot.slane %v2498, 1
        %v2515 = vrot.slane %v2498, 2
        %v2516 = vrot.slane %v2498, 3
        %v2517 = vrot.slane %v2498, 4
        %v2518 = vrot.slane %v2498, 5
        %v2519 = vrot.slane %v2498, 6
        %v2520 = vrot.slane %v2498, 7
        %v2521 = vrot.slane %v2499, 1
        %v2522 = vrot.slane %v2499, 2
        %v2523 = vrot.slane %v2499, 3
        %v2524 = vrot.slane %v2499, 4
        %v2525 = vrot.slane %v2499, 5
        %v2526 = vrot.slane %v2499, 6
        %v2527 = vrot.slane %v2499, 7
        %v2528 = vrot.slane %v2500, 1
        %v2529 = vrot.slane %v2500, 2
        %v2530 = vrot.slane %v2500, 3
        %v2531 = vrot.slane %v2500, 4
        %v2532 = vrot.slane %v2500, 5
        %v2533 = vrot.slane %v2500, 6
        %v2534 = vrot.slane %v2500, 7
        %v2535 = vrot.slane %v2501, 1
        %v2536 = vrot.slane %v2501, 2
        %v2537 = vrot.slane %v2501, 3
        %v2538 = vrot.slane %v2501, 4
        %v2539 = vrot.slane %v2501, 5
        %v2540 = vrot.slane %v2501, 6
        %v2541 = vrot.slane %v2501, 7
        %v2542 = vrot.slane %v2502, 1
        %v2543 = vrot.slane %v2502, 2
        %v2544 = vrot.slane %v2502, 3
        %v2545 = vrot.slane %v2502, 4
        %v2546 = vrot.slane %v2502, 5
        %v2547 = vrot.slane %v2502, 6
        %v2548 = vrot.slane %v2502, 7
        %v2549 = vrot.slane %v2503, 1
        %v2550 = vrot.slane %v2503, 2
        %v2551 = vrot.slane %v2503, 3
        %v2552 = vrot.slane %v2503, 4
        %v2553 = vrot.slane %v2503, 5
        %v2554 = vrot.slane %v2503, 6
        %v2555 = vrot.slane %v2503, 7
        %v2556 = vrot.slane %v2504, 1
        %v2557 = vrot.slane %v2504, 2
        %v2558 = vrot.slane %v2504, 3
        %v2559 = vrot.slane %v2504, 4
        %v2560 = vrot.slane %v2504, 5
        %v2561 = vrot.slane %v2504, 6
        %v2562 = vrot.slane %v2504, 7
        %v2563 = vrot.slane %v2505, 1
        %v2564 = vrot.slane %v2505, 2
        %v2565 = vrot.slane %v2505, 3
        %v2566 = vrot.slane %v2505, 4
        %v2567 = vrot.slane %v2505, 5
        %v2568 = vrot.slane %v2505, 6
        %v2569 = vrot.slane %v2505, 7
        %v2634 = vmul.f32 %v2426, %v2498
        %v2635 = vmul.f32 %v2427, %v2514
        %v2636 = vmul.f32 %v2428, %v2515
        %v2637 = vmul.f32 %v2429, %v2516
        %v2638 = vmul.f32 %v2430, %v2517
        %v2639 = vmul.f32 %v2431, %v2518
        %v2640 = vmul.f32 %v2432, %v2519
        %v2641 = vmul.f32 %v2433, %v2520
        %v2642 = vmul.f32 %v2434, %v2499
        %v2643 = vmul.f32 %v2435, %v2521
        %v2644 = vmul.f32 %v2436, %v2522
        %v2645 = vmul.f32 %v2437, %v2523
        %v2646 = vmul.f32 %v2438, %v2524
        %v2647 = vmul.f32 %v2439, %v2525
        %v2648 = vmul.f32 %v2440, %v2526
        %v2649 = vmul.f32 %v2441, %v2527
        %v2650 = vmul.f32 %v2442, %v2500
        %v2651 = vmul.f32 %v2443, %v2528
        %v2652 = vmul.f32 %v2444, %v2529
        %v2653 = vmul.f32 %v2445, %v2530
        %v2654 = vmul.f32 %v2446, %v2531
        %v2655 = vmul.f32 %v2447, %v2532
        %v2656 = vmul.f32 %v2448, %v2533
        %v2657 = vmul.f32 %v2449, %v2534
        %v2658 = vmul.f32 %v2450, %v2501
        %v2659 = vmul.f32 %v2451, %v2535
        %v2660 = vmul.f32 %v2452, %v2536
        %v2661 = vmul.f32 %v2453, %v2537
        %v2662 = vmul.f32 %v2454, %v2538
        %v2663 = vmul.f32 %v2455, %v2539
        %v2664 = vmul.f32 %v2456, %v2540
        %v2665 = vmul.f32 %v2457, %v2541
        %v2666 = vmul.f32 %v2458, %v2502
        %v2667 = vmul.f32 %v2459, %v2542
        %v2668 = vmul.f32 %v2460, %v2543
        %v2669 = vmul.f32 %v2461, %v2544
        %v2670 = vmul.f32 %v2462, %v2545
        %v2671 = vmul.f32 %v2463, %v2546
        %v2672 = vmul.f32 %v2464, %v2547
        %v2673 = vmul.f32 %v2465, %v2548
        %v2674 = vmul.f32 %v2466, %v2503
        %v2675 = vmul.f32 %v2467, %v2549
        %v2676 = vmul.f32 %v2468, %v2550
        %v2677 = vmul.f32 %v2469, %v2551
        %v2678 = vmul.f32 %v2470, %v2552
        %v2679 = vmul.f32 %v2471, %v2553
        %v2680 = vmul.f32 %v2472, %v2554
        %v2681 = vmul.f32 %v2473, %v2555
        %v2682 = vmul.f32 %v2474, %v2504
        %v2683 = vmul.f32 %v2475, %v2556
        %v2684 = vmul.f32 %v2476, %v2557
        %v2685 = vmul.f32 %v2477, %v2558
        %v2686 = vmul.f32 %v2478, %v2559
        %v2687 = vmul.f32 %v2479, %v2560
        %v2688 = vmul.f32 %v2480, %v2561
        %v2689 = vmul.f32 %v2481, %v2562
        %v2690 = vmul.f32 %v2482, %v2505
        %v2691 = vmul.f32 %v2483, %v2563
        %v2692 = vmul.f32 %v2484, %v2564
        %v2693 = vmul.f32 %v2485, %v2565
        %v2694 = vmul.f32 %v2486, %v2566
        %v2695 = vmul.f32 %v2487, %v2567
        %v2696 = vmul.f32 %v2488, %v2568
        %v2697 = vmul.f32 %v2489, %v2569
        %v2698 = vmul.f32 %v2634, %v1726
        %v2699 = vmul.f32 %v2635, %v1726
        %v2700 = vmul.f32 %v2636, %v1726
        %v2701 = vmul.f32 %v2637, %v1726
        %v2702 = vmul.f32 %v2638, %v1726
        %v2703 = vmul.f32 %v2639, %v1726
        %v2704 = vmul.f32 %v2640, %v1726
        %v2705 = vmul.f32 %v2641, %v1726
        %v2706 = vmul.f32 %v2642, %v1726
        %v2707 = vmul.f32 %v2643, %v1726
        %v2708 = vmul.f32 %v2644, %v1726
        %v2709 = vmul.f32 %v2645, %v1726
        %v2710 = vmul.f32 %v2646, %v1726
        %v2711 = vmul.f32 %v2647, %v1726
        %v2712 = vmul.f32 %v2648, %v1726
        %v2713 = vmul.f32 %v2649, %v1726
        %v2714 = vmul.f32 %v2650, %v1726
        %v2715 = vmul.f32 %v2651, %v1726
        %v2716 = vmul.f32 %v2652, %v1726
        %v2717 = vmul.f32 %v2653, %v1726
        %v2718 = vmul.f32 %v2654, %v1726
        %v2719 = vmul.f32 %v2655, %v1726
        %v2720 = vmul.f32 %v2656, %v1726
        %v2721 = vmul.f32 %v2657, %v1726
        %v2722 = vmul.f32 %v2658, %v1726
        %v2723 = vmul.f32 %v2659, %v1726
        %v2724 = vmul.f32 %v2660, %v1726
        %v2725 = vmul.f32 %v2661, %v1726
        %v2726 = vmul.f32 %v2662, %v1726
        %v2727 = vmul.f32 %v2663, %v1726
        %v2728 = vmul.f32 %v2664, %v1726
        %v2729 = vmul.f32 %v2665, %v1726
        %v2730 = vmul.f32 %v2666, %v1726
        %v2731 = vmul.f32 %v2667, %v1726
        %v2732 = vmul.f32 %v2668, %v1726
        %v2733 = vmul.f32 %v2669, %v1726
        %v2734 = vmul.f32 %v2670, %v1726
        %v2735 = vmul.f32 %v2671, %v1726
        %v2736 = vmul.f32 %v2672, %v1726
        %v2737 = vmul.f32 %v2673, %v1726
        %v2738 = vmul.f32 %v2674, %v1726
        %v2739 = vmul.f32 %v2675, %v1726
        %v2740 = vmul.f32 %v2676, %v1726
        %v2741 = vmul.f32 %v2677, %v1726
        %v2742 = vmul.f32 %v2678, %v1726
        %v2743 = vmul.f32 %v2679, %v1726
        %v2744 = vmul.f32 %v2680, %v1726
        %v2745 = vmul.f32 %v2681, %v1726
        %v2746 = vmul.f32 %v2682, %v1726
        %v2747 = vmul.f32 %v2683, %v1726
        %v2748 = vmul.f32 %v2684, %v1726
        %v2749 = vmul.f32 %v2685, %v1726
        %v2750 = vmul.f32 %v2686, %v1726
        %v2751 = vmul.f32 %v2687, %v1726
        %v2752 = vmul.f32 %v2688, %v1726
        %v2753 = vmul.f32 %v2689, %v1726
        %v2754 = vmul.f32 %v2690, %v1726
        %v2755 = vmul.f32 %v2691, %v1726
        %v2756 = vmul.f32 %v2692, %v1726
        %v2757 = vmul.f32 %v2693, %v1726
        %v2758 = vmul.f32 %v2694, %v1726
        %v2759 = vmul.f32 %v2695, %v1726
        %v2760 = vmul.f32 %v2696, %v1726
        %v2761 = vmul.f32 %v2697, %v1726
        %v2762 = vadd.f32 %v2698, %v1794
        %v2763 = vadd.f32 %v2699, %v1794
        %v2764 = vadd.f32 %v2700, %v1794
        %v2765 = vadd.f32 %v2701, %v1794
        %v2766 = vadd.f32 %v2702, %v1794
        %v2767 = vadd.f32 %v2703, %v1794
        %v2768 = vadd.f32 %v2704, %v1794
        %v2769 = vadd.f32 %v2705, %v1794
        %v2770 = vadd.f32 %v2706, %v1794
        %v2771 = vadd.f32 %v2707, %v1794
        %v2772 = vadd.f32 %v2708, %v1794
        %v2773 = vadd.f32 %v2709, %v1794
        %v2774 = vadd.f32 %v2710, %v1794
        %v2775 = vadd.f32 %v2711, %v1794
        %v2776 = vadd.f32 %v2712, %v1794
        %v2777 = vadd.f32 %v2713, %v1794
        %v2778 = vadd.f32 %v2714, %v1794
        %v2779 = vadd.f32 %v2715, %v1794
        %v2780 = vadd.f32 %v2716, %v1794
        %v2781 = vadd.f32 %v2717, %v1794
        %v2782 = vadd.f32 %v2718, %v1794
        %v2783 = vadd.f32 %v2719, %v1794
        %v2784 = vadd.f32 %v2720, %v1794
        %v2785 = vadd.f32 %v2721, %v1794
        %v2786 = vadd.f32 %v2722, %v1794
        %v2787 = vadd.f32 %v2723, %v1794
        %v2788 = vadd.f32 %v2724, %v1794
        %v2789 = vadd.f32 %v2725, %v1794
        %v2790 = vadd.f32 %v2726, %v1794
        %v2791 = vadd.f32 %v2727, %v1794
        %v2792 = vadd.f32 %v2728, %v1794
        %v2793 = vadd.f32 %v2729, %v1794
        %v2794 = vadd.f32 %v2730, %v1794
        %v2795 = vadd.f32 %v2731, %v1794
        %v2796 = vadd.f32 %v2732, %v1794
        %v2797 = vadd.f32 %v2733, %v1794
        %v2798 = vadd.f32 %v2734, %v1794
        %v2799 = vadd.f32 %v2735, %v1794
        %v2800 = vadd.f32 %v2736, %v1794
        %v2801 = vadd.f32 %v2737, %v1794
        %v2802 = vadd.f32 %v2738, %v1794
        %v2803 = vadd.f32 %v2739, %v1794
        %v2804 = vadd.f32 %v2740, %v1794
        %v2805 = vadd.f32 %v2741, %v1794
        %v2806 = vadd.f32 %v2742, %v1794
        %v2807 = vadd.f32 %v2743, %v1794
        %v2808 = vadd.f32 %v2744, %v1794
        %v2809 = vadd.f32 %v2745, %v1794
        %v2810 = vadd.f32 %v2746, %v1794
        %v2811 = vadd.f32 %v2747, %v1794
        %v2812 = vadd.f32 %v2748, %v1794
        %v2813 = vadd.f32 %v2749, %v1794
        %v2814 = vadd.f32 %v2750, %v1794
        %v2815 = vadd.f32 %v2751, %v1794
        %v2816 = vadd.f32 %v2752, %v1794
        %v2817 = vadd.f32 %v2753, %v1794
        %v2818 = vadd.f32 %v2754, %v1794
        %v2819 = vadd.f32 %v2755, %v1794
        %v2820 = vadd.f32 %v2756, %v1794
        %v2821 = vadd.f32 %v2757, %v1794
        %v2822 = vadd.f32 %v2758, %v1794
        %v2823 = vadd.f32 %v2759, %v1794
        %v2824 = vadd.f32 %v2760, %v1794
        %v2825 = vadd.f32 %v2761, %v1794
        %v2826 = vpack.c.bf16 %v1796, %v1795
        %v2827 = vpack.c.bf16 %v1798, %v1797
        %v2828 = vpack.c.bf16 %v1800, %v1799
        %v2829 = vpack.c.bf16 %v1802, %v1801
        %v2830 = vpack.c.bf16 %v1804, %v1803
        %v2831 = vpack.c.bf16 %v1806, %v1805
        %v2832 = vpack.c.bf16 %v1808, %v1807
        %v2833 = vpack.c.bf16 %v1810, %v1809
        %v2834 = vpack.c.bf16 %v1812, %v1811
        %v2835 = vpack.c.bf16 %v1814, %v1813
        %v2836 = vpack.c.bf16 %v1816, %v1815
        %v2837 = vpack.c.bf16 %v1818, %v1817
        %v2838 = vpack.c.bf16 %v1820, %v1819
        %v2839 = vpack.c.bf16 %v1822, %v1821
        %v2840 = vpack.c.bf16 %v1824, %v1823
        %v2841 = vpack.c.bf16 %v1826, %v1825
        %v2842 = vpack.c.bf16 %v1828, %v1827
        %v2843 = vpack.c.bf16 %v1830, %v1829
        %v2844 = vpack.c.bf16 %v1832, %v1831
        %v2845 = vpack.c.bf16 %v1834, %v1833
        %v2846 = vpack.c.bf16 %v1836, %v1835
        %v2847 = vpack.c.bf16 %v1838, %v1837
        %v2848 = vpack.c.bf16 %v1840, %v1839
        %v2849 = vpack.c.bf16 %v1842, %v1841
        %v2850 = vpack.c.bf16 %v1844, %v1843
        %v2851 = vpack.c.bf16 %v1846, %v1845
        %v2852 = vpack.c.bf16 %v1848, %v1847
        %v2853 = vpack.c.bf16 %v1850, %v1849
        %v2854 = vpack.c.bf16 %v1852, %v1851
        %v2855 = vpack.c.bf16 %v1854, %v1853
        %v2856 = vpack.c.bf16 %v1856, %v1855
        %v2857 = vpack.c.bf16 %v1858, %v1857
        %v2858 = vld [vmem:[#allocation7] sm:$0xff]
        %v2859 = vld [vmem:[#allocation7 + $0x8] sm:$0xff]
        %v2860 = vld [vmem:[#allocation7 + $0x10] sm:$0xff]
        %v2861 = vld [vmem:[#allocation7 + $0x18] sm:$0xff]
        %v2862 = vld [vmem:[#allocation7 + $0x20] sm:$0xff]
        %v2863 = vld [vmem:[#allocation7 + $0x28] sm:$0xff]
        %v2864 = vld [vmem:[#allocation7 + $0x30] sm:$0xff]
        %v2865 = vld [vmem:[#allocation7 + $0x38] sm:$0xff]
        %v2866 = vld [vmem:[#allocation7 + $0x40] sm:$0xff]
        %v2867 = vld [vmem:[#allocation7 + $0x48] sm:$0xff]
        %v2868 = vld [vmem:[#allocation7 + $0x50] sm:$0xff]
        %v2869 = vld [vmem:[#allocation7 + $0x58] sm:$0xff]
        %v2870 = vld [vmem:[#allocation7 + $0x60] sm:$0xff]
        %v2871 = vld [vmem:[#allocation7 + $0x68] sm:$0xff]
        %v2872 = vld [vmem:[#allocation7 + $0x70] sm:$0xff]
        %v2873 = vld [vmem:[#allocation7 + $0x78] sm:$0xff]
        %v2874 = vld [vmem:[%s5] sm:$0x3]
        %v2876 = vlaneseq
        %v2877 = vshrl.u32 %v2876, 7
        %v2878 = vsub.s32 0, %v2877
        %v2879 = vrot.slane %v2874, %v2878
        %v2880 = vlaneseq
        %v2881 = vshrl.u32 %v2880, 7
        %v2882 = vsub.s32 1, %v2881
        %v2883 = vrot.slane %v2874, %v2882
        %v2902 = vunpack.c.l.b16 %v2858
        %v2903 = vunpack.c.h.b16 %v2858
        %v2904 = vunpack.c.l.b16 %v2859
        %v2905 = vunpack.c.h.b16 %v2859
        %v2906 = vunpack.c.l.b16 %v2860
        %v2907 = vunpack.c.h.b16 %v2860
        %v2908 = vunpack.c.l.b16 %v2861
        %v2909 = vunpack.c.h.b16 %v2861
        %v2910 = vunpack.c.l.b16 %v2862
        %v2911 = vunpack.c.h.b16 %v2862
        %v2912 = vunpack.c.l.b16 %v2863
        %v2913 = vunpack.c.h.b16 %v2863
        %v2914 = vunpack.c.l.b16 %v2864
        %v2915 = vunpack.c.h.b16 %v2864
        %v2916 = vunpack.c.l.b16 %v2865
        %v2917 = vunpack.c.h.b16 %v2865
        %v2918 = vunpack.c.l.b16 %v2866
        %v2919 = vunpack.c.h.b16 %v2866
        %v2920 = vunpack.c.l.b16 %v2867
        %v2921 = vunpack.c.h.b16 %v2867
        %v2922 = vunpack.c.l.b16 %v2868
        %v2923 = vunpack.c.h.b16 %v2868
        %v2924 = vunpack.c.l.b16 %v2869
        %v2925 = vunpack.c.h.b16 %v2869
        %v2926 = vunpack.c.l.b16 %v2870
        %v2927 = vunpack.c.h.b16 %v2870
        %v2928 = vunpack.c.l.b16 %v2871
        %v2929 = vunpack.c.h.b16 %v2871
        %v2930 = vunpack.c.l.b16 %v2872
        %v2931 = vunpack.c.h.b16 %v2872
        %v2932 = vunpack.c.l.b16 %v2873
        %v2933 = vunpack.c.h.b16 %v2873
        %v2934 = vpack.c.b16 %v2904, %v2902
        %v2935 = vpack.c.b16 %v2905, %v2903
        %v2936 = vpack.c.b16 %v2908, %v2906
        %v2937 = vpack.c.b16 %v2909, %v2907
        %v2938 = vpack.c.b16 %v2912, %v2910
        %v2939 = vpack.c.b16 %v2913, %v2911
        %v2940 = vpack.c.b16 %v2916, %v2914
        %v2941 = vpack.c.b16 %v2917, %v2915
        %v2942 = vpack.c.b16 %v2920, %v2918
        %v2943 = vpack.c.b16 %v2921, %v2919
        %v2944 = vpack.c.b16 %v2924, %v2922
        %v2945 = vpack.c.b16 %v2925, %v2923
        %v2946 = vpack.c.b16 %v2928, %v2926
        %v2947 = vpack.c.b16 %v2929, %v2927
        %v2948 = vpack.c.b16 %v2932, %v2930
        %v2949 = vpack.c.b16 %v2933, %v2931
        %2966 = vmatprep.subr.bf16.mxu0 %v2949
        %2967 = vmatpush1.bf16.msra.mxu0 %v2948
        %2968 = vmatprep.subr.bf16.mxu0 %v2947
        %2969 = vmatpush1.bf16.msra.mxu0 %v2946
        %2970 = vmatprep.subr.bf16.mxu0 %v2945
        %2971 = vmatpush1.bf16.msra.mxu0 %v2944
        %2972 = vmatprep.subr.bf16.mxu0 %v2943
        %2973 = vmatpush1.bf16.msra.mxu0 %v2942
        %2974 = vmatprep.subr.bf16.mxu0 %v2941
        %2975 = vmatpush1.bf16.msra.mxu0 %v2940
        %2976 = vmatprep.subr.bf16.mxu0 %v2939
        %2977 = vmatpush1.bf16.msra.mxu0 %v2938
        %2978 = vmatprep.subr.bf16.mxu0 %v2937
        %2979 = vmatpush1.bf16.msra.mxu0 %v2936
        %2980 = vmatprep.subr.bf16.mxu0 %v2935
        %2981 = vmatpush1.bf16.msra.mxu0 %v2934
        %2982 = vmatprep.subr.bf16.mxu0 0
        %2983 = vmatpush2.bf16.msra.mxu0 0
        %2984 = vmatprep.subr.bf16.mxu0 0
        %2985 = vmatpush2.bf16.msra.mxu0 0
        %2986 = vmatprep.subr.bf16.mxu0 0
        %2987 = vmatpush2.bf16.msra.mxu0 0
        %2988 = vmatprep.subr.bf16.mxu0 0
        %2989 = vmatpush2.bf16.msra.mxu0 0
        %2990 = vmatprep.subr.bf16.mxu0 0
        %2991 = vmatpush2.bf16.msra.mxu0 0
        %2992 = vmatprep.subr.bf16.mxu0 0
        %2993 = vmatpush2.bf16.msra.mxu0 0
        %2994 = vmatprep.subr.bf16.mxu0 0
        %2995 = vmatpush2.bf16.msra.mxu0 0
        %2996 = vmatprep.subr.bf16.mxu0 0
        %2997 = vmatpush2.bf16.msra.mxu0 0
        %2998 = vmatprep.mubr.bf16.mxu0 0
        %2999 = vmatmul.mubr.bf16.gmra.mxu0 %v2826
        %v3000 = vpop.f32.mrf.mxu0
        %v3001 = vadd.f32 %v2879, %v3000
        %v3002 = vpop.f32.mrf.mxu0
        %v3003 = vadd.f32 %v2883, %v3002
        %v3004 = vpop.f32.mrf.mxu0
        %v3005 = vadd.f32 %v2879, %v3004
        %v3006 = vpop.f32.mrf.mxu0
        %v3007 = vadd.f32 %v2883, %v3006
        %3008 = vmatprep.mubr.bf16.mxu0 0
        %3009 = vmatmul.mubr.bf16.gmra.mxu0 %v2827
        %v3010 = vpop.f32.mrf.mxu0
        %v3011 = vadd.f32 %v2879, %v3010
        %v3012 = vpop.f32.mrf.mxu0
        %v3013 = vadd.f32 %v2883, %v3012
        %v3014 = vpop.f32.mrf.mxu0
        %v3015 = vadd.f32 %v2879, %v3014
        %v3016 = vpop.f32.mrf.mxu0
        %v3017 = vadd.f32 %v2883, %v3016
        %3018 = vmatprep.mubr.bf16.mxu0 0
        %3019 = vmatmul.mubr.bf16.gmra.mxu0 %v2828
        %v3020 = vpop.f32.mrf.mxu0
        %v3021 = vadd.f32 %v2879, %v3020
        %v3022 = vpop.f32.mrf.mxu0
        %v3023 = vadd.f32 %v2883, %v3022
        %v3024 = vpop.f32.mrf.mxu0
        %v3025 = vadd.f32 %v2879, %v3024
        %v3026 = vpop.f32.mrf.mxu0
        %v3027 = vadd.f32 %v2883, %v3026
        %3028 = vmatprep.mubr.bf16.mxu0 0
        %3029 = vmatmul.mubr.bf16.gmra.mxu0 %v2829
        %v3030 = vpop.f32.mrf.mxu0
        %v3031 = vadd.f32 %v2879, %v3030
        %v3032 = vpop.f32.mrf.mxu0
        %v3033 = vadd.f32 %v2883, %v3032
        %v3034 = vpop.f32.mrf.mxu0
        %v3035 = vadd.f32 %v2879, %v3034
        %v3036 = vpop.f32.mrf.mxu0
        %v3037 = vadd.f32 %v2883, %v3036
        %3038 = vmatprep.mubr.bf16.mxu0 0
        %3039 = vmatmul.mubr.bf16.gmra.mxu0 %v2830
        %v3040 = vpop.f32.mrf.mxu0
        %v3041 = vadd.f32 %v2879, %v3040
        %v3042 = vpop.f32.mrf.mxu0
        %v3043 = vadd.f32 %v2883, %v3042
        %v3044 = vpop.f32.mrf.mxu0
        %v3045 = vadd.f32 %v2879, %v3044
        %v3046 = vpop.f32.mrf.mxu0
        %v3047 = vadd.f32 %v2883, %v3046
        %3048 = vmatprep.mubr.bf16.mxu0 0
        %3049 = vmatmul.mubr.bf16.gmra.mxu0 %v2831
        %v3050 = vpop.f32.mrf.mxu0
        %v3051 = vadd.f32 %v2879, %v3050
        %v3052 = vpop.f32.mrf.mxu0
        %v3053 = vadd.f32 %v2883, %v3052
        %v3054 = vpop.f32.mrf.mxu0
        %v3055 = vadd.f32 %v2879, %v3054
        %v3056 = vpop.f32.mrf.mxu0
        %v3057 = vadd.f32 %v2883, %v3056
        %3058 = vmatprep.mubr.bf16.mxu0 0
        %3059 = vmatmul.mubr.bf16.gmra.mxu0 %v2832
        %v3060 = vpop.f32.mrf.mxu0
        %v3061 = vadd.f32 %v2879, %v3060
        %v3062 = vpop.f32.mrf.mxu0
        %v3063 = vadd.f32 %v2883, %v3062
        %v3064 = vpop.f32.mrf.mxu0
        %v3065 = vadd.f32 %v2879, %v3064
        %v3066 = vpop.f32.mrf.mxu0
        %v3067 = vadd.f32 %v2883, %v3066
        %3068 = vmatprep.mubr.bf16.mxu0 0
        %3069 = vmatmul.mubr.bf16.gmra.mxu0 %v2833
        %v3070 = vpop.f32.mrf.mxu0
        %v3071 = vadd.f32 %v2879, %v3070
        %v3072 = vpop.f32.mrf.mxu0
        %v3073 = vadd.f32 %v2883, %v3072
        %v3074 = vpop.f32.mrf.mxu0
        %v3075 = vadd.f32 %v2879, %v3074
        %v3076 = vpop.f32.mrf.mxu0
        %v3077 = vadd.f32 %v2883, %v3076
        %3078 = vmatprep.mubr.bf16.mxu0 0
        %3079 = vmatmul.mubr.bf16.gmra.mxu0 %v2834
        %v3080 = vpop.f32.mrf.mxu0
        %v3081 = vadd.f32 %v2879, %v3080
        %v3082 = vpop.f32.mrf.mxu0
        %v3083 = vadd.f32 %v2883, %v3082
        %v3084 = vpop.f32.mrf.mxu0
        %v3085 = vadd.f32 %v2879, %v3084
        %v3086 = vpop.f32.mrf.mxu0
        %v3087 = vadd.f32 %v2883, %v3086
        %3088 = vmatprep.mubr.bf16.mxu0 0
        %3089 = vmatmul.mubr.bf16.gmra.mxu0 %v2835
        %v3090 = vpop.f32.mrf.mxu0
        %v3091 = vadd.f32 %v2879, %v3090
        %v3092 = vpop.f32.mrf.mxu0
        %v3093 = vadd.f32 %v2883, %v3092
        %v3094 = vpop.f32.mrf.mxu0
        %v3095 = vadd.f32 %v2879, %v3094
        %v3096 = vpop.f32.mrf.mxu0
        %v3097 = vadd.f32 %v2883, %v3096
        %3098 = vmatprep.mubr.bf16.mxu0 0
        %3099 = vmatmul.mubr.bf16.gmra.mxu0 %v2836
        %v3100 = vpop.f32.mrf.mxu0
        %v3101 = vadd.f32 %v2879, %v3100
        %v3102 = vpop.f32.mrf.mxu0
        %v3103 = vadd.f32 %v2883, %v3102
        %v3104 = vpop.f32.mrf.mxu0
        %v3105 = vadd.f32 %v2879, %v3104
        %v3106 = vpop.f32.mrf.mxu0
        %v3107 = vadd.f32 %v2883, %v3106
        %3108 = vmatprep.mubr.bf16.mxu0 0
        %3109 = vmatmul.mubr.bf16.gmra.mxu0 %v2837
        %v3110 = vpop.f32.mrf.mxu0
        %v3111 = vadd.f32 %v2879, %v3110
        %v3112 = vpop.f32.mrf.mxu0
        %v3113 = vadd.f32 %v2883, %v3112
        %v3114 = vpop.f32.mrf.mxu0
        %v3115 = vadd.f32 %v2879, %v3114
        %v3116 = vpop.f32.mrf.mxu0
        %v3117 = vadd.f32 %v2883, %v3116
        %3118 = vmatprep.mubr.bf16.mxu0 0
        %3119 = vmatmul.mubr.bf16.gmra.mxu0 %v2838
        %v3120 = vpop.f32.mrf.mxu0
        %v3121 = vadd.f32 %v2879, %v3120
        %v3122 = vpop.f32.mrf.mxu0
        %v3123 = vadd.f32 %v2883, %v3122
        %v3124 = vpop.f32.mrf.mxu0
        %v3125 = vadd.f32 %v2879, %v3124
        %v3126 = vpop.f32.mrf.mxu0
        %v3127 = vadd.f32 %v2883, %v3126
        %3128 = vmatprep.mubr.bf16.mxu0 0
        %3129 = vmatmul.mubr.bf16.gmra.mxu0 %v2839
        %v3130 = vpop.f32.mrf.mxu0
        %v3131 = vadd.f32 %v2879, %v3130
        %v3132 = vpop.f32.mrf.mxu0
        %v3133 = vadd.f32 %v2883, %v3132
        %v3134 = vpop.f32.mrf.mxu0
        %v3135 = vadd.f32 %v2879, %v3134
        %v3136 = vpop.f32.mrf.mxu0
        %v3137 = vadd.f32 %v2883, %v3136
        %3138 = vmatprep.mubr.bf16.mxu0 0
        %3139 = vmatmul.mubr.bf16.gmra.mxu0 %v2840
        %v3140 = vpop.f32.mrf.mxu0
        %v3141 = vadd.f32 %v2879, %v3140
        %v3142 = vpop.f32.mrf.mxu0
        %v3143 = vadd.f32 %v2883, %v3142
        %v3144 = vpop.f32.mrf.mxu0
        %v3145 = vadd.f32 %v2879, %v3144
        %v3146 = vpop.f32.mrf.mxu0
        %v3147 = vadd.f32 %v2883, %v3146
        %3148 = vmatprep.mubr.bf16.mxu0 0
        %3149 = vmatmul.mubr.bf16.gmra.mxu0 %v2841
        %v3150 = vpop.f32.mrf.mxu0
        %v3151 = vadd.f32 %v2879, %v3150
        %v3152 = vpop.f32.mrf.mxu0
        %v3153 = vadd.f32 %v2883, %v3152
        %v3154 = vpop.f32.mrf.mxu0
        %v3155 = vadd.f32 %v2879, %v3154
        %v3156 = vpop.f32.mrf.mxu0
        %v3157 = vadd.f32 %v2883, %v3156
        %3158 = vmatprep.mubr.bf16.mxu0 0
        %3159 = vmatmul.mubr.bf16.gmra.mxu0 %v2842
        %v3160 = vpop.f32.mrf.mxu0
        %v3161 = vadd.f32 %v2879, %v3160
        %v3162 = vpop.f32.mrf.mxu0
        %v3163 = vadd.f32 %v2883, %v3162
        %v3164 = vpop.f32.mrf.mxu0
        %v3165 = vadd.f32 %v2879, %v3164
        %v3166 = vpop.f32.mrf.mxu0
        %v3167 = vadd.f32 %v2883, %v3166
        %3168 = vmatprep.mubr.bf16.mxu0 0
        %3169 = vmatmul.mubr.bf16.gmra.mxu0 %v2843
        %v3170 = vpop.f32.mrf.mxu0
        %v3171 = vadd.f32 %v2879, %v3170
        %v3172 = vpop.f32.mrf.mxu0
        %v3173 = vadd.f32 %v2883, %v3172
        %v3174 = vpop.f32.mrf.mxu0
        %v3175 = vadd.f32 %v2879, %v3174
        %v3176 = vpop.f32.mrf.mxu0
        %v3177 = vadd.f32 %v2883, %v3176
        %3178 = vmatprep.mubr.bf16.mxu0 0
        %3179 = vmatmul.mubr.bf16.gmra.mxu0 %v2844
        %v3180 = vpop.f32.mrf.mxu0
        %v3181 = vadd.f32 %v2879, %v3180
        %v3182 = vpop.f32.mrf.mxu0
        %v3183 = vadd.f32 %v2883, %v3182
        %v3184 = vpop.f32.mrf.mxu0
        %v3185 = vadd.f32 %v2879, %v3184
        %v3186 = vpop.f32.mrf.mxu0
        %v3187 = vadd.f32 %v2883, %v3186
        %3188 = vmatprep.mubr.bf16.mxu0 0
        %3189 = vmatmul.mubr.bf16.gmra.mxu0 %v2845
        %v3190 = vpop.f32.mrf.mxu0
        %v3191 = vadd.f32 %v2879, %v3190
        %v3192 = vpop.f32.mrf.mxu0
        %v3193 = vadd.f32 %v2883, %v3192
        %v3194 = vpop.f32.mrf.mxu0
        %v3195 = vadd.f32 %v2879, %v3194
        %v3196 = vpop.f32.mrf.mxu0
        %v3197 = vadd.f32 %v2883, %v3196
        %3198 = vmatprep.mubr.bf16.mxu0 0
        %3199 = vmatmul.mubr.bf16.gmra.mxu0 %v2846
        %v3200 = vpop.f32.mrf.mxu0
        %v3201 = vadd.f32 %v2879, %v3200
        %v3202 = vpop.f32.mrf.mxu0
        %v3203 = vadd.f32 %v2883, %v3202
        %v3204 = vpop.f32.mrf.mxu0
        %v3205 = vadd.f32 %v2879, %v3204
        %v3206 = vpop.f32.mrf.mxu0
        %v3207 = vadd.f32 %v2883, %v3206
        %3208 = vmatprep.mubr.bf16.mxu0 0
        %3209 = vmatmul.mubr.bf16.gmra.mxu0 %v2847
        %v3210 = vpop.f32.mrf.mxu0
        %v3211 = vadd.f32 %v2879, %v3210
        %v3212 = vpop.f32.mrf.mxu0
        %v3213 = vadd.f32 %v2883, %v3212
        %v3214 = vpop.f32.mrf.mxu0
        %v3215 = vadd.f32 %v2879, %v3214
        %v3216 = vpop.f32.mrf.mxu0
        %v3217 = vadd.f32 %v2883, %v3216
        %3218 = vmatprep.mubr.bf16.mxu0 0
        %3219 = vmatmul.mubr.bf16.gmra.mxu0 %v2848
        %v3220 = vpop.f32.mrf.mxu0
        %v3221 = vadd.f32 %v2879, %v3220
        %v3222 = vpop.f32.mrf.mxu0
        %v3223 = vadd.f32 %v2883, %v3222
        %v3224 = vpop.f32.mrf.mxu0
        %v3225 = vadd.f32 %v2879, %v3224
        %v3226 = vpop.f32.mrf.mxu0
        %v3227 = vadd.f32 %v2883, %v3226
        %3228 = vmatprep.mubr.bf16.mxu0 0
        %3229 = vmatmul.mubr.bf16.gmra.mxu0 %v2849
        %v3230 = vpop.f32.mrf.mxu0
        %v3231 = vadd.f32 %v2879, %v3230
        %v3232 = vpop.f32.mrf.mxu0
        %v3233 = vadd.f32 %v2883, %v3232
        %v3234 = vpop.f32.mrf.mxu0
        %v3235 = vadd.f32 %v2879, %v3234
        %v3236 = vpop.f32.mrf.mxu0
        %v3237 = vadd.f32 %v2883, %v3236
        %3238 = vmatprep.mubr.bf16.mxu0 0
        %3239 = vmatmul.mubr.bf16.gmra.mxu0 %v2850
        %v3240 = vpop.f32.mrf.mxu0
        %v3241 = vadd.f32 %v2879, %v3240
        %v3242 = vpop.f32.mrf.mxu0
        %v3243 = vadd.f32 %v2883, %v3242
        %v3244 = vpop.f32.mrf.mxu0
        %v3245 = vadd.f32 %v2879, %v3244
        %v3246 = vpop.f32.mrf.mxu0
        %v3247 = vadd.f32 %v2883, %v3246
        %3248 = vmatprep.mubr.bf16.mxu0 0
        %3249 = vmatmul.mubr.bf16.gmra.mxu0 %v2851
        %v3250 = vpop.f32.mrf.mxu0
        %v3251 = vadd.f32 %v2879, %v3250
        %v3252 = vpop.f32.mrf.mxu0
        %v3253 = vadd.f32 %v2883, %v3252
        %v3254 = vpop.f32.mrf.mxu0
        %v3255 = vadd.f32 %v2879, %v3254
        %v3256 = vpop.f32.mrf.mxu0
        %v3257 = vadd.f32 %v2883, %v3256
        %3258 = vmatprep.mubr.bf16.mxu0 0
        %3259 = vmatmul.mubr.bf16.gmra.mxu0 %v2852
        %v3260 = vpop.f32.mrf.mxu0
        %v3261 = vadd.f32 %v2879, %v3260
        %v3262 = vpop.f32.mrf.mxu0
        %v3263 = vadd.f32 %v2883, %v3262
        %v3264 = vpop.f32.mrf.mxu0
        %v3265 = vadd.f32 %v2879, %v3264
        %v3266 = vpop.f32.mrf.mxu0
        %v3267 = vadd.f32 %v2883, %v3266
        %3268 = vmatprep.mubr.bf16.mxu0 0
        %3269 = vmatmul.mubr.bf16.gmra.mxu0 %v2853
        %v3270 = vpop.f32.mrf.mxu0
        %v3271 = vadd.f32 %v2879, %v3270
        %v3272 = vpop.f32.mrf.mxu0
        %v3273 = vadd.f32 %v2883, %v3272
        %v3274 = vpop.f32.mrf.mxu0
        %v3275 = vadd.f32 %v2879, %v3274
        %v3276 = vpop.f32.mrf.mxu0
        %v3277 = vadd.f32 %v2883, %v3276
        %3278 = vmatprep.mubr.bf16.mxu0 0
        %3279 = vmatmul.mubr.bf16.gmra.mxu0 %v2854
        %v3280 = vpop.f32.mrf.mxu0
        %v3281 = vadd.f32 %v2879, %v3280
        %v3282 = vpop.f32.mrf.mxu0
        %v3283 = vadd.f32 %v2883, %v3282
        %v3284 = vpop.f32.mrf.mxu0
        %v3285 = vadd.f32 %v2879, %v3284
        %v3286 = vpop.f32.mrf.mxu0
        %v3287 = vadd.f32 %v2883, %v3286
        %3288 = vmatprep.mubr.bf16.mxu0 0
        %3289 = vmatmul.mubr.bf16.gmra.mxu0 %v2855
        %v3290 = vpop.f32.mrf.mxu0
        %v3291 = vadd.f32 %v2879, %v3290
        %v3292 = vpop.f32.mrf.mxu0
        %v3293 = vadd.f32 %v2883, %v3292
        %v3294 = vpop.f32.mrf.mxu0
        %v3295 = vadd.f32 %v2879, %v3294
        %v3296 = vpop.f32.mrf.mxu0
        %v3297 = vadd.f32 %v2883, %v3296
        %3298 = vmatprep.mubr.bf16.mxu0 0
        %3299 = vmatmul.mubr.bf16.gmra.mxu0 %v2856
        %v3300 = vpop.f32.mrf.mxu0
        %v3301 = vadd.f32 %v2879, %v3300
        %v3302 = vpop.f32.mrf.mxu0
        %v3303 = vadd.f32 %v2883, %v3302
        %v3304 = vpop.f32.mrf.mxu0
        %v3305 = vadd.f32 %v2879, %v3304
        %v3306 = vpop.f32.mrf.mxu0
        %v3307 = vadd.f32 %v2883, %v3306
        %3308 = vmatprep.mubr.bf16.mxu0 0
        %3309 = vmatmul.mubr.bf16.gmra.mxu0 %v2857
        %v3310 = vpop.f32.mrf.mxu0
        %v3311 = vadd.f32 %v2879, %v3310
        %v3312 = vpop.f32.mrf.mxu0
        %v3313 = vadd.f32 %v2883, %v3312
        %v3314 = vpop.f32.mrf.mxu0
        %v3315 = vadd.f32 %v2879, %v3314
        %v3316 = vpop.f32.mrf.mxu0
        %v3317 = vadd.f32 %v2883, %v3316
        %3318 = vdwg.mxu0
        %v3319 = vpack.c.bf16 %v2762, %v2762
        %v3320 = vpack.c.bf16 %v2763, %v2763
        %v3321 = vpack.c.bf16 %v2764, %v2764
        %v3322 = vpack.c.bf16 %v2765, %v2765
        %v3323 = vpack.c.bf16 %v2766, %v2766
        %v3324 = vpack.c.bf16 %v2767, %v2767
        %v3325 = vpack.c.bf16 %v2768, %v2768
        %v3326 = vpack.c.bf16 %v2769, %v2769
        %v3327 = vpack.c.bf16 %v2770, %v2770
        %v3328 = vpack.c.bf16 %v2771, %v2771
        %v3329 = vpack.c.bf16 %v2772, %v2772
        %v3330 = vpack.c.bf16 %v2773, %v2773
        %v3331 = vpack.c.bf16 %v2774, %v2774
        %v3332 = vpack.c.bf16 %v2775, %v2775
        %v3333 = vpack.c.bf16 %v2776, %v2776
        %v3334 = vpack.c.bf16 %v2777, %v2777
        %v3335 = vpack.c.bf16 %v2778, %v2778
        %v3336 = vpack.c.bf16 %v2779, %v2779
        %v3337 = vpack.c.bf16 %v2780, %v2780
        %v3338 = vpack.c.bf16 %v2781, %v2781
        %v3339 = vpack.c.bf16 %v2782, %v2782
        %v3340 = vpack.c.bf16 %v2783, %v2783
        %v3341 = vpack.c.bf16 %v2784, %v2784
        %v3342 = vpack.c.bf16 %v2785, %v2785
        %v3343 = vpack.c.bf16 %v2786, %v2786
        %v3344 = vpack.c.bf16 %v2787, %v2787
        %v3345 = vpack.c.bf16 %v2788, %v2788
        %v3346 = vpack.c.bf16 %v2789, %v2789
        %v3347 = vpack.c.bf16 %v2790, %v2790
        %v3348 = vpack.c.bf16 %v2791, %v2791
        %v3349 = vpack.c.bf16 %v2792, %v2792
        %v3350 = vpack.c.bf16 %v2793, %v2793
        %v3351 = vpack.c.bf16 %v2794, %v2794
        %v3352 = vpack.c.bf16 %v2795, %v2795
        %v3353 = vpack.c.bf16 %v2796, %v2796
        %v3354 = vpack.c.bf16 %v2797, %v2797
        %v3355 = vpack.c.bf16 %v2798, %v2798
        %v3356 = vpack.c.bf16 %v2799, %v2799
        %v3357 = vpack.c.bf16 %v2800, %v2800
        %v3358 = vpack.c.bf16 %v2801, %v2801
        %v3359 = vpack.c.bf16 %v2802, %v2802
        %v3360 = vpack.c.bf16 %v2803, %v2803
        %v3361 = vpack.c.bf16 %v2804, %v2804
        %v3362 = vpack.c.bf16 %v2805, %v2805
        %v3363 = vpack.c.bf16 %v2806, %v2806
        %v3364 = vpack.c.bf16 %v2807, %v2807
        %v3365 = vpack.c.bf16 %v2808, %v2808
        %v3366 = vpack.c.bf16 %v2809, %v2809
        %v3367 = vpack.c.bf16 %v2810, %v2810
        %v3368 = vpack.c.bf16 %v2811, %v2811
        %v3369 = vpack.c.bf16 %v2812, %v2812
        %v3370 = vpack.c.bf16 %v2813, %v2813
        %v3371 = vpack.c.bf16 %v2814, %v2814
        %v3372 = vpack.c.bf16 %v2815, %v2815
        %v3373 = vpack.c.bf16 %v2816, %v2816
        %v3374 = vpack.c.bf16 %v2817, %v2817
        %v3375 = vpack.c.bf16 %v2818, %v2818
        %v3376 = vpack.c.bf16 %v2819, %v2819
        %v3377 = vpack.c.bf16 %v2820, %v2820
        %v3378 = vpack.c.bf16 %v2821, %v2821
        %v3379 = vpack.c.bf16 %v2822, %v2822
        %v3380 = vpack.c.bf16 %v2823, %v2823
        %v3381 = vpack.c.bf16 %v2824, %v2824
        %v3382 = vpack.c.bf16 %v2825, %v2825
        %v3383 = vld [vmem:[#allocation5] sm:$0xf]
        %v3384 = vld [vmem:[#allocation5 + $0x4] sm:$0xf]
        %v3385 = vld [vmem:[#allocation5 + $0x8] sm:$0xf]
        %v3386 = vld [vmem:[#allocation5 + $0xc] sm:$0xf]
        %v3387 = vld [vmem:[#allocation5 + $0x10] sm:$0xf]
        %v3388 = vld [vmem:[#allocation5 + $0x14] sm:$0xf]
        %v3389 = vld [vmem:[#allocation5 + $0x18] sm:$0xf]
        %v3390 = vld [vmem:[#allocation5 + $0x1c] sm:$0xf]
        %v3391 = vld [vmem:[#allocation5 + $0x20] sm:$0xf]
        %v3392 = vld [vmem:[#allocation5 + $0x24] sm:$0xf]
        %v3393 = vld [vmem:[#allocation5 + $0x28] sm:$0xf]
        %v3394 = vld [vmem:[#allocation5 + $0x2c] sm:$0xf]
        %v3395 = vld [vmem:[#allocation5 + $0x30] sm:$0xf]
        %v3396 = vld [vmem:[#allocation5 + $0x34] sm:$0xf]
        %v3397 = vld [vmem:[#allocation5 + $0x38] sm:$0xf]
        %v3398 = vld [vmem:[#allocation5 + $0x3c] sm:$0xf]
        %v3399 = vld [vmem:[%s3] sm:$0x1]
        %v3401 = vlaneseq
        %v3402 = vshrl.u32 %v3401, 7
        %v3403 = vsub.s32 0, %v3402
        %v3404 = vrot.slane %v3399, %v3403
        %v3470 = vunpack.c.l.b16 %v3319
        %v3471 = vunpack.c.l.b16 %v3320
        %v3472 = vunpack.c.l.b16 %v3321
        %v3473 = vunpack.c.l.b16 %v3322
        %v3474 = vunpack.c.l.b16 %v3323
        %v3475 = vunpack.c.l.b16 %v3324
        %v3476 = vunpack.c.l.b16 %v3325
        %v3477 = vunpack.c.l.b16 %v3326
        %v3478 = vunpack.c.l.b16 %v3327
        %v3479 = vunpack.c.l.b16 %v3328
        %v3480 = vunpack.c.l.b16 %v3329
        %v3481 = vunpack.c.l.b16 %v3330
        %v3482 = vunpack.c.l.b16 %v3331
        %v3483 = vunpack.c.l.b16 %v3332
        %v3484 = vunpack.c.l.b16 %v3333
        %v3485 = vunpack.c.l.b16 %v3334
        %v3486 = vunpack.c.l.b16 %v3335
        %v3487 = vunpack.c.l.b16 %v3336
        %v3488 = vunpack.c.l.b16 %v3337
        %v3489 = vunpack.c.l.b16 %v3338
        %v3490 = vunpack.c.l.b16 %v3339
        %v3491 = vunpack.c.l.b16 %v3340
        %v3492 = vunpack.c.l.b16 %v3341
        %v3493 = vunpack.c.l.b16 %v3342
        %v3494 = vunpack.c.l.b16 %v3343
        %v3495 = vunpack.c.l.b16 %v3344
        %v3496 = vunpack.c.l.b16 %v3345
        %v3497 = vunpack.c.l.b16 %v3346
        %v3498 = vunpack.c.l.b16 %v3347
        %v3499 = vunpack.c.l.b16 %v3348
        %v3500 = vunpack.c.l.b16 %v3349
        %v3501 = vunpack.c.l.b16 %v3350
        %v3502 = vunpack.c.l.b16 %v3351
        %v3503 = vunpack.c.l.b16 %v3352
        %v3504 = vunpack.c.l.b16 %v3353
        %v3505 = vunpack.c.l.b16 %v3354
        %v3506 = vunpack.c.l.b16 %v3355
        %v3507 = vunpack.c.l.b16 %v3356
        %v3508 = vunpack.c.l.b16 %v3357
        %v3509 = vunpack.c.l.b16 %v3358
        %v3510 = vunpack.c.l.b16 %v3359
        %v3511 = vunpack.c.l.b16 %v3360
        %v3512 = vunpack.c.l.b16 %v3361
        %v3513 = vunpack.c.l.b16 %v3362
        %v3514 = vunpack.c.l.b16 %v3363
        %v3515 = vunpack.c.l.b16 %v3364
        %v3516 = vunpack.c.l.b16 %v3365
        %v3517 = vunpack.c.l.b16 %v3366
        %v3518 = vunpack.c.l.b16 %v3367
        %v3519 = vunpack.c.l.b16 %v3368
        %v3520 = vunpack.c.l.b16 %v3369
        %v3521 = vunpack.c.l.b16 %v3370
        %v3522 = vunpack.c.l.b16 %v3371
        %v3523 = vunpack.c.l.b16 %v3372
        %v3524 = vunpack.c.l.b16 %v3373
        %v3525 = vunpack.c.l.b16 %v3374
        %v3526 = vunpack.c.l.b16 %v3375
        %v3527 = vunpack.c.l.b16 %v3376
        %v3528 = vunpack.c.l.b16 %v3377
        %v3529 = vunpack.c.l.b16 %v3378
        %v3530 = vunpack.c.l.b16 %v3379
        %v3531 = vunpack.c.l.b16 %v3380
        %v3532 = vunpack.c.l.b16 %v3381
        %v3533 = vunpack.c.l.b16 %v3382
        %v3534 = vrot.slane %v3471, 7
        %v3535 = vsel %vm1924, %v3534, %v3470
        %v3536 = vrot.slane %v3472, 6
        %v3537 = vsel %vm1927, %v3536, %v3535
        %v3538 = vrot.slane %v3473, 5
        %v3539 = vsel %vm1930, %v3538, %v3537
        %v3540 = vrot.slane %v3474, 4
        %v3541 = vsel %vm1933, %v3540, %v3539
        %v3542 = vrot.slane %v3475, 3
        %v3543 = vsel %vm1936, %v3542, %v3541
        %v3544 = vrot.slane %v3476, 2
        %v3545 = vsel %vm1939, %v3544, %v3543
        %v3546 = vrot.slane %v3477, 1
        %v3547 = vsel %vm1942, %v3546, %v3545
        %v3548 = vrot.slane %v3479, 7
        %v3549 = vsel %vm1924, %v3548, %v3478
        %v3550 = vrot.slane %v3480, 6
        %v3551 = vsel %vm1927, %v3550, %v3549
        %v3552 = vrot.slane %v3481, 5
        %v3553 = vsel %vm1930, %v3552, %v3551
        %v3554 = vrot.slane %v3482, 4
        %v3555 = vsel %vm1933, %v3554, %v3553
        %v3556 = vrot.slane %v3483, 3
        %v3557 = vsel %vm1936, %v3556, %v3555
        %v3558 = vrot.slane %v3484, 2
        %v3559 = vsel %vm1939, %v3558, %v3557
        %v3560 = vrot.slane %v3485, 1
        %v3561 = vsel %vm1942, %v3560, %v3559
        %v3562 = vrot.slane %v3487, 7
        %v3563 = vsel %vm1924, %v3562, %v3486
        %v3564 = vrot.slane %v3488, 6
        %v3565 = vsel %vm1927, %v3564, %v3563
        %v3566 = vrot.slane %v3489, 5
        %v3567 = vsel %vm1930, %v3566, %v3565
        %v3568 = vrot.slane %v3490, 4
        %v3569 = vsel %vm1933, %v3568, %v3567
        %v3570 = vrot.slane %v3491, 3
        %v3571 = vsel %vm1936, %v3570, %v3569
        %v3572 = vrot.slane %v3492, 2
        %v3573 = vsel %vm1939, %v3572, %v3571
        %v3574 = vrot.slane %v3493, 1
        %v3575 = vsel %vm1942, %v3574, %v3573
        %v3576 = vrot.slane %v3495, 7
        %v3577 = vsel %vm1924, %v3576, %v3494
        %v3578 = vrot.slane %v3496, 6
        %v3579 = vsel %vm1927, %v3578, %v3577
        %v3580 = vrot.slane %v3497, 5
        %v3581 = vsel %vm1930, %v3580, %v3579
        %v3582 = vrot.slane %v3498, 4
        %v3583 = vsel %vm1933, %v3582, %v3581
        %v3584 = vrot.slane %v3499, 3
        %v3585 = vsel %vm1936, %v3584, %v3583
        %v3586 = vrot.slane %v3500, 2
        %v3587 = vsel %vm1939, %v3586, %v3585
        %v3588 = vrot.slane %v3501, 1
        %v3589 = vsel %vm1942, %v3588, %v3587
        %v3590 = vrot.slane %v3503, 7
        %v3591 = vsel %vm1924, %v3590, %v3502
        %v3592 = vrot.slane %v3504, 6
        %v3593 = vsel %vm1927, %v3592, %v3591
        %v3594 = vrot.slane %v3505, 5
        %v3595 = vsel %vm1930, %v3594, %v3593
        %v3596 = vrot.slane %v3506, 4
        %v3597 = vsel %vm1933, %v3596, %v3595
        %v3598 = vrot.slane %v3507, 3
        %v3599 = vsel %vm1936, %v3598, %v3597
        %v3600 = vrot.slane %v3508, 2
        %v3601 = vsel %vm1939, %v3600, %v3599
        %v3602 = vrot.slane %v3509, 1
        %v3603 = vsel %vm1942, %v3602, %v3601
        %v3604 = vrot.slane %v3511, 7
        %v3605 = vsel %vm1924, %v3604, %v3510
        %v3606 = vrot.slane %v3512, 6
        %v3607 = vsel %vm1927, %v3606, %v3605
        %v3608 = vrot.slane %v3513, 5
        %v3609 = vsel %vm1930, %v3608, %v3607
        %v3610 = vrot.slane %v3514, 4
        %v3611 = vsel %vm1933, %v3610, %v3609
        %v3612 = vrot.slane %v3515, 3
        %v3613 = vsel %vm1936, %v3612, %v3611
        %v3614 = vrot.slane %v3516, 2
        %v3615 = vsel %vm1939, %v3614, %v3613
        %v3616 = vrot.slane %v3517, 1
        %v3617 = vsel %vm1942, %v3616, %v3615
        %v3618 = vrot.slane %v3519, 7
        %v3619 = vsel %vm1924, %v3618, %v3518
        %v3620 = vrot.slane %v3520, 6
        %v3621 = vsel %vm1927, %v3620, %v3619
        %v3622 = vrot.slane %v3521, 5
        %v3623 = vsel %vm1930, %v3622, %v3621
        %v3624 = vrot.slane %v3522, 4
        %v3625 = vsel %vm1933, %v3624, %v3623
        %v3626 = vrot.slane %v3523, 3
        %v3627 = vsel %vm1936, %v3626, %v3625
        %v3628 = vrot.slane %v3524, 2
        %v3629 = vsel %vm1939, %v3628, %v3627
        %v3630 = vrot.slane %v3525, 1
        %v3631 = vsel %vm1942, %v3630, %v3629
        %v3632 = vrot.slane %v3527, 7
        %v3633 = vsel %vm1924, %v3632, %v3526
        %v3634 = vrot.slane %v3528, 6
        %v3635 = vsel %vm1927, %v3634, %v3633
        %v3636 = vrot.slane %v3529, 5
        %v3637 = vsel %vm1930, %v3636, %v3635
        %v3638 = vrot.slane %v3530, 4
        %v3639 = vsel %vm1933, %v3638, %v3637
        %v3640 = vrot.slane %v3531, 3
        %v3641 = vsel %vm1936, %v3640, %v3639
        %v3642 = vrot.slane %v3532, 2
        %v3643 = vsel %vm1939, %v3642, %v3641
        %v3644 = vrot.slane %v3533, 1
        %v3645 = vsel %vm1942, %v3644, %v3643
        %v3646 = vpack.c.b16 %v3561, %v3547
        %v3647 = vpack.c.b16 %v3589, %v3575
        %v3648 = vpack.c.b16 %v3617, %v3603
        %v3649 = vpack.c.b16 %v3645, %v3631
        %v3670 = vunpack.c.l.b16 %v3383
        %v3671 = vunpack.c.l.b16 %v3384
        %v3672 = vunpack.c.l.b16 %v3385
        %v3673 = vunpack.c.l.b16 %v3386
        %v3674 = vunpack.c.l.b16 %v3387
        %v3675 = vunpack.c.l.b16 %v3388
        %v3676 = vunpack.c.l.b16 %v3389
        %v3677 = vunpack.c.l.b16 %v3390
        %v3678 = vunpack.c.l.b16 %v3391
        %v3679 = vunpack.c.l.b16 %v3392
        %v3680 = vunpack.c.l.b16 %v3393
        %v3681 = vunpack.c.l.b16 %v3394
        %v3682 = vunpack.c.l.b16 %v3395
        %v3683 = vunpack.c.l.b16 %v3396
        %v3684 = vunpack.c.l.b16 %v3397
        %v3685 = vunpack.c.l.b16 %v3398
        %v3686 = vpack.c.b16 %v3671, %v3670
        %v3687 = vpack.c.b16 %v3673, %v3672
        %v3688 = vpack.c.b16 %v3675, %v3674
        %v3689 = vpack.c.b16 %v3677, %v3676
        %v3690 = vpack.c.b16 %v3679, %v3678
        %v3691 = vpack.c.b16 %v3681, %v3680
        %v3692 = vpack.c.b16 %v3683, %v3682
        %v3693 = vpack.c.b16 %v3685, %v3684
        %3702 = vmatprep.subr.bf16.mxu0 0
        %3703 = vmatpush1.bf16.msra.mxu0 %v3693
        %3704 = vmatprep.subr.bf16.mxu0 0
        %3705 = vmatpush1.bf16.msra.mxu0 %v3692
        %3706 = vmatprep.subr.bf16.mxu0 0
        %3707 = vmatpush1.bf16.msra.mxu0 %v3691
        %3708 = vmatprep.subr.bf16.mxu0 0
        %3709 = vmatpush1.bf16.msra.mxu0 %v3690
        %3710 = vmatprep.subr.bf16.mxu0 0
        %3711 = vmatpush1.bf16.msra.mxu0 %v3689
        %3712 = vmatprep.subr.bf16.mxu0 0
        %3713 = vmatpush1.bf16.msra.mxu0 %v3688
        %3714 = vmatprep.subr.bf16.mxu0 0
        %3715 = vmatpush1.bf16.msra.mxu0 %v3687
        %3716 = vmatprep.subr.bf16.mxu0 0
        %3717 = vmatpush1.bf16.msra.mxu0 %v3686
        %3718 = vmatprep.subr.bf16.mxu0 0
        %3719 = vmatpush2.bf16.msra.mxu0 0
        %3720 = vmatprep.subr.bf16.mxu0 0
        %3721 = vmatpush2.bf16.msra.mxu0 0
        %3722 = vmatprep.subr.bf16.mxu0 0
        %3723 = vmatpush2.bf16.msra.mxu0 0
        %3724 = vmatprep.subr.bf16.mxu0 0
        %3725 = vmatpush2.bf16.msra.mxu0 0
        %3726 = vmatprep.subr.bf16.mxu0 0
        %3727 = vmatpush2.bf16.msra.mxu0 0
        %3728 = vmatprep.subr.bf16.mxu0 0
        %3729 = vmatpush2.bf16.msra.mxu0 0
        %3730 = vmatprep.subr.bf16.mxu0 0
        %3731 = vmatpush2.bf16.msra.mxu0 0
        %3732 = vmatprep.subr.bf16.mxu0 0
        %3733 = vmatpush2.bf16.msra.mxu0 0
        %3734 = vmatprep.mubr.bf16.mxu0 0
        %3735 = vmatmul.mubr.bf16.gmra.mxu0 %v3646
        %v3736 = vpop.f32.mrf.mxu0
        %v3737 = vadd.f32 %v3404, %v3736
        %v3738 = vpop.f32.mrf.mxu0
        %v3739 = vpop.f32.mrf.mxu0
        %v3740 = vadd.f32 %v3404, %v3739
        %v3741 = vpop.f32.mrf.mxu0
        %3742 = vmatprep.mubr.bf16.mxu0 0
        %3743 = vmatmul.mubr.bf16.gmra.mxu0 %v3647
        %v3744 = vpop.f32.mrf.mxu0
        %v3745 = vadd.f32 %v3404, %v3744
        %v3746 = vpop.f32.mrf.mxu0
        %v3747 = vpop.f32.mrf.mxu0
        %v3748 = vadd.f32 %v3404, %v3747
        %v3749 = vpop.f32.mrf.mxu0
        %3750 = vmatprep.mubr.bf16.mxu0 0
        %3751 = vmatmul.mubr.bf16.gmra.mxu0 %v3648
        %v3752 = vpop.f32.mrf.mxu0
        %v3753 = vadd.f32 %v3404, %v3752
        %v3754 = vpop.f32.mrf.mxu0
        %v3755 = vpop.f32.mrf.mxu0
        %v3756 = vadd.f32 %v3404, %v3755
        %v3757 = vpop.f32.mrf.mxu0
        %3758 = vmatprep.mubr.bf16.mxu0 0
        %3759 = vmatmul.mubr.bf16.gmra.mxu0 %v3649
        %v3760 = vpop.f32.mrf.mxu0
        %v3761 = vadd.f32 %v3404, %v3760
        %v3762 = vpop.f32.mrf.mxu0
        %v3763 = vpop.f32.mrf.mxu0
        %v3764 = vadd.f32 %v3404, %v3763
        %v3765 = vpop.f32.mrf.mxu0
        %3766 = vdwg.mxu0
        %v3767 = vld [vmem:[%s817] sm:$0xff]
        %v3768 = vld [vmem:[%s817 + $0x8] sm:$0xff]
        %v3769 = vld [vmem:[%s817 + $0x10] sm:$0xff]
        %v3770 = vld [vmem:[%s817 + $0x18] sm:$0xff]
        %v3771 = vld [vmem:[%s817 + $0x20] sm:$0xff]
        %v3772 = vld [vmem:[%s817 + $0x28] sm:$0xff]
        %v3773 = vld [vmem:[%s817 + $0x30] sm:$0xff]
        %v3774 = vld [vmem:[%s817 + $0x38] sm:$0xff]
        %v3839 = vrot.slane %v3005, 7
        %v3840 = vsel %vm1924, %v3839, %v3001
        %v3841 = vrot.slane %v3011, 6
        %v3842 = vsel %vm1927, %v3841, %v3840
        %v3843 = vrot.slane %v3015, 5
        %v3844 = vsel %vm1930, %v3843, %v3842
        %v3845 = vrot.slane %v3021, 4
        %v3846 = vsel %vm1933, %v3845, %v3844
        %v3847 = vrot.slane %v3025, 3
        %v3848 = vsel %vm1936, %v3847, %v3846
        %v3849 = vrot.slane %v3031, 2
        %v3850 = vsel %vm1939, %v3849, %v3848
        %v3851 = vrot.slane %v3035, 1
        %v3852 = vsel %vm1942, %v3851, %v3850
        %v3853 = vrot.slane %v3045, 7
        %v3854 = vsel %vm1924, %v3853, %v3041
        %v3855 = vrot.slane %v3051, 6
        %v3856 = vsel %vm1927, %v3855, %v3854
        %v3857 = vrot.slane %v3055, 5
        %v3858 = vsel %vm1930, %v3857, %v3856
        %v3859 = vrot.slane %v3061, 4
        %v3860 = vsel %vm1933, %v3859, %v3858
        %v3861 = vrot.slane %v3065, 3
        %v3862 = vsel %vm1936, %v3861, %v3860
        %v3863 = vrot.slane %v3071, 2
        %v3864 = vsel %vm1939, %v3863, %v3862
        %v3865 = vrot.slane %v3075, 1
        %v3866 = vsel %vm1942, %v3865, %v3864
        %v3867 = vrot.slane %v3085, 7
        %v3868 = vsel %vm1924, %v3867, %v3081
        %v3869 = vrot.slane %v3091, 6
        %v3870 = vsel %vm1927, %v3869, %v3868
        %v3871 = vrot.slane %v3095, 5
        %v3872 = vsel %vm1930, %v3871, %v3870
        %v3873 = vrot.slane %v3101, 4
        %v3874 = vsel %vm1933, %v3873, %v3872
        %v3875 = vrot.slane %v3105, 3
        %v3876 = vsel %vm1936, %v3875, %v3874
        %v3877 = vrot.slane %v3111, 2
        %v3878 = vsel %vm1939, %v3877, %v3876
        %v3879 = vrot.slane %v3115, 1
        %v3880 = vsel %vm1942, %v3879, %v3878
        %v3881 = vrot.slane %v3125, 7
        %v3882 = vsel %vm1924, %v3881, %v3121
        %v3883 = vrot.slane %v3131, 6
        %v3884 = vsel %vm1927, %v3883, %v3882
        %v3885 = vrot.slane %v3135, 5
        %v3886 = vsel %vm1930, %v3885, %v3884
        %v3887 = vrot.slane %v3141, 4
        %v3888 = vsel %vm1933, %v3887, %v3886
        %v3889 = vrot.slane %v3145, 3
        %v3890 = vsel %vm1936, %v3889, %v3888
        %v3891 = vrot.slane %v3151, 2
        %v3892 = vsel %vm1939, %v3891, %v3890
        %v3893 = vrot.slane %v3155, 1
        %v3894 = vsel %vm1942, %v3893, %v3892
        %v3895 = vrot.slane %v3165, 7
        %v3896 = vsel %vm1924, %v3895, %v3161
        %v3897 = vrot.slane %v3171, 6
        %v3898 = vsel %vm1927, %v3897, %v3896
        %v3899 = vrot.slane %v3175, 5
        %v3900 = vsel %vm1930, %v3899, %v3898
        %v3901 = vrot.slane %v3181, 4
        %v3902 = vsel %vm1933, %v3901, %v3900
        %v3903 = vrot.slane %v3185, 3
        %v3904 = vsel %vm1936, %v3903, %v3902
        %v3905 = vrot.slane %v3191, 2
        %v3906 = vsel %vm1939, %v3905, %v3904
        %v3907 = vrot.slane %v3195, 1
        %v3908 = vsel %vm1942, %v3907, %v3906
        %v3909 = vrot.slane %v3205, 7
        %v3910 = vsel %vm1924, %v3909, %v3201
        %v3911 = vrot.slane %v3211, 6
        %v3912 = vsel %vm1927, %v3911, %v3910
        %v3913 = vrot.slane %v3215, 5
        %v3914 = vsel %vm1930, %v3913, %v3912
        %v3915 = vrot.slane %v3221, 4
        %v3916 = vsel %vm1933, %v3915, %v3914
        %v3917 = vrot.slane %v3225, 3
        %v3918 = vsel %vm1936, %v3917, %v3916
        %v3919 = vrot.slane %v3231, 2
        %v3920 = vsel %vm1939, %v3919, %v3918
        %v3921 = vrot.slane %v3235, 1
        %v3922 = vsel %vm1942, %v3921, %v3920
        %v3923 = vrot.slane %v3245, 7
        %v3924 = vsel %vm1924, %v3923, %v3241
        %v3925 = vrot.slane %v3251, 6
        %v3926 = vsel %vm1927, %v3925, %v3924
        %v3927 = vrot.slane %v3255, 5
        %v3928 = vsel %vm1930, %v3927, %v3926
        %v3929 = vrot.slane %v3261, 4
        %v3930 = vsel %vm1933, %v3929, %v3928
        %v3931 = vrot.slane %v3265, 3
        %v3932 = vsel %vm1936, %v3931, %v3930
        %v3933 = vrot.slane %v3271, 2
        %v3934 = vsel %vm1939, %v3933, %v3932
        %v3935 = vrot.slane %v3275, 1
        %v3936 = vsel %vm1942, %v3935, %v3934
        %v3937 = vrot.slane %v3285, 7
        %v3938 = vsel %vm1924, %v3937, %v3281
        %v3939 = vrot.slane %v3291, 6
        %v3940 = vsel %vm1927, %v3939, %v3938
        %v3941 = vrot.slane %v3295, 5
        %v3942 = vsel %vm1930, %v3941, %v3940
        %v3943 = vrot.slane %v3301, 4
        %v3944 = vsel %vm1933, %v3943, %v3942
        %v3945 = vrot.slane %v3305, 3
        %v3946 = vsel %vm1936, %v3945, %v3944
        %v3947 = vrot.slane %v3311, 2
        %v3948 = vsel %vm1939, %v3947, %v3946
        %v3949 = vrot.slane %v3315, 1
        %v3950 = vsel %vm1942, %v3949, %v3948
        %v3959 = vmul.f32 %v3737, %v3852
        %v3960 = vmul.f32 %v3740, %v3866
        %v3961 = vmul.f32 %v3745, %v3880
        %v3962 = vmul.f32 %v3748, %v3894
        %v3963 = vmul.f32 %v3753, %v3908
        %v3964 = vmul.f32 %v3756, %v3922
        %v3965 = vmul.f32 %v3761, %v3936
        %v3966 = vmul.f32 %v3764, %v3950
        %3967 = vadd.xlane.f32.xlu0 %v3959
        %v3968 = vpop.xlane.xlu0 %3967
        %3969 = vadd.xlane.f32.xlu0 %v3960
        %v3970 = vpop.xlane.xlu0 %3969
        %3971 = vadd.xlane.f32.xlu0 %v3961
        %v3972 = vpop.xlane.xlu0 %3971
        %3973 = vadd.xlane.f32.xlu0 %v3962
        %v3974 = vpop.xlane.xlu0 %3973
        %3975 = vadd.xlane.f32.xlu0 %v3963
        %v3976 = vpop.xlane.xlu0 %3975
        %3977 = vadd.xlane.f32.xlu0 %v3964
        %v3978 = vpop.xlane.xlu0 %3977
        %3979 = vadd.xlane.f32.xlu0 %v3965
        %v3980 = vpop.xlane.xlu0 %3979
        %3981 = vadd.xlane.f32.xlu0 %v3966
        %v3982 = vpop.xlane.xlu0 %3981
        %v3983 = vmul.f32 %v3968, 0.088388346
        %v3984 = vmul.f32 %v3970, 0.088388346
        %v3985 = vmul.f32 %v3972, 0.088388346
        %v3986 = vmul.f32 %v3974, 0.088388346
        %v3987 = vmul.f32 %v3976, 0.088388346
        %v3988 = vmul.f32 %v3978, 0.088388346
        %v3989 = vmul.f32 %v3980, 0.088388346
        %v3990 = vmul.f32 %v3982, 0.088388346
        %v3991 = vadd.f32 %v3983, %v3767
        %v3992 = vadd.f32 %v3984, %v3768
        %v3993 = vadd.f32 %v3985, %v3769
        %v3994 = vadd.f32 %v3986, %v3770
        %v3995 = vadd.f32 %v3987, %v3771
        %v3996 = vadd.f32 %v3988, %v3772
        %v3997 = vadd.f32 %v3989, %v3773
        %v3998 = vadd.f32 %v3990, %v3774
        %v3999 = vrot.slane %v3001, 1
        %v4000 = vsel %vm1924, %v3005, %v3999
        %v4001 = vrot.slane %v3011, 7
        %v4002 = vsel %vm1927, %v4001, %v4000
        %v4003 = vrot.slane %v3015, 6
        %v4004 = vsel %vm1930, %v4003, %v4002
        %v4005 = vrot.slane %v3021, 5
        %v4006 = vsel %vm1933, %v4005, %v4004
        %v4007 = vrot.slane %v3025, 4
        %v4008 = vsel %vm1936, %v4007, %v4006
        %v4009 = vrot.slane %v3031, 3
        %v4010 = vsel %vm1939, %v4009, %v4008
        %v4011 = vrot.slane %v3035, 2
        %v4012 = vsel %vm1942, %v4011, %v4010
        %v4013 = vrot.slane %v3041, 1
        %v4014 = vsel %vm1924, %v3045, %v4013
        %v4015 = vrot.slane %v3051, 7
        %v4016 = vsel %vm1927, %v4015, %v4014
        %v4017 = vrot.slane %v3055, 6
        %v4018 = vsel %vm1930, %v4017, %v4016
        %v4019 = vrot.slane %v3061, 5
        %v4020 = vsel %vm1933, %v4019, %v4018
        %v4021 = vrot.slane %v3065, 4
        %v4022 = vsel %vm1936, %v4021, %v4020
        %v4023 = vrot.slane %v3071, 3
        %v4024 = vsel %vm1939, %v4023, %v4022
        %v4025 = vrot.slane %v3075, 2
        %v4026 = vsel %vm1942, %v4025, %v4024
        %v4027 = vrot.slane %v3081, 1
        %v4028 = vsel %vm1924, %v3085, %v4027
        %v4029 = vrot.slane %v3091, 7
        %v4030 = vsel %vm1927, %v4029, %v4028
        %v4031 = vrot.slane %v3095, 6
        %v4032 = vsel %vm1930, %v4031, %v4030
        %v4033 = vrot.slane %v3101, 5
        %v4034 = vsel %vm1933, %v4033, %v4032
        %v4035 = vrot.slane %v3105, 4
        %v4036 = vsel %vm1936, %v4035, %v4034
        %v4037 = vrot.slane %v3111, 3
        %v4038 = vsel %vm1939, %v4037, %v4036
        %v4039 = vrot.slane %v3115, 2
        %v4040 = vsel %vm1942, %v4039, %v4038
        %v4041 = vrot.slane %v3121, 1
        %v4042 = vsel %vm1924, %v3125, %v4041
        %v4043 = vrot.slane %v3131, 7
        %v4044 = vsel %vm1927, %v4043, %v4042
        %v4045 = vrot.slane %v3135, 6
        %v4046 = vsel %vm1930, %v4045, %v4044
        %v4047 = vrot.slane %v3141, 5
        %v4048 = vsel %vm1933, %v4047, %v4046
        %v4049 = vrot.slane %v3145, 4
        %v4050 = vsel %vm1936, %v4049, %v4048
        %v4051 = vrot.slane %v3151, 3
        %v4052 = vsel %vm1939, %v4051, %v4050
        %v4053 = vrot.slane %v3155, 2
        %v4054 = vsel %vm1942, %v4053, %v4052
        %v4055 = vrot.slane %v3161, 1
        %v4056 = vsel %vm1924, %v3165, %v4055
        %v4057 = vrot.slane %v3171, 7
        %v4058 = vsel %vm1927, %v4057, %v4056
        %v4059 = vrot.slane %v3175, 6
        %v4060 = vsel %vm1930, %v4059, %v4058
        %v4061 = vrot.slane %v3181, 5
        %v4062 = vsel %vm1933, %v4061, %v4060
        %v4063 = vrot.slane %v3185, 4
        %v4064 = vsel %vm1936, %v4063, %v4062
        %v4065 = vrot.slane %v3191, 3
        %v4066 = vsel %vm1939, %v4065, %v4064
        %v4067 = vrot.slane %v3195, 2
        %v4068 = vsel %vm1942, %v4067, %v4066
        %v4069 = vrot.slane %v3201, 1
        %v4070 = vsel %vm1924, %v3205, %v4069
        %v4071 = vrot.slane %v3211, 7
        %v4072 = vsel %vm1927, %v4071, %v4070
        %v4073 = vrot.slane %v3215, 6
        %v4074 = vsel %vm1930, %v4073, %v4072
        %v4075 = vrot.slane %v3221, 5
        %v4076 = vsel %vm1933, %v4075, %v4074
        %v4077 = vrot.slane %v3225, 4
        %v4078 = vsel %vm1936, %v4077, %v4076
        %v4079 = vrot.slane %v3231, 3
        %v4080 = vsel %vm1939, %v4079, %v4078
        %v4081 = vrot.slane %v3235, 2
        %v4082 = vsel %vm1942, %v4081, %v4080
        %v4083 = vrot.slane %v3241, 1
        %v4084 = vsel %vm1924, %v3245, %v4083
        %v4085 = vrot.slane %v3251, 7
        %v4086 = vsel %vm1927, %v4085, %v4084
        %v4087 = vrot.slane %v3255, 6
        %v4088 = vsel %vm1930, %v4087, %v4086
        %v4089 = vrot.slane %v3261, 5
        %v4090 = vsel %vm1933, %v4089, %v4088
        %v4091 = vrot.slane %v3265, 4
        %v4092 = vsel %vm1936, %v4091, %v4090
        %v4093 = vrot.slane %v3271, 3
        %v4094 = vsel %vm1939, %v4093, %v4092
        %v4095 = vrot.slane %v3275, 2
        %v4096 = vsel %vm1942, %v4095, %v4094
        %v4097 = vrot.slane %v3281, 1
        %v4098 = vsel %vm1924, %v3285, %v4097
        %v4099 = vrot.slane %v3291, 7
        %v4100 = vsel %vm1927, %v4099, %v4098
        %v4101 = vrot.slane %v3295, 6
        %v4102 = vsel %vm1930, %v4101, %v4100
        %v4103 = vrot.slane %v3301, 5
        %v4104 = vsel %vm1933, %v4103, %v4102
        %v4105 = vrot.slane %v3305, 4
        %v4106 = vsel %vm1936, %v4105, %v4104
        %v4107 = vrot.slane %v3311, 3
        %v4108 = vsel %vm1939, %v4107, %v4106
        %v4109 = vrot.slane %v3315, 2
        %v4110 = vsel %vm1942, %v4109, %v4108
        %v4119 = vmul.f32 %v3737, %v4012
        %v4120 = vmul.f32 %v3740, %v4026
        %v4121 = vmul.f32 %v3745, %v4040
        %v4122 = vmul.f32 %v3748, %v4054
        %v4123 = vmul.f32 %v3753, %v4068
        %v4124 = vmul.f32 %v3756, %v4082
        %v4125 = vmul.f32 %v3761, %v4096
        %v4126 = vmul.f32 %v3764, %v4110
        %4127 = vadd.xlane.f32.xlu0 %v4119
        %v4128 = vpop.xlane.xlu0 %4127
        %4129 = vadd.xlane.f32.xlu0 %v4120
        %v4130 = vpop.xlane.xlu0 %4129
        %4131 = vadd.xlane.f32.xlu0 %v4121
        %v4132 = vpop.xlane.xlu0 %4131
        %4133 = vadd.xlane.f32.xlu0 %v4122
        %v4134 = vpop.xlane.xlu0 %4133
        %4135 = vadd.xlane.f32.xlu0 %v4123
        %v4136 = vpop.xlane.xlu0 %4135
        %4137 = vadd.xlane.f32.xlu0 %v4124
        %v4138 = vpop.xlane.xlu0 %4137
        %4139 = vadd.xlane.f32.xlu0 %v4125
        %v4140 = vpop.xlane.xlu0 %4139
        %4141 = vadd.xlane.f32.xlu0 %v4126
        %v4142 = vpop.xlane.xlu0 %4141
        %v4143 = vmul.f32 %v4128, 0.088388346
        %v4144 = vmul.f32 %v4130, 0.088388346
        %v4145 = vmul.f32 %v4132, 0.088388346
        %v4146 = vmul.f32 %v4134, 0.088388346
        %v4147 = vmul.f32 %v4136, 0.088388346
        %v4148 = vmul.f32 %v4138, 0.088388346
        %v4149 = vmul.f32 %v4140, 0.088388346
        %v4150 = vmul.f32 %v4142, 0.088388346
        %v4151 = vadd.f32 %v4143, %v3767
        %v4152 = vadd.f32 %v4144, %v3768
        %v4153 = vadd.f32 %v4145, %v3769
        %v4154 = vadd.f32 %v4146, %v3770
        %v4155 = vadd.f32 %v4147, %v3771
        %v4156 = vadd.f32 %v4148, %v3772
        %v4157 = vadd.f32 %v4149, %v3773
        %v4158 = vadd.f32 %v4150, %v3774
        %v4159 = vrot.slane %v3001, 2
        %v4160 = vrot.slane %v3005, 1
        %v4161 = vsel %vm1924, %v4160, %v4159
        %v4162 = vsel %vm1927, %v3011, %v4161
        %v4163 = vrot.slane %v3015, 7
        %v4164 = vsel %vm1930, %v4163, %v4162
        %v4165 = vrot.slane %v3021, 6
        %v4166 = vsel %vm1933, %v4165, %v4164
        %v4167 = vrot.slane %v3025, 5
        %v4168 = vsel %vm1936, %v4167, %v4166
        %v4169 = vrot.slane %v3031, 4
        %v4170 = vsel %vm1939, %v4169, %v4168
        %v4171 = vrot.slane %v3035, 3
        %v4172 = vsel %vm1942, %v4171, %v4170
        %v4173 = vrot.slane %v3041, 2
        %v4174 = vrot.slane %v3045, 1
        %v4175 = vsel %vm1924, %v4174, %v4173
        %v4176 = vsel %vm1927, %v3051, %v4175
        %v4177 = vrot.slane %v3055, 7
        %v4178 = vsel %vm1930, %v4177, %v4176
        %v4179 = vrot.slane %v3061, 6
        %v4180 = vsel %vm1933, %v4179, %v4178
        %v4181 = vrot.slane %v3065, 5
        %v4182 = vsel %vm1936, %v4181, %v4180
        %v4183 = vrot.slane %v3071, 4
        %v4184 = vsel %vm1939, %v4183, %v4182
        %v4185 = vrot.slane %v3075, 3
        %v4186 = vsel %vm1942, %v4185, %v4184
        %v4187 = vrot.slane %v3081, 2
        %v4188 = vrot.slane %v3085, 1
        %v4189 = vsel %vm1924, %v4188, %v4187
        %v4190 = vsel %vm1927, %v3091, %v4189
        %v4191 = vrot.slane %v3095, 7
        %v4192 = vsel %vm1930, %v4191, %v4190
        %v4193 = vrot.slane %v3101, 6
        %v4194 = vsel %vm1933, %v4193, %v4192
        %v4195 = vrot.slane %v3105, 5
        %v4196 = vsel %vm1936, %v4195, %v4194
        %v4197 = vrot.slane %v3111, 4
        %v4198 = vsel %vm1939, %v4197, %v4196
        %v4199 = vrot.slane %v3115, 3
        %v4200 = vsel %vm1942, %v4199, %v4198
        %v4201 = vrot.slane %v3121, 2
        %v4202 = vrot.slane %v3125, 1
        %v4203 = vsel %vm1924, %v4202, %v4201
        %v4204 = vsel %vm1927, %v3131, %v4203
        %v4205 = vrot.slane %v3135, 7
        %v4206 = vsel %vm1930, %v4205, %v4204
        %v4207 = vrot.slane %v3141, 6
        %v4208 = vsel %vm1933, %v4207, %v4206
        %v4209 = vrot.slane %v3145, 5
        %v4210 = vsel %vm1936, %v4209, %v4208
        %v4211 = vrot.slane %v3151, 4
        %v4212 = vsel %vm1939, %v4211, %v4210
        %v4213 = vrot.slane %v3155, 3
        %v4214 = vsel %vm1942, %v4213, %v4212
        %v4215 = vrot.slane %v3161, 2
        %v4216 = vrot.slane %v3165, 1
        %v4217 = vsel %vm1924, %v4216, %v4215
        %v4218 = vsel %vm1927, %v3171, %v4217
        %v4219 = vrot.slane %v3175, 7
        %v4220 = vsel %vm1930, %v4219, %v4218
        %v4221 = vrot.slane %v3181, 6
        %v4222 = vsel %vm1933, %v4221, %v4220
        %v4223 = vrot.slane %v3185, 5
        %v4224 = vsel %vm1936, %v4223, %v4222
        %v4225 = vrot.slane %v3191, 4
        %v4226 = vsel %vm1939, %v4225, %v4224
        %v4227 = vrot.slane %v3195, 3
        %v4228 = vsel %vm1942, %v4227, %v4226
        %v4229 = vrot.slane %v3201, 2
        %v4230 = vrot.slane %v3205, 1
        %v4231 = vsel %vm1924, %v4230, %v4229
        %v4232 = vsel %vm1927, %v3211, %v4231
        %v4233 = vrot.slane %v3215, 7
        %v4234 = vsel %vm1930, %v4233, %v4232
        %v4235 = vrot.slane %v3221, 6
        %v4236 = vsel %vm1933, %v4235, %v4234
        %v4237 = vrot.slane %v3225, 5
        %v4238 = vsel %vm1936, %v4237, %v4236
        %v4239 = vrot.slane %v3231, 4
        %v4240 = vsel %vm1939, %v4239, %v4238
        %v4241 = vrot.slane %v3235, 3
        %v4242 = vsel %vm1942, %v4241, %v4240
        %v4243 = vrot.slane %v3241, 2
        %v4244 = vrot.slane %v3245, 1
        %v4245 = vsel %vm1924, %v4244, %v4243
        %v4246 = vsel %vm1927, %v3251, %v4245
        %v4247 = vrot.slane %v3255, 7
        %v4248 = vsel %vm1930, %v4247, %v4246
        %v4249 = vrot.slane %v3261, 6
        %v4250 = vsel %vm1933, %v4249, %v4248
        %v4251 = vrot.slane %v3265, 5
        %v4252 = vsel %vm1936, %v4251, %v4250
        %v4253 = vrot.slane %v3271, 4
        %v4254 = vsel %vm1939, %v4253, %v4252
        %v4255 = vrot.slane %v3275, 3
        %v4256 = vsel %vm1942, %v4255, %v4254
        %v4257 = vrot.slane %v3281, 2
        %v4258 = vrot.slane %v3285, 1
        %v4259 = vsel %vm1924, %v4258, %v4257
        %v4260 = vsel %vm1927, %v3291, %v4259
        %v4261 = vrot.slane %v3295, 7
        %v4262 = vsel %vm1930, %v4261, %v4260
        %v4263 = vrot.slane %v3301, 6
        %v4264 = vsel %vm1933, %v4263, %v4262
        %v4265 = vrot.slane %v3305, 5
        %v4266 = vsel %vm1936, %v4265, %v4264
        %v4267 = vrot.slane %v3311, 4
        %v4268 = vsel %vm1939, %v4267, %v4266
        %v4269 = vrot.slane %v3315, 3
        %v4270 = vsel %vm1942, %v4269, %v4268
        %v4279 = vmul.f32 %v3737, %v4172
        %v4280 = vmul.f32 %v3740, %v4186
        %v4281 = vmul.f32 %v3745, %v4200
        %v4282 = vmul.f32 %v3748, %v4214
        %v4283 = vmul.f32 %v3753, %v4228
        %v4284 = vmul.f32 %v3756, %v4242
        %v4285 = vmul.f32 %v3761, %v4256
        %v4286 = vmul.f32 %v3764, %v4270
        %4287 = vadd.xlane.f32.xlu0 %v4279
        %v4288 = vpop.xlane.xlu0 %4287
        %4289 = vadd.xlane.f32.xlu0 %v4280
        %v4290 = vpop.xlane.xlu0 %4289
        %4291 = vadd.xlane.f32.xlu0 %v4281
        %v4292 = vpop.xlane.xlu0 %4291
        %4293 = vadd.xlane.f32.xlu0 %v4282
        %v4294 = vpop.xlane.xlu0 %4293
        %4295 = vadd.xlane.f32.xlu0 %v4283
        %v4296 = vpop.xlane.xlu0 %4295
        %4297 = vadd.xlane.f32.xlu0 %v4284
        %v4298 = vpop.xlane.xlu0 %4297
        %4299 = vadd.xlane.f32.xlu0 %v4285
        %v4300 = vpop.xlane.xlu0 %4299
        %4301 = vadd.xlane.f32.xlu0 %v4286
        %v4302 = vpop.xlane.xlu0 %4301
        %v4303 = vmul.f32 %v4288, 0.088388346
        %v4304 = vmul.f32 %v4290, 0.088388346
        %v4305 = vmul.f32 %v4292, 0.088388346
        %v4306 = vmul.f32 %v4294, 0.088388346
        %v4307 = vmul.f32 %v4296, 0.088388346
        %v4308 = vmul.f32 %v4298, 0.088388346
        %v4309 = vmul.f32 %v4300, 0.088388346
        %v4310 = vmul.f32 %v4302, 0.088388346
        %v4311 = vadd.f32 %v4303, %v3767
        %v4312 = vadd.f32 %v4304, %v3768
        %v4313 = vadd.f32 %v4305, %v3769
        %v4314 = vadd.f32 %v4306, %v3770
        %v4315 = vadd.f32 %v4307, %v3771
        %v4316 = vadd.f32 %v4308, %v3772
        %v4317 = vadd.f32 %v4309, %v3773
        %v4318 = vadd.f32 %v4310, %v3774
        %v4319 = vrot.slane %v3001, 3
        %v4320 = vrot.slane %v3005, 2
        %v4321 = vsel %vm1924, %v4320, %v4319
        %v4322 = vrot.slane %v3011, 1
        %v4323 = vsel %vm1927, %v4322, %v4321
        %v4324 = vsel %vm1930, %v3015, %v4323
        %v4325 = vrot.slane %v3021, 7
        %v4326 = vsel %vm1933, %v4325, %v4324
        %v4327 = vrot.slane %v3025, 6
        %v4328 = vsel %vm1936, %v4327, %v4326
        %v4329 = vrot.slane %v3031, 5
        %v4330 = vsel %vm1939, %v4329, %v4328
        %v4331 = vrot.slane %v3035, 4
        %v4332 = vsel %vm1942, %v4331, %v4330
        %v4333 = vrot.slane %v3041, 3
        %v4334 = vrot.slane %v3045, 2
        %v4335 = vsel %vm1924, %v4334, %v4333
        %v4336 = vrot.slane %v3051, 1
        %v4337 = vsel %vm1927, %v4336, %v4335
        %v4338 = vsel %vm1930, %v3055, %v4337
        %v4339 = vrot.slane %v3061, 7
        %v4340 = vsel %vm1933, %v4339, %v4338
        %v4341 = vrot.slane %v3065, 6
        %v4342 = vsel %vm1936, %v4341, %v4340
        %v4343 = vrot.slane %v3071, 5
        %v4344 = vsel %vm1939, %v4343, %v4342
        %v4345 = vrot.slane %v3075, 4
        %v4346 = vsel %vm1942, %v4345, %v4344
        %v4347 = vrot.slane %v3081, 3
        %v4348 = vrot.slane %v3085, 2
        %v4349 = vsel %vm1924, %v4348, %v4347
        %v4350 = vrot.slane %v3091, 1
        %v4351 = vsel %vm1927, %v4350, %v4349
        %v4352 = vsel %vm1930, %v3095, %v4351
        %v4353 = vrot.slane %v3101, 7
        %v4354 = vsel %vm1933, %v4353, %v4352
        %v4355 = vrot.slane %v3105, 6
        %v4356 = vsel %vm1936, %v4355, %v4354
        %v4357 = vrot.slane %v3111, 5
        %v4358 = vsel %vm1939, %v4357, %v4356
        %v4359 = vrot.slane %v3115, 4
        %v4360 = vsel %vm1942, %v4359, %v4358
        %v4361 = vrot.slane %v3121, 3
        %v4362 = vrot.slane %v3125, 2
        %v4363 = vsel %vm1924, %v4362, %v4361
        %v4364 = vrot.slane %v3131, 1
        %v4365 = vsel %vm1927, %v4364, %v4363
        %v4366 = vsel %vm1930, %v3135, %v4365
        %v4367 = vrot.slane %v3141, 7
        %v4368 = vsel %vm1933, %v4367, %v4366
        %v4369 = vrot.slane %v3145, 6
        %v4370 = vsel %vm1936, %v4369, %v4368
        %v4371 = vrot.slane %v3151, 5
        %v4372 = vsel %vm1939, %v4371, %v4370
        %v4373 = vrot.slane %v3155, 4
        %v4374 = vsel %vm1942, %v4373, %v4372
        %v4375 = vrot.slane %v3161, 3
        %v4376 = vrot.slane %v3165, 2
        %v4377 = vsel %vm1924, %v4376, %v4375
        %v4378 = vrot.slane %v3171, 1
        %v4379 = vsel %vm1927, %v4378, %v4377
        %v4380 = vsel %vm1930, %v3175, %v4379
        %v4381 = vrot.slane %v3181, 7
        %v4382 = vsel %vm1933, %v4381, %v4380
        %v4383 = vrot.slane %v3185, 6
        %v4384 = vsel %vm1936, %v4383, %v4382
        %v4385 = vrot.slane %v3191, 5
        %v4386 = vsel %vm1939, %v4385, %v4384
        %v4387 = vrot.slane %v3195, 4
        %v4388 = vsel %vm1942, %v4387, %v4386
        %v4389 = vrot.slane %v3201, 3
        %v4390 = vrot.slane %v3205, 2
        %v4391 = vsel %vm1924, %v4390, %v4389
        %v4392 = vrot.slane %v3211, 1
        %v4393 = vsel %vm1927, %v4392, %v4391
        %v4394 = vsel %vm1930, %v3215, %v4393
        %v4395 = vrot.slane %v3221, 7
        %v4396 = vsel %vm1933, %v4395, %v4394
        %v4397 = vrot.slane %v3225, 6
        %v4398 = vsel %vm1936, %v4397, %v4396
        %v4399 = vrot.slane %v3231, 5
        %v4400 = vsel %vm1939, %v4399, %v4398
        %v4401 = vrot.slane %v3235, 4
        %v4402 = vsel %vm1942, %v4401, %v4400
        %v4403 = vrot.slane %v3241, 3
        %v4404 = vrot.slane %v3245, 2
        %v4405 = vsel %vm1924, %v4404, %v4403
        %v4406 = vrot.slane %v3251, 1
        %v4407 = vsel %vm1927, %v4406, %v4405
        %v4408 = vsel %vm1930, %v3255, %v4407
        %v4409 = vrot.slane %v3261, 7
        %v4410 = vsel %vm1933, %v4409, %v4408
        %v4411 = vrot.slane %v3265, 6
        %v4412 = vsel %vm1936, %v4411, %v4410
        %v4413 = vrot.slane %v3271, 5
        %v4414 = vsel %vm1939, %v4413, %v4412
        %v4415 = vrot.slane %v3275, 4
        %v4416 = vsel %vm1942, %v4415, %v4414
        %v4417 = vrot.slane %v3281, 3
        %v4418 = vrot.slane %v3285, 2
        %v4419 = vsel %vm1924, %v4418, %v4417
        %v4420 = vrot.slane %v3291, 1
        %v4421 = vsel %vm1927, %v4420, %v4419
        %v4422 = vsel %vm1930, %v3295, %v4421
        %v4423 = vrot.slane %v3301, 7
        %v4424 = vsel %vm1933, %v4423, %v4422
        %v4425 = vrot.slane %v3305, 6
        %v4426 = vsel %vm1936, %v4425, %v4424
        %v4427 = vrot.slane %v3311, 5
        %v4428 = vsel %vm1939, %v4427, %v4426
        %v4429 = vrot.slane %v3315, 4
        %v4430 = vsel %vm1942, %v4429, %v4428
        %v4439 = vmul.f32 %v3737, %v4332
        %v4440 = vmul.f32 %v3740, %v4346
        %v4441 = vmul.f32 %v3745, %v4360
        %v4442 = vmul.f32 %v3748, %v4374
        %v4443 = vmul.f32 %v3753, %v4388
        %v4444 = vmul.f32 %v3756, %v4402
        %v4445 = vmul.f32 %v3761, %v4416
        %v4446 = vmul.f32 %v3764, %v4430
        %4447 = vadd.xlane.f32.xlu0 %v4439
        %v4448 = vpop.xlane.xlu0 %4447
        %4449 = vadd.xlane.f32.xlu0 %v4440
        %v4450 = vpop.xlane.xlu0 %4449
        %4451 = vadd.xlane.f32.xlu0 %v4441
        %v4452 = vpop.xlane.xlu0 %4451
        %4453 = vadd.xlane.f32.xlu0 %v4442
        %v4454 = vpop.xlane.xlu0 %4453
        %4455 = vadd.xlane.f32.xlu0 %v4443
        %v4456 = vpop.xlane.xlu0 %4455
        %4457 = vadd.xlane.f32.xlu0 %v4444
        %v4458 = vpop.xlane.xlu0 %4457
        %4459 = vadd.xlane.f32.xlu0 %v4445
        %v4460 = vpop.xlane.xlu0 %4459
        %4461 = vadd.xlane.f32.xlu0 %v4446
        %v4462 = vpop.xlane.xlu0 %4461
        %v4463 = vmul.f32 %v4448, 0.088388346
        %v4464 = vmul.f32 %v4450, 0.088388346
        %v4465 = vmul.f32 %v4452, 0.088388346
        %v4466 = vmul.f32 %v4454, 0.088388346
        %v4467 = vmul.f32 %v4456, 0.088388346
        %v4468 = vmul.f32 %v4458, 0.088388346
        %v4469 = vmul.f32 %v4460, 0.088388346
        %v4470 = vmul.f32 %v4462, 0.088388346
        %v4471 = vadd.f32 %v4463, %v3767
        %v4472 = vadd.f32 %v4464, %v3768
        %v4473 = vadd.f32 %v4465, %v3769
        %v4474 = vadd.f32 %v4466, %v3770
        %v4475 = vadd.f32 %v4467, %v3771
        %v4476 = vadd.f32 %v4468, %v3772
        %v4477 = vadd.f32 %v4469, %v3773
        %v4478 = vadd.f32 %v4470, %v3774
        %v4479 = vrot.slane %v3001, 4
        %v4480 = vrot.slane %v3005, 3
        %v4481 = vsel %vm1924, %v4480, %v4479
        %v4482 = vrot.slane %v3011, 2
        %v4483 = vsel %vm1927, %v4482, %v4481
        %v4484 = vrot.slane %v3015, 1
        %v4485 = vsel %vm1930, %v4484, %v4483
        %v4486 = vsel %vm1933, %v3021, %v4485
        %v4487 = vrot.slane %v3025, 7
        %v4488 = vsel %vm1936, %v4487, %v4486
        %v4489 = vrot.slane %v3031, 6
        %v4490 = vsel %vm1939, %v4489, %v4488
        %v4491 = vrot.slane %v3035, 5
        %v4492 = vsel %vm1942, %v4491, %v4490
        %v4493 = vrot.slane %v3041, 4
        %v4494 = vrot.slane %v3045, 3
        %v4495 = vsel %vm1924, %v4494, %v4493
        %v4496 = vrot.slane %v3051, 2
        %v4497 = vsel %vm1927, %v4496, %v4495
        %v4498 = vrot.slane %v3055, 1
        %v4499 = vsel %vm1930, %v4498, %v4497
        %v4500 = vsel %vm1933, %v3061, %v4499
        %v4501 = vrot.slane %v3065, 7
        %v4502 = vsel %vm1936, %v4501, %v4500
        %v4503 = vrot.slane %v3071, 6
        %v4504 = vsel %vm1939, %v4503, %v4502
        %v4505 = vrot.slane %v3075, 5
        %v4506 = vsel %vm1942, %v4505, %v4504
        %v4507 = vrot.slane %v3081, 4
        %v4508 = vrot.slane %v3085, 3
        %v4509 = vsel %vm1924, %v4508, %v4507
        %v4510 = vrot.slane %v3091, 2
        %v4511 = vsel %vm1927, %v4510, %v4509
        %v4512 = vrot.slane %v3095, 1
        %v4513 = vsel %vm1930, %v4512, %v4511
        %v4514 = vsel %vm1933, %v3101, %v4513
        %v4515 = vrot.slane %v3105, 7
        %v4516 = vsel %vm1936, %v4515, %v4514
        %v4517 = vrot.slane %v3111, 6
        %v4518 = vsel %vm1939, %v4517, %v4516
        %v4519 = vrot.slane %v3115, 5
        %v4520 = vsel %vm1942, %v4519, %v4518
        %v4521 = vrot.slane %v3121, 4
        %v4522 = vrot.slane %v3125, 3
        %v4523 = vsel %vm1924, %v4522, %v4521
        %v4524 = vrot.slane %v3131, 2
        %v4525 = vsel %vm1927, %v4524, %v4523
        %v4526 = vrot.slane %v3135, 1
        %v4527 = vsel %vm1930, %v4526, %v4525
        %v4528 = vsel %vm1933, %v3141, %v4527
        %v4529 = vrot.slane %v3145, 7
        %v4530 = vsel %vm1936, %v4529, %v4528
        %v4531 = vrot.slane %v3151, 6
        %v4532 = vsel %vm1939, %v4531, %v4530
        %v4533 = vrot.slane %v3155, 5
        %v4534 = vsel %vm1942, %v4533, %v4532
        %v4535 = vrot.slane %v3161, 4
        %v4536 = vrot.slane %v3165, 3
        %v4537 = vsel %vm1924, %v4536, %v4535
        %v4538 = vrot.slane %v3171, 2
        %v4539 = vsel %vm1927, %v4538, %v4537
        %v4540 = vrot.slane %v3175, 1
        %v4541 = vsel %vm1930, %v4540, %v4539
        %v4542 = vsel %vm1933, %v3181, %v4541
        %v4543 = vrot.slane %v3185, 7
        %v4544 = vsel %vm1936, %v4543, %v4542
        %v4545 = vrot.slane %v3191, 6
        %v4546 = vsel %vm1939, %v4545, %v4544
        %v4547 = vrot.slane %v3195, 5
        %v4548 = vsel %vm1942, %v4547, %v4546
        %v4549 = vrot.slane %v3201, 4
        %v4550 = vrot.slane %v3205, 3
        %v4551 = vsel %vm1924, %v4550, %v4549
        %v4552 = vrot.slane %v3211, 2
        %v4553 = vsel %vm1927, %v4552, %v4551
        %v4554 = vrot.slane %v3215, 1
        %v4555 = vsel %vm1930, %v4554, %v4553
        %v4556 = vsel %vm1933, %v3221, %v4555
        %v4557 = vrot.slane %v3225, 7
        %v4558 = vsel %vm1936, %v4557, %v4556
        %v4559 = vrot.slane %v3231, 6
        %v4560 = vsel %vm1939, %v4559, %v4558
        %v4561 = vrot.slane %v3235, 5
        %v4562 = vsel %vm1942, %v4561, %v4560
        %v4563 = vrot.slane %v3241, 4
        %v4564 = vrot.slane %v3245, 3
        %v4565 = vsel %vm1924, %v4564, %v4563
        %v4566 = vrot.slane %v3251, 2
        %v4567 = vsel %vm1927, %v4566, %v4565
        %v4568 = vrot.slane %v3255, 1
        %v4569 = vsel %vm1930, %v4568, %v4567
        %v4570 = vsel %vm1933, %v3261, %v4569
        %v4571 = vrot.slane %v3265, 7
        %v4572 = vsel %vm1936, %v4571, %v4570
        %v4573 = vrot.slane %v3271, 6
        %v4574 = vsel %vm1939, %v4573, %v4572
        %v4575 = vrot.slane %v3275, 5
        %v4576 = vsel %vm1942, %v4575, %v4574
        %v4577 = vrot.slane %v3281, 4
        %v4578 = vrot.slane %v3285, 3
        %v4579 = vsel %vm1924, %v4578, %v4577
        %v4580 = vrot.slane %v3291, 2
        %v4581 = vsel %vm1927, %v4580, %v4579
        %v4582 = vrot.slane %v3295, 1
        %v4583 = vsel %vm1930, %v4582, %v4581
        %v4584 = vsel %vm1933, %v3301, %v4583
        %v4585 = vrot.slane %v3305, 7
        %v4586 = vsel %vm1936, %v4585, %v4584
        %v4587 = vrot.slane %v3311, 6
        %v4588 = vsel %vm1939, %v4587, %v4586
        %v4589 = vrot.slane %v3315, 5
        %v4590 = vsel %vm1942, %v4589, %v4588
        %v4599 = vmul.f32 %v3737, %v4492
        %v4600 = vmul.f32 %v3740, %v4506
        %v4601 = vmul.f32 %v3745, %v4520
        %v4602 = vmul.f32 %v3748, %v4534
        %v4603 = vmul.f32 %v3753, %v4548
        %v4604 = vmul.f32 %v3756, %v4562
        %v4605 = vmul.f32 %v3761, %v4576
        %v4606 = vmul.f32 %v3764, %v4590
        %4607 = vadd.xlane.f32.xlu0 %v4599
        %v4608 = vpop.xlane.xlu0 %4607
        %4609 = vadd.xlane.f32.xlu0 %v4600
        %v4610 = vpop.xlane.xlu0 %4609
        %4611 = vadd.xlane.f32.xlu0 %v4601
        %v4612 = vpop.xlane.xlu0 %4611
        %4613 = vadd.xlane.f32.xlu0 %v4602
        %v4614 = vpop.xlane.xlu0 %4613
        %4615 = vadd.xlane.f32.xlu0 %v4603
        %v4616 = vpop.xlane.xlu0 %4615
        %4617 = vadd.xlane.f32.xlu0 %v4604
        %v4618 = vpop.xlane.xlu0 %4617
        %4619 = vadd.xlane.f32.xlu0 %v4605
        %v4620 = vpop.xlane.xlu0 %4619
        %4621 = vadd.xlane.f32.xlu0 %v4606
        %v4622 = vpop.xlane.xlu0 %4621
        %v4623 = vmul.f32 %v4608, 0.088388346
        %v4624 = vmul.f32 %v4610, 0.088388346
        %v4625 = vmul.f32 %v4612, 0.088388346
        %v4626 = vmul.f32 %v4614, 0.088388346
        %v4627 = vmul.f32 %v4616, 0.088388346
        %v4628 = vmul.f32 %v4618, 0.088388346
        %v4629 = vmul.f32 %v4620, 0.088388346
        %v4630 = vmul.f32 %v4622, 0.088388346
        %v4631 = vadd.f32 %v4623, %v3767
        %v4632 = vadd.f32 %v4624, %v3768
        %v4633 = vadd.f32 %v4625, %v3769
        %v4634 = vadd.f32 %v4626, %v3770
        %v4635 = vadd.f32 %v4627, %v3771
        %v4636 = vadd.f32 %v4628, %v3772
        %v4637 = vadd.f32 %v4629, %v3773
        %v4638 = vadd.f32 %v4630, %v3774
        %v4639 = vrot.slane %v3001, 5
        %v4640 = vrot.slane %v3005, 4
        %v4641 = vsel %vm1924, %v4640, %v4639
        %v4642 = vrot.slane %v3011, 3
        %v4643 = vsel %vm1927, %v4642, %v4641
        %v4644 = vrot.slane %v3015, 2
        %v4645 = vsel %vm1930, %v4644, %v4643
        %v4646 = vrot.slane %v3021, 1
        %v4647 = vsel %vm1933, %v4646, %v4645
        %v4648 = vsel %vm1936, %v3025, %v4647
        %v4649 = vrot.slane %v3031, 7
        %v4650 = vsel %vm1939, %v4649, %v4648
        %v4651 = vrot.slane %v3035, 6
        %v4652 = vsel %vm1942, %v4651, %v4650
        %v4653 = vrot.slane %v3041, 5
        %v4654 = vrot.slane %v3045, 4
        %v4655 = vsel %vm1924, %v4654, %v4653
        %v4656 = vrot.slane %v3051, 3
        %v4657 = vsel %vm1927, %v4656, %v4655
        %v4658 = vrot.slane %v3055, 2
        %v4659 = vsel %vm1930, %v4658, %v4657
        %v4660 = vrot.slane %v3061, 1
        %v4661 = vsel %vm1933, %v4660, %v4659
        %v4662 = vsel %vm1936, %v3065, %v4661
        %v4663 = vrot.slane %v3071, 7
        %v4664 = vsel %vm1939, %v4663, %v4662
        %v4665 = vrot.slane %v3075, 6
        %v4666 = vsel %vm1942, %v4665, %v4664
        %v4667 = vrot.slane %v3081, 5
        %v4668 = vrot.slane %v3085, 4
        %v4669 = vsel %vm1924, %v4668, %v4667
        %v4670 = vrot.slane %v3091, 3
        %v4671 = vsel %vm1927, %v4670, %v4669
        %v4672 = vrot.slane %v3095, 2
        %v4673 = vsel %vm1930, %v4672, %v4671
        %v4674 = vrot.slane %v3101, 1
        %v4675 = vsel %vm1933, %v4674, %v4673
        %v4676 = vsel %vm1936, %v3105, %v4675
        %v4677 = vrot.slane %v3111, 7
        %v4678 = vsel %vm1939, %v4677, %v4676
        %v4679 = vrot.slane %v3115, 6
        %v4680 = vsel %vm1942, %v4679, %v4678
        %v4681 = vrot.slane %v3121, 5
        %v4682 = vrot.slane %v3125, 4
        %v4683 = vsel %vm1924, %v4682, %v4681
        %v4684 = vrot.slane %v3131, 3
        %v4685 = vsel %vm1927, %v4684, %v4683
        %v4686 = vrot.slane %v3135, 2
        %v4687 = vsel %vm1930, %v4686, %v4685
        %v4688 = vrot.slane %v3141, 1
        %v4689 = vsel %vm1933, %v4688, %v4687
        %v4690 = vsel %vm1936, %v3145, %v4689
        %v4691 = vrot.slane %v3151, 7
        %v4692 = vsel %vm1939, %v4691, %v4690
        %v4693 = vrot.slane %v3155, 6
        %v4694 = vsel %vm1942, %v4693, %v4692
        %v4695 = vrot.slane %v3161, 5
        %v4696 = vrot.slane %v3165, 4
        %v4697 = vsel %vm1924, %v4696, %v4695
        %v4698 = vrot.slane %v3171, 3
        %v4699 = vsel %vm1927, %v4698, %v4697
        %v4700 = vrot.slane %v3175, 2
        %v4701 = vsel %vm1930, %v4700, %v4699
        %v4702 = vrot.slane %v3181, 1
        %v4703 = vsel %vm1933, %v4702, %v4701
        %v4704 = vsel %vm1936, %v3185, %v4703
        %v4705 = vrot.slane %v3191, 7
        %v4706 = vsel %vm1939, %v4705, %v4704
        %v4707 = vrot.slane %v3195, 6
        %v4708 = vsel %vm1942, %v4707, %v4706
        %v4709 = vrot.slane %v3201, 5
        %v4710 = vrot.slane %v3205, 4
        %v4711 = vsel %vm1924, %v4710, %v4709
        %v4712 = vrot.slane %v3211, 3
        %v4713 = vsel %vm1927, %v4712, %v4711
        %v4714 = vrot.slane %v3215, 2
        %v4715 = vsel %vm1930, %v4714, %v4713
        %v4716 = vrot.slane %v3221, 1
        %v4717 = vsel %vm1933, %v4716, %v4715
        %v4718 = vsel %vm1936, %v3225, %v4717
        %v4719 = vrot.slane %v3231, 7
        %v4720 = vsel %vm1939, %v4719, %v4718
        %v4721 = vrot.slane %v3235, 6
        %v4722 = vsel %vm1942, %v4721, %v4720
        %v4723 = vrot.slane %v3241, 5
        %v4724 = vrot.slane %v3245, 4
        %v4725 = vsel %vm1924, %v4724, %v4723
        %v4726 = vrot.slane %v3251, 3
        %v4727 = vsel %vm1927, %v4726, %v4725
        %v4728 = vrot.slane %v3255, 2
        %v4729 = vsel %vm1930, %v4728, %v4727
        %v4730 = vrot.slane %v3261, 1
        %v4731 = vsel %vm1933, %v4730, %v4729
        %v4732 = vsel %vm1936, %v3265, %v4731
        %v4733 = vrot.slane %v3271, 7
        %v4734 = vsel %vm1939, %v4733, %v4732
        %v4735 = vrot.slane %v3275, 6
        %v4736 = vsel %vm1942, %v4735, %v4734
        %v4737 = vrot.slane %v3281, 5
        %v4738 = vrot.slane %v3285, 4
        %v4739 = vsel %vm1924, %v4738, %v4737
        %v4740 = vrot.slane %v3291, 3
        %v4741 = vsel %vm1927, %v4740, %v4739
        %v4742 = vrot.slane %v3295, 2
        %v4743 = vsel %vm1930, %v4742, %v4741
        %v4744 = vrot.slane %v3301, 1
        %v4745 = vsel %vm1933, %v4744, %v4743
        %v4746 = vsel %vm1936, %v3305, %v4745
        %v4747 = vrot.slane %v3311, 7
        %v4748 = vsel %vm1939, %v4747, %v4746
        %v4749 = vrot.slane %v3315, 6
        %v4750 = vsel %vm1942, %v4749, %v4748
        %v4759 = vmul.f32 %v3737, %v4652
        %v4760 = vmul.f32 %v3740, %v4666
        %v4761 = vmul.f32 %v3745, %v4680
        %v4762 = vmul.f32 %v3748, %v4694
        %v4763 = vmul.f32 %v3753, %v4708
        %v4764 = vmul.f32 %v3756, %v4722
        %v4765 = vmul.f32 %v3761, %v4736
        %v4766 = vmul.f32 %v3764, %v4750
        %4767 = vadd.xlane.f32.xlu0 %v4759
        %v4768 = vpop.xlane.xlu0 %4767
        %4769 = vadd.xlane.f32.xlu0 %v4760
        %v4770 = vpop.xlane.xlu0 %4769
        %4771 = vadd.xlane.f32.xlu0 %v4761
        %v4772 = vpop.xlane.xlu0 %4771
        %4773 = vadd.xlane.f32.xlu0 %v4762
        %v4774 = vpop.xlane.xlu0 %4773
        %4775 = vadd.xlane.f32.xlu0 %v4763
        %v4776 = vpop.xlane.xlu0 %4775
        %4777 = vadd.xlane.f32.xlu0 %v4764
        %v4778 = vpop.xlane.xlu0 %4777
        %4779 = vadd.xlane.f32.xlu0 %v4765
        %v4780 = vpop.xlane.xlu0 %4779
        %4781 = vadd.xlane.f32.xlu0 %v4766
        %v4782 = vpop.xlane.xlu0 %4781
        %v4783 = vmul.f32 %v4768, 0.088388346
        %v4784 = vmul.f32 %v4770, 0.088388346
        %v4785 = vmul.f32 %v4772, 0.088388346
        %v4786 = vmul.f32 %v4774, 0.088388346
        %v4787 = vmul.f32 %v4776, 0.088388346
        %v4788 = vmul.f32 %v4778, 0.088388346
        %v4789 = vmul.f32 %v4780, 0.088388346
        %v4790 = vmul.f32 %v4782, 0.088388346
        %v4791 = vadd.f32 %v4783, %v3767
        %v4792 = vadd.f32 %v4784, %v3768
        %v4793 = vadd.f32 %v4785, %v3769
        %v4794 = vadd.f32 %v4786, %v3770
        %v4795 = vadd.f32 %v4787, %v3771
        %v4796 = vadd.f32 %v4788, %v3772
        %v4797 = vadd.f32 %v4789, %v3773
        %v4798 = vadd.f32 %v4790, %v3774
        %v4799 = vrot.slane %v3001, 6
        %v4800 = vrot.slane %v3005, 5
        %v4801 = vsel %vm1924, %v4800, %v4799
        %v4802 = vrot.slane %v3011, 4
        %v4803 = vsel %vm1927, %v4802, %v4801
        %v4804 = vrot.slane %v3015, 3
        %v4805 = vsel %vm1930, %v4804, %v4803
        %v4806 = vrot.slane %v3021, 2
        %v4807 = vsel %vm1933, %v4806, %v4805
        %v4808 = vrot.slane %v3025, 1
        %v4809 = vsel %vm1936, %v4808, %v4807
        %v4810 = vsel %vm1939, %v3031, %v4809
        %v4811 = vrot.slane %v3035, 7
        %v4812 = vsel %vm1942, %v4811, %v4810
        %v4813 = vrot.slane %v3041, 6
        %v4814 = vrot.slane %v3045, 5
        %v4815 = vsel %vm1924, %v4814, %v4813
        %v4816 = vrot.slane %v3051, 4
        %v4817 = vsel %vm1927, %v4816, %v4815
        %v4818 = vrot.slane %v3055, 3
        %v4819 = vsel %vm1930, %v4818, %v4817
        %v4820 = vrot.slane %v3061, 2
        %v4821 = vsel %vm1933, %v4820, %v4819
        %v4822 = vrot.slane %v3065, 1
        %v4823 = vsel %vm1936, %v4822, %v4821
        %v4824 = vsel %vm1939, %v3071, %v4823
        %v4825 = vrot.slane %v3075, 7
        %v4826 = vsel %vm1942, %v4825, %v4824
        %v4827 = vrot.slane %v3081, 6
        %v4828 = vrot.slane %v3085, 5
        %v4829 = vsel %vm1924, %v4828, %v4827
        %v4830 = vrot.slane %v3091, 4
        %v4831 = vsel %vm1927, %v4830, %v4829
        %v4832 = vrot.slane %v3095, 3
        %v4833 = vsel %vm1930, %v4832, %v4831
        %v4834 = vrot.slane %v3101, 2
        %v4835 = vsel %vm1933, %v4834, %v4833
        %v4836 = vrot.slane %v3105, 1
        %v4837 = vsel %vm1936, %v4836, %v4835
        %v4838 = vsel %vm1939, %v3111, %v4837
        %v4839 = vrot.slane %v3115, 7
        %v4840 = vsel %vm1942, %v4839, %v4838
        %v4841 = vrot.slane %v3121, 6
        %v4842 = vrot.slane %v3125, 5
        %v4843 = vsel %vm1924, %v4842, %v4841
        %v4844 = vrot.slane %v3131, 4
        %v4845 = vsel %vm1927, %v4844, %v4843
        %v4846 = vrot.slane %v3135, 3
        %v4847 = vsel %vm1930, %v4846, %v4845
        %v4848 = vrot.slane %v3141, 2
        %v4849 = vsel %vm1933, %v4848, %v4847
        %v4850 = vrot.slane %v3145, 1
        %v4851 = vsel %vm1936, %v4850, %v4849
        %v4852 = vsel %vm1939, %v3151, %v4851
        %v4853 = vrot.slane %v3155, 7
        %v4854 = vsel %vm1942, %v4853, %v4852
        %v4855 = vrot.slane %v3161, 6
        %v4856 = vrot.slane %v3165, 5
        %v4857 = vsel %vm1924, %v4856, %v4855
        %v4858 = vrot.slane %v3171, 4
        %v4859 = vsel %vm1927, %v4858, %v4857
        %v4860 = vrot.slane %v3175, 3
        %v4861 = vsel %vm1930, %v4860, %v4859
        %v4862 = vrot.slane %v3181, 2
        %v4863 = vsel %vm1933, %v4862, %v4861
        %v4864 = vrot.slane %v3185, 1
        %v4865 = vsel %vm1936, %v4864, %v4863
        %v4866 = vsel %vm1939, %v3191, %v4865
        %v4867 = vrot.slane %v3195, 7
        %v4868 = vsel %vm1942, %v4867, %v4866
        %v4869 = vrot.slane %v3201, 6
        %v4870 = vrot.slane %v3205, 5
        %v4871 = vsel %vm1924, %v4870, %v4869
        %v4872 = vrot.slane %v3211, 4
        %v4873 = vsel %vm1927, %v4872, %v4871
        %v4874 = vrot.slane %v3215, 3
        %v4875 = vsel %vm1930, %v4874, %v4873
        %v4876 = vrot.slane %v3221, 2
        %v4877 = vsel %vm1933, %v4876, %v4875
        %v4878 = vrot.slane %v3225, 1
        %v4879 = vsel %vm1936, %v4878, %v4877
        %v4880 = vsel %vm1939, %v3231, %v4879
        %v4881 = vrot.slane %v3235, 7
        %v4882 = vsel %vm1942, %v4881, %v4880
        %v4883 = vrot.slane %v3241, 6
        %v4884 = vrot.slane %v3245, 5
        %v4885 = vsel %vm1924, %v4884, %v4883
        %v4886 = vrot.slane %v3251, 4
        %v4887 = vsel %vm1927, %v4886, %v4885
        %v4888 = vrot.slane %v3255, 3
        %v4889 = vsel %vm1930, %v4888, %v4887
        %v4890 = vrot.slane %v3261, 2
        %v4891 = vsel %vm1933, %v4890, %v4889
        %v4892 = vrot.slane %v3265, 1
        %v4893 = vsel %vm1936, %v4892, %v4891
        %v4894 = vsel %vm1939, %v3271, %v4893
        %v4895 = vrot.slane %v3275, 7
        %v4896 = vsel %vm1942, %v4895, %v4894
        %v4897 = vrot.slane %v3281, 6
        %v4898 = vrot.slane %v3285, 5
        %v4899 = vsel %vm1924, %v4898, %v4897
        %v4900 = vrot.slane %v3291, 4
        %v4901 = vsel %vm1927, %v4900, %v4899
        %v4902 = vrot.slane %v3295, 3
        %v4903 = vsel %vm1930, %v4902, %v4901
        %v4904 = vrot.slane %v3301, 2
        %v4905 = vsel %vm1933, %v4904, %v4903
        %v4906 = vrot.slane %v3305, 1
        %v4907 = vsel %vm1936, %v4906, %v4905
        %v4908 = vsel %vm1939, %v3311, %v4907
        %v4909 = vrot.slane %v3315, 7
        %v4910 = vsel %vm1942, %v4909, %v4908
        %v4919 = vmul.f32 %v3737, %v4812
        %v4920 = vmul.f32 %v3740, %v4826
        %v4921 = vmul.f32 %v3745, %v4840
        %v4922 = vmul.f32 %v3748, %v4854
        %v4923 = vmul.f32 %v3753, %v4868
        %v4924 = vmul.f32 %v3756, %v4882
        %v4925 = vmul.f32 %v3761, %v4896
        %v4926 = vmul.f32 %v3764, %v4910
        %4927 = vadd.xlane.f32.xlu0 %v4919
        %v4928 = vpop.xlane.xlu0 %4927
        %4929 = vadd.xlane.f32.xlu0 %v4920
        %v4930 = vpop.xlane.xlu0 %4929
        %4931 = vadd.xlane.f32.xlu0 %v4921
        %v4932 = vpop.xlane.xlu0 %4931
        %4933 = vadd.xlane.f32.xlu0 %v4922
        %v4934 = vpop.xlane.xlu0 %4933
        %4935 = vadd.xlane.f32.xlu0 %v4923
        %v4936 = vpop.xlane.xlu0 %4935
        %4937 = vadd.xlane.f32.xlu0 %v4924
        %v4938 = vpop.xlane.xlu0 %4937
        %4939 = vadd.xlane.f32.xlu0 %v4925
        %v4940 = vpop.xlane.xlu0 %4939
        %4941 = vadd.xlane.f32.xlu0 %v4926
        %v4942 = vpop.xlane.xlu0 %4941
        %v4943 = vmul.f32 %v4928, 0.088388346
        %v4944 = vmul.f32 %v4930, 0.088388346
        %v4945 = vmul.f32 %v4932, 0.088388346
        %v4946 = vmul.f32 %v4934, 0.088388346
        %v4947 = vmul.f32 %v4936, 0.088388346
        %v4948 = vmul.f32 %v4938, 0.088388346
        %v4949 = vmul.f32 %v4940, 0.088388346
        %v4950 = vmul.f32 %v4942, 0.088388346
        %v4951 = vadd.f32 %v4943, %v3767
        %v4952 = vadd.f32 %v4944, %v3768
        %v4953 = vadd.f32 %v4945, %v3769
        %v4954 = vadd.f32 %v4946, %v3770
        %v4955 = vadd.f32 %v4947, %v3771
        %v4956 = vadd.f32 %v4948, %v3772
        %v4957 = vadd.f32 %v4949, %v3773
        %v4958 = vadd.f32 %v4950, %v3774
        %v4959 = vrot.slane %v3001, 7
        %v4960 = vrot.slane %v3005, 6
        %v4961 = vsel %vm1924, %v4960, %v4959
        %v4962 = vrot.slane %v3011, 5
        %v4963 = vsel %vm1927, %v4962, %v4961
        %v4964 = vrot.slane %v3015, 4
        %v4965 = vsel %vm1930, %v4964, %v4963
        %v4966 = vrot.slane %v3021, 3
        %v4967 = vsel %vm1933, %v4966, %v4965
        %v4968 = vrot.slane %v3025, 2
        %v4969 = vsel %vm1936, %v4968, %v4967
        %v4970 = vrot.slane %v3031, 1
        %v4971 = vsel %vm1939, %v4970, %v4969
        %v4972 = vsel %vm1942, %v3035, %v4971
        %v4973 = vrot.slane %v3041, 7
        %v4974 = vrot.slane %v3045, 6
        %v4975 = vsel %vm1924, %v4974, %v4973
        %v4976 = vrot.slane %v3051, 5
        %v4977 = vsel %vm1927, %v4976, %v4975
        %v4978 = vrot.slane %v3055, 4
        %v4979 = vsel %vm1930, %v4978, %v4977
        %v4980 = vrot.slane %v3061, 3
        %v4981 = vsel %vm1933, %v4980, %v4979
        %v4982 = vrot.slane %v3065, 2
        %v4983 = vsel %vm1936, %v4982, %v4981
        %v4984 = vrot.slane %v3071, 1
        %v4985 = vsel %vm1939, %v4984, %v4983
        %v4986 = vsel %vm1942, %v3075, %v4985
        %v4987 = vrot.slane %v3081, 7
        %v4988 = vrot.slane %v3085, 6
        %v4989 = vsel %vm1924, %v4988, %v4987
        %v4990 = vrot.slane %v3091, 5
        %v4991 = vsel %vm1927, %v4990, %v4989
        %v4992 = vrot.slane %v3095, 4
        %v4993 = vsel %vm1930, %v4992, %v4991
        %v4994 = vrot.slane %v3101, 3
        %v4995 = vsel %vm1933, %v4994, %v4993
        %v4996 = vrot.slane %v3105, 2
        %v4997 = vsel %vm1936, %v4996, %v4995
        %v4998 = vrot.slane %v3111, 1
        %v4999 = vsel %vm1939, %v4998, %v4997
        %v5000 = vsel %vm1942, %v3115, %v4999
        %v5001 = vrot.slane %v3121, 7
        %v5002 = vrot.slane %v3125, 6
        %v5003 = vsel %vm1924, %v5002, %v5001
        %v5004 = vrot.slane %v3131, 5
        %v5005 = vsel %vm1927, %v5004, %v5003
        %v5006 = vrot.slane %v3135, 4
        %v5007 = vsel %vm1930, %v5006, %v5005
        %v5008 = vrot.slane %v3141, 3
        %v5009 = vsel %vm1933, %v5008, %v5007
        %v5010 = vrot.slane %v3145, 2
        %v5011 = vsel %vm1936, %v5010, %v5009
        %v5012 = vrot.slane %v3151, 1
        %v5013 = vsel %vm1939, %v5012, %v5011
        %v5014 = vsel %vm1942, %v3155, %v5013
        %v5015 = vrot.slane %v3161, 7
        %v5016 = vrot.slane %v3165, 6
        %v5017 = vsel %vm1924, %v5016, %v5015
        %v5018 = vrot.slane %v3171, 5
        %v5019 = vsel %vm1927, %v5018, %v5017
        %v5020 = vrot.slane %v3175, 4
        %v5021 = vsel %vm1930, %v5020, %v5019
        %v5022 = vrot.slane %v3181, 3
        %v5023 = vsel %vm1933, %v5022, %v5021
        %v5024 = vrot.slane %v3185, 2
        %v5025 = vsel %vm1936, %v5024, %v5023
        %v5026 = vrot.slane %v3191, 1
        %v5027 = vsel %vm1939, %v5026, %v5025
        %v5028 = vsel %vm1942, %v3195, %v5027
        %v5029 = vrot.slane %v3201, 7
        %v5030 = vrot.slane %v3205, 6
        %v5031 = vsel %vm1924, %v5030, %v5029
        %v5032 = vrot.slane %v3211, 5
        %v5033 = vsel %vm1927, %v5032, %v5031
        %v5034 = vrot.slane %v3215, 4
        %v5035 = vsel %vm1930, %v5034, %v5033
        %v5036 = vrot.slane %v3221, 3
        %v5037 = vsel %vm1933, %v5036, %v5035
        %v5038 = vrot.slane %v3225, 2
        %v5039 = vsel %vm1936, %v5038, %v5037
        %v5040 = vrot.slane %v3231, 1
        %v5041 = vsel %vm1939, %v5040, %v5039
        %v5042 = vsel %vm1942, %v3235, %v5041
        %v5043 = vrot.slane %v3241, 7
        %v5044 = vrot.slane %v3245, 6
        %v5045 = vsel %vm1924, %v5044, %v5043
        %v5046 = vrot.slane %v3251, 5
        %v5047 = vsel %vm1927, %v5046, %v5045
        %v5048 = vrot.slane %v3255, 4
        %v5049 = vsel %vm1930, %v5048, %v5047
        %v5050 = vrot.slane %v3261, 3
        %v5051 = vsel %vm1933, %v5050, %v5049
        %v5052 = vrot.slane %v3265, 2
        %v5053 = vsel %vm1936, %v5052, %v5051
        %v5054 = vrot.slane %v3271, 1
        %v5055 = vsel %vm1939, %v5054, %v5053
        %v5056 = vsel %vm1942, %v3275, %v5055
        %v5057 = vrot.slane %v3281, 7
        %v5058 = vrot.slane %v3285, 6
        %v5059 = vsel %vm1924, %v5058, %v5057
        %v5060 = vrot.slane %v3291, 5
        %v5061 = vsel %vm1927, %v5060, %v5059
        %v5062 = vrot.slane %v3295, 4
        %v5063 = vsel %vm1930, %v5062, %v5061
        %v5064 = vrot.slane %v3301, 3
        %v5065 = vsel %vm1933, %v5064, %v5063
        %v5066 = vrot.slane %v3305, 2
        %v5067 = vsel %vm1936, %v5066, %v5065
        %v5068 = vrot.slane %v3311, 1
        %v5069 = vsel %vm1939, %v5068, %v5067
        %v5070 = vsel %vm1942, %v3315, %v5069
        %v5079 = vmul.f32 %v3737, %v4972
        %v5080 = vmul.f32 %v3740, %v4986
        %v5081 = vmul.f32 %v3745, %v5000
        %v5082 = vmul.f32 %v3748, %v5014
        %v5083 = vmul.f32 %v3753, %v5028
        %v5084 = vmul.f32 %v3756, %v5042
        %v5085 = vmul.f32 %v3761, %v5056
        %v5086 = vmul.f32 %v3764, %v5070
        %5087 = vadd.xlane.f32.xlu0 %v5079
        %v5088 = vpop.xlane.xlu0 %5087
        %5089 = vadd.xlane.f32.xlu0 %v5080
        %v5090 = vpop.xlane.xlu0 %5089
        %5091 = vadd.xlane.f32.xlu0 %v5081
        %v5092 = vpop.xlane.xlu0 %5091
        %5093 = vadd.xlane.f32.xlu0 %v5082
        %v5094 = vpop.xlane.xlu0 %5093
        %5095 = vadd.xlane.f32.xlu0 %v5083
        %v5096 = vpop.xlane.xlu0 %5095
        %5097 = vadd.xlane.f32.xlu0 %v5084
        %v5098 = vpop.xlane.xlu0 %5097
        %5099 = vadd.xlane.f32.xlu0 %v5085
        %v5100 = vpop.xlane.xlu0 %5099
        %5101 = vadd.xlane.f32.xlu0 %v5086
        %v5102 = vpop.xlane.xlu0 %5101
        %v5103 = vmul.f32 %v5088, 0.088388346
        %v5104 = vmul.f32 %v5090, 0.088388346
        %v5105 = vmul.f32 %v5092, 0.088388346
        %v5106 = vmul.f32 %v5094, 0.088388346
        %v5107 = vmul.f32 %v5096, 0.088388346
        %v5108 = vmul.f32 %v5098, 0.088388346
        %v5109 = vmul.f32 %v5100, 0.088388346
        %v5110 = vmul.f32 %v5102, 0.088388346
        %v5111 = vadd.f32 %v5103, %v3767
        %v5112 = vadd.f32 %v5104, %v3768
        %v5113 = vadd.f32 %v5105, %v3769
        %v5114 = vadd.f32 %v5106, %v3770
        %v5115 = vadd.f32 %v5107, %v3771
        %v5116 = vadd.f32 %v5108, %v3772
        %v5117 = vadd.f32 %v5109, %v3773
        %v5118 = vadd.f32 %v5110, %v3774
        %5127 = vrot.lane.b32.xlu0 %v4151, 127
        %v5128 = vpop.permute.xlu0 %5127
        %5129 = vrot.lane.b32.xlu0 %v4152, 127
        %v5130 = vpop.permute.xlu0 %5129
        %5131 = vrot.lane.b32.xlu0 %v4153, 127
        %v5132 = vpop.permute.xlu0 %5131
        %5133 = vrot.lane.b32.xlu0 %v4154, 127
        %v5134 = vpop.permute.xlu0 %5133
        %5135 = vrot.lane.b32.xlu0 %v4155, 127
        %v5136 = vpop.permute.xlu0 %5135
        %5137 = vrot.lane.b32.xlu0 %v4156, 127
        %v5138 = vpop.permute.xlu0 %5137
        %5139 = vrot.lane.b32.xlu0 %v4157, 127
        %v5140 = vpop.permute.xlu0 %5139
        %5141 = vrot.lane.b32.xlu0 %v4158, 127
        %v5142 = vpop.permute.xlu0 %5141
        %v5151 = vmax.f32 %v3991, %v5128
        %v5152 = vmax.f32 %v3992, %v5130
        %v5153 = vmax.f32 %v3993, %v5132
        %v5154 = vmax.f32 %v3994, %v5134
        %v5155 = vmax.f32 %v3995, %v5136
        %v5156 = vmax.f32 %v3996, %v5138
        %v5157 = vmax.f32 %v3997, %v5140
        %v5158 = vmax.f32 %v3998, %v5142
        %5167 = vrot.lane.b32.xlu0 %v4311, 126
        %v5168 = vpop.permute.xlu0 %5167
        %5169 = vrot.lane.b32.xlu0 %v4312, 126
        %v5170 = vpop.permute.xlu0 %5169
        %5171 = vrot.lane.b32.xlu0 %v4313, 126
        %v5172 = vpop.permute.xlu0 %5171
        %5173 = vrot.lane.b32.xlu0 %v4314, 126
        %v5174 = vpop.permute.xlu0 %5173
        %5175 = vrot.lane.b32.xlu0 %v4315, 126
        %v5176 = vpop.permute.xlu0 %5175
        %5177 = vrot.lane.b32.xlu0 %v4316, 126
        %v5178 = vpop.permute.xlu0 %5177
        %5179 = vrot.lane.b32.xlu0 %v4317, 126
        %v5180 = vpop.permute.xlu0 %5179
        %5181 = vrot.lane.b32.xlu0 %v4318, 126
        %v5182 = vpop.permute.xlu0 %5181
        %v5191 = vmax.f32 %v5151, %v5168
        %v5192 = vmax.f32 %v5152, %v5170
        %v5193 = vmax.f32 %v5153, %v5172
        %v5194 = vmax.f32 %v5154, %v5174
        %v5195 = vmax.f32 %v5155, %v5176
        %v5196 = vmax.f32 %v5156, %v5178
        %v5197 = vmax.f32 %v5157, %v5180
        %v5198 = vmax.f32 %v5158, %v5182
        %5207 = vrot.lane.b32.xlu0 %v4471, 125
        %v5208 = vpop.permute.xlu0 %5207
        %5209 = vrot.lane.b32.xlu0 %v4472, 125
        %v5210 = vpop.permute.xlu0 %5209
        %5211 = vrot.lane.b32.xlu0 %v4473, 125
        %v5212 = vpop.permute.xlu0 %5211
        %5213 = vrot.lane.b32.xlu0 %v4474, 125
        %v5214 = vpop.permute.xlu0 %5213
        %5215 = vrot.lane.b32.xlu0 %v4475, 125
        %v5216 = vpop.permute.xlu0 %5215
        %5217 = vrot.lane.b32.xlu0 %v4476, 125
        %v5218 = vpop.permute.xlu0 %5217
        %5219 = vrot.lane.b32.xlu0 %v4477, 125
        %v5220 = vpop.permute.xlu0 %5219
        %5221 = vrot.lane.b32.xlu0 %v4478, 125
        %v5222 = vpop.permute.xlu0 %5221
        %v5231 = vmax.f32 %v5191, %v5208
        %v5232 = vmax.f32 %v5192, %v5210
        %v5233 = vmax.f32 %v5193, %v5212
        %v5234 = vmax.f32 %v5194, %v5214
        %v5235 = vmax.f32 %v5195, %v5216
        %v5236 = vmax.f32 %v5196, %v5218
        %v5237 = vmax.f32 %v5197, %v5220
        %v5238 = vmax.f32 %v5198, %v5222
        %5247 = vrot.lane.b32.xlu0 %v4631, 124
        %v5248 = vpop.permute.xlu0 %5247
        %5249 = vrot.lane.b32.xlu0 %v4632, 124
        %v5250 = vpop.permute.xlu0 %5249
        %5251 = vrot.lane.b32.xlu0 %v4633, 124
        %v5252 = vpop.permute.xlu0 %5251
        %5253 = vrot.lane.b32.xlu0 %v4634, 124
        %v5254 = vpop.permute.xlu0 %5253
        %5255 = vrot.lane.b32.xlu0 %v4635, 124
        %v5256 = vpop.permute.xlu0 %5255
        %5257 = vrot.lane.b32.xlu0 %v4636, 124
        %v5258 = vpop.permute.xlu0 %5257
        %5259 = vrot.lane.b32.xlu0 %v4637, 124
        %v5260 = vpop.permute.xlu0 %5259
        %5261 = vrot.lane.b32.xlu0 %v4638, 124
        %v5262 = vpop.permute.xlu0 %5261
        %v5271 = vmax.f32 %v5231, %v5248
        %v5272 = vmax.f32 %v5232, %v5250
        %v5273 = vmax.f32 %v5233, %v5252
        %v5274 = vmax.f32 %v5234, %v5254
        %v5275 = vmax.f32 %v5235, %v5256
        %v5276 = vmax.f32 %v5236, %v5258
        %v5277 = vmax.f32 %v5237, %v5260
        %v5278 = vmax.f32 %v5238, %v5262
        %5287 = vrot.lane.b32.xlu0 %v4791, 123
        %v5288 = vpop.permute.xlu0 %5287
        %5289 = vrot.lane.b32.xlu0 %v4792, 123
        %v5290 = vpop.permute.xlu0 %5289
        %5291 = vrot.lane.b32.xlu0 %v4793, 123
        %v5292 = vpop.permute.xlu0 %5291
        %5293 = vrot.lane.b32.xlu0 %v4794, 123
        %v5294 = vpop.permute.xlu0 %5293
        %5295 = vrot.lane.b32.xlu0 %v4795, 123
        %v5296 = vpop.permute.xlu0 %5295
        %5297 = vrot.lane.b32.xlu0 %v4796, 123
        %v5298 = vpop.permute.xlu0 %5297
        %5299 = vrot.lane.b32.xlu0 %v4797, 123
        %v5300 = vpop.permute.xlu0 %5299
        %5301 = vrot.lane.b32.xlu0 %v4798, 123
        %v5302 = vpop.permute.xlu0 %5301
        %v5311 = vmax.f32 %v5271, %v5288
        %v5312 = vmax.f32 %v5272, %v5290
        %v5313 = vmax.f32 %v5273, %v5292
        %v5314 = vmax.f32 %v5274, %v5294
        %v5315 = vmax.f32 %v5275, %v5296
        %v5316 = vmax.f32 %v5276, %v5298
        %v5317 = vmax.f32 %v5277, %v5300
        %v5318 = vmax.f32 %v5278, %v5302
        %5327 = vrot.lane.b32.xlu0 %v4951, 122
        %v5328 = vpop.permute.xlu0 %5327
        %5329 = vrot.lane.b32.xlu0 %v4952, 122
        %v5330 = vpop.permute.xlu0 %5329
        %5331 = vrot.lane.b32.xlu0 %v4953, 122
        %v5332 = vpop.permute.xlu0 %5331
        %5333 = vrot.lane.b32.xlu0 %v4954, 122
        %v5334 = vpop.permute.xlu0 %5333
        %5335 = vrot.lane.b32.xlu0 %v4955, 122
        %v5336 = vpop.permute.xlu0 %5335
        %5337 = vrot.lane.b32.xlu0 %v4956, 122
        %v5338 = vpop.permute.xlu0 %5337
        %5339 = vrot.lane.b32.xlu0 %v4957, 122
        %v5340 = vpop.permute.xlu0 %5339
        %5341 = vrot.lane.b32.xlu0 %v4958, 122
        %v5342 = vpop.permute.xlu0 %5341
        %v5351 = vmax.f32 %v5311, %v5328
        %v5352 = vmax.f32 %v5312, %v5330
        %v5353 = vmax.f32 %v5313, %v5332
        %v5354 = vmax.f32 %v5314, %v5334
        %v5355 = vmax.f32 %v5315, %v5336
        %v5356 = vmax.f32 %v5316, %v5338
        %v5357 = vmax.f32 %v5317, %v5340
        %v5358 = vmax.f32 %v5318, %v5342
        %5367 = vrot.lane.b32.xlu0 %v5111, 121
        %v5368 = vpop.permute.xlu0 %5367
        %5369 = vrot.lane.b32.xlu0 %v5112, 121
        %v5370 = vpop.permute.xlu0 %5369
        %5371 = vrot.lane.b32.xlu0 %v5113, 121
        %v5372 = vpop.permute.xlu0 %5371
        %5373 = vrot.lane.b32.xlu0 %v5114, 121
        %v5374 = vpop.permute.xlu0 %5373
        %5375 = vrot.lane.b32.xlu0 %v5115, 121
        %v5376 = vpop.permute.xlu0 %5375
        %5377 = vrot.lane.b32.xlu0 %v5116, 121
        %v5378 = vpop.permute.xlu0 %5377
        %5379 = vrot.lane.b32.xlu0 %v5117, 121
        %v5380 = vpop.permute.xlu0 %5379
        %5381 = vrot.lane.b32.xlu0 %v5118, 121
        %v5382 = vpop.permute.xlu0 %5381
        %v5391 = vmax.f32 %v5351, %v5368
        %v5392 = vmax.f32 %v5352, %v5370
        %v5393 = vmax.f32 %v5353, %v5372
        %v5394 = vmax.f32 %v5354, %v5374
        %v5395 = vmax.f32 %v5355, %v5376
        %v5396 = vmax.f32 %v5356, %v5378
        %v5397 = vmax.f32 %v5357, %v5380
        %v5398 = vmax.f32 %v5358, %v5382
        %v5399 = vsub.f32 %v3991, %v5391
        %v5400 = vsub.f32 %v3992, %v5392
        %v5401 = vsub.f32 %v3993, %v5393
        %v5402 = vsub.f32 %v3994, %v5394
        %v5403 = vsub.f32 %v3995, %v5395
        %v5404 = vsub.f32 %v3996, %v5396
        %v5405 = vsub.f32 %v3997, %v5397
        %v5406 = vsub.f32 %v3998, %v5398
        %v5407 = vmul.f32 %v5399, 1.442695
        %v5408 = vpow.pop %v5407
        %v5409 = vmul.f32 %v5400, 1.442695
        %v5410 = vpow.pop %v5409
        %v5411 = vmul.f32 %v5401, 1.442695
        %v5412 = vpow.pop %v5411
        %v5413 = vmul.f32 %v5402, 1.442695
        %v5414 = vpow.pop %v5413
        %v5415 = vmul.f32 %v5403, 1.442695
        %v5416 = vpow.pop %v5415
        %v5417 = vmul.f32 %v5404, 1.442695
        %v5418 = vpow.pop %v5417
        %v5419 = vmul.f32 %v5405, 1.442695
        %v5420 = vpow.pop %v5419
        %v5421 = vmul.f32 %v5406, 1.442695
        %v5422 = vpow.pop %v5421
        %5431 = vrot.lane.b32.xlu0 %v5391, 1
        %v5432 = vpop.permute.xlu0 %5431
        %5433 = vrot.lane.b32.xlu0 %v5392, 1
        %v5434 = vpop.permute.xlu0 %5433
        %5435 = vrot.lane.b32.xlu0 %v5393, 1
        %v5436 = vpop.permute.xlu0 %5435
        %5437 = vrot.lane.b32.xlu0 %v5394, 1
        %v5438 = vpop.permute.xlu0 %5437
        %5439 = vrot.lane.b32.xlu0 %v5395, 1
        %v5440 = vpop.permute.xlu0 %5439
        %5441 = vrot.lane.b32.xlu0 %v5396, 1
        %v5442 = vpop.permute.xlu0 %5441
        %5443 = vrot.lane.b32.xlu0 %v5397, 1
        %v5444 = vpop.permute.xlu0 %5443
        %5445 = vrot.lane.b32.xlu0 %v5398, 1
        %v5446 = vpop.permute.xlu0 %5445
        %v5455 = vsub.f32 %v4151, %v5432
        %v5456 = vsub.f32 %v4152, %v5434
        %v5457 = vsub.f32 %v4153, %v5436
        %v5458 = vsub.f32 %v4154, %v5438
        %v5459 = vsub.f32 %v4155, %v5440
        %v5460 = vsub.f32 %v4156, %v5442
        %v5461 = vsub.f32 %v4157, %v5444
        %v5462 = vsub.f32 %v4158, %v5446
        %v5463 = vmul.f32 %v5455, 1.442695
        %v5464 = vpow.pop %v5463
        %v5465 = vmul.f32 %v5456, 1.442695
        %v5466 = vpow.pop %v5465
        %v5467 = vmul.f32 %v5457, 1.442695
        %v5468 = vpow.pop %v5467
        %v5469 = vmul.f32 %v5458, 1.442695
        %v5470 = vpow.pop %v5469
        %v5471 = vmul.f32 %v5459, 1.442695
        %v5472 = vpow.pop %v5471
        %v5473 = vmul.f32 %v5460, 1.442695
        %v5474 = vpow.pop %v5473
        %v5475 = vmul.f32 %v5461, 1.442695
        %v5476 = vpow.pop %v5475
        %v5477 = vmul.f32 %v5462, 1.442695
        %v5478 = vpow.pop %v5477
        %5479 = vrot.lane.b32.xlu0 %v5391, 2
        %v5480 = vpop.permute.xlu0 %5479
        %5481 = vrot.lane.b32.xlu0 %v5392, 2
        %v5482 = vpop.permute.xlu0 %5481
        %5483 = vrot.lane.b32.xlu0 %v5393, 2
        %v5484 = vpop.permute.xlu0 %5483
        %5485 = vrot.lane.b32.xlu0 %v5394, 2
        %v5486 = vpop.permute.xlu0 %5485
        %5487 = vrot.lane.b32.xlu0 %v5395, 2
        %v5488 = vpop.permute.xlu0 %5487
        %5489 = vrot.lane.b32.xlu0 %v5396, 2
        %v5490 = vpop.permute.xlu0 %5489
        %5491 = vrot.lane.b32.xlu0 %v5397, 2
        %v5492 = vpop.permute.xlu0 %5491
        %5493 = vrot.lane.b32.xlu0 %v5398, 2
        %v5494 = vpop.permute.xlu0 %5493
        %v5503 = vsub.f32 %v4311, %v5480
        %v5504 = vsub.f32 %v4312, %v5482
        %v5505 = vsub.f32 %v4313, %v5484
        %v5506 = vsub.f32 %v4314, %v5486
        %v5507 = vsub.f32 %v4315, %v5488
        %v5508 = vsub.f32 %v4316, %v5490
        %v5509 = vsub.f32 %v4317, %v5492
        %v5510 = vsub.f32 %v4318, %v5494
        %v5511 = vmul.f32 %v5503, 1.442695
        %v5512 = vpow.pop %v5511
        %v5513 = vmul.f32 %v5504, 1.442695
        %v5514 = vpow.pop %v5513
        %v5515 = vmul.f32 %v5505, 1.442695
        %v5516 = vpow.pop %v5515
        %v5517 = vmul.f32 %v5506, 1.442695
        %v5518 = vpow.pop %v5517
        %v5519 = vmul.f32 %v5507, 1.442695
        %v5520 = vpow.pop %v5519
        %v5521 = vmul.f32 %v5508, 1.442695
        %v5522 = vpow.pop %v5521
        %v5523 = vmul.f32 %v5509, 1.442695
        %v5524 = vpow.pop %v5523
        %v5525 = vmul.f32 %v5510, 1.442695
        %v5526 = vpow.pop %v5525
        %5527 = vrot.lane.b32.xlu0 %v5391, 3
        %v5528 = vpop.permute.xlu0 %5527
        %5529 = vrot.lane.b32.xlu0 %v5392, 3
        %v5530 = vpop.permute.xlu0 %5529
        %5531 = vrot.lane.b32.xlu0 %v5393, 3
        %v5532 = vpop.permute.xlu0 %5531
        %5533 = vrot.lane.b32.xlu0 %v5394, 3
        %v5534 = vpop.permute.xlu0 %5533
        %5535 = vrot.lane.b32.xlu0 %v5395, 3
        %v5536 = vpop.permute.xlu0 %5535
        %5537 = vrot.lane.b32.xlu0 %v5396, 3
        %v5538 = vpop.permute.xlu0 %5537
        %5539 = vrot.lane.b32.xlu0 %v5397, 3
        %v5540 = vpop.permute.xlu0 %5539
        %5541 = vrot.lane.b32.xlu0 %v5398, 3
        %v5542 = vpop.permute.xlu0 %5541
        %v5551 = vsub.f32 %v4471, %v5528
        %v5552 = vsub.f32 %v4472, %v5530
        %v5553 = vsub.f32 %v4473, %v5532
        %v5554 = vsub.f32 %v4474, %v5534
        %v5555 = vsub.f32 %v4475, %v5536
        %v5556 = vsub.f32 %v4476, %v5538
        %v5557 = vsub.f32 %v4477, %v5540
        %v5558 = vsub.f32 %v4478, %v5542
        %v5559 = vmul.f32 %v5551, 1.442695
        %v5560 = vpow.pop %v5559
        %v5561 = vmul.f32 %v5552, 1.442695
        %v5562 = vpow.pop %v5561
        %v5563 = vmul.f32 %v5553, 1.442695
        %v5564 = vpow.pop %v5563
        %v5565 = vmul.f32 %v5554, 1.442695
        %v5566 = vpow.pop %v5565
        %v5567 = vmul.f32 %v5555, 1.442695
        %v5568 = vpow.pop %v5567
        %v5569 = vmul.f32 %v5556, 1.442695
        %v5570 = vpow.pop %v5569
        %v5571 = vmul.f32 %v5557, 1.442695
        %v5572 = vpow.pop %v5571
        %v5573 = vmul.f32 %v5558, 1.442695
        %v5574 = vpow.pop %v5573
        %5575 = vrot.lane.b32.xlu0 %v5391, 4
        %v5576 = vpop.permute.xlu0 %5575
        %5577 = vrot.lane.b32.xlu0 %v5392, 4
        %v5578 = vpop.permute.xlu0 %5577
        %5579 = vrot.lane.b32.xlu0 %v5393, 4
        %v5580 = vpop.permute.xlu0 %5579
        %5581 = vrot.lane.b32.xlu0 %v5394, 4
        %v5582 = vpop.permute.xlu0 %5581
        %5583 = vrot.lane.b32.xlu0 %v5395, 4
        %v5584 = vpop.permute.xlu0 %5583
        %5585 = vrot.lane.b32.xlu0 %v5396, 4
        %v5586 = vpop.permute.xlu0 %5585
        %5587 = vrot.lane.b32.xlu0 %v5397, 4
        %v5588 = vpop.permute.xlu0 %5587
        %5589 = vrot.lane.b32.xlu0 %v5398, 4
        %v5590 = vpop.permute.xlu0 %5589
        %v5599 = vsub.f32 %v4631, %v5576
        %v5600 = vsub.f32 %v4632, %v5578
        %v5601 = vsub.f32 %v4633, %v5580
        %v5602 = vsub.f32 %v4634, %v5582
        %v5603 = vsub.f32 %v4635, %v5584
        %v5604 = vsub.f32 %v4636, %v5586
        %v5605 = vsub.f32 %v4637, %v5588
        %v5606 = vsub.f32 %v4638, %v5590
        %v5607 = vmul.f32 %v5599, 1.442695
        %v5608 = vpow.pop %v5607
        %v5609 = vmul.f32 %v5600, 1.442695
        %v5610 = vpow.pop %v5609
        %v5611 = vmul.f32 %v5601, 1.442695
        %v5612 = vpow.pop %v5611
        %v5613 = vmul.f32 %v5602, 1.442695
        %v5614 = vpow.pop %v5613
        %v5615 = vmul.f32 %v5603, 1.442695
        %v5616 = vpow.pop %v5615
        %v5617 = vmul.f32 %v5604, 1.442695
        %v5618 = vpow.pop %v5617
        %v5619 = vmul.f32 %v5605, 1.442695
        %v5620 = vpow.pop %v5619
        %v5621 = vmul.f32 %v5606, 1.442695
        %v5622 = vpow.pop %v5621
        %5623 = vrot.lane.b32.xlu0 %v5391, 5
        %v5624 = vpop.permute.xlu0 %5623
        %5625 = vrot.lane.b32.xlu0 %v5392, 5
        %v5626 = vpop.permute.xlu0 %5625
        %5627 = vrot.lane.b32.xlu0 %v5393, 5
        %v5628 = vpop.permute.xlu0 %5627
        %5629 = vrot.lane.b32.xlu0 %v5394, 5
        %v5630 = vpop.permute.xlu0 %5629
        %5631 = vrot.lane.b32.xlu0 %v5395, 5
        %v5632 = vpop.permute.xlu0 %5631
        %5633 = vrot.lane.b32.xlu0 %v5396, 5
        %v5634 = vpop.permute.xlu0 %5633
        %5635 = vrot.lane.b32.xlu0 %v5397, 5
        %v5636 = vpop.permute.xlu0 %5635
        %5637 = vrot.lane.b32.xlu0 %v5398, 5
        %v5638 = vpop.permute.xlu0 %5637
        %v5647 = vsub.f32 %v4791, %v5624
        %v5648 = vsub.f32 %v4792, %v5626
        %v5649 = vsub.f32 %v4793, %v5628
        %v5650 = vsub.f32 %v4794, %v5630
        %v5651 = vsub.f32 %v4795, %v5632
        %v5652 = vsub.f32 %v4796, %v5634
        %v5653 = vsub.f32 %v4797, %v5636
        %v5654 = vsub.f32 %v4798, %v5638
        %v5655 = vmul.f32 %v5647, 1.442695
        %v5656 = vpow.pop %v5655
        %v5657 = vmul.f32 %v5648, 1.442695
        %v5658 = vpow.pop %v5657
        %v5659 = vmul.f32 %v5649, 1.442695
        %v5660 = vpow.pop %v5659
        %v5661 = vmul.f32 %v5650, 1.442695
        %v5662 = vpow.pop %v5661
        %v5663 = vmul.f32 %v5651, 1.442695
        %v5664 = vpow.pop %v5663
        %v5665 = vmul.f32 %v5652, 1.442695
        %v5666 = vpow.pop %v5665
        %v5667 = vmul.f32 %v5653, 1.442695
        %v5668 = vpow.pop %v5667
        %v5669 = vmul.f32 %v5654, 1.442695
        %v5670 = vpow.pop %v5669
        %5671 = vrot.lane.b32.xlu0 %v5391, 6
        %v5672 = vpop.permute.xlu0 %5671
        %5673 = vrot.lane.b32.xlu0 %v5392, 6
        %v5674 = vpop.permute.xlu0 %5673
        %5675 = vrot.lane.b32.xlu0 %v5393, 6
        %v5676 = vpop.permute.xlu0 %5675
        %5677 = vrot.lane.b32.xlu0 %v5394, 6
        %v5678 = vpop.permute.xlu0 %5677
        %5679 = vrot.lane.b32.xlu0 %v5395, 6
        %v5680 = vpop.permute.xlu0 %5679
        %5681 = vrot.lane.b32.xlu0 %v5396, 6
        %v5682 = vpop.permute.xlu0 %5681
        %5683 = vrot.lane.b32.xlu0 %v5397, 6
        %v5684 = vpop.permute.xlu0 %5683
        %5685 = vrot.lane.b32.xlu0 %v5398, 6
        %v5686 = vpop.permute.xlu0 %5685
        %v5695 = vsub.f32 %v4951, %v5672
        %v5696 = vsub.f32 %v4952, %v5674
        %v5697 = vsub.f32 %v4953, %v5676
        %v5698 = vsub.f32 %v4954, %v5678
        %v5699 = vsub.f32 %v4955, %v5680
        %v5700 = vsub.f32 %v4956, %v5682
        %v5701 = vsub.f32 %v4957, %v5684
        %v5702 = vsub.f32 %v4958, %v5686
        %v5703 = vmul.f32 %v5695, 1.442695
        %v5704 = vpow.pop %v5703
        %v5705 = vmul.f32 %v5696, 1.442695
        %v5706 = vpow.pop %v5705
        %v5707 = vmul.f32 %v5697, 1.442695
        %v5708 = vpow.pop %v5707
        %v5709 = vmul.f32 %v5698, 1.442695
        %v5710 = vpow.pop %v5709
        %v5711 = vmul.f32 %v5699, 1.442695
        %v5712 = vpow.pop %v5711
        %v5713 = vmul.f32 %v5700, 1.442695
        %v5714 = vpow.pop %v5713
        %v5715 = vmul.f32 %v5701, 1.442695
        %v5716 = vpow.pop %v5715
        %v5717 = vmul.f32 %v5702, 1.442695
        %v5718 = vpow.pop %v5717
        %5719 = vrot.lane.b32.xlu0 %v5391, 7
        %v5720 = vpop.permute.xlu0 %5719
        %5721 = vrot.lane.b32.xlu0 %v5392, 7
        %v5722 = vpop.permute.xlu0 %5721
        %5723 = vrot.lane.b32.xlu0 %v5393, 7
        %v5724 = vpop.permute.xlu0 %5723
        %5725 = vrot.lane.b32.xlu0 %v5394, 7
        %v5726 = vpop.permute.xlu0 %5725
        %5727 = vrot.lane.b32.xlu0 %v5395, 7
        %v5728 = vpop.permute.xlu0 %5727
        %5729 = vrot.lane.b32.xlu0 %v5396, 7
        %v5730 = vpop.permute.xlu0 %5729
        %5731 = vrot.lane.b32.xlu0 %v5397, 7
        %v5732 = vpop.permute.xlu0 %5731
        %5733 = vrot.lane.b32.xlu0 %v5398, 7
        %v5734 = vpop.permute.xlu0 %5733
        %v5743 = vsub.f32 %v5111, %v5720
        %v5744 = vsub.f32 %v5112, %v5722
        %v5745 = vsub.f32 %v5113, %v5724
        %v5746 = vsub.f32 %v5114, %v5726
        %v5747 = vsub.f32 %v5115, %v5728
        %v5748 = vsub.f32 %v5116, %v5730
        %v5749 = vsub.f32 %v5117, %v5732
        %v5750 = vsub.f32 %v5118, %v5734
        %v5751 = vmul.f32 %v5743, 1.442695
        %v5752 = vpow.pop %v5751
        %v5753 = vmul.f32 %v5744, 1.442695
        %v5754 = vpow.pop %v5753
        %v5755 = vmul.f32 %v5745, 1.442695
        %v5756 = vpow.pop %v5755
        %v5757 = vmul.f32 %v5746, 1.442695
        %v5758 = vpow.pop %v5757
        %v5759 = vmul.f32 %v5747, 1.442695
        %v5760 = vpow.pop %v5759
        %v5761 = vmul.f32 %v5748, 1.442695
        %v5762 = vpow.pop %v5761
        %v5763 = vmul.f32 %v5749, 1.442695
        %v5764 = vpow.pop %v5763
        %v5765 = vmul.f32 %v5750, 1.442695
        %v5766 = vpow.pop %v5765
        %5775 = vrot.lane.b32.xlu0 %v5464, 127
        %v5776 = vpop.permute.xlu0 %5775
        %5777 = vrot.lane.b32.xlu0 %v5466, 127
        %v5778 = vpop.permute.xlu0 %5777
        %5779 = vrot.lane.b32.xlu0 %v5468, 127
        %v5780 = vpop.permute.xlu0 %5779
        %5781 = vrot.lane.b32.xlu0 %v5470, 127
        %v5782 = vpop.permute.xlu0 %5781
        %5783 = vrot.lane.b32.xlu0 %v5472, 127
        %v5784 = vpop.permute.xlu0 %5783
        %5785 = vrot.lane.b32.xlu0 %v5474, 127
        %v5786 = vpop.permute.xlu0 %5785
        %5787 = vrot.lane.b32.xlu0 %v5476, 127
        %v5788 = vpop.permute.xlu0 %5787
        %5789 = vrot.lane.b32.xlu0 %v5478, 127
        %v5790 = vpop.permute.xlu0 %5789
        %v5799 = vadd.f32 %v5408, %v5776
        %v5800 = vadd.f32 %v5410, %v5778
        %v5801 = vadd.f32 %v5412, %v5780
        %v5802 = vadd.f32 %v5414, %v5782
        %v5803 = vadd.f32 %v5416, %v5784
        %v5804 = vadd.f32 %v5418, %v5786
        %v5805 = vadd.f32 %v5420, %v5788
        %v5806 = vadd.f32 %v5422, %v5790
        %5815 = vrot.lane.b32.xlu0 %v5512, 126
        %v5816 = vpop.permute.xlu0 %5815
        %5817 = vrot.lane.b32.xlu0 %v5514, 126
        %v5818 = vpop.permute.xlu0 %5817
        %5819 = vrot.lane.b32.xlu0 %v5516, 126
        %v5820 = vpop.permute.xlu0 %5819
        %5821 = vrot.lane.b32.xlu0 %v5518, 126
        %v5822 = vpop.permute.xlu0 %5821
        %5823 = vrot.lane.b32.xlu0 %v5520, 126
        %v5824 = vpop.permute.xlu0 %5823
        %5825 = vrot.lane.b32.xlu0 %v5522, 126
        %v5826 = vpop.permute.xlu0 %5825
        %5827 = vrot.lane.b32.xlu0 %v5524, 126
        %v5828 = vpop.permute.xlu0 %5827
        %5829 = vrot.lane.b32.xlu0 %v5526, 126
        %v5830 = vpop.permute.xlu0 %5829
        %v5839 = vadd.f32 %v5799, %v5816
        %v5840 = vadd.f32 %v5800, %v5818
        %v5841 = vadd.f32 %v5801, %v5820
        %v5842 = vadd.f32 %v5802, %v5822
        %v5843 = vadd.f32 %v5803, %v5824
        %v5844 = vadd.f32 %v5804, %v5826
        %v5845 = vadd.f32 %v5805, %v5828
        %v5846 = vadd.f32 %v5806, %v5830
        %5855 = vrot.lane.b32.xlu0 %v5560, 125
        %v5856 = vpop.permute.xlu0 %5855
        %5857 = vrot.lane.b32.xlu0 %v5562, 125
        %v5858 = vpop.permute.xlu0 %5857
        %5859 = vrot.lane.b32.xlu0 %v5564, 125
        %v5860 = vpop.permute.xlu0 %5859
        %5861 = vrot.lane.b32.xlu0 %v5566, 125
        %v5862 = vpop.permute.xlu0 %5861
        %5863 = vrot.lane.b32.xlu0 %v5568, 125
        %v5864 = vpop.permute.xlu0 %5863
        %5865 = vrot.lane.b32.xlu0 %v5570, 125
        %v5866 = vpop.permute.xlu0 %5865
        %5867 = vrot.lane.b32.xlu0 %v5572, 125
        %v5868 = vpop.permute.xlu0 %5867
        %5869 = vrot.lane.b32.xlu0 %v5574, 125
        %v5870 = vpop.permute.xlu0 %5869
        %v5879 = vadd.f32 %v5839, %v5856
        %v5880 = vadd.f32 %v5840, %v5858
        %v5881 = vadd.f32 %v5841, %v5860
        %v5882 = vadd.f32 %v5842, %v5862
        %v5883 = vadd.f32 %v5843, %v5864
        %v5884 = vadd.f32 %v5844, %v5866
        %v5885 = vadd.f32 %v5845, %v5868
        %v5886 = vadd.f32 %v5846, %v5870
        %5895 = vrot.lane.b32.xlu0 %v5608, 124
        %v5896 = vpop.permute.xlu0 %5895
        %5897 = vrot.lane.b32.xlu0 %v5610, 124
        %v5898 = vpop.permute.xlu0 %5897
        %5899 = vrot.lane.b32.xlu0 %v5612, 124
        %v5900 = vpop.permute.xlu0 %5899
        %5901 = vrot.lane.b32.xlu0 %v5614, 124
        %v5902 = vpop.permute.xlu0 %5901
        %5903 = vrot.lane.b32.xlu0 %v5616, 124
        %v5904 = vpop.permute.xlu0 %5903
        %5905 = vrot.lane.b32.xlu0 %v5618, 124
        %v5906 = vpop.permute.xlu0 %5905
        %5907 = vrot.lane.b32.xlu0 %v5620, 124
        %v5908 = vpop.permute.xlu0 %5907
        %5909 = vrot.lane.b32.xlu0 %v5622, 124
        %v5910 = vpop.permute.xlu0 %5909
        %v5919 = vadd.f32 %v5879, %v5896
        %v5920 = vadd.f32 %v5880, %v5898
        %v5921 = vadd.f32 %v5881, %v5900
        %v5922 = vadd.f32 %v5882, %v5902
        %v5923 = vadd.f32 %v5883, %v5904
        %v5924 = vadd.f32 %v5884, %v5906
        %v5925 = vadd.f32 %v5885, %v5908
        %v5926 = vadd.f32 %v5886, %v5910
        %5935 = vrot.lane.b32.xlu0 %v5656, 123
        %v5936 = vpop.permute.xlu0 %5935
        %5937 = vrot.lane.b32.xlu0 %v5658, 123
        %v5938 = vpop.permute.xlu0 %5937
        %5939 = vrot.lane.b32.xlu0 %v5660, 123
        %v5940 = vpop.permute.xlu0 %5939
        %5941 = vrot.lane.b32.xlu0 %v5662, 123
        %v5942 = vpop.permute.xlu0 %5941
        %5943 = vrot.lane.b32.xlu0 %v5664, 123
        %v5944 = vpop.permute.xlu0 %5943
        %5945 = vrot.lane.b32.xlu0 %v5666, 123
        %v5946 = vpop.permute.xlu0 %5945
        %5947 = vrot.lane.b32.xlu0 %v5668, 123
        %v5948 = vpop.permute.xlu0 %5947
        %5949 = vrot.lane.b32.xlu0 %v5670, 123
        %v5950 = vpop.permute.xlu0 %5949
        %v5959 = vadd.f32 %v5919, %v5936
        %v5960 = vadd.f32 %v5920, %v5938
        %v5961 = vadd.f32 %v5921, %v5940
        %v5962 = vadd.f32 %v5922, %v5942
        %v5963 = vadd.f32 %v5923, %v5944
        %v5964 = vadd.f32 %v5924, %v5946
        %v5965 = vadd.f32 %v5925, %v5948
        %v5966 = vadd.f32 %v5926, %v5950
        %5975 = vrot.lane.b32.xlu0 %v5704, 122
        %v5976 = vpop.permute.xlu0 %5975
        %5977 = vrot.lane.b32.xlu0 %v5706, 122
        %v5978 = vpop.permute.xlu0 %5977
        %5979 = vrot.lane.b32.xlu0 %v5708, 122
        %v5980 = vpop.permute.xlu0 %5979
        %5981 = vrot.lane.b32.xlu0 %v5710, 122
        %v5982 = vpop.permute.xlu0 %5981
        %5983 = vrot.lane.b32.xlu0 %v5712, 122
        %v5984 = vpop.permute.xlu0 %5983
        %5985 = vrot.lane.b32.xlu0 %v5714, 122
        %v5986 = vpop.permute.xlu0 %5985
        %5987 = vrot.lane.b32.xlu0 %v5716, 122
        %v5988 = vpop.permute.xlu0 %5987
        %5989 = vrot.lane.b32.xlu0 %v5718, 122
        %v5990 = vpop.permute.xlu0 %5989
        %v5999 = vadd.f32 %v5959, %v5976
        %v6000 = vadd.f32 %v5960, %v5978
        %v6001 = vadd.f32 %v5961, %v5980
        %v6002 = vadd.f32 %v5962, %v5982
        %v6003 = vadd.f32 %v5963, %v5984
        %v6004 = vadd.f32 %v5964, %v5986
        %v6005 = vadd.f32 %v5965, %v5988
        %v6006 = vadd.f32 %v5966, %v5990
        %6015 = vrot.lane.b32.xlu0 %v5752, 121
        %v6016 = vpop.permute.xlu0 %6015
        %6017 = vrot.lane.b32.xlu0 %v5754, 121
        %v6018 = vpop.permute.xlu0 %6017
        %6019 = vrot.lane.b32.xlu0 %v5756, 121
        %v6020 = vpop.permute.xlu0 %6019
        %6021 = vrot.lane.b32.xlu0 %v5758, 121
        %v6022 = vpop.permute.xlu0 %6021
        %6023 = vrot.lane.b32.xlu0 %v5760, 121
        %v6024 = vpop.permute.xlu0 %6023
        %6025 = vrot.lane.b32.xlu0 %v5762, 121
        %v6026 = vpop.permute.xlu0 %6025
        %6027 = vrot.lane.b32.xlu0 %v5764, 121
        %v6028 = vpop.permute.xlu0 %6027
        %6029 = vrot.lane.b32.xlu0 %v5766, 121
        %v6030 = vpop.permute.xlu0 %6029
        %v6039 = vadd.f32 %v5999, %v6016
        %v6040 = vadd.f32 %v6000, %v6018
        %v6041 = vadd.f32 %v6001, %v6020
        %v6042 = vadd.f32 %v6002, %v6022
        %v6043 = vadd.f32 %v6003, %v6024
        %v6044 = vadd.f32 %v6004, %v6026
        %v6045 = vadd.f32 %v6005, %v6028
        %v6046 = vadd.f32 %v6006, %v6030
        %6048 = vset.pattern.permute.xlu0 0
        %6049 = vperm.xlu0 %6048, %v5408
        %v6050 = vpop.permute.xlu0 %6049
        %6053 = vset.pattern.permute.xlu0 0
        %6054 = vperm.xlu0 %6053, %v5410
        %v6055 = vpop.permute.xlu0 %6054
        %6058 = vset.pattern.permute.xlu0 0
        %6059 = vperm.xlu0 %6058, %v5412
        %v6060 = vpop.permute.xlu0 %6059
        %6063 = vset.pattern.permute.xlu0 0
        %6064 = vperm.xlu0 %6063, %v5414
        %v6065 = vpop.permute.xlu0 %6064
        %6068 = vset.pattern.permute.xlu0 0
        %6069 = vperm.xlu0 %6068, %v5416
        %v6070 = vpop.permute.xlu0 %6069
        %6073 = vset.pattern.permute.xlu0 0
        %6074 = vperm.xlu0 %6073, %v5418
        %v6075 = vpop.permute.xlu0 %6074
        %6078 = vset.pattern.permute.xlu0 0
        %6079 = vperm.xlu0 %6078, %v5420
        %v6080 = vpop.permute.xlu0 %6079
        %6083 = vset.pattern.permute.xlu0 0
        %6084 = vperm.xlu0 %6083, %v5422
        %v6085 = vpop.permute.xlu0 %6084
        %v6151 = vrot.slane %v3007, 7
        %v6152 = vsel %vm1924, %v6151, %v3003
        %v6153 = vrot.slane %v3013, 6
        %v6154 = vsel %vm1927, %v6153, %v6152
        %v6155 = vrot.slane %v3017, 5
        %v6156 = vsel %vm1930, %v6155, %v6154
        %v6157 = vrot.slane %v3023, 4
        %v6158 = vsel %vm1933, %v6157, %v6156
        %v6159 = vrot.slane %v3027, 3
        %v6160 = vsel %vm1936, %v6159, %v6158
        %v6161 = vrot.slane %v3033, 2
        %v6162 = vsel %vm1939, %v6161, %v6160
        %v6163 = vrot.slane %v3037, 1
        %v6164 = vsel %vm1942, %v6163, %v6162
        %v6165 = vrot.slane %v3047, 7
        %v6166 = vsel %vm1924, %v6165, %v3043
        %v6167 = vrot.slane %v3053, 6
        %v6168 = vsel %vm1927, %v6167, %v6166
        %v6169 = vrot.slane %v3057, 5
        %v6170 = vsel %vm1930, %v6169, %v6168
        %v6171 = vrot.slane %v3063, 4
        %v6172 = vsel %vm1933, %v6171, %v6170
        %v6173 = vrot.slane %v3067, 3
        %v6174 = vsel %vm1936, %v6173, %v6172
        %v6175 = vrot.slane %v3073, 2
        %v6176 = vsel %vm1939, %v6175, %v6174
        %v6177 = vrot.slane %v3077, 1
        %v6178 = vsel %vm1942, %v6177, %v6176
        %v6179 = vrot.slane %v3087, 7
        %v6180 = vsel %vm1924, %v6179, %v3083
        %v6181 = vrot.slane %v3093, 6
        %v6182 = vsel %vm1927, %v6181, %v6180
        %v6183 = vrot.slane %v3097, 5
        %v6184 = vsel %vm1930, %v6183, %v6182
        %v6185 = vrot.slane %v3103, 4
        %v6186 = vsel %vm1933, %v6185, %v6184
        %v6187 = vrot.slane %v3107, 3
        %v6188 = vsel %vm1936, %v6187, %v6186
        %v6189 = vrot.slane %v3113, 2
        %v6190 = vsel %vm1939, %v6189, %v6188
        %v6191 = vrot.slane %v3117, 1
        %v6192 = vsel %vm1942, %v6191, %v6190
        %v6193 = vrot.slane %v3127, 7
        %v6194 = vsel %vm1924, %v6193, %v3123
        %v6195 = vrot.slane %v3133, 6
        %v6196 = vsel %vm1927, %v6195, %v6194
        %v6197 = vrot.slane %v3137, 5
        %v6198 = vsel %vm1930, %v6197, %v6196
        %v6199 = vrot.slane %v3143, 4
        %v6200 = vsel %vm1933, %v6199, %v6198
        %v6201 = vrot.slane %v3147, 3
        %v6202 = vsel %vm1936, %v6201, %v6200
        %v6203 = vrot.slane %v3153, 2
        %v6204 = vsel %vm1939, %v6203, %v6202
        %v6205 = vrot.slane %v3157, 1
        %v6206 = vsel %vm1942, %v6205, %v6204
        %v6207 = vrot.slane %v3167, 7
        %v6208 = vsel %vm1924, %v6207, %v3163
        %v6209 = vrot.slane %v3173, 6
        %v6210 = vsel %vm1927, %v6209, %v6208
        %v6211 = vrot.slane %v3177, 5
        %v6212 = vsel %vm1930, %v6211, %v6210
        %v6213 = vrot.slane %v3183, 4
        %v6214 = vsel %vm1933, %v6213, %v6212
        %v6215 = vrot.slane %v3187, 3
        %v6216 = vsel %vm1936, %v6215, %v6214
        %v6217 = vrot.slane %v3193, 2
        %v6218 = vsel %vm1939, %v6217, %v6216
        %v6219 = vrot.slane %v3197, 1
        %v6220 = vsel %vm1942, %v6219, %v6218
        %v6221 = vrot.slane %v3207, 7
        %v6222 = vsel %vm1924, %v6221, %v3203
        %v6223 = vrot.slane %v3213, 6
        %v6224 = vsel %vm1927, %v6223, %v6222
        %v6225 = vrot.slane %v3217, 5
        %v6226 = vsel %vm1930, %v6225, %v6224
        %v6227 = vrot.slane %v3223, 4
        %v6228 = vsel %vm1933, %v6227, %v6226
        %v6229 = vrot.slane %v3227, 3
        %v6230 = vsel %vm1936, %v6229, %v6228
        %v6231 = vrot.slane %v3233, 2
        %v6232 = vsel %vm1939, %v6231, %v6230
        %v6233 = vrot.slane %v3237, 1
        %v6234 = vsel %vm1942, %v6233, %v6232
        %v6235 = vrot.slane %v3247, 7
        %v6236 = vsel %vm1924, %v6235, %v3243
        %v6237 = vrot.slane %v3253, 6
        %v6238 = vsel %vm1927, %v6237, %v6236
        %v6239 = vrot.slane %v3257, 5
        %v6240 = vsel %vm1930, %v6239, %v6238
        %v6241 = vrot.slane %v3263, 4
        %v6242 = vsel %vm1933, %v6241, %v6240
        %v6243 = vrot.slane %v3267, 3
        %v6244 = vsel %vm1936, %v6243, %v6242
        %v6245 = vrot.slane %v3273, 2
        %v6246 = vsel %vm1939, %v6245, %v6244
        %v6247 = vrot.slane %v3277, 1
        %v6248 = vsel %vm1942, %v6247, %v6246
        %v6249 = vrot.slane %v3287, 7
        %v6250 = vsel %vm1924, %v6249, %v3283
        %v6251 = vrot.slane %v3293, 6
        %v6252 = vsel %vm1927, %v6251, %v6250
        %v6253 = vrot.slane %v3297, 5
        %v6254 = vsel %vm1930, %v6253, %v6252
        %v6255 = vrot.slane %v3303, 4
        %v6256 = vsel %vm1933, %v6255, %v6254
        %v6257 = vrot.slane %v3307, 3
        %v6258 = vsel %vm1936, %v6257, %v6256
        %v6259 = vrot.slane %v3313, 2
        %v6260 = vsel %vm1939, %v6259, %v6258
        %v6261 = vrot.slane %v3317, 1
        %v6262 = vsel %vm1942, %v6261, %v6260
        %v6271 = vmul.f32 %v6050, %v6164
        %v6272 = vmul.f32 %v6055, %v6178
        %v6273 = vmul.f32 %v6060, %v6192
        %v6274 = vmul.f32 %v6065, %v6206
        %v6275 = vmul.f32 %v6070, %v6220
        %v6276 = vmul.f32 %v6075, %v6234
        %v6277 = vmul.f32 %v6080, %v6248
        %v6278 = vmul.f32 %v6085, %v6262
        %6279 = vset.pattern.permute.xlu0 1
        %6280 = vperm.xlu0 %6279, %v5464
        %v6281 = vpop.permute.xlu0 %6280
        %6283 = vset.pattern.permute.xlu0 1
        %6284 = vperm.xlu0 %6283, %v5466
        %v6285 = vpop.permute.xlu0 %6284
        %6287 = vset.pattern.permute.xlu0 1
        %6288 = vperm.xlu0 %6287, %v5468
        %v6289 = vpop.permute.xlu0 %6288
        %6291 = vset.pattern.permute.xlu0 1
        %6292 = vperm.xlu0 %6291, %v5470
        %v6293 = vpop.permute.xlu0 %6292
        %6295 = vset.pattern.permute.xlu0 1
        %6296 = vperm.xlu0 %6295, %v5472
        %v6297 = vpop.permute.xlu0 %6296
        %6299 = vset.pattern.permute.xlu0 1
        %6300 = vperm.xlu0 %6299, %v5474
        %v6301 = vpop.permute.xlu0 %6300
        %6303 = vset.pattern.permute.xlu0 1
        %6304 = vperm.xlu0 %6303, %v5476
        %v6305 = vpop.permute.xlu0 %6304
        %6307 = vset.pattern.permute.xlu0 1
        %6308 = vperm.xlu0 %6307, %v5478
        %v6309 = vpop.permute.xlu0 %6308
        %v6311 = vrot.slane %v3003, 1
        %v6312 = vsel %vm1924, %v3007, %v6311
        %v6313 = vrot.slane %v3013, 7
        %v6314 = vsel %vm1927, %v6313, %v6312
        %v6315 = vrot.slane %v3017, 6
        %v6316 = vsel %vm1930, %v6315, %v6314
        %v6317 = vrot.slane %v3023, 5
        %v6318 = vsel %vm1933, %v6317, %v6316
        %v6319 = vrot.slane %v3027, 4
        %v6320 = vsel %vm1936, %v6319, %v6318
        %v6321 = vrot.slane %v3033, 3
        %v6322 = vsel %vm1939, %v6321, %v6320
        %v6323 = vrot.slane %v3037, 2
        %v6324 = vsel %vm1942, %v6323, %v6322
        %v6325 = vrot.slane %v3043, 1
        %v6326 = vsel %vm1924, %v3047, %v6325
        %v6327 = vrot.slane %v3053, 7
        %v6328 = vsel %vm1927, %v6327, %v6326
        %v6329 = vrot.slane %v3057, 6
        %v6330 = vsel %vm1930, %v6329, %v6328
        %v6331 = vrot.slane %v3063, 5
        %v6332 = vsel %vm1933, %v6331, %v6330
        %v6333 = vrot.slane %v3067, 4
        %v6334 = vsel %vm1936, %v6333, %v6332
        %v6335 = vrot.slane %v3073, 3
        %v6336 = vsel %vm1939, %v6335, %v6334
        %v6337 = vrot.slane %v3077, 2
        %v6338 = vsel %vm1942, %v6337, %v6336
        %v6339 = vrot.slane %v3083, 1
        %v6340 = vsel %vm1924, %v3087, %v6339
        %v6341 = vrot.slane %v3093, 7
        %v6342 = vsel %vm1927, %v6341, %v6340
        %v6343 = vrot.slane %v3097, 6
        %v6344 = vsel %vm1930, %v6343, %v6342
        %v6345 = vrot.slane %v3103, 5
        %v6346 = vsel %vm1933, %v6345, %v6344
        %v6347 = vrot.slane %v3107, 4
        %v6348 = vsel %vm1936, %v6347, %v6346
        %v6349 = vrot.slane %v3113, 3
        %v6350 = vsel %vm1939, %v6349, %v6348
        %v6351 = vrot.slane %v3117, 2
        %v6352 = vsel %vm1942, %v6351, %v6350
        %v6353 = vrot.slane %v3123, 1
        %v6354 = vsel %vm1924, %v3127, %v6353
        %v6355 = vrot.slane %v3133, 7
        %v6356 = vsel %vm1927, %v6355, %v6354
        %v6357 = vrot.slane %v3137, 6
        %v6358 = vsel %vm1930, %v6357, %v6356
        %v6359 = vrot.slane %v3143, 5
        %v6360 = vsel %vm1933, %v6359, %v6358
        %v6361 = vrot.slane %v3147, 4
        %v6362 = vsel %vm1936, %v6361, %v6360
        %v6363 = vrot.slane %v3153, 3
        %v6364 = vsel %vm1939, %v6363, %v6362
        %v6365 = vrot.slane %v3157, 2
        %v6366 = vsel %vm1942, %v6365, %v6364
        %v6367 = vrot.slane %v3163, 1
        %v6368 = vsel %vm1924, %v3167, %v6367
        %v6369 = vrot.slane %v3173, 7
        %v6370 = vsel %vm1927, %v6369, %v6368
        %v6371 = vrot.slane %v3177, 6
        %v6372 = vsel %vm1930, %v6371, %v6370
        %v6373 = vrot.slane %v3183, 5
        %v6374 = vsel %vm1933, %v6373, %v6372
        %v6375 = vrot.slane %v3187, 4
        %v6376 = vsel %vm1936, %v6375, %v6374
        %v6377 = vrot.slane %v3193, 3
        %v6378 = vsel %vm1939, %v6377, %v6376
        %v6379 = vrot.slane %v3197, 2
        %v6380 = vsel %vm1942, %v6379, %v6378
        %v6381 = vrot.slane %v3203, 1
        %v6382 = vsel %vm1924, %v3207, %v6381
        %v6383 = vrot.slane %v3213, 7
        %v6384 = vsel %vm1927, %v6383, %v6382
        %v6385 = vrot.slane %v3217, 6
        %v6386 = vsel %vm1930, %v6385, %v6384
        %v6387 = vrot.slane %v3223, 5
        %v6388 = vsel %vm1933, %v6387, %v6386
        %v6389 = vrot.slane %v3227, 4
        %v6390 = vsel %vm1936, %v6389, %v6388
        %v6391 = vrot.slane %v3233, 3
        %v6392 = vsel %vm1939, %v6391, %v6390
        %v6393 = vrot.slane %v3237, 2
        %v6394 = vsel %vm1942, %v6393, %v6392
        %v6395 = vrot.slane %v3243, 1
        %v6396 = vsel %vm1924, %v3247, %v6395
        %v6397 = vrot.slane %v3253, 7
        %v6398 = vsel %vm1927, %v6397, %v6396
        %v6399 = vrot.slane %v3257, 6
        %v6400 = vsel %vm1930, %v6399, %v6398
        %v6401 = vrot.slane %v3263, 5
        %v6402 = vsel %vm1933, %v6401, %v6400
        %v6403 = vrot.slane %v3267, 4
        %v6404 = vsel %vm1936, %v6403, %v6402
        %v6405 = vrot.slane %v3273, 3
        %v6406 = vsel %vm1939, %v6405, %v6404
        %v6407 = vrot.slane %v3277, 2
        %v6408 = vsel %vm1942, %v6407, %v6406
        %v6409 = vrot.slane %v3283, 1
        %v6410 = vsel %vm1924, %v3287, %v6409
        %v6411 = vrot.slane %v3293, 7
        %v6412 = vsel %vm1927, %v6411, %v6410
        %v6413 = vrot.slane %v3297, 6
        %v6414 = vsel %vm1930, %v6413, %v6412
        %v6415 = vrot.slane %v3303, 5
        %v6416 = vsel %vm1933, %v6415, %v6414
        %v6417 = vrot.slane %v3307, 4
        %v6418 = vsel %vm1936, %v6417, %v6416
        %v6419 = vrot.slane %v3313, 3
        %v6420 = vsel %vm1939, %v6419, %v6418
        %v6421 = vrot.slane %v3317, 2
        %v6422 = vsel %vm1942, %v6421, %v6420
        %v6431 = vmul.f32 %v6281, %v6324
        %v6432 = vmul.f32 %v6285, %v6338
        %v6433 = vmul.f32 %v6289, %v6352
        %v6434 = vmul.f32 %v6293, %v6366
        %v6435 = vmul.f32 %v6297, %v6380
        %v6436 = vmul.f32 %v6301, %v6394
        %v6437 = vmul.f32 %v6305, %v6408
        %v6438 = vmul.f32 %v6309, %v6422
        %v6439 = vadd.f32 %v6271, %v6431
        %v6440 = vadd.f32 %v6272, %v6432
        %v6441 = vadd.f32 %v6273, %v6433
        %v6442 = vadd.f32 %v6274, %v6434
        %v6443 = vadd.f32 %v6275, %v6435
        %v6444 = vadd.f32 %v6276, %v6436
        %v6445 = vadd.f32 %v6277, %v6437
        %v6446 = vadd.f32 %v6278, %v6438
        %6447 = vset.pattern.permute.xlu0 2
        %6448 = vperm.xlu0 %6447, %v5512
        %v6449 = vpop.permute.xlu0 %6448
        %6451 = vset.pattern.permute.xlu0 2
        %6452 = vperm.xlu0 %6451, %v5514
        %v6453 = vpop.permute.xlu0 %6452
        %6455 = vset.pattern.permute.xlu0 2
        %6456 = vperm.xlu0 %6455, %v5516
        %v6457 = vpop.permute.xlu0 %6456
        %6459 = vset.pattern.permute.xlu0 2
        %6460 = vperm.xlu0 %6459, %v5518
        %v6461 = vpop.permute.xlu0 %6460
        %6463 = vset.pattern.permute.xlu0 2
        %6464 = vperm.xlu0 %6463, %v5520
        %v6465 = vpop.permute.xlu0 %6464
        %6467 = vset.pattern.permute.xlu0 2
        %6468 = vperm.xlu0 %6467, %v5522
        %v6469 = vpop.permute.xlu0 %6468
        %6471 = vset.pattern.permute.xlu0 2
        %6472 = vperm.xlu0 %6471, %v5524
        %v6473 = vpop.permute.xlu0 %6472
        %6475 = vset.pattern.permute.xlu0 2
        %6476 = vperm.xlu0 %6475, %v5526
        %v6477 = vpop.permute.xlu0 %6476
        %v6479 = vrot.slane %v3003, 2
        %v6480 = vrot.slane %v3007, 1
        %v6481 = vsel %vm1924, %v6480, %v6479
        %v6482 = vsel %vm1927, %v3013, %v6481
        %v6483 = vrot.slane %v3017, 7
        %v6484 = vsel %vm1930, %v6483, %v6482
        %v6485 = vrot.slane %v3023, 6
        %v6486 = vsel %vm1933, %v6485, %v6484
        %v6487 = vrot.slane %v3027, 5
        %v6488 = vsel %vm1936, %v6487, %v6486
        %v6489 = vrot.slane %v3033, 4
        %v6490 = vsel %vm1939, %v6489, %v6488
        %v6491 = vrot.slane %v3037, 3
        %v6492 = vsel %vm1942, %v6491, %v6490
        %v6493 = vrot.slane %v3043, 2
        %v6494 = vrot.slane %v3047, 1
        %v6495 = vsel %vm1924, %v6494, %v6493
        %v6496 = vsel %vm1927, %v3053, %v6495
        %v6497 = vrot.slane %v3057, 7
        %v6498 = vsel %vm1930, %v6497, %v6496
        %v6499 = vrot.slane %v3063, 6
        %v6500 = vsel %vm1933, %v6499, %v6498
        %v6501 = vrot.slane %v3067, 5
        %v6502 = vsel %vm1936, %v6501, %v6500
        %v6503 = vrot.slane %v3073, 4
        %v6504 = vsel %vm1939, %v6503, %v6502
        %v6505 = vrot.slane %v3077, 3
        %v6506 = vsel %vm1942, %v6505, %v6504
        %v6507 = vrot.slane %v3083, 2
        %v6508 = vrot.slane %v3087, 1
        %v6509 = vsel %vm1924, %v6508, %v6507
        %v6510 = vsel %vm1927, %v3093, %v6509
        %v6511 = vrot.slane %v3097, 7
        %v6512 = vsel %vm1930, %v6511, %v6510
        %v6513 = vrot.slane %v3103, 6
        %v6514 = vsel %vm1933, %v6513, %v6512
        %v6515 = vrot.slane %v3107, 5
        %v6516 = vsel %vm1936, %v6515, %v6514
        %v6517 = vrot.slane %v3113, 4
        %v6518 = vsel %vm1939, %v6517, %v6516
        %v6519 = vrot.slane %v3117, 3
        %v6520 = vsel %vm1942, %v6519, %v6518
        %v6521 = vrot.slane %v3123, 2
        %v6522 = vrot.slane %v3127, 1
        %v6523 = vsel %vm1924, %v6522, %v6521
        %v6524 = vsel %vm1927, %v3133, %v6523
        %v6525 = vrot.slane %v3137, 7
        %v6526 = vsel %vm1930, %v6525, %v6524
        %v6527 = vrot.slane %v3143, 6
        %v6528 = vsel %vm1933, %v6527, %v6526
        %v6529 = vrot.slane %v3147, 5
        %v6530 = vsel %vm1936, %v6529, %v6528
        %v6531 = vrot.slane %v3153, 4
        %v6532 = vsel %vm1939, %v6531, %v6530
        %v6533 = vrot.slane %v3157, 3
        %v6534 = vsel %vm1942, %v6533, %v6532
        %v6535 = vrot.slane %v3163, 2
        %v6536 = vrot.slane %v3167, 1
        %v6537 = vsel %vm1924, %v6536, %v6535
        %v6538 = vsel %vm1927, %v3173, %v6537
        %v6539 = vrot.slane %v3177, 7
        %v6540 = vsel %vm1930, %v6539, %v6538
        %v6541 = vrot.slane %v3183, 6
        %v6542 = vsel %vm1933, %v6541, %v6540
        %v6543 = vrot.slane %v3187, 5
        %v6544 = vsel %vm1936, %v6543, %v6542
        %v6545 = vrot.slane %v3193, 4
        %v6546 = vsel %vm1939, %v6545, %v6544
        %v6547 = vrot.slane %v3197, 3
        %v6548 = vsel %vm1942, %v6547, %v6546
        %v6549 = vrot.slane %v3203, 2
        %v6550 = vrot.slane %v3207, 1
        %v6551 = vsel %vm1924, %v6550, %v6549
        %v6552 = vsel %vm1927, %v3213, %v6551
        %v6553 = vrot.slane %v3217, 7
        %v6554 = vsel %vm1930, %v6553, %v6552
        %v6555 = vrot.slane %v3223, 6
        %v6556 = vsel %vm1933, %v6555, %v6554
        %v6557 = vrot.slane %v3227, 5
        %v6558 = vsel %vm1936, %v6557, %v6556
        %v6559 = vrot.slane %v3233, 4
        %v6560 = vsel %vm1939, %v6559, %v6558
        %v6561 = vrot.slane %v3237, 3
        %v6562 = vsel %vm1942, %v6561, %v6560
        %v6563 = vrot.slane %v3243, 2
        %v6564 = vrot.slane %v3247, 1
        %v6565 = vsel %vm1924, %v6564, %v6563
        %v6566 = vsel %vm1927, %v3253, %v6565
        %v6567 = vrot.slane %v3257, 7
        %v6568 = vsel %vm1930, %v6567, %v6566
        %v6569 = vrot.slane %v3263, 6
        %v6570 = vsel %vm1933, %v6569, %v6568
        %v6571 = vrot.slane %v3267, 5
        %v6572 = vsel %vm1936, %v6571, %v6570
        %v6573 = vrot.slane %v3273, 4
        %v6574 = vsel %vm1939, %v6573, %v6572
        %v6575 = vrot.slane %v3277, 3
        %v6576 = vsel %vm1942, %v6575, %v6574
        %v6577 = vrot.slane %v3283, 2
        %v6578 = vrot.slane %v3287, 1
        %v6579 = vsel %vm1924, %v6578, %v6577
        %v6580 = vsel %vm1927, %v3293, %v6579
        %v6581 = vrot.slane %v3297, 7
        %v6582 = vsel %vm1930, %v6581, %v6580
        %v6583 = vrot.slane %v3303, 6
        %v6584 = vsel %vm1933, %v6583, %v6582
        %v6585 = vrot.slane %v3307, 5
        %v6586 = vsel %vm1936, %v6585, %v6584
        %v6587 = vrot.slane %v3313, 4
        %v6588 = vsel %vm1939, %v6587, %v6586
        %v6589 = vrot.slane %v3317, 3
        %v6590 = vsel %vm1942, %v6589, %v6588
        %v6599 = vmul.f32 %v6449, %v6492
        %v6600 = vmul.f32 %v6453, %v6506
        %v6601 = vmul.f32 %v6457, %v6520
        %v6602 = vmul.f32 %v6461, %v6534
        %v6603 = vmul.f32 %v6465, %v6548
        %v6604 = vmul.f32 %v6469, %v6562
        %v6605 = vmul.f32 %v6473, %v6576
        %v6606 = vmul.f32 %v6477, %v6590
        %v6607 = vadd.f32 %v6439, %v6599
        %v6608 = vadd.f32 %v6440, %v6600
        %v6609 = vadd.f32 %v6441, %v6601
        %v6610 = vadd.f32 %v6442, %v6602
        %v6611 = vadd.f32 %v6443, %v6603
        %v6612 = vadd.f32 %v6444, %v6604
        %v6613 = vadd.f32 %v6445, %v6605
        %v6614 = vadd.f32 %v6446, %v6606
        %6615 = vset.pattern.permute.xlu0 3
        %6616 = vperm.xlu0 %6615, %v5560
        %v6617 = vpop.permute.xlu0 %6616
        %6619 = vset.pattern.permute.xlu0 3
        %6620 = vperm.xlu0 %6619, %v5562
        %v6621 = vpop.permute.xlu0 %6620
        %6623 = vset.pattern.permute.xlu0 3
        %6624 = vperm.xlu0 %6623, %v5564
        %v6625 = vpop.permute.xlu0 %6624
        %6627 = vset.pattern.permute.xlu0 3
        %6628 = vperm.xlu0 %6627, %v5566
        %v6629 = vpop.permute.xlu0 %6628
        %6631 = vset.pattern.permute.xlu0 3
        %6632 = vperm.xlu0 %6631, %v5568
        %v6633 = vpop.permute.xlu0 %6632
        %6635 = vset.pattern.permute.xlu0 3
        %6636 = vperm.xlu0 %6635, %v5570
        %v6637 = vpop.permute.xlu0 %6636
        %6639 = vset.pattern.permute.xlu0 3
        %6640 = vperm.xlu0 %6639, %v5572
        %v6641 = vpop.permute.xlu0 %6640
        %6643 = vset.pattern.permute.xlu0 3
        %6644 = vperm.xlu0 %6643, %v5574
        %v6645 = vpop.permute.xlu0 %6644
        %v6647 = vrot.slane %v3003, 3
        %v6648 = vrot.slane %v3007, 2
        %v6649 = vsel %vm1924, %v6648, %v6647
        %v6650 = vrot.slane %v3013, 1
        %v6651 = vsel %vm1927, %v6650, %v6649
        %v6652 = vsel %vm1930, %v3017, %v6651
        %v6653 = vrot.slane %v3023, 7
        %v6654 = vsel %vm1933, %v6653, %v6652
        %v6655 = vrot.slane %v3027, 6
        %v6656 = vsel %vm1936, %v6655, %v6654
        %v6657 = vrot.slane %v3033, 5
        %v6658 = vsel %vm1939, %v6657, %v6656
        %v6659 = vrot.slane %v3037, 4
        %v6660 = vsel %vm1942, %v6659, %v6658
        %v6661 = vrot.slane %v3043, 3
        %v6662 = vrot.slane %v3047, 2
        %v6663 = vsel %vm1924, %v6662, %v6661
        %v6664 = vrot.slane %v3053, 1
        %v6665 = vsel %vm1927, %v6664, %v6663
        %v6666 = vsel %vm1930, %v3057, %v6665
        %v6667 = vrot.slane %v3063, 7
        %v6668 = vsel %vm1933, %v6667, %v6666
        %v6669 = vrot.slane %v3067, 6
        %v6670 = vsel %vm1936, %v6669, %v6668
        %v6671 = vrot.slane %v3073, 5
        %v6672 = vsel %vm1939, %v6671, %v6670
        %v6673 = vrot.slane %v3077, 4
        %v6674 = vsel %vm1942, %v6673, %v6672
        %v6675 = vrot.slane %v3083, 3
        %v6676 = vrot.slane %v3087, 2
        %v6677 = vsel %vm1924, %v6676, %v6675
        %v6678 = vrot.slane %v3093, 1
        %v6679 = vsel %vm1927, %v6678, %v6677
        %v6680 = vsel %vm1930, %v3097, %v6679
        %v6681 = vrot.slane %v3103, 7
        %v6682 = vsel %vm1933, %v6681, %v6680
        %v6683 = vrot.slane %v3107, 6
        %v6684 = vsel %vm1936, %v6683, %v6682
        %v6685 = vrot.slane %v3113, 5
        %v6686 = vsel %vm1939, %v6685, %v6684
        %v6687 = vrot.slane %v3117, 4
        %v6688 = vsel %vm1942, %v6687, %v6686
        %v6689 = vrot.slane %v3123, 3
        %v6690 = vrot.slane %v3127, 2
        %v6691 = vsel %vm1924, %v6690, %v6689
        %v6692 = vrot.slane %v3133, 1
        %v6693 = vsel %vm1927, %v6692, %v6691
        %v6694 = vsel %vm1930, %v3137, %v6693
        %v6695 = vrot.slane %v3143, 7
        %v6696 = vsel %vm1933, %v6695, %v6694
        %v6697 = vrot.slane %v3147, 6
        %v6698 = vsel %vm1936, %v6697, %v6696
        %v6699 = vrot.slane %v3153, 5
        %v6700 = vsel %vm1939, %v6699, %v6698
        %v6701 = vrot.slane %v3157, 4
        %v6702 = vsel %vm1942, %v6701, %v6700
        %v6703 = vrot.slane %v3163, 3
        %v6704 = vrot.slane %v3167, 2
        %v6705 = vsel %vm1924, %v6704, %v6703
        %v6706 = vrot.slane %v3173, 1
        %v6707 = vsel %vm1927, %v6706, %v6705
        %v6708 = vsel %vm1930, %v3177, %v6707
        %v6709 = vrot.slane %v3183, 7
        %v6710 = vsel %vm1933, %v6709, %v6708
        %v6711 = vrot.slane %v3187, 6
        %v6712 = vsel %vm1936, %v6711, %v6710
        %v6713 = vrot.slane %v3193, 5
        %v6714 = vsel %vm1939, %v6713, %v6712
        %v6715 = vrot.slane %v3197, 4
        %v6716 = vsel %vm1942, %v6715, %v6714
        %v6717 = vrot.slane %v3203, 3
        %v6718 = vrot.slane %v3207, 2
        %v6719 = vsel %vm1924, %v6718, %v6717
        %v6720 = vrot.slane %v3213, 1
        %v6721 = vsel %vm1927, %v6720, %v6719
        %v6722 = vsel %vm1930, %v3217, %v6721
        %v6723 = vrot.slane %v3223, 7
        %v6724 = vsel %vm1933, %v6723, %v6722
        %v6725 = vrot.slane %v3227, 6
        %v6726 = vsel %vm1936, %v6725, %v6724
        %v6727 = vrot.slane %v3233, 5
        %v6728 = vsel %vm1939, %v6727, %v6726
        %v6729 = vrot.slane %v3237, 4
        %v6730 = vsel %vm1942, %v6729, %v6728
        %v6731 = vrot.slane %v3243, 3
        %v6732 = vrot.slane %v3247, 2
        %v6733 = vsel %vm1924, %v6732, %v6731
        %v6734 = vrot.slane %v3253, 1
        %v6735 = vsel %vm1927, %v6734, %v6733
        %v6736 = vsel %vm1930, %v3257, %v6735
        %v6737 = vrot.slane %v3263, 7
        %v6738 = vsel %vm1933, %v6737, %v6736
        %v6739 = vrot.slane %v3267, 6
        %v6740 = vsel %vm1936, %v6739, %v6738
        %v6741 = vrot.slane %v3273, 5
        %v6742 = vsel %vm1939, %v6741, %v6740
        %v6743 = vrot.slane %v3277, 4
        %v6744 = vsel %vm1942, %v6743, %v6742
        %v6745 = vrot.slane %v3283, 3
        %v6746 = vrot.slane %v3287, 2
        %v6747 = vsel %vm1924, %v6746, %v6745
        %v6748 = vrot.slane %v3293, 1
        %v6749 = vsel %vm1927, %v6748, %v6747
        %v6750 = vsel %vm1930, %v3297, %v6749
        %v6751 = vrot.slane %v3303, 7
        %v6752 = vsel %vm1933, %v6751, %v6750
        %v6753 = vrot.slane %v3307, 6
        %v6754 = vsel %vm1936, %v6753, %v6752
        %v6755 = vrot.slane %v3313, 5
        %v6756 = vsel %vm1939, %v6755, %v6754
        %v6757 = vrot.slane %v3317, 4
        %v6758 = vsel %vm1942, %v6757, %v6756
        %v6767 = vmul.f32 %v6617, %v6660
        %v6768 = vmul.f32 %v6621, %v6674
        %v6769 = vmul.f32 %v6625, %v6688
        %v6770 = vmul.f32 %v6629, %v6702
        %v6771 = vmul.f32 %v6633, %v6716
        %v6772 = vmul.f32 %v6637, %v6730
        %v6773 = vmul.f32 %v6641, %v6744
        %v6774 = vmul.f32 %v6645, %v6758
        %v6775 = vadd.f32 %v6607, %v6767
        %v6776 = vadd.f32 %v6608, %v6768
        %v6777 = vadd.f32 %v6609, %v6769
        %v6778 = vadd.f32 %v6610, %v6770
        %v6779 = vadd.f32 %v6611, %v6771
        %v6780 = vadd.f32 %v6612, %v6772
        %v6781 = vadd.f32 %v6613, %v6773
        %v6782 = vadd.f32 %v6614, %v6774
        %6783 = vset.pattern.permute.xlu0 4
        %6784 = vperm.xlu0 %6783, %v5608
        %v6785 = vpop.permute.xlu0 %6784
        %6787 = vset.pattern.permute.xlu0 4
        %6788 = vperm.xlu0 %6787, %v5610
        %v6789 = vpop.permute.xlu0 %6788
        %6791 = vset.pattern.permute.xlu0 4
        %6792 = vperm.xlu0 %6791, %v5612
        %v6793 = vpop.permute.xlu0 %6792
        %6795 = vset.pattern.permute.xlu0 4
        %6796 = vperm.xlu0 %6795, %v5614
        %v6797 = vpop.permute.xlu0 %6796
        %6799 = vset.pattern.permute.xlu0 4
        %6800 = vperm.xlu0 %6799, %v5616
        %v6801 = vpop.permute.xlu0 %6800
        %6803 = vset.pattern.permute.xlu0 4
        %6804 = vperm.xlu0 %6803, %v5618
        %v6805 = vpop.permute.xlu0 %6804
        %6807 = vset.pattern.permute.xlu0 4
        %6808 = vperm.xlu0 %6807, %v5620
        %v6809 = vpop.permute.xlu0 %6808
        %6811 = vset.pattern.permute.xlu0 4
        %6812 = vperm.xlu0 %6811, %v5622
        %v6813 = vpop.permute.xlu0 %6812
        %v6815 = vrot.slane %v3003, 4
        %v6816 = vrot.slane %v3007, 3
        %v6817 = vsel %vm1924, %v6816, %v6815
        %v6818 = vrot.slane %v3013, 2
        %v6819 = vsel %vm1927, %v6818, %v6817
        %v6820 = vrot.slane %v3017, 1
        %v6821 = vsel %vm1930, %v6820, %v6819
        %v6822 = vsel %vm1933, %v3023, %v6821
        %v6823 = vrot.slane %v3027, 7
        %v6824 = vsel %vm1936, %v6823, %v6822
        %v6825 = vrot.slane %v3033, 6
        %v6826 = vsel %vm1939, %v6825, %v6824
        %v6827 = vrot.slane %v3037, 5
        %v6828 = vsel %vm1942, %v6827, %v6826
        %v6829 = vrot.slane %v3043, 4
        %v6830 = vrot.slane %v3047, 3
        %v6831 = vsel %vm1924, %v6830, %v6829
        %v6832 = vrot.slane %v3053, 2
        %v6833 = vsel %vm1927, %v6832, %v6831
        %v6834 = vrot.slane %v3057, 1
        %v6835 = vsel %vm1930, %v6834, %v6833
        %v6836 = vsel %vm1933, %v3063, %v6835
        %v6837 = vrot.slane %v3067, 7
        %v6838 = vsel %vm1936, %v6837, %v6836
        %v6839 = vrot.slane %v3073, 6
        %v6840 = vsel %vm1939, %v6839, %v6838
        %v6841 = vrot.slane %v3077, 5
        %v6842 = vsel %vm1942, %v6841, %v6840
        %v6843 = vrot.slane %v3083, 4
        %v6844 = vrot.slane %v3087, 3
        %v6845 = vsel %vm1924, %v6844, %v6843
        %v6846 = vrot.slane %v3093, 2
        %v6847 = vsel %vm1927, %v6846, %v6845
        %v6848 = vrot.slane %v3097, 1
        %v6849 = vsel %vm1930, %v6848, %v6847
        %v6850 = vsel %vm1933, %v3103, %v6849
        %v6851 = vrot.slane %v3107, 7
        %v6852 = vsel %vm1936, %v6851, %v6850
        %v6853 = vrot.slane %v3113, 6
        %v6854 = vsel %vm1939, %v6853, %v6852
        %v6855 = vrot.slane %v3117, 5
        %v6856 = vsel %vm1942, %v6855, %v6854
        %v6857 = vrot.slane %v3123, 4
        %v6858 = vrot.slane %v3127, 3
        %v6859 = vsel %vm1924, %v6858, %v6857
        %v6860 = vrot.slane %v3133, 2
        %v6861 = vsel %vm1927, %v6860, %v6859
        %v6862 = vrot.slane %v3137, 1
        %v6863 = vsel %vm1930, %v6862, %v6861
        %v6864 = vsel %vm1933, %v3143, %v6863
        %v6865 = vrot.slane %v3147, 7
        %v6866 = vsel %vm1936, %v6865, %v6864
        %v6867 = vrot.slane %v3153, 6
        %v6868 = vsel %vm1939, %v6867, %v6866
        %v6869 = vrot.slane %v3157, 5
        %v6870 = vsel %vm1942, %v6869, %v6868
        %v6871 = vrot.slane %v3163, 4
        %v6872 = vrot.slane %v3167, 3
        %v6873 = vsel %vm1924, %v6872, %v6871
        %v6874 = vrot.slane %v3173, 2
        %v6875 = vsel %vm1927, %v6874, %v6873
        %v6876 = vrot.slane %v3177, 1
        %v6877 = vsel %vm1930, %v6876, %v6875
        %v6878 = vsel %vm1933, %v3183, %v6877
        %v6879 = vrot.slane %v3187, 7
        %v6880 = vsel %vm1936, %v6879, %v6878
        %v6881 = vrot.slane %v3193, 6
        %v6882 = vsel %vm1939, %v6881, %v6880
        %v6883 = vrot.slane %v3197, 5
        %v6884 = vsel %vm1942, %v6883, %v6882
        %v6885 = vrot.slane %v3203, 4
        %v6886 = vrot.slane %v3207, 3
        %v6887 = vsel %vm1924, %v6886, %v6885
        %v6888 = vrot.slane %v3213, 2
        %v6889 = vsel %vm1927, %v6888, %v6887
        %v6890 = vrot.slane %v3217, 1
        %v6891 = vsel %vm1930, %v6890, %v6889
        %v6892 = vsel %vm1933, %v3223, %v6891
        %v6893 = vrot.slane %v3227, 7
        %v6894 = vsel %vm1936, %v6893, %v6892
        %v6895 = vrot.slane %v3233, 6
        %v6896 = vsel %vm1939, %v6895, %v6894
        %v6897 = vrot.slane %v3237, 5
        %v6898 = vsel %vm1942, %v6897, %v6896
        %v6899 = vrot.slane %v3243, 4
        %v6900 = vrot.slane %v3247, 3
        %v6901 = vsel %vm1924, %v6900, %v6899
        %v6902 = vrot.slane %v3253, 2
        %v6903 = vsel %vm1927, %v6902, %v6901
        %v6904 = vrot.slane %v3257, 1
        %v6905 = vsel %vm1930, %v6904, %v6903
        %v6906 = vsel %vm1933, %v3263, %v6905
        %v6907 = vrot.slane %v3267, 7
        %v6908 = vsel %vm1936, %v6907, %v6906
        %v6909 = vrot.slane %v3273, 6
        %v6910 = vsel %vm1939, %v6909, %v6908
        %v6911 = vrot.slane %v3277, 5
        %v6912 = vsel %vm1942, %v6911, %v6910
        %v6913 = vrot.slane %v3283, 4
        %v6914 = vrot.slane %v3287, 3
        %v6915 = vsel %vm1924, %v6914, %v6913
        %v6916 = vrot.slane %v3293, 2
        %v6917 = vsel %vm1927, %v6916, %v6915
        %v6918 = vrot.slane %v3297, 1
        %v6919 = vsel %vm1930, %v6918, %v6917
        %v6920 = vsel %vm1933, %v3303, %v6919
        %v6921 = vrot.slane %v3307, 7
        %v6922 = vsel %vm1936, %v6921, %v6920
        %v6923 = vrot.slane %v3313, 6
        %v6924 = vsel %vm1939, %v6923, %v6922
        %v6925 = vrot.slane %v3317, 5
        %v6926 = vsel %vm1942, %v6925, %v6924
        %v6935 = vmul.f32 %v6785, %v6828
        %v6936 = vmul.f32 %v6789, %v6842
        %v6937 = vmul.f32 %v6793, %v6856
        %v6938 = vmul.f32 %v6797, %v6870
        %v6939 = vmul.f32 %v6801, %v6884
        %v6940 = vmul.f32 %v6805, %v6898
        %v6941 = vmul.f32 %v6809, %v6912
        %v6942 = vmul.f32 %v6813, %v6926
        %v6943 = vadd.f32 %v6775, %v6935
        %v6944 = vadd.f32 %v6776, %v6936
        %v6945 = vadd.f32 %v6777, %v6937
        %v6946 = vadd.f32 %v6778, %v6938
        %v6947 = vadd.f32 %v6779, %v6939
        %v6948 = vadd.f32 %v6780, %v6940
        %v6949 = vadd.f32 %v6781, %v6941
        %v6950 = vadd.f32 %v6782, %v6942
        %6951 = vset.pattern.permute.xlu0 5
        %6952 = vperm.xlu0 %6951, %v5656
        %v6953 = vpop.permute.xlu0 %6952
        %6955 = vset.pattern.permute.xlu0 5
        %6956 = vperm.xlu0 %6955, %v5658
        %v6957 = vpop.permute.xlu0 %6956
        %6959 = vset.pattern.permute.xlu0 5
        %6960 = vperm.xlu0 %6959, %v5660
        %v6961 = vpop.permute.xlu0 %6960
        %6963 = vset.pattern.permute.xlu0 5
        %6964 = vperm.xlu0 %6963, %v5662
        %v6965 = vpop.permute.xlu0 %6964
        %6967 = vset.pattern.permute.xlu0 5
        %6968 = vperm.xlu0 %6967, %v5664
        %v6969 = vpop.permute.xlu0 %6968
        %6971 = vset.pattern.permute.xlu0 5
        %6972 = vperm.xlu0 %6971, %v5666
        %v6973 = vpop.permute.xlu0 %6972
        %6975 = vset.pattern.permute.xlu0 5
        %6976 = vperm.xlu0 %6975, %v5668
        %v6977 = vpop.permute.xlu0 %6976
        %6979 = vset.pattern.permute.xlu0 5
        %6980 = vperm.xlu0 %6979, %v5670
        %v6981 = vpop.permute.xlu0 %6980
        %v6983 = vrot.slane %v3003, 5
        %v6984 = vrot.slane %v3007, 4
        %v6985 = vsel %vm1924, %v6984, %v6983
        %v6986 = vrot.slane %v3013, 3
        %v6987 = vsel %vm1927, %v6986, %v6985
        %v6988 = vrot.slane %v3017, 2
        %v6989 = vsel %vm1930, %v6988, %v6987
        %v6990 = vrot.slane %v3023, 1
        %v6991 = vsel %vm1933, %v6990, %v6989
        %v6992 = vsel %vm1936, %v3027, %v6991
        %v6993 = vrot.slane %v3033, 7
        %v6994 = vsel %vm1939, %v6993, %v6992
        %v6995 = vrot.slane %v3037, 6
        %v6996 = vsel %vm1942, %v6995, %v6994
        %v6997 = vrot.slane %v3043, 5
        %v6998 = vrot.slane %v3047, 4
        %v6999 = vsel %vm1924, %v6998, %v6997
        %v7000 = vrot.slane %v3053, 3
        %v7001 = vsel %vm1927, %v7000, %v6999
        %v7002 = vrot.slane %v3057, 2
        %v7003 = vsel %vm1930, %v7002, %v7001
        %v7004 = vrot.slane %v3063, 1
        %v7005 = vsel %vm1933, %v7004, %v7003
        %v7006 = vsel %vm1936, %v3067, %v7005
        %v7007 = vrot.slane %v3073, 7
        %v7008 = vsel %vm1939, %v7007, %v7006
        %v7009 = vrot.slane %v3077, 6
        %v7010 = vsel %vm1942, %v7009, %v7008
        %v7011 = vrot.slane %v3083, 5
        %v7012 = vrot.slane %v3087, 4
        %v7013 = vsel %vm1924, %v7012, %v7011
        %v7014 = vrot.slane %v3093, 3
        %v7015 = vsel %vm1927, %v7014, %v7013
        %v7016 = vrot.slane %v3097, 2
        %v7017 = vsel %vm1930, %v7016, %v7015
        %v7018 = vrot.slane %v3103, 1
        %v7019 = vsel %vm1933, %v7018, %v7017
        %v7020 = vsel %vm1936, %v3107, %v7019
        %v7021 = vrot.slane %v3113, 7
        %v7022 = vsel %vm1939, %v7021, %v7020
        %v7023 = vrot.slane %v3117, 6
        %v7024 = vsel %vm1942, %v7023, %v7022
        %v7025 = vrot.slane %v3123, 5
        %v7026 = vrot.slane %v3127, 4
        %v7027 = vsel %vm1924, %v7026, %v7025
        %v7028 = vrot.slane %v3133, 3
        %v7029 = vsel %vm1927, %v7028, %v7027
        %v7030 = vrot.slane %v3137, 2
        %v7031 = vsel %vm1930, %v7030, %v7029
        %v7032 = vrot.slane %v3143, 1
        %v7033 = vsel %vm1933, %v7032, %v7031
        %v7034 = vsel %vm1936, %v3147, %v7033
        %v7035 = vrot.slane %v3153, 7
        %v7036 = vsel %vm1939, %v7035, %v7034
        %v7037 = vrot.slane %v3157, 6
        %v7038 = vsel %vm1942, %v7037, %v7036
        %v7039 = vrot.slane %v3163, 5
        %v7040 = vrot.slane %v3167, 4
        %v7041 = vsel %vm1924, %v7040, %v7039
        %v7042 = vrot.slane %v3173, 3
        %v7043 = vsel %vm1927, %v7042, %v7041
        %v7044 = vrot.slane %v3177, 2
        %v7045 = vsel %vm1930, %v7044, %v7043
        %v7046 = vrot.slane %v3183, 1
        %v7047 = vsel %vm1933, %v7046, %v7045
        %v7048 = vsel %vm1936, %v3187, %v7047
        %v7049 = vrot.slane %v3193, 7
        %v7050 = vsel %vm1939, %v7049, %v7048
        %v7051 = vrot.slane %v3197, 6
        %v7052 = vsel %vm1942, %v7051, %v7050
        %v7053 = vrot.slane %v3203, 5
        %v7054 = vrot.slane %v3207, 4
        %v7055 = vsel %vm1924, %v7054, %v7053
        %v7056 = vrot.slane %v3213, 3
        %v7057 = vsel %vm1927, %v7056, %v7055
        %v7058 = vrot.slane %v3217, 2
        %v7059 = vsel %vm1930, %v7058, %v7057
        %v7060 = vrot.slane %v3223, 1
        %v7061 = vsel %vm1933, %v7060, %v7059
        %v7062 = vsel %vm1936, %v3227, %v7061
        %v7063 = vrot.slane %v3233, 7
        %v7064 = vsel %vm1939, %v7063, %v7062
        %v7065 = vrot.slane %v3237, 6
        %v7066 = vsel %vm1942, %v7065, %v7064
        %v7067 = vrot.slane %v3243, 5
        %v7068 = vrot.slane %v3247, 4
        %v7069 = vsel %vm1924, %v7068, %v7067
        %v7070 = vrot.slane %v3253, 3
        %v7071 = vsel %vm1927, %v7070, %v7069
        %v7072 = vrot.slane %v3257, 2
        %v7073 = vsel %vm1930, %v7072, %v7071
        %v7074 = vrot.slane %v3263, 1
        %v7075 = vsel %vm1933, %v7074, %v7073
        %v7076 = vsel %vm1936, %v3267, %v7075
        %v7077 = vrot.slane %v3273, 7
        %v7078 = vsel %vm1939, %v7077, %v7076
        %v7079 = vrot.slane %v3277, 6
        %v7080 = vsel %vm1942, %v7079, %v7078
        %v7081 = vrot.slane %v3283, 5
        %v7082 = vrot.slane %v3287, 4
        %v7083 = vsel %vm1924, %v7082, %v7081
        %v7084 = vrot.slane %v3293, 3
        %v7085 = vsel %vm1927, %v7084, %v7083
        %v7086 = vrot.slane %v3297, 2
        %v7087 = vsel %vm1930, %v7086, %v7085
        %v7088 = vrot.slane %v3303, 1
        %v7089 = vsel %vm1933, %v7088, %v7087
        %v7090 = vsel %vm1936, %v3307, %v7089
        %v7091 = vrot.slane %v3313, 7
        %v7092 = vsel %vm1939, %v7091, %v7090
        %v7093 = vrot.slane %v3317, 6
        %v7094 = vsel %vm1942, %v7093, %v7092
        %v7103 = vmul.f32 %v6953, %v6996
        %v7104 = vmul.f32 %v6957, %v7010
        %v7105 = vmul.f32 %v6961, %v7024
        %v7106 = vmul.f32 %v6965, %v7038
        %v7107 = vmul.f32 %v6969, %v7052
        %v7108 = vmul.f32 %v6973, %v7066
        %v7109 = vmul.f32 %v6977, %v7080
        %v7110 = vmul.f32 %v6981, %v7094
        %v7111 = vadd.f32 %v6943, %v7103
        %v7112 = vadd.f32 %v6944, %v7104
        %v7113 = vadd.f32 %v6945, %v7105
        %v7114 = vadd.f32 %v6946, %v7106
        %v7115 = vadd.f32 %v6947, %v7107
        %v7116 = vadd.f32 %v6948, %v7108
        %v7117 = vadd.f32 %v6949, %v7109
        %v7118 = vadd.f32 %v6950, %v7110
        %7119 = vset.pattern.permute.xlu0 6
        %7120 = vperm.xlu0 %7119, %v5704
        %v7121 = vpop.permute.xlu0 %7120
        %7123 = vset.pattern.permute.xlu0 6
        %7124 = vperm.xlu0 %7123, %v5706
        %v7125 = vpop.permute.xlu0 %7124
        %7127 = vset.pattern.permute.xlu0 6
        %7128 = vperm.xlu0 %7127, %v5708
        %v7129 = vpop.permute.xlu0 %7128
        %7131 = vset.pattern.permute.xlu0 6
        %7132 = vperm.xlu0 %7131, %v5710
        %v7133 = vpop.permute.xlu0 %7132
        %7135 = vset.pattern.permute.xlu0 6
        %7136 = vperm.xlu0 %7135, %v5712
        %v7137 = vpop.permute.xlu0 %7136
        %7139 = vset.pattern.permute.xlu0 6
        %7140 = vperm.xlu0 %7139, %v5714
        %v7141 = vpop.permute.xlu0 %7140
        %7143 = vset.pattern.permute.xlu0 6
        %7144 = vperm.xlu0 %7143, %v5716
        %v7145 = vpop.permute.xlu0 %7144
        %7147 = vset.pattern.permute.xlu0 6
        %7148 = vperm.xlu0 %7147, %v5718
        %v7149 = vpop.permute.xlu0 %7148
        %v7151 = vrot.slane %v3003, 6
        %v7152 = vrot.slane %v3007, 5
        %v7153 = vsel %vm1924, %v7152, %v7151
        %v7154 = vrot.slane %v3013, 4
        %v7155 = vsel %vm1927, %v7154, %v7153
        %v7156 = vrot.slane %v3017, 3
        %v7157 = vsel %vm1930, %v7156, %v7155
        %v7158 = vrot.slane %v3023, 2
        %v7159 = vsel %vm1933, %v7158, %v7157
        %v7160 = vrot.slane %v3027, 1
        %v7161 = vsel %vm1936, %v7160, %v7159
        %v7162 = vsel %vm1939, %v3033, %v7161
        %v7163 = vrot.slane %v3037, 7
        %v7164 = vsel %vm1942, %v7163, %v7162
        %v7165 = vrot.slane %v3043, 6
        %v7166 = vrot.slane %v3047, 5
        %v7167 = vsel %vm1924, %v7166, %v7165
        %v7168 = vrot.slane %v3053, 4
        %v7169 = vsel %vm1927, %v7168, %v7167
        %v7170 = vrot.slane %v3057, 3
        %v7171 = vsel %vm1930, %v7170, %v7169
        %v7172 = vrot.slane %v3063, 2
        %v7173 = vsel %vm1933, %v7172, %v7171
        %v7174 = vrot.slane %v3067, 1
        %v7175 = vsel %vm1936, %v7174, %v7173
        %v7176 = vsel %vm1939, %v3073, %v7175
        %v7177 = vrot.slane %v3077, 7
        %v7178 = vsel %vm1942, %v7177, %v7176
        %v7179 = vrot.slane %v3083, 6
        %v7180 = vrot.slane %v3087, 5
        %v7181 = vsel %vm1924, %v7180, %v7179
        %v7182 = vrot.slane %v3093, 4
        %v7183 = vsel %vm1927, %v7182, %v7181
        %v7184 = vrot.slane %v3097, 3
        %v7185 = vsel %vm1930, %v7184, %v7183
        %v7186 = vrot.slane %v3103, 2
        %v7187 = vsel %vm1933, %v7186, %v7185
        %v7188 = vrot.slane %v3107, 1
        %v7189 = vsel %vm1936, %v7188, %v7187
        %v7190 = vsel %vm1939, %v3113, %v7189
        %v7191 = vrot.slane %v3117, 7
        %v7192 = vsel %vm1942, %v7191, %v7190
        %v7193 = vrot.slane %v3123, 6
        %v7194 = vrot.slane %v3127, 5
        %v7195 = vsel %vm1924, %v7194, %v7193
        %v7196 = vrot.slane %v3133, 4
        %v7197 = vsel %vm1927, %v7196, %v7195
        %v7198 = vrot.slane %v3137, 3
        %v7199 = vsel %vm1930, %v7198, %v7197
        %v7200 = vrot.slane %v3143, 2
        %v7201 = vsel %vm1933, %v7200, %v7199
        %v7202 = vrot.slane %v3147, 1
        %v7203 = vsel %vm1936, %v7202, %v7201
        %v7204 = vsel %vm1939, %v3153, %v7203
        %v7205 = vrot.slane %v3157, 7
        %v7206 = vsel %vm1942, %v7205, %v7204
        %v7207 = vrot.slane %v3163, 6
        %v7208 = vrot.slane %v3167, 5
        %v7209 = vsel %vm1924, %v7208, %v7207
        %v7210 = vrot.slane %v3173, 4
        %v7211 = vsel %vm1927, %v7210, %v7209
        %v7212 = vrot.slane %v3177, 3
        %v7213 = vsel %vm1930, %v7212, %v7211
        %v7214 = vrot.slane %v3183, 2
        %v7215 = vsel %vm1933, %v7214, %v7213
        %v7216 = vrot.slane %v3187, 1
        %v7217 = vsel %vm1936, %v7216, %v7215
        %v7218 = vsel %vm1939, %v3193, %v7217
        %v7219 = vrot.slane %v3197, 7
        %v7220 = vsel %vm1942, %v7219, %v7218
        %v7221 = vrot.slane %v3203, 6
        %v7222 = vrot.slane %v3207, 5
        %v7223 = vsel %vm1924, %v7222, %v7221
        %v7224 = vrot.slane %v3213, 4
        %v7225 = vsel %vm1927, %v7224, %v7223
        %v7226 = vrot.slane %v3217, 3
        %v7227 = vsel %vm1930, %v7226, %v7225
        %v7228 = vrot.slane %v3223, 2
        %v7229 = vsel %vm1933, %v7228, %v7227
        %v7230 = vrot.slane %v3227, 1
        %v7231 = vsel %vm1936, %v7230, %v7229
        %v7232 = vsel %vm1939, %v3233, %v7231
        %v7233 = vrot.slane %v3237, 7
        %v7234 = vsel %vm1942, %v7233, %v7232
        %v7235 = vrot.slane %v3243, 6
        %v7236 = vrot.slane %v3247, 5
        %v7237 = vsel %vm1924, %v7236, %v7235
        %v7238 = vrot.slane %v3253, 4
        %v7239 = vsel %vm1927, %v7238, %v7237
        %v7240 = vrot.slane %v3257, 3
        %v7241 = vsel %vm1930, %v7240, %v7239
        %v7242 = vrot.slane %v3263, 2
        %v7243 = vsel %vm1933, %v7242, %v7241
        %v7244 = vrot.slane %v3267, 1
        %v7245 = vsel %vm1936, %v7244, %v7243
        %v7246 = vsel %vm1939, %v3273, %v7245
        %v7247 = vrot.slane %v3277, 7
        %v7248 = vsel %vm1942, %v7247, %v7246
        %v7249 = vrot.slane %v3283, 6
        %v7250 = vrot.slane %v3287, 5
        %v7251 = vsel %vm1924, %v7250, %v7249
        %v7252 = vrot.slane %v3293, 4
        %v7253 = vsel %vm1927, %v7252, %v7251
        %v7254 = vrot.slane %v3297, 3
        %v7255 = vsel %vm1930, %v7254, %v7253
        %v7256 = vrot.slane %v3303, 2
        %v7257 = vsel %vm1933, %v7256, %v7255
        %v7258 = vrot.slane %v3307, 1
        %v7259 = vsel %vm1936, %v7258, %v7257
        %v7260 = vsel %vm1939, %v3313, %v7259
        %v7261 = vrot.slane %v3317, 7
        %v7262 = vsel %vm1942, %v7261, %v7260
        %v7271 = vmul.f32 %v7121, %v7164
        %v7272 = vmul.f32 %v7125, %v7178
        %v7273 = vmul.f32 %v7129, %v7192
        %v7274 = vmul.f32 %v7133, %v7206
        %v7275 = vmul.f32 %v7137, %v7220
        %v7276 = vmul.f32 %v7141, %v7234
        %v7277 = vmul.f32 %v7145, %v7248
        %v7278 = vmul.f32 %v7149, %v7262
        %v7279 = vadd.f32 %v7111, %v7271
        %v7280 = vadd.f32 %v7112, %v7272
        %v7281 = vadd.f32 %v7113, %v7273
        %v7282 = vadd.f32 %v7114, %v7274
        %v7283 = vadd.f32 %v7115, %v7275
        %v7284 = vadd.f32 %v7116, %v7276
        %v7285 = vadd.f32 %v7117, %v7277
        %v7286 = vadd.f32 %v7118, %v7278
        %7287 = vset.pattern.permute.xlu0 7
        %7288 = vperm.xlu0 %7287, %v5752
        %v7289 = vpop.permute.xlu0 %7288
        %7291 = vset.pattern.permute.xlu0 7
        %7292 = vperm.xlu0 %7291, %v5754
        %v7293 = vpop.permute.xlu0 %7292
        %7295 = vset.pattern.permute.xlu0 7
        %7296 = vperm.xlu0 %7295, %v5756
        %v7297 = vpop.permute.xlu0 %7296
        %7299 = vset.pattern.permute.xlu0 7
        %7300 = vperm.xlu0 %7299, %v5758
        %v7301 = vpop.permute.xlu0 %7300
        %7303 = vset.pattern.permute.xlu0 7
        %7304 = vperm.xlu0 %7303, %v5760
        %v7305 = vpop.permute.xlu0 %7304
        %7307 = vset.pattern.permute.xlu0 7
        %7308 = vperm.xlu0 %7307, %v5762
        %v7309 = vpop.permute.xlu0 %7308
        %7311 = vset.pattern.permute.xlu0 7
        %7312 = vperm.xlu0 %7311, %v5764
        %v7313 = vpop.permute.xlu0 %7312
        %7315 = vset.pattern.permute.xlu0 7
        %7316 = vperm.xlu0 %7315, %v5766
        %v7317 = vpop.permute.xlu0 %7316
        %v7319 = vrot.slane %v3003, 7
        %v7320 = vrot.slane %v3007, 6
        %v7321 = vsel %vm1924, %v7320, %v7319
        %v7322 = vrot.slane %v3013, 5
        %v7323 = vsel %vm1927, %v7322, %v7321
        %v7324 = vrot.slane %v3017, 4
        %v7325 = vsel %vm1930, %v7324, %v7323
        %v7326 = vrot.slane %v3023, 3
        %v7327 = vsel %vm1933, %v7326, %v7325
        %v7328 = vrot.slane %v3027, 2
        %v7329 = vsel %vm1936, %v7328, %v7327
        %v7330 = vrot.slane %v3033, 1
        %v7331 = vsel %vm1939, %v7330, %v7329
        %v7332 = vsel %vm1942, %v3037, %v7331
        %v7333 = vrot.slane %v3043, 7
        %v7334 = vrot.slane %v3047, 6
        %v7335 = vsel %vm1924, %v7334, %v7333
        %v7336 = vrot.slane %v3053, 5
        %v7337 = vsel %vm1927, %v7336, %v7335
        %v7338 = vrot.slane %v3057, 4
        %v7339 = vsel %vm1930, %v7338, %v7337
        %v7340 = vrot.slane %v3063, 3
        %v7341 = vsel %vm1933, %v7340, %v7339
        %v7342 = vrot.slane %v3067, 2
        %v7343 = vsel %vm1936, %v7342, %v7341
        %v7344 = vrot.slane %v3073, 1
        %v7345 = vsel %vm1939, %v7344, %v7343
        %v7346 = vsel %vm1942, %v3077, %v7345
        %v7347 = vrot.slane %v3083, 7
        %v7348 = vrot.slane %v3087, 6
        %v7349 = vsel %vm1924, %v7348, %v7347
        %v7350 = vrot.slane %v3093, 5
        %v7351 = vsel %vm1927, %v7350, %v7349
        %v7352 = vrot.slane %v3097, 4
        %v7353 = vsel %vm1930, %v7352, %v7351
        %v7354 = vrot.slane %v3103, 3
        %v7355 = vsel %vm1933, %v7354, %v7353
        %v7356 = vrot.slane %v3107, 2
        %v7357 = vsel %vm1936, %v7356, %v7355
        %v7358 = vrot.slane %v3113, 1
        %v7359 = vsel %vm1939, %v7358, %v7357
        %v7360 = vsel %vm1942, %v3117, %v7359
        %v7361 = vrot.slane %v3123, 7
        %v7362 = vrot.slane %v3127, 6
        %v7363 = vsel %vm1924, %v7362, %v7361
        %v7364 = vrot.slane %v3133, 5
        %v7365 = vsel %vm1927, %v7364, %v7363
        %v7366 = vrot.slane %v3137, 4
        %v7367 = vsel %vm1930, %v7366, %v7365
        %v7368 = vrot.slane %v3143, 3
        %v7369 = vsel %vm1933, %v7368, %v7367
        %v7370 = vrot.slane %v3147, 2
        %v7371 = vsel %vm1936, %v7370, %v7369
        %v7372 = vrot.slane %v3153, 1
        %v7373 = vsel %vm1939, %v7372, %v7371
        %v7374 = vsel %vm1942, %v3157, %v7373
        %v7375 = vrot.slane %v3163, 7
        %v7376 = vrot.slane %v3167, 6
        %v7377 = vsel %vm1924, %v7376, %v7375
        %v7378 = vrot.slane %v3173, 5
        %v7379 = vsel %vm1927, %v7378, %v7377
        %v7380 = vrot.slane %v3177, 4
        %v7381 = vsel %vm1930, %v7380, %v7379
        %v7382 = vrot.slane %v3183, 3
        %v7383 = vsel %vm1933, %v7382, %v7381
        %v7384 = vrot.slane %v3187, 2
        %v7385 = vsel %vm1936, %v7384, %v7383
        %v7386 = vrot.slane %v3193, 1
        %v7387 = vsel %vm1939, %v7386, %v7385
        %v7388 = vsel %vm1942, %v3197, %v7387
        %v7389 = vrot.slane %v3203, 7
        %v7390 = vrot.slane %v3207, 6
        %v7391 = vsel %vm1924, %v7390, %v7389
        %v7392 = vrot.slane %v3213, 5
        %v7393 = vsel %vm1927, %v7392, %v7391
        %v7394 = vrot.slane %v3217, 4
        %v7395 = vsel %vm1930, %v7394, %v7393
        %v7396 = vrot.slane %v3223, 3
        %v7397 = vsel %vm1933, %v7396, %v7395
        %v7398 = vrot.slane %v3227, 2
        %v7399 = vsel %vm1936, %v7398, %v7397
        %v7400 = vrot.slane %v3233, 1
        %v7401 = vsel %vm1939, %v7400, %v7399
        %v7402 = vsel %vm1942, %v3237, %v7401
        %v7403 = vrot.slane %v3243, 7
        %v7404 = vrot.slane %v3247, 6
        %v7405 = vsel %vm1924, %v7404, %v7403
        %v7406 = vrot.slane %v3253, 5
        %v7407 = vsel %vm1927, %v7406, %v7405
        %v7408 = vrot.slane %v3257, 4
        %v7409 = vsel %vm1930, %v7408, %v7407
        %v7410 = vrot.slane %v3263, 3
        %v7411 = vsel %vm1933, %v7410, %v7409
        %v7412 = vrot.slane %v3267, 2
        %v7413 = vsel %vm1936, %v7412, %v7411
        %v7414 = vrot.slane %v3273, 1
        %v7415 = vsel %vm1939, %v7414, %v7413
        %v7416 = vsel %vm1942, %v3277, %v7415
        %v7417 = vrot.slane %v3283, 7
        %v7418 = vrot.slane %v3287, 6
        %v7419 = vsel %vm1924, %v7418, %v7417
        %v7420 = vrot.slane %v3293, 5
        %v7421 = vsel %vm1927, %v7420, %v7419
        %v7422 = vrot.slane %v3297, 4
        %v7423 = vsel %vm1930, %v7422, %v7421
        %v7424 = vrot.slane %v3303, 3
        %v7425 = vsel %vm1933, %v7424, %v7423
        %v7426 = vrot.slane %v3307, 2
        %v7427 = vsel %vm1936, %v7426, %v7425
        %v7428 = vrot.slane %v3313, 1
        %v7429 = vsel %vm1939, %v7428, %v7427
        %v7430 = vsel %vm1942, %v3317, %v7429
        %v7439 = vmul.f32 %v7289, %v7332
        %v7440 = vmul.f32 %v7293, %v7346
        %v7441 = vmul.f32 %v7297, %v7360
        %v7442 = vmul.f32 %v7301, %v7374
        %v7443 = vmul.f32 %v7305, %v7388
        %v7444 = vmul.f32 %v7309, %v7402
        %v7445 = vmul.f32 %v7313, %v7416
        %v7446 = vmul.f32 %v7317, %v7430
        %v7447 = vadd.f32 %v7279, %v7439
        %v7448 = vadd.f32 %v7280, %v7440
        %v7449 = vadd.f32 %v7281, %v7441
        %v7450 = vadd.f32 %v7282, %v7442
        %v7451 = vadd.f32 %v7283, %v7443
        %v7452 = vadd.f32 %v7284, %v7444
        %v7453 = vadd.f32 %v7285, %v7445
        %v7454 = vadd.f32 %v7286, %v7446
        %v7455 = vrcp.pop %v6039
        %v7456 = vrcp.pop %v6040
        %v7457 = vrcp.pop %v6041
        %v7458 = vrcp.pop %v6042
        %v7459 = vrcp.pop %v6043
        %v7460 = vrcp.pop %v6044
        %v7461 = vrcp.pop %v6045
        %v7462 = vrcp.pop %v6046
        %7464 = vset.pattern.permute.xlu0 0
        %7465 = vperm.xlu0 %7464, %v7455
        %v7466 = vpop.permute.xlu0 %7465
        %7469 = vset.pattern.permute.xlu0 0
        %7470 = vperm.xlu0 %7469, %v7456
        %v7471 = vpop.permute.xlu0 %7470
        %7474 = vset.pattern.permute.xlu0 0
        %7475 = vperm.xlu0 %7474, %v7457
        %v7476 = vpop.permute.xlu0 %7475
        %7479 = vset.pattern.permute.xlu0 0
        %7480 = vperm.xlu0 %7479, %v7458
        %v7481 = vpop.permute.xlu0 %7480
        %7484 = vset.pattern.permute.xlu0 0
        %7485 = vperm.xlu0 %7484, %v7459
        %v7486 = vpop.permute.xlu0 %7485
        %7489 = vset.pattern.permute.xlu0 0
        %7490 = vperm.xlu0 %7489, %v7460
        %v7491 = vpop.permute.xlu0 %7490
        %7494 = vset.pattern.permute.xlu0 0
        %7495 = vperm.xlu0 %7494, %v7461
        %v7496 = vpop.permute.xlu0 %7495
        %7499 = vset.pattern.permute.xlu0 0
        %7500 = vperm.xlu0 %7499, %v7462
        %v7501 = vpop.permute.xlu0 %7500
        %v7503 = vmul.f32 %v7447, %v7466
        %v7504 = vmul.f32 %v7448, %v7471
        %v7505 = vmul.f32 %v7449, %v7476
        %v7506 = vmul.f32 %v7450, %v7481
        %v7507 = vmul.f32 %v7451, %v7486
        %v7508 = vmul.f32 %v7452, %v7491
        %v7509 = vmul.f32 %v7453, %v7496
        %v7510 = vmul.f32 %v7454, %v7501
        %v7511 = vpack.c.bf16 %v7504, %v7503
        %v7512 = vpack.c.bf16 %v7506, %v7505
        %v7513 = vpack.c.bf16 %v7508, %v7507
        %v7514 = vpack.c.bf16 %v7510, %v7509
        %v7515 = vld [vmem:[#allocation8] sm:$0xf]
        %v7516 = vld [vmem:[#allocation8 + $0x4] sm:$0xf]
        %v7517 = vld [vmem:[#allocation8 + $0x8] sm:$0xf]
        %v7518 = vld [vmem:[#allocation8 + $0xc] sm:$0xf]
        %v7519 = vld [vmem:[#allocation8 + $0x10] sm:$0xf]
        %v7520 = vld [vmem:[#allocation8 + $0x14] sm:$0xf]
        %v7521 = vld [vmem:[#allocation8 + $0x18] sm:$0xf]
        %v7522 = vld [vmem:[#allocation8 + $0x1c] sm:$0xf]
        %v7523 = vld [vmem:[#allocation8 + $0x20] sm:$0xf]
        %v7524 = vld [vmem:[#allocation8 + $0x24] sm:$0xf]
        %v7525 = vld [vmem:[#allocation8 + $0x28] sm:$0xf]
        %v7526 = vld [vmem:[#allocation8 + $0x2c] sm:$0xf]
        %v7527 = vld [vmem:[#allocation8 + $0x30] sm:$0xf]
        %v7528 = vld [vmem:[#allocation8 + $0x34] sm:$0xf]
        %v7529 = vld [vmem:[#allocation8 + $0x38] sm:$0xf]
        %v7530 = vld [vmem:[#allocation8 + $0x3c] sm:$0xf]
        %v7531 = vld [vmem:[%s7] sm:$0x1]
        %v7533 = vlaneseq
        %v7534 = vshrl.u32 %v7533, 7
        %v7535 = vsub.s32 0, %v7534
        %v7536 = vrot.slane %v7531, %v7535
        %v7554 = vunpack.c.l.b16 %v7515
        %v7555 = vunpack.c.l.b16 %v7516
        %v7556 = vunpack.c.l.b16 %v7517
        %v7557 = vunpack.c.l.b16 %v7518
        %v7558 = vunpack.c.l.b16 %v7519
        %v7559 = vunpack.c.l.b16 %v7520
        %v7560 = vunpack.c.l.b16 %v7521
        %v7561 = vunpack.c.l.b16 %v7522
        %v7562 = vunpack.c.l.b16 %v7523
        %v7563 = vunpack.c.l.b16 %v7524
        %v7564 = vunpack.c.l.b16 %v7525
        %v7565 = vunpack.c.l.b16 %v7526
        %v7566 = vunpack.c.l.b16 %v7527
        %v7567 = vunpack.c.l.b16 %v7528
        %v7568 = vunpack.c.l.b16 %v7529
        %v7569 = vunpack.c.l.b16 %v7530
        %v7570 = vpack.c.b16 %v7555, %v7554
        %v7571 = vpack.c.b16 %v7557, %v7556
        %v7572 = vpack.c.b16 %v7559, %v7558
        %v7573 = vpack.c.b16 %v7561, %v7560
        %v7574 = vpack.c.b16 %v7563, %v7562
        %v7575 = vpack.c.b16 %v7565, %v7564
        %v7576 = vpack.c.b16 %v7567, %v7566
        %v7577 = vpack.c.b16 %v7569, %v7568
        %7586 = vmatprep.subr.bf16.mxu0 0
        %7587 = vmatpush1.bf16.msra.mxu0 %v7577
        %7588 = vmatprep.subr.bf16.mxu0 0
        %7589 = vmatpush1.bf16.msra.mxu0 %v7576
        %7590 = vmatprep.subr.bf16.mxu0 0
        %7591 = vmatpush1.bf16.msra.mxu0 %v7575
        %7592 = vmatprep.subr.bf16.mxu0 0
        %7593 = vmatpush1.bf16.msra.mxu0 %v7574
        %7594 = vmatprep.subr.bf16.mxu0 0
        %7595 = vmatpush1.bf16.msra.mxu0 %v7573
        %7596 = vmatprep.subr.bf16.mxu0 0
        %7597 = vmatpush1.bf16.msra.mxu0 %v7572
        %7598 = vmatprep.subr.bf16.mxu0 0
        %7599 = vmatpush1.bf16.msra.mxu0 %v7571
        %7600 = vmatprep.subr.bf16.mxu0 0
        %7601 = vmatpush1.bf16.msra.mxu0 %v7570
        %7602 = vmatprep.subr.bf16.mxu0 0
        %7603 = vmatpush2.bf16.msra.mxu0 0
        %7604 = vmatprep.subr.bf16.mxu0 0
        %7605 = vmatpush2.bf16.msra.mxu0 0
        %7606 = vmatprep.subr.bf16.mxu0 0
        %7607 = vmatpush2.bf16.msra.mxu0 0
        %7608 = vmatprep.subr.bf16.mxu0 0
        %7609 = vmatpush2.bf16.msra.mxu0 0
        %7610 = vmatprep.subr.bf16.mxu0 0
        %7611 = vmatpush2.bf16.msra.mxu0 0
        %7612 = vmatprep.subr.bf16.mxu0 0
        %7613 = vmatpush2.bf16.msra.mxu0 0
        %7614 = vmatprep.subr.bf16.mxu0 0
        %7615 = vmatpush2.bf16.msra.mxu0 0
        %7616 = vmatprep.subr.bf16.mxu0 0
        %7617 = vmatpush2.bf16.msra.mxu0 0
        %7618 = vmatprep.mubr.bf16.mxu0 0
        %7619 = vmatmul.mubr.bf16.gmra.mxu0 %v7511
        %v7620 = vpop.f32.mrf.mxu0
        %v7621 = vadd.f32 %v7536, %v7620
        %v7622 = vpop.f32.mrf.mxu0
        %v7623 = vpop.f32.mrf.mxu0
        %v7624 = vadd.f32 %v7536, %v7623
        %v7625 = vpop.f32.mrf.mxu0
        %7626 = vmatprep.mubr.bf16.mxu0 0
        %7627 = vmatmul.mubr.bf16.gmra.mxu0 %v7512
        %v7628 = vpop.f32.mrf.mxu0
        %v7629 = vadd.f32 %v7536, %v7628
        %v7630 = vpop.f32.mrf.mxu0
        %v7631 = vpop.f32.mrf.mxu0
        %v7632 = vadd.f32 %v7536, %v7631
        %v7633 = vpop.f32.mrf.mxu0
        %7634 = vmatprep.mubr.bf16.mxu0 0
        %7635 = vmatmul.mubr.bf16.gmra.mxu0 %v7513
        %v7636 = vpop.f32.mrf.mxu0
        %v7637 = vadd.f32 %v7536, %v7636
        %v7638 = vpop.f32.mrf.mxu0
        %v7639 = vpop.f32.mrf.mxu0
        %v7640 = vadd.f32 %v7536, %v7639
        %v7641 = vpop.f32.mrf.mxu0
        %7642 = vmatprep.mubr.bf16.mxu0 0
        %7643 = vmatmul.mubr.bf16.gmra.mxu0 %v7514
        %v7644 = vpop.f32.mrf.mxu0
        %v7645 = vadd.f32 %v7536, %v7644
        %v7646 = vpop.f32.mrf.mxu0
        %v7647 = vpop.f32.mrf.mxu0
        %v7648 = vadd.f32 %v7536, %v7647
        %v7649 = vpop.f32.mrf.mxu0
        %7650 = vdwg.mxu0
        %v7659 = vrot.slane %v7621, 1
        %v7660 = vrot.slane %v7621, 2
        %v7661 = vrot.slane %v7621, 3
        %v7662 = vrot.slane %v7621, 4
        %v7663 = vrot.slane %v7621, 5
        %v7664 = vrot.slane %v7621, 6
        %v7665 = vrot.slane %v7621, 7
        %v7666 = vrot.slane %v7624, 1
        %v7667 = vrot.slane %v7624, 2
        %v7668 = vrot.slane %v7624, 3
        %v7669 = vrot.slane %v7624, 4
        %v7670 = vrot.slane %v7624, 5
        %v7671 = vrot.slane %v7624, 6
        %v7672 = vrot.slane %v7624, 7
        %v7673 = vrot.slane %v7629, 1
        %v7674 = vrot.slane %v7629, 2
        %v7675 = vrot.slane %v7629, 3
        %v7676 = vrot.slane %v7629, 4
        %v7677 = vrot.slane %v7629, 5
        %v7678 = vrot.slane %v7629, 6
        %v7679 = vrot.slane %v7629, 7
        %v7680 = vrot.slane %v7632, 1
        %v7681 = vrot.slane %v7632, 2
        %v7682 = vrot.slane %v7632, 3
        %v7683 = vrot.slane %v7632, 4
        %v7684 = vrot.slane %v7632, 5
        %v7685 = vrot.slane %v7632, 6
        %v7686 = vrot.slane %v7632, 7
        %v7687 = vrot.slane %v7637, 1
        %v7688 = vrot.slane %v7637, 2
        %v7689 = vrot.slane %v7637, 3
        %v7690 = vrot.slane %v7637, 4
        %v7691 = vrot.slane %v7637, 5
        %v7692 = vrot.slane %v7637, 6
        %v7693 = vrot.slane %v7637, 7
        %v7694 = vrot.slane %v7640, 1
        %v7695 = vrot.slane %v7640, 2
        %v7696 = vrot.slane %v7640, 3
        %v7697 = vrot.slane %v7640, 4
        %v7698 = vrot.slane %v7640, 5
        %v7699 = vrot.slane %v7640, 6
        %v7700 = vrot.slane %v7640, 7
        %v7701 = vrot.slane %v7645, 1
        %v7702 = vrot.slane %v7645, 2
        %v7703 = vrot.slane %v7645, 3
        %v7704 = vrot.slane %v7645, 4
        %v7705 = vrot.slane %v7645, 5
        %v7706 = vrot.slane %v7645, 6
        %v7707 = vrot.slane %v7645, 7
        %v7708 = vrot.slane %v7648, 1
        %v7709 = vrot.slane %v7648, 2
        %v7710 = vrot.slane %v7648, 3
        %v7711 = vrot.slane %v7648, 4
        %v7712 = vrot.slane %v7648, 5
        %v7713 = vrot.slane %v7648, 6
        %v7714 = vrot.slane %v7648, 7
        %v7779 = vadd.f32 %v2762, %v7621
        %v7780 = vadd.f32 %v2763, %v7659
        %v7781 = vadd.f32 %v2764, %v7660
        %v7782 = vadd.f32 %v2765, %v7661
        %v7783 = vadd.f32 %v2766, %v7662
        %v7784 = vadd.f32 %v2767, %v7663
        %v7785 = vadd.f32 %v2768, %v7664
        %v7786 = vadd.f32 %v2769, %v7665
        %v7787 = vadd.f32 %v2770, %v7624
        %v7788 = vadd.f32 %v2771, %v7666
        %v7789 = vadd.f32 %v2772, %v7667
        %v7790 = vadd.f32 %v2773, %v7668
        %v7791 = vadd.f32 %v2774, %v7669
        %v7792 = vadd.f32 %v2775, %v7670
        %v7793 = vadd.f32 %v2776, %v7671
        %v7794 = vadd.f32 %v2777, %v7672
        %v7795 = vadd.f32 %v2778, %v7629
        %v7796 = vadd.f32 %v2779, %v7673
        %v7797 = vadd.f32 %v2780, %v7674
        %v7798 = vadd.f32 %v2781, %v7675
        %v7799 = vadd.f32 %v2782, %v7676
        %v7800 = vadd.f32 %v2783, %v7677
        %v7801 = vadd.f32 %v2784, %v7678
        %v7802 = vadd.f32 %v2785, %v7679
        %v7803 = vadd.f32 %v2786, %v7632
        %v7804 = vadd.f32 %v2787, %v7680
        %v7805 = vadd.f32 %v2788, %v7681
        %v7806 = vadd.f32 %v2789, %v7682
        %v7807 = vadd.f32 %v2790, %v7683
        %v7808 = vadd.f32 %v2791, %v7684
        %v7809 = vadd.f32 %v2792, %v7685
        %v7810 = vadd.f32 %v2793, %v7686
        %v7811 = vadd.f32 %v2794, %v7637
        %v7812 = vadd.f32 %v2795, %v7687
        %v7813 = vadd.f32 %v2796, %v7688
        %v7814 = vadd.f32 %v2797, %v7689
        %v7815 = vadd.f32 %v2798, %v7690
        %v7816 = vadd.f32 %v2799, %v7691
        %v7817 = vadd.f32 %v2800, %v7692
        %v7818 = vadd.f32 %v2801, %v7693
        %v7819 = vadd.f32 %v2802, %v7640
        %v7820 = vadd.f32 %v2803, %v7694
        %v7821 = vadd.f32 %v2804, %v7695
        %v7822 = vadd.f32 %v2805, %v7696
        %v7823 = vadd.f32 %v2806, %v7697
        %v7824 = vadd.f32 %v2807, %v7698
        %v7825 = vadd.f32 %v2808, %v7699
        %v7826 = vadd.f32 %v2809, %v7700
        %v7827 = vadd.f32 %v2810, %v7645
        %v7828 = vadd.f32 %v2811, %v7701
        %v7829 = vadd.f32 %v2812, %v7702
        %v7830 = vadd.f32 %v2813, %v7703
        %v7831 = vadd.f32 %v2814, %v7704
        %v7832 = vadd.f32 %v2815, %v7705
        %v7833 = vadd.f32 %v2816, %v7706
        %v7834 = vadd.f32 %v2817, %v7707
        %v7835 = vadd.f32 %v2818, %v7648
        %v7836 = vadd.f32 %v2819, %v7708
        %v7837 = vadd.f32 %v2820, %v7709
        %v7838 = vadd.f32 %v2821, %v7710
        %v7839 = vadd.f32 %v2822, %v7711
        %v7840 = vadd.f32 %v2823, %v7712
        %v7841 = vadd.f32 %v2824, %v7713
        %v7842 = vadd.f32 %v2825, %v7714
        %v7843 = vld [vmem:[%s12 + $0x2] sm:$0x1]
        %v7844 = vld [vmem:[%s12 + $0x3] sm:$0x1]
        %v7909 = vrot.slane %v7780, 7
        %v7910 = vsel %vm1924, %v7909, %v7779
        %v7911 = vrot.slane %v7781, 6
        %v7912 = vsel %vm1927, %v7911, %v7910
        %v7913 = vrot.slane %v7782, 5
        %v7914 = vsel %vm1930, %v7913, %v7912
        %v7915 = vrot.slane %v7783, 4
        %v7916 = vsel %vm1933, %v7915, %v7914
        %v7917 = vrot.slane %v7784, 3
        %v7918 = vsel %vm1936, %v7917, %v7916
        %v7919 = vrot.slane %v7785, 2
        %v7920 = vsel %vm1939, %v7919, %v7918
        %v7921 = vrot.slane %v7786, 1
        %v7922 = vsel %vm1942, %v7921, %v7920
        %v7923 = vrot.slane %v7788, 7
        %v7924 = vsel %vm1924, %v7923, %v7787
        %v7925 = vrot.slane %v7789, 6
        %v7926 = vsel %vm1927, %v7925, %v7924
        %v7927 = vrot.slane %v7790, 5
        %v7928 = vsel %vm1930, %v7927, %v7926
        %v7929 = vrot.slane %v7791, 4
        %v7930 = vsel %vm1933, %v7929, %v7928
        %v7931 = vrot.slane %v7792, 3
        %v7932 = vsel %vm1936, %v7931, %v7930
        %v7933 = vrot.slane %v7793, 2
        %v7934 = vsel %vm1939, %v7933, %v7932
        %v7935 = vrot.slane %v7794, 1
        %v7936 = vsel %vm1942, %v7935, %v7934
        %v7937 = vrot.slane %v7796, 7
        %v7938 = vsel %vm1924, %v7937, %v7795
        %v7939 = vrot.slane %v7797, 6
        %v7940 = vsel %vm1927, %v7939, %v7938
        %v7941 = vrot.slane %v7798, 5
        %v7942 = vsel %vm1930, %v7941, %v7940
        %v7943 = vrot.slane %v7799, 4
        %v7944 = vsel %vm1933, %v7943, %v7942
        %v7945 = vrot.slane %v7800, 3
        %v7946 = vsel %vm1936, %v7945, %v7944
        %v7947 = vrot.slane %v7801, 2
        %v7948 = vsel %vm1939, %v7947, %v7946
        %v7949 = vrot.slane %v7802, 1
        %v7950 = vsel %vm1942, %v7949, %v7948
        %v7951 = vrot.slane %v7804, 7
        %v7952 = vsel %vm1924, %v7951, %v7803
        %v7953 = vrot.slane %v7805, 6
        %v7954 = vsel %vm1927, %v7953, %v7952
        %v7955 = vrot.slane %v7806, 5
        %v7956 = vsel %vm1930, %v7955, %v7954
        %v7957 = vrot.slane %v7807, 4
        %v7958 = vsel %vm1933, %v7957, %v7956
        %v7959 = vrot.slane %v7808, 3
        %v7960 = vsel %vm1936, %v7959, %v7958
        %v7961 = vrot.slane %v7809, 2
        %v7962 = vsel %vm1939, %v7961, %v7960
        %v7963 = vrot.slane %v7810, 1
        %v7964 = vsel %vm1942, %v7963, %v7962
        %v7965 = vrot.slane %v7812, 7
        %v7966 = vsel %vm1924, %v7965, %v7811
        %v7967 = vrot.slane %v7813, 6
        %v7968 = vsel %vm1927, %v7967, %v7966
        %v7969 = vrot.slane %v7814, 5
        %v7970 = vsel %vm1930, %v7969, %v7968
        %v7971 = vrot.slane %v7815, 4
        %v7972 = vsel %vm1933, %v7971, %v7970
        %v7973 = vrot.slane %v7816, 3
        %v7974 = vsel %vm1936, %v7973, %v7972
        %v7975 = vrot.slane %v7817, 2
        %v7976 = vsel %vm1939, %v7975, %v7974
        %v7977 = vrot.slane %v7818, 1
        %v7978 = vsel %vm1942, %v7977, %v7976
        %v7979 = vrot.slane %v7820, 7
        %v7980 = vsel %vm1924, %v7979, %v7819
        %v7981 = vrot.slane %v7821, 6
        %v7982 = vsel %vm1927, %v7981, %v7980
        %v7983 = vrot.slane %v7822, 5
        %v7984 = vsel %vm1930, %v7983, %v7982
        %v7985 = vrot.slane %v7823, 4
        %v7986 = vsel %vm1933, %v7985, %v7984
        %v7987 = vrot.slane %v7824, 3
        %v7988 = vsel %vm1936, %v7987, %v7986
        %v7989 = vrot.slane %v7825, 2
        %v7990 = vsel %vm1939, %v7989, %v7988
        %v7991 = vrot.slane %v7826, 1
        %v7992 = vsel %vm1942, %v7991, %v7990
        %v7993 = vrot.slane %v7828, 7
        %v7994 = vsel %vm1924, %v7993, %v7827
        %v7995 = vrot.slane %v7829, 6
        %v7996 = vsel %vm1927, %v7995, %v7994
        %v7997 = vrot.slane %v7830, 5
        %v7998 = vsel %vm1930, %v7997, %v7996
        %v7999 = vrot.slane %v7831, 4
        %v8000 = vsel %vm1933, %v7999, %v7998
        %v8001 = vrot.slane %v7832, 3
        %v8002 = vsel %vm1936, %v8001, %v8000
        %v8003 = vrot.slane %v7833, 2
        %v8004 = vsel %vm1939, %v8003, %v8002
        %v8005 = vrot.slane %v7834, 1
        %v8006 = vsel %vm1942, %v8005, %v8004
        %v8007 = vrot.slane %v7836, 7
        %v8008 = vsel %vm1924, %v8007, %v7835
        %v8009 = vrot.slane %v7837, 6
        %v8010 = vsel %vm1927, %v8009, %v8008
        %v8011 = vrot.slane %v7838, 5
        %v8012 = vsel %vm1930, %v8011, %v8010
        %v8013 = vrot.slane %v7839, 4
        %v8014 = vsel %vm1933, %v8013, %v8012
        %v8015 = vrot.slane %v7840, 3
        %v8016 = vsel %vm1936, %v8015, %v8014
        %v8017 = vrot.slane %v7841, 2
        %v8018 = vsel %vm1939, %v8017, %v8016
        %v8019 = vrot.slane %v7842, 1
        %v8020 = vsel %vm1942, %v8019, %v8018
        %8029 = vadd.xlane.f32.xlu0 %v7922
        %v8030 = vpop.xlane.xlu0 %8029
        %8031 = vadd.xlane.f32.xlu0 %v7936
        %v8032 = vpop.xlane.xlu0 %8031
        %8033 = vadd.xlane.f32.xlu0 %v7950
        %v8034 = vpop.xlane.xlu0 %8033
        %8035 = vadd.xlane.f32.xlu0 %v7964
        %v8036 = vpop.xlane.xlu0 %8035
        %8037 = vadd.xlane.f32.xlu0 %v7978
        %v8038 = vpop.xlane.xlu0 %8037
        %8039 = vadd.xlane.f32.xlu0 %v7992
        %v8040 = vpop.xlane.xlu0 %8039
        %8041 = vadd.xlane.f32.xlu0 %v8006
        %v8042 = vpop.xlane.xlu0 %8041
        %8043 = vadd.xlane.f32.xlu0 %v8020
        %v8044 = vpop.xlane.xlu0 %8043
        %v8045 = vmul.f32 %v8030, %v1018
        %v8046 = vmul.f32 %v8032, %v1018
        %v8047 = vmul.f32 %v8034, %v1018
        %v8048 = vmul.f32 %v8036, %v1018
        %v8049 = vmul.f32 %v8038, %v1018
        %v8050 = vmul.f32 %v8040, %v1018
        %v8051 = vmul.f32 %v8042, %v1018
        %v8052 = vmul.f32 %v8044, %v1018
        %v8053 = vmul.f32 %v7779, %v7779
        %v8054 = vmul.f32 %v7780, %v7780
        %v8055 = vmul.f32 %v7781, %v7781
        %v8056 = vmul.f32 %v7782, %v7782
        %v8057 = vmul.f32 %v7783, %v7783
        %v8058 = vmul.f32 %v7784, %v7784
        %v8059 = vmul.f32 %v7785, %v7785
        %v8060 = vmul.f32 %v7786, %v7786
        %v8061 = vmul.f32 %v7787, %v7787
        %v8062 = vmul.f32 %v7788, %v7788
        %v8063 = vmul.f32 %v7789, %v7789
        %v8064 = vmul.f32 %v7790, %v7790
        %v8065 = vmul.f32 %v7791, %v7791
        %v8066 = vmul.f32 %v7792, %v7792
        %v8067 = vmul.f32 %v7793, %v7793
        %v8068 = vmul.f32 %v7794, %v7794
        %v8069 = vmul.f32 %v7795, %v7795
        %v8070 = vmul.f32 %v7796, %v7796
        %v8071 = vmul.f32 %v7797, %v7797
        %v8072 = vmul.f32 %v7798, %v7798
        %v8073 = vmul.f32 %v7799, %v7799
        %v8074 = vmul.f32 %v7800, %v7800
        %v8075 = vmul.f32 %v7801, %v7801
        %v8076 = vmul.f32 %v7802, %v7802
        %v8077 = vmul.f32 %v7803, %v7803
        %v8078 = vmul.f32 %v7804, %v7804
        %v8079 = vmul.f32 %v7805, %v7805
        %v8080 = vmul.f32 %v7806, %v7806
        %v8081 = vmul.f32 %v7807, %v7807
        %v8082 = vmul.f32 %v7808, %v7808
        %v8083 = vmul.f32 %v7809, %v7809
        %v8084 = vmul.f32 %v7810, %v7810
        %v8085 = vmul.f32 %v7811, %v7811
        %v8086 = vmul.f32 %v7812, %v7812
        %v8087 = vmul.f32 %v7813, %v7813
        %v8088 = vmul.f32 %v7814, %v7814
        %v8089 = vmul.f32 %v7815, %v7815
        %v8090 = vmul.f32 %v7816, %v7816
        %v8091 = vmul.f32 %v7817, %v7817
        %v8092 = vmul.f32 %v7818, %v7818
        %v8093 = vmul.f32 %v7819, %v7819
        %v8094 = vmul.f32 %v7820, %v7820
        %v8095 = vmul.f32 %v7821, %v7821
        %v8096 = vmul.f32 %v7822, %v7822
        %v8097 = vmul.f32 %v7823, %v7823
        %v8098 = vmul.f32 %v7824, %v7824
        %v8099 = vmul.f32 %v7825, %v7825
        %v8100 = vmul.f32 %v7826, %v7826
        %v8101 = vmul.f32 %v7827, %v7827
        %v8102 = vmul.f32 %v7828, %v7828
        %v8103 = vmul.f32 %v7829, %v7829
        %v8104 = vmul.f32 %v7830, %v7830
        %v8105 = vmul.f32 %v7831, %v7831
        %v8106 = vmul.f32 %v7832, %v7832
        %v8107 = vmul.f32 %v7833, %v7833
        %v8108 = vmul.f32 %v7834, %v7834
        %v8109 = vmul.f32 %v7835, %v7835
        %v8110 = vmul.f32 %v7836, %v7836
        %v8111 = vmul.f32 %v7837, %v7837
        %v8112 = vmul.f32 %v7838, %v7838
        %v8113 = vmul.f32 %v7839, %v7839
        %v8114 = vmul.f32 %v7840, %v7840
        %v8115 = vmul.f32 %v7841, %v7841
        %v8116 = vmul.f32 %v7842, %v7842
        %v8181 = vrot.slane %v8054, 7
        %v8182 = vsel %vm1924, %v8181, %v8053
        %v8183 = vrot.slane %v8055, 6
        %v8184 = vsel %vm1927, %v8183, %v8182
        %v8185 = vrot.slane %v8056, 5
        %v8186 = vsel %vm1930, %v8185, %v8184
        %v8187 = vrot.slane %v8057, 4
        %v8188 = vsel %vm1933, %v8187, %v8186
        %v8189 = vrot.slane %v8058, 3
        %v8190 = vsel %vm1936, %v8189, %v8188
        %v8191 = vrot.slane %v8059, 2
        %v8192 = vsel %vm1939, %v8191, %v8190
        %v8193 = vrot.slane %v8060, 1
        %v8194 = vsel %vm1942, %v8193, %v8192
        %v8195 = vrot.slane %v8062, 7
        %v8196 = vsel %vm1924, %v8195, %v8061
        %v8197 = vrot.slane %v8063, 6
        %v8198 = vsel %vm1927, %v8197, %v8196
        %v8199 = vrot.slane %v8064, 5
        %v8200 = vsel %vm1930, %v8199, %v8198
        %v8201 = vrot.slane %v8065, 4
        %v8202 = vsel %vm1933, %v8201, %v8200
        %v8203 = vrot.slane %v8066, 3
        %v8204 = vsel %vm1936, %v8203, %v8202
        %v8205 = vrot.slane %v8067, 2
        %v8206 = vsel %vm1939, %v8205, %v8204
        %v8207 = vrot.slane %v8068, 1
        %v8208 = vsel %vm1942, %v8207, %v8206
        %v8209 = vrot.slane %v8070, 7
        %v8210 = vsel %vm1924, %v8209, %v8069
        %v8211 = vrot.slane %v8071, 6
        %v8212 = vsel %vm1927, %v8211, %v8210
        %v8213 = vrot.slane %v8072, 5
        %v8214 = vsel %vm1930, %v8213, %v8212
        %v8215 = vrot.slane %v8073, 4
        %v8216 = vsel %vm1933, %v8215, %v8214
        %v8217 = vrot.slane %v8074, 3
        %v8218 = vsel %vm1936, %v8217, %v8216
        %v8219 = vrot.slane %v8075, 2
        %v8220 = vsel %vm1939, %v8219, %v8218
        %v8221 = vrot.slane %v8076, 1
        %v8222 = vsel %vm1942, %v8221, %v8220
        %v8223 = vrot.slane %v8078, 7
        %v8224 = vsel %vm1924, %v8223, %v8077
        %v8225 = vrot.slane %v8079, 6
        %v8226 = vsel %vm1927, %v8225, %v8224
        %v8227 = vrot.slane %v8080, 5
        %v8228 = vsel %vm1930, %v8227, %v8226
        %v8229 = vrot.slane %v8081, 4
        %v8230 = vsel %vm1933, %v8229, %v8228
        %v8231 = vrot.slane %v8082, 3
        %v8232 = vsel %vm1936, %v8231, %v8230
        %v8233 = vrot.slane %v8083, 2
        %v8234 = vsel %vm1939, %v8233, %v8232
        %v8235 = vrot.slane %v8084, 1
        %v8236 = vsel %vm1942, %v8235, %v8234
        %v8237 = vrot.slane %v8086, 7
        %v8238 = vsel %vm1924, %v8237, %v8085
        %v8239 = vrot.slane %v8087, 6
        %v8240 = vsel %vm1927, %v8239, %v8238
        %v8241 = vrot.slane %v8088, 5
        %v8242 = vsel %vm1930, %v8241, %v8240
        %v8243 = vrot.slane %v8089, 4
        %v8244 = vsel %vm1933, %v8243, %v8242
        %v8245 = vrot.slane %v8090, 3
        %v8246 = vsel %vm1936, %v8245, %v8244
        %v8247 = vrot.slane %v8091, 2
        %v8248 = vsel %vm1939, %v8247, %v8246
        %v8249 = vrot.slane %v8092, 1
        %v8250 = vsel %vm1942, %v8249, %v8248
        %v8251 = vrot.slane %v8094, 7
        %v8252 = vsel %vm1924, %v8251, %v8093
        %v8253 = vrot.slane %v8095, 6
        %v8254 = vsel %vm1927, %v8253, %v8252
        %v8255 = vrot.slane %v8096, 5
        %v8256 = vsel %vm1930, %v8255, %v8254
        %v8257 = vrot.slane %v8097, 4
        %v8258 = vsel %vm1933, %v8257, %v8256
        %v8259 = vrot.slane %v8098, 3
        %v8260 = vsel %vm1936, %v8259, %v8258
        %v8261 = vrot.slane %v8099, 2
        %v8262 = vsel %vm1939, %v8261, %v8260
        %v8263 = vrot.slane %v8100, 1
        %v8264 = vsel %vm1942, %v8263, %v8262
        %v8265 = vrot.slane %v8102, 7
        %v8266 = vsel %vm1924, %v8265, %v8101
        %v8267 = vrot.slane %v8103, 6
        %v8268 = vsel %vm1927, %v8267, %v8266
        %v8269 = vrot.slane %v8104, 5
        %v8270 = vsel %vm1930, %v8269, %v8268
        %v8271 = vrot.slane %v8105, 4
        %v8272 = vsel %vm1933, %v8271, %v8270
        %v8273 = vrot.slane %v8106, 3
        %v8274 = vsel %vm1936, %v8273, %v8272
        %v8275 = vrot.slane %v8107, 2
        %v8276 = vsel %vm1939, %v8275, %v8274
        %v8277 = vrot.slane %v8108, 1
        %v8278 = vsel %vm1942, %v8277, %v8276
        %v8279 = vrot.slane %v8110, 7
        %v8280 = vsel %vm1924, %v8279, %v8109
        %v8281 = vrot.slane %v8111, 6
        %v8282 = vsel %vm1927, %v8281, %v8280
        %v8283 = vrot.slane %v8112, 5
        %v8284 = vsel %vm1930, %v8283, %v8282
        %v8285 = vrot.slane %v8113, 4
        %v8286 = vsel %vm1933, %v8285, %v8284
        %v8287 = vrot.slane %v8114, 3
        %v8288 = vsel %vm1936, %v8287, %v8286
        %v8289 = vrot.slane %v8115, 2
        %v8290 = vsel %vm1939, %v8289, %v8288
        %v8291 = vrot.slane %v8116, 1
        %v8292 = vsel %vm1942, %v8291, %v8290
        %8301 = vadd.xlane.f32.xlu0 %v8194
        %v8302 = vpop.xlane.xlu0 %8301
        %8303 = vadd.xlane.f32.xlu0 %v8208
        %v8304 = vpop.xlane.xlu0 %8303
        %8305 = vadd.xlane.f32.xlu0 %v8222
        %v8306 = vpop.xlane.xlu0 %8305
        %8307 = vadd.xlane.f32.xlu0 %v8236
        %v8308 = vpop.xlane.xlu0 %8307
        %8309 = vadd.xlane.f32.xlu0 %v8250
        %v8310 = vpop.xlane.xlu0 %8309
        %8311 = vadd.xlane.f32.xlu0 %v8264
        %v8312 = vpop.xlane.xlu0 %8311
        %8313 = vadd.xlane.f32.xlu0 %v8278
        %v8314 = vpop.xlane.xlu0 %8313
        %8315 = vadd.xlane.f32.xlu0 %v8292
        %v8316 = vpop.xlane.xlu0 %8315
        %v8317 = vmul.f32 %v8302, %v1018
        %v8318 = vmul.f32 %v8304, %v1018
        %v8319 = vmul.f32 %v8306, %v1018
        %v8320 = vmul.f32 %v8308, %v1018
        %v8321 = vmul.f32 %v8310, %v1018
        %v8322 = vmul.f32 %v8312, %v1018
        %v8323 = vmul.f32 %v8314, %v1018
        %v8324 = vmul.f32 %v8316, %v1018
        %v8325 = vmul.f32 %v8045, %v8045
        %v8326 = vmul.f32 %v8046, %v8046
        %v8327 = vmul.f32 %v8047, %v8047
        %v8328 = vmul.f32 %v8048, %v8048
        %v8329 = vmul.f32 %v8049, %v8049
        %v8330 = vmul.f32 %v8050, %v8050
        %v8331 = vmul.f32 %v8051, %v8051
        %v8332 = vmul.f32 %v8052, %v8052
        %v8333 = vsub.f32 %v8317, %v8325
        %v8334 = vsub.f32 %v8318, %v8326
        %v8335 = vsub.f32 %v8319, %v8327
        %v8336 = vsub.f32 %v8320, %v8328
        %v8337 = vsub.f32 %v8321, %v8329
        %v8338 = vsub.f32 %v8322, %v8330
        %v8339 = vsub.f32 %v8323, %v8331
        %v8340 = vsub.f32 %v8324, %v8332
        %v8349 = vrot.slane %v8045, 1
        %v8350 = vrot.slane %v8045, 2
        %v8351 = vrot.slane %v8045, 3
        %v8352 = vrot.slane %v8045, 4
        %v8353 = vrot.slane %v8045, 5
        %v8354 = vrot.slane %v8045, 6
        %v8355 = vrot.slane %v8045, 7
        %v8356 = vrot.slane %v8046, 1
        %v8357 = vrot.slane %v8046, 2
        %v8358 = vrot.slane %v8046, 3
        %v8359 = vrot.slane %v8046, 4
        %v8360 = vrot.slane %v8046, 5
        %v8361 = vrot.slane %v8046, 6
        %v8362 = vrot.slane %v8046, 7
        %v8363 = vrot.slane %v8047, 1
        %v8364 = vrot.slane %v8047, 2
        %v8365 = vrot.slane %v8047, 3
        %v8366 = vrot.slane %v8047, 4
        %v8367 = vrot.slane %v8047, 5
        %v8368 = vrot.slane %v8047, 6
        %v8369 = vrot.slane %v8047, 7
        %v8370 = vrot.slane %v8048, 1
        %v8371 = vrot.slane %v8048, 2
        %v8372 = vrot.slane %v8048, 3
        %v8373 = vrot.slane %v8048, 4
        %v8374 = vrot.slane %v8048, 5
        %v8375 = vrot.slane %v8048, 6
        %v8376 = vrot.slane %v8048, 7
        %v8377 = vrot.slane %v8049, 1
        %v8378 = vrot.slane %v8049, 2
        %v8379 = vrot.slane %v8049, 3
        %v8380 = vrot.slane %v8049, 4
        %v8381 = vrot.slane %v8049, 5
        %v8382 = vrot.slane %v8049, 6
        %v8383 = vrot.slane %v8049, 7
        %v8384 = vrot.slane %v8050, 1
        %v8385 = vrot.slane %v8050, 2
        %v8386 = vrot.slane %v8050, 3
        %v8387 = vrot.slane %v8050, 4
        %v8388 = vrot.slane %v8050, 5
        %v8389 = vrot.slane %v8050, 6
        %v8390 = vrot.slane %v8050, 7
        %v8391 = vrot.slane %v8051, 1
        %v8392 = vrot.slane %v8051, 2
        %v8393 = vrot.slane %v8051, 3
        %v8394 = vrot.slane %v8051, 4
        %v8395 = vrot.slane %v8051, 5
        %v8396 = vrot.slane %v8051, 6
        %v8397 = vrot.slane %v8051, 7
        %v8398 = vrot.slane %v8052, 1
        %v8399 = vrot.slane %v8052, 2
        %v8400 = vrot.slane %v8052, 3
        %v8401 = vrot.slane %v8052, 4
        %v8402 = vrot.slane %v8052, 5
        %v8403 = vrot.slane %v8052, 6
        %v8404 = vrot.slane %v8052, 7
        %v8469 = vsub.f32 %v7779, %v8045
        %v8470 = vsub.f32 %v7780, %v8349
        %v8471 = vsub.f32 %v7781, %v8350
        %v8472 = vsub.f32 %v7782, %v8351
        %v8473 = vsub.f32 %v7783, %v8352
        %v8474 = vsub.f32 %v7784, %v8353
        %v8475 = vsub.f32 %v7785, %v8354
        %v8476 = vsub.f32 %v7786, %v8355
        %v8477 = vsub.f32 %v7787, %v8046
        %v8478 = vsub.f32 %v7788, %v8356
        %v8479 = vsub.f32 %v7789, %v8357
        %v8480 = vsub.f32 %v7790, %v8358
        %v8481 = vsub.f32 %v7791, %v8359
        %v8482 = vsub.f32 %v7792, %v8360
        %v8483 = vsub.f32 %v7793, %v8361
        %v8484 = vsub.f32 %v7794, %v8362
        %v8485 = vsub.f32 %v7795, %v8047
        %v8486 = vsub.f32 %v7796, %v8363
        %v8487 = vsub.f32 %v7797, %v8364
        %v8488 = vsub.f32 %v7798, %v8365
        %v8489 = vsub.f32 %v7799, %v8366
        %v8490 = vsub.f32 %v7800, %v8367
        %v8491 = vsub.f32 %v7801, %v8368
        %v8492 = vsub.f32 %v7802, %v8369
        %v8493 = vsub.f32 %v7803, %v8048
        %v8494 = vsub.f32 %v7804, %v8370
        %v8495 = vsub.f32 %v7805, %v8371
        %v8496 = vsub.f32 %v7806, %v8372
        %v8497 = vsub.f32 %v7807, %v8373
        %v8498 = vsub.f32 %v7808, %v8374
        %v8499 = vsub.f32 %v7809, %v8375
        %v8500 = vsub.f32 %v7810, %v8376
        %v8501 = vsub.f32 %v7811, %v8049
        %v8502 = vsub.f32 %v7812, %v8377
        %v8503 = vsub.f32 %v7813, %v8378
        %v8504 = vsub.f32 %v7814, %v8379
        %v8505 = vsub.f32 %v7815, %v8380
        %v8506 = vsub.f32 %v7816, %v8381
        %v8507 = vsub.f32 %v7817, %v8382
        %v8508 = vsub.f32 %v7818, %v8383
        %v8509 = vsub.f32 %v7819, %v8050
        %v8510 = vsub.f32 %v7820, %v8384
        %v8511 = vsub.f32 %v7821, %v8385
        %v8512 = vsub.f32 %v7822, %v8386
        %v8513 = vsub.f32 %v7823, %v8387
        %v8514 = vsub.f32 %v7824, %v8388
        %v8515 = vsub.f32 %v7825, %v8389
        %v8516 = vsub.f32 %v7826, %v8390
        %v8517 = vsub.f32 %v7827, %v8051
        %v8518 = vsub.f32 %v7828, %v8391
        %v8519 = vsub.f32 %v7829, %v8392
        %v8520 = vsub.f32 %v7830, %v8393
        %v8521 = vsub.f32 %v7831, %v8394
        %v8522 = vsub.f32 %v7832, %v8395
        %v8523 = vsub.f32 %v7833, %v8396
        %v8524 = vsub.f32 %v7834, %v8397
        %v8525 = vsub.f32 %v7835, %v8052
        %v8526 = vsub.f32 %v7836, %v8398
        %v8527 = vsub.f32 %v7837, %v8399
        %v8528 = vsub.f32 %v7838, %v8400
        %v8529 = vsub.f32 %v7839, %v8401
        %v8530 = vsub.f32 %v7840, %v8402
        %v8531 = vsub.f32 %v7841, %v8403
        %v8532 = vsub.f32 %v7842, %v8404
        %v8533 = vadd.f32 %v8333, 1e-12
        %v8534 = vadd.f32 %v8334, 1e-12
        %v8535 = vadd.f32 %v8335, 1e-12
        %v8536 = vadd.f32 %v8336, 1e-12
        %v8537 = vadd.f32 %v8337, 1e-12
        %v8538 = vadd.f32 %v8338, 1e-12
        %v8539 = vadd.f32 %v8339, 1e-12
        %v8540 = vadd.f32 %v8340, 1e-12
        %v8541 = vrsqrt.pop %v8533
        %v8542 = vrsqrt.pop %v8534
        %v8543 = vrsqrt.pop %v8535
        %v8544 = vrsqrt.pop %v8536
        %v8545 = vrsqrt.pop %v8537
        %v8546 = vrsqrt.pop %v8538
        %v8547 = vrsqrt.pop %v8539
        %v8548 = vrsqrt.pop %v8540
        %v8557 = vrot.slane %v8541, 1
        %v8558 = vrot.slane %v8541, 2
        %v8559 = vrot.slane %v8541, 3
        %v8560 = vrot.slane %v8541, 4
        %v8561 = vrot.slane %v8541, 5
        %v8562 = vrot.slane %v8541, 6
        %v8563 = vrot.slane %v8541, 7
        %v8564 = vrot.slane %v8542, 1
        %v8565 = vrot.slane %v8542, 2
        %v8566 = vrot.slane %v8542, 3
        %v8567 = vrot.slane %v8542, 4
        %v8568 = vrot.slane %v8542, 5
        %v8569 = vrot.slane %v8542, 6
        %v8570 = vrot.slane %v8542, 7
        %v8571 = vrot.slane %v8543, 1
        %v8572 = vrot.slane %v8543, 2
        %v8573 = vrot.slane %v8543, 3
        %v8574 = vrot.slane %v8543, 4
        %v8575 = vrot.slane %v8543, 5
        %v8576 = vrot.slane %v8543, 6
        %v8577 = vrot.slane %v8543, 7
        %v8578 = vrot.slane %v8544, 1
        %v8579 = vrot.slane %v8544, 2
        %v8580 = vrot.slane %v8544, 3
        %v8581 = vrot.slane %v8544, 4
        %v8582 = vrot.slane %v8544, 5
        %v8583 = vrot.slane %v8544, 6
        %v8584 = vrot.slane %v8544, 7
        %v8585 = vrot.slane %v8545, 1
        %v8586 = vrot.slane %v8545, 2
        %v8587 = vrot.slane %v8545, 3
        %v8588 = vrot.slane %v8545, 4
        %v8589 = vrot.slane %v8545, 5
        %v8590 = vrot.slane %v8545, 6
        %v8591 = vrot.slane %v8545, 7
        %v8592 = vrot.slane %v8546, 1
        %v8593 = vrot.slane %v8546, 2
        %v8594 = vrot.slane %v8546, 3
        %v8595 = vrot.slane %v8546, 4
        %v8596 = vrot.slane %v8546, 5
        %v8597 = vrot.slane %v8546, 6
        %v8598 = vrot.slane %v8546, 7
        %v8599 = vrot.slane %v8547, 1
        %v8600 = vrot.slane %v8547, 2
        %v8601 = vrot.slane %v8547, 3
        %v8602 = vrot.slane %v8547, 4
        %v8603 = vrot.slane %v8547, 5
        %v8604 = vrot.slane %v8547, 6
        %v8605 = vrot.slane %v8547, 7
        %v8606 = vrot.slane %v8548, 1
        %v8607 = vrot.slane %v8548, 2
        %v8608 = vrot.slane %v8548, 3
        %v8609 = vrot.slane %v8548, 4
        %v8610 = vrot.slane %v8548, 5
        %v8611 = vrot.slane %v8548, 6
        %v8612 = vrot.slane %v8548, 7
        %v8677 = vmul.f32 %v8469, %v8541
        %v8678 = vmul.f32 %v8470, %v8557
        %v8679 = vmul.f32 %v8471, %v8558
        %v8680 = vmul.f32 %v8472, %v8559
        %v8681 = vmul.f32 %v8473, %v8560
        %v8682 = vmul.f32 %v8474, %v8561
        %v8683 = vmul.f32 %v8475, %v8562
        %v8684 = vmul.f32 %v8476, %v8563
        %v8685 = vmul.f32 %v8477, %v8542
        %v8686 = vmul.f32 %v8478, %v8564
        %v8687 = vmul.f32 %v8479, %v8565
        %v8688 = vmul.f32 %v8480, %v8566
        %v8689 = vmul.f32 %v8481, %v8567
        %v8690 = vmul.f32 %v8482, %v8568
        %v8691 = vmul.f32 %v8483, %v8569
        %v8692 = vmul.f32 %v8484, %v8570
        %v8693 = vmul.f32 %v8485, %v8543
        %v8694 = vmul.f32 %v8486, %v8571
        %v8695 = vmul.f32 %v8487, %v8572
        %v8696 = vmul.f32 %v8488, %v8573
        %v8697 = vmul.f32 %v8489, %v8574
        %v8698 = vmul.f32 %v8490, %v8575
        %v8699 = vmul.f32 %v8491, %v8576
        %v8700 = vmul.f32 %v8492, %v8577
        %v8701 = vmul.f32 %v8493, %v8544
        %v8702 = vmul.f32 %v8494, %v8578
        %v8703 = vmul.f32 %v8495, %v8579
        %v8704 = vmul.f32 %v8496, %v8580
        %v8705 = vmul.f32 %v8497, %v8581
        %v8706 = vmul.f32 %v8498, %v8582
        %v8707 = vmul.f32 %v8499, %v8583
        %v8708 = vmul.f32 %v8500, %v8584
        %v8709 = vmul.f32 %v8501, %v8545
        %v8710 = vmul.f32 %v8502, %v8585
        %v8711 = vmul.f32 %v8503, %v8586
        %v8712 = vmul.f32 %v8504, %v8587
        %v8713 = vmul.f32 %v8505, %v8588
        %v8714 = vmul.f32 %v8506, %v8589
        %v8715 = vmul.f32 %v8507, %v8590
        %v8716 = vmul.f32 %v8508, %v8591
        %v8717 = vmul.f32 %v8509, %v8546
        %v8718 = vmul.f32 %v8510, %v8592
        %v8719 = vmul.f32 %v8511, %v8593
        %v8720 = vmul.f32 %v8512, %v8594
        %v8721 = vmul.f32 %v8513, %v8595
        %v8722 = vmul.f32 %v8514, %v8596
        %v8723 = vmul.f32 %v8515, %v8597
        %v8724 = vmul.f32 %v8516, %v8598
        %v8725 = vmul.f32 %v8517, %v8547
        %v8726 = vmul.f32 %v8518, %v8599
        %v8727 = vmul.f32 %v8519, %v8600
        %v8728 = vmul.f32 %v8520, %v8601
        %v8729 = vmul.f32 %v8521, %v8602
        %v8730 = vmul.f32 %v8522, %v8603
        %v8731 = vmul.f32 %v8523, %v8604
        %v8732 = vmul.f32 %v8524, %v8605
        %v8733 = vmul.f32 %v8525, %v8548
        %v8734 = vmul.f32 %v8526, %v8606
        %v8735 = vmul.f32 %v8527, %v8607
        %v8736 = vmul.f32 %v8528, %v8608
        %v8737 = vmul.f32 %v8529, %v8609
        %v8738 = vmul.f32 %v8530, %v8610
        %v8739 = vmul.f32 %v8531, %v8611
        %v8740 = vmul.f32 %v8532, %v8612
        %v8741 = vlaneseq
        %v8742 = vshrl.u32 %v8741, 7
        %v8743 = vsub.s32 0, %v8742
        %v8744 = vrot.slane %v7843, %v8743
        %v8745 = vmul.f32 %v8677, %v8744
        %v8746 = vmul.f32 %v8678, %v8744
        %v8747 = vmul.f32 %v8679, %v8744
        %v8748 = vmul.f32 %v8680, %v8744
        %v8749 = vmul.f32 %v8681, %v8744
        %v8750 = vmul.f32 %v8682, %v8744
        %v8751 = vmul.f32 %v8683, %v8744
        %v8752 = vmul.f32 %v8684, %v8744
        %v8753 = vmul.f32 %v8685, %v8744
        %v8754 = vmul.f32 %v8686, %v8744
        %v8755 = vmul.f32 %v8687, %v8744
        %v8756 = vmul.f32 %v8688, %v8744
        %v8757 = vmul.f32 %v8689, %v8744
        %v8758 = vmul.f32 %v8690, %v8744
        %v8759 = vmul.f32 %v8691, %v8744
        %v8760 = vmul.f32 %v8692, %v8744
        %v8761 = vmul.f32 %v8693, %v8744
        %v8762 = vmul.f32 %v8694, %v8744
        %v8763 = vmul.f32 %v8695, %v8744
        %v8764 = vmul.f32 %v8696, %v8744
        %v8765 = vmul.f32 %v8697, %v8744
        %v8766 = vmul.f32 %v8698, %v8744
        %v8767 = vmul.f32 %v8699, %v8744
        %v8768 = vmul.f32 %v8700, %v8744
        %v8769 = vmul.f32 %v8701, %v8744
        %v8770 = vmul.f32 %v8702, %v8744
        %v8771 = vmul.f32 %v8703, %v8744
        %v8772 = vmul.f32 %v8704, %v8744
        %v8773 = vmul.f32 %v8705, %v8744
        %v8774 = vmul.f32 %v8706, %v8744
        %v8775 = vmul.f32 %v8707, %v8744
        %v8776 = vmul.f32 %v8708, %v8744
        %v8777 = vmul.f32 %v8709, %v8744
        %v8778 = vmul.f32 %v8710, %v8744
        %v8779 = vmul.f32 %v8711, %v8744
        %v8780 = vmul.f32 %v8712, %v8744
        %v8781 = vmul.f32 %v8713, %v8744
        %v8782 = vmul.f32 %v8714, %v8744
        %v8783 = vmul.f32 %v8715, %v8744
        %v8784 = vmul.f32 %v8716, %v8744
        %v8785 = vmul.f32 %v8717, %v8744
        %v8786 = vmul.f32 %v8718, %v8744
        %v8787 = vmul.f32 %v8719, %v8744
        %v8788 = vmul.f32 %v8720, %v8744
        %v8789 = vmul.f32 %v8721, %v8744
        %v8790 = vmul.f32 %v8722, %v8744
        %v8791 = vmul.f32 %v8723, %v8744
        %v8792 = vmul.f32 %v8724, %v8744
        %v8793 = vmul.f32 %v8725, %v8744
        %v8794 = vmul.f32 %v8726, %v8744
        %v8795 = vmul.f32 %v8727, %v8744
        %v8796 = vmul.f32 %v8728, %v8744
        %v8797 = vmul.f32 %v8729, %v8744
        %v8798 = vmul.f32 %v8730, %v8744
        %v8799 = vmul.f32 %v8731, %v8744
        %v8800 = vmul.f32 %v8732, %v8744
        %v8801 = vmul.f32 %v8733, %v8744
        %v8802 = vmul.f32 %v8734, %v8744
        %v8803 = vmul.f32 %v8735, %v8744
        %v8804 = vmul.f32 %v8736, %v8744
        %v8805 = vmul.f32 %v8737, %v8744
        %v8806 = vmul.f32 %v8738, %v8744
        %v8807 = vmul.f32 %v8739, %v8744
        %v8808 = vmul.f32 %v8740, %v8744
        %v8809 = vlaneseq
        %v8810 = vshrl.u32 %v8809, 7
        %v8811 = vsub.s32 0, %v8810
        %v8812 = vrot.slane %v7844, %v8811
        %v8813 = vadd.f32 %v8745, %v8812
        %v8814 = vadd.f32 %v8746, %v8812
        %v8815 = vadd.f32 %v8747, %v8812
        %v8816 = vadd.f32 %v8748, %v8812
        %v8817 = vadd.f32 %v8749, %v8812
        %v8818 = vadd.f32 %v8750, %v8812
        %v8819 = vadd.f32 %v8751, %v8812
        %v8820 = vadd.f32 %v8752, %v8812
        %v8821 = vadd.f32 %v8753, %v8812
        %v8822 = vadd.f32 %v8754, %v8812
        %v8823 = vadd.f32 %v8755, %v8812
        %v8824 = vadd.f32 %v8756, %v8812
        %v8825 = vadd.f32 %v8757, %v8812
        %v8826 = vadd.f32 %v8758, %v8812
        %v8827 = vadd.f32 %v8759, %v8812
        %v8828 = vadd.f32 %v8760, %v8812
        %v8829 = vadd.f32 %v8761, %v8812
        %v8830 = vadd.f32 %v8762, %v8812
        %v8831 = vadd.f32 %v8763, %v8812
        %v8832 = vadd.f32 %v8764, %v8812
        %v8833 = vadd.f32 %v8765, %v8812
        %v8834 = vadd.f32 %v8766, %v8812
        %v8835 = vadd.f32 %v8767, %v8812
        %v8836 = vadd.f32 %v8768, %v8812
        %v8837 = vadd.f32 %v8769, %v8812
        %v8838 = vadd.f32 %v8770, %v8812
        %v8839 = vadd.f32 %v8771, %v8812
        %v8840 = vadd.f32 %v8772, %v8812
        %v8841 = vadd.f32 %v8773, %v8812
        %v8842 = vadd.f32 %v8774, %v8812
        %v8843 = vadd.f32 %v8775, %v8812
        %v8844 = vadd.f32 %v8776, %v8812
        %v8845 = vadd.f32 %v8777, %v8812
        %v8846 = vadd.f32 %v8778, %v8812
        %v8847 = vadd.f32 %v8779, %v8812
        %v8848 = vadd.f32 %v8780, %v8812
        %v8849 = vadd.f32 %v8781, %v8812
        %v8850 = vadd.f32 %v8782, %v8812
        %v8851 = vadd.f32 %v8783, %v8812
        %v8852 = vadd.f32 %v8784, %v8812
        %v8853 = vadd.f32 %v8785, %v8812
        %v8854 = vadd.f32 %v8786, %v8812
        %v8855 = vadd.f32 %v8787, %v8812
        %v8856 = vadd.f32 %v8788, %v8812
        %v8857 = vadd.f32 %v8789, %v8812
        %v8858 = vadd.f32 %v8790, %v8812
        %v8859 = vadd.f32 %v8791, %v8812
        %v8860 = vadd.f32 %v8792, %v8812
        %v8861 = vadd.f32 %v8793, %v8812
        %v8862 = vadd.f32 %v8794, %v8812
        %v8863 = vadd.f32 %v8795, %v8812
        %v8864 = vadd.f32 %v8796, %v8812
        %v8865 = vadd.f32 %v8797, %v8812
        %v8866 = vadd.f32 %v8798, %v8812
        %v8867 = vadd.f32 %v8799, %v8812
        %v8868 = vadd.f32 %v8800, %v8812
        %v8869 = vadd.f32 %v8801, %v8812
        %v8870 = vadd.f32 %v8802, %v8812
        %v8871 = vadd.f32 %v8803, %v8812
        %v8872 = vadd.f32 %v8804, %v8812
        %v8873 = vadd.f32 %v8805, %v8812
        %v8874 = vadd.f32 %v8806, %v8812
        %v8875 = vadd.f32 %v8807, %v8812
        %v8876 = vadd.f32 %v8808, %v8812
        %v8877 = vpack.c.bf16 %v8813, %v8813
        %v8878 = vpack.c.bf16 %v8814, %v8814
        %v8879 = vpack.c.bf16 %v8815, %v8815
        %v8880 = vpack.c.bf16 %v8816, %v8816
        %v8881 = vpack.c.bf16 %v8817, %v8817
        %v8882 = vpack.c.bf16 %v8818, %v8818
        %v8883 = vpack.c.bf16 %v8819, %v8819
        %v8884 = vpack.c.bf16 %v8820, %v8820
        %v8885 = vpack.c.bf16 %v8821, %v8821
        %v8886 = vpack.c.bf16 %v8822, %v8822
        %v8887 = vpack.c.bf16 %v8823, %v8823
        %v8888 = vpack.c.bf16 %v8824, %v8824
        %v8889 = vpack.c.bf16 %v8825, %v8825
        %v8890 = vpack.c.bf16 %v8826, %v8826
        %v8891 = vpack.c.bf16 %v8827, %v8827
        %v8892 = vpack.c.bf16 %v8828, %v8828
        %v8893 = vpack.c.bf16 %v8829, %v8829
        %v8894 = vpack.c.bf16 %v8830, %v8830
        %v8895 = vpack.c.bf16 %v8831, %v8831
        %v8896 = vpack.c.bf16 %v8832, %v8832
        %v8897 = vpack.c.bf16 %v8833, %v8833
        %v8898 = vpack.c.bf16 %v8834, %v8834
        %v8899 = vpack.c.bf16 %v8835, %v8835
        %v8900 = vpack.c.bf16 %v8836, %v8836
        %v8901 = vpack.c.bf16 %v8837, %v8837
        %v8902 = vpack.c.bf16 %v8838, %v8838
        %v8903 = vpack.c.bf16 %v8839, %v8839
        %v8904 = vpack.c.bf16 %v8840, %v8840
        %v8905 = vpack.c.bf16 %v8841, %v8841
        %v8906 = vpack.c.bf16 %v8842, %v8842
        %v8907 = vpack.c.bf16 %v8843, %v8843
        %v8908 = vpack.c.bf16 %v8844, %v8844
        %v8909 = vpack.c.bf16 %v8845, %v8845
        %v8910 = vpack.c.bf16 %v8846, %v8846
        %v8911 = vpack.c.bf16 %v8847, %v8847
        %v8912 = vpack.c.bf16 %v8848, %v8848
        %v8913 = vpack.c.bf16 %v8849, %v8849
        %v8914 = vpack.c.bf16 %v8850, %v8850
        %v8915 = vpack.c.bf16 %v8851, %v8851
        %v8916 = vpack.c.bf16 %v8852, %v8852
        %v8917 = vpack.c.bf16 %v8853, %v8853
        %v8918 = vpack.c.bf16 %v8854, %v8854
        %v8919 = vpack.c.bf16 %v8855, %v8855
        %v8920 = vpack.c.bf16 %v8856, %v8856
        %v8921 = vpack.c.bf16 %v8857, %v8857
        %v8922 = vpack.c.bf16 %v8858, %v8858
        %v8923 = vpack.c.bf16 %v8859, %v8859
        %v8924 = vpack.c.bf16 %v8860, %v8860
        %v8925 = vpack.c.bf16 %v8861, %v8861
        %v8926 = vpack.c.bf16 %v8862, %v8862
        %v8927 = vpack.c.bf16 %v8863, %v8863
        %v8928 = vpack.c.bf16 %v8864, %v8864
        %v8929 = vpack.c.bf16 %v8865, %v8865
        %v8930 = vpack.c.bf16 %v8866, %v8866
        %v8931 = vpack.c.bf16 %v8867, %v8867
        %v8932 = vpack.c.bf16 %v8868, %v8868
        %v8933 = vpack.c.bf16 %v8869, %v8869
        %v8934 = vpack.c.bf16 %v8870, %v8870
        %v8935 = vpack.c.bf16 %v8871, %v8871
        %v8936 = vpack.c.bf16 %v8872, %v8872
        %v8937 = vpack.c.bf16 %v8873, %v8873
        %v8938 = vpack.c.bf16 %v8874, %v8874
        %v8939 = vpack.c.bf16 %v8875, %v8875
        %v8940 = vpack.c.bf16 %v8876, %v8876
        %v8941 = vld [vmem:[%s8] sm:$0xff]
        %v8942 = vld [vmem:[%s8 + $0x8] sm:$0xff]
        %v8943 = vld [vmem:[%s8 + $0x10] sm:$0xff]
        %v8944 = vld [vmem:[%s8 + $0x18] sm:$0xff]
        %v8945 = vld [vmem:[%s8 + $0x20] sm:$0xff]
        %v8946 = vld [vmem:[%s8 + $0x28] sm:$0xff]
        %v8947 = vld [vmem:[%s8 + $0x30] sm:$0xff]
        %v8948 = vld [vmem:[%s8 + $0x38] sm:$0xff]
        %v8949 = vld [vmem:[%s8 + $0x40] sm:$0xff]
        %v8950 = vld [vmem:[%s8 + $0x48] sm:$0xff]
        %v8951 = vld [vmem:[%s8 + $0x50] sm:$0xff]
        %v8952 = vld [vmem:[%s8 + $0x58] sm:$0xff]
        %v8953 = vld [vmem:[%s8 + $0x60] sm:$0xff]
        %v8954 = vld [vmem:[%s8 + $0x68] sm:$0xff]
        %v8955 = vld [vmem:[%s8 + $0x70] sm:$0xff]
        %v8956 = vld [vmem:[%s8 + $0x78] sm:$0xff]
        %v8957 = vld [vmem:[%s8 + $0x80] sm:$0xff]
        %v8958 = vld [vmem:[%s8 + $0x88] sm:$0xff]
        %v8959 = vld [vmem:[%s8 + $0x90] sm:$0xff]
        %v8960 = vld [vmem:[%s8 + $0x98] sm:$0xff]
        %v8961 = vld [vmem:[%s8 + $0xa0] sm:$0xff]
        %v8962 = vld [vmem:[%s8 + $0xa8] sm:$0xff]
        %v8963 = vld [vmem:[%s8 + $0xb0] sm:$0xff]
        %v8964 = vld [vmem:[%s8 + $0xb8] sm:$0xff]
        %v8965 = vld [vmem:[%s8 + $0xc0] sm:$0xff]
        %v8966 = vld [vmem:[%s8 + $0xc8] sm:$0xff]
        %v8967 = vld [vmem:[%s8 + $0xd0] sm:$0xff]
        %v8968 = vld [vmem:[%s8 + $0xd8] sm:$0xff]
        %v8969 = vld [vmem:[%s8 + $0xe0] sm:$0xff]
        %v8970 = vld [vmem:[%s8 + $0xe8] sm:$0xff]
        %v8971 = vld [vmem:[%s8 + $0xf0] sm:$0xff]
        %v8972 = vld [vmem:[%s8 + $0xf8] sm:$0xff]
        %v8973 = vld [vmem:[%s9] sm:$0xf]
        %v8975 = vlaneseq
        %v8976 = vshrl.u32 %v8975, 7
        %v8977 = vsub.s32 0, %v8976
        %v8978 = vrot.slane %v8973, %v8977
        %v8979 = vlaneseq
        %v8980 = vshrl.u32 %v8979, 7
        %v8981 = vsub.s32 1, %v8980
        %v8982 = vrot.slane %v8973, %v8981
        %v8983 = vlaneseq
        %v8984 = vshrl.u32 %v8983, 7
        %v8985 = vsub.s32 2, %v8984
        %v8986 = vrot.slane %v8973, %v8985
        %v8987 = vlaneseq
        %v8988 = vshrl.u32 %v8987, 7
        %v8989 = vsub.s32 3, %v8988
        %v8990 = vrot.slane %v8973, %v8989
        %v9059 = vunpack.c.l.b16 %v8877
        %v9060 = vunpack.c.l.b16 %v8878
        %v9061 = vunpack.c.l.b16 %v8879
        %v9062 = vunpack.c.l.b16 %v8880
        %v9063 = vunpack.c.l.b16 %v8881
        %v9064 = vunpack.c.l.b16 %v8882
        %v9065 = vunpack.c.l.b16 %v8883
        %v9066 = vunpack.c.l.b16 %v8884
        %v9067 = vunpack.c.l.b16 %v8885
        %v9068 = vunpack.c.l.b16 %v8886
        %v9069 = vunpack.c.l.b16 %v8887
        %v9070 = vunpack.c.l.b16 %v8888
        %v9071 = vunpack.c.l.b16 %v8889
        %v9072 = vunpack.c.l.b16 %v8890
        %v9073 = vunpack.c.l.b16 %v8891
        %v9074 = vunpack.c.l.b16 %v8892
        %v9075 = vunpack.c.l.b16 %v8893
        %v9076 = vunpack.c.l.b16 %v8894
        %v9077 = vunpack.c.l.b16 %v8895
        %v9078 = vunpack.c.l.b16 %v8896
        %v9079 = vunpack.c.l.b16 %v8897
        %v9080 = vunpack.c.l.b16 %v8898
        %v9081 = vunpack.c.l.b16 %v8899
        %v9082 = vunpack.c.l.b16 %v8900
        %v9083 = vunpack.c.l.b16 %v8901
        %v9084 = vunpack.c.l.b16 %v8902
        %v9085 = vunpack.c.l.b16 %v8903
        %v9086 = vunpack.c.l.b16 %v8904
        %v9087 = vunpack.c.l.b16 %v8905
        %v9088 = vunpack.c.l.b16 %v8906
        %v9089 = vunpack.c.l.b16 %v8907
        %v9090 = vunpack.c.l.b16 %v8908
        %v9091 = vunpack.c.l.b16 %v8909
        %v9092 = vunpack.c.l.b16 %v8910
        %v9093 = vunpack.c.l.b16 %v8911
        %v9094 = vunpack.c.l.b16 %v8912
        %v9095 = vunpack.c.l.b16 %v8913
        %v9096 = vunpack.c.l.b16 %v8914
        %v9097 = vunpack.c.l.b16 %v8915
        %v9098 = vunpack.c.l.b16 %v8916
        %v9099 = vunpack.c.l.b16 %v8917
        %v9100 = vunpack.c.l.b16 %v8918
        %v9101 = vunpack.c.l.b16 %v8919
        %v9102 = vunpack.c.l.b16 %v8920
        %v9103 = vunpack.c.l.b16 %v8921
        %v9104 = vunpack.c.l.b16 %v8922
        %v9105 = vunpack.c.l.b16 %v8923
        %v9106 = vunpack.c.l.b16 %v8924
        %v9107 = vunpack.c.l.b16 %v8925
        %v9108 = vunpack.c.l.b16 %v8926
        %v9109 = vunpack.c.l.b16 %v8927
        %v9110 = vunpack.c.l.b16 %v8928
        %v9111 = vunpack.c.l.b16 %v8929
        %v9112 = vunpack.c.l.b16 %v8930
        %v9113 = vunpack.c.l.b16 %v8931
        %v9114 = vunpack.c.l.b16 %v8932
        %v9115 = vunpack.c.l.b16 %v8933
        %v9116 = vunpack.c.l.b16 %v8934
        %v9117 = vunpack.c.l.b16 %v8935
        %v9118 = vunpack.c.l.b16 %v8936
        %v9119 = vunpack.c.l.b16 %v8937
        %v9120 = vunpack.c.l.b16 %v8938
        %v9121 = vunpack.c.l.b16 %v8939
        %v9122 = vunpack.c.l.b16 %v8940
        %v9123 = vrot.slane %v9060, 7
        %v9124 = vsel %vm1924, %v9123, %v9059
        %v9125 = vrot.slane %v9061, 6
        %v9126 = vsel %vm1927, %v9125, %v9124
        %v9127 = vrot.slane %v9062, 5
        %v9128 = vsel %vm1930, %v9127, %v9126
        %v9129 = vrot.slane %v9063, 4
        %v9130 = vsel %vm1933, %v9129, %v9128
        %v9131 = vrot.slane %v9064, 3
        %v9132 = vsel %vm1936, %v9131, %v9130
        %v9133 = vrot.slane %v9065, 2
        %v9134 = vsel %vm1939, %v9133, %v9132
        %v9135 = vrot.slane %v9066, 1
        %v9136 = vsel %vm1942, %v9135, %v9134
        %v9137 = vrot.slane %v9068, 7
        %v9138 = vsel %vm1924, %v9137, %v9067
        %v9139 = vrot.slane %v9069, 6
        %v9140 = vsel %vm1927, %v9139, %v9138
        %v9141 = vrot.slane %v9070, 5
        %v9142 = vsel %vm1930, %v9141, %v9140
        %v9143 = vrot.slane %v9071, 4
        %v9144 = vsel %vm1933, %v9143, %v9142
        %v9145 = vrot.slane %v9072, 3
        %v9146 = vsel %vm1936, %v9145, %v9144
        %v9147 = vrot.slane %v9073, 2
        %v9148 = vsel %vm1939, %v9147, %v9146
        %v9149 = vrot.slane %v9074, 1
        %v9150 = vsel %vm1942, %v9149, %v9148
        %v9151 = vrot.slane %v9076, 7
        %v9152 = vsel %vm1924, %v9151, %v9075
        %v9153 = vrot.slane %v9077, 6
        %v9154 = vsel %vm1927, %v9153, %v9152
        %v9155 = vrot.slane %v9078, 5
        %v9156 = vsel %vm1930, %v9155, %v9154
        %v9157 = vrot.slane %v9079, 4
        %v9158 = vsel %vm1933, %v9157, %v9156
        %v9159 = vrot.slane %v9080, 3
        %v9160 = vsel %vm1936, %v9159, %v9158
        %v9161 = vrot.slane %v9081, 2
        %v9162 = vsel %vm1939, %v9161, %v9160
        %v9163 = vrot.slane %v9082, 1
        %v9164 = vsel %vm1942, %v9163, %v9162
        %v9165 = vrot.slane %v9084, 7
        %v9166 = vsel %vm1924, %v9165, %v9083
        %v9167 = vrot.slane %v9085, 6
        %v9168 = vsel %vm1927, %v9167, %v9166
        %v9169 = vrot.slane %v9086, 5
        %v9170 = vsel %vm1930, %v9169, %v9168
        %v9171 = vrot.slane %v9087, 4
        %v9172 = vsel %vm1933, %v9171, %v9170
        %v9173 = vrot.slane %v9088, 3
        %v9174 = vsel %vm1936, %v9173, %v9172
        %v9175 = vrot.slane %v9089, 2
        %v9176 = vsel %vm1939, %v9175, %v9174
        %v9177 = vrot.slane %v9090, 1
        %v9178 = vsel %vm1942, %v9177, %v9176
        %v9179 = vrot.slane %v9092, 7
        %v9180 = vsel %vm1924, %v9179, %v9091
        %v9181 = vrot.slane %v9093, 6
        %v9182 = vsel %vm1927, %v9181, %v9180
        %v9183 = vrot.slane %v9094, 5
        %v9184 = vsel %vm1930, %v9183, %v9182
        %v9185 = vrot.slane %v9095, 4
        %v9186 = vsel %vm1933, %v9185, %v9184
        %v9187 = vrot.slane %v9096, 3
        %v9188 = vsel %vm1936, %v9187, %v9186
        %v9189 = vrot.slane %v9097, 2
        %v9190 = vsel %vm1939, %v9189, %v9188
        %v9191 = vrot.slane %v9098, 1
        %v9192 = vsel %vm1942, %v9191, %v9190
        %v9193 = vrot.slane %v9100, 7
        %v9194 = vsel %vm1924, %v9193, %v9099
        %v9195 = vrot.slane %v9101, 6
        %v9196 = vsel %vm1927, %v9195, %v9194
        %v9197 = vrot.slane %v9102, 5
        %v9198 = vsel %vm1930, %v9197, %v9196
        %v9199 = vrot.slane %v9103, 4
        %v9200 = vsel %vm1933, %v9199, %v9198
        %v9201 = vrot.slane %v9104, 3
        %v9202 = vsel %vm1936, %v9201, %v9200
        %v9203 = vrot.slane %v9105, 2
        %v9204 = vsel %vm1939, %v9203, %v9202
        %v9205 = vrot.slane %v9106, 1
        %v9206 = vsel %vm1942, %v9205, %v9204
        %v9207 = vrot.slane %v9108, 7
        %v9208 = vsel %vm1924, %v9207, %v9107
        %v9209 = vrot.slane %v9109, 6
        %v9210 = vsel %vm1927, %v9209, %v9208
        %v9211 = vrot.slane %v9110, 5
        %v9212 = vsel %vm1930, %v9211, %v9210
        %v9213 = vrot.slane %v9111, 4
        %v9214 = vsel %vm1933, %v9213, %v9212
        %v9215 = vrot.slane %v9112, 3
        %v9216 = vsel %vm1936, %v9215, %v9214
        %v9217 = vrot.slane %v9113, 2
        %v9218 = vsel %vm1939, %v9217, %v9216
        %v9219 = vrot.slane %v9114, 1
        %v9220 = vsel %vm1942, %v9219, %v9218
        %v9221 = vrot.slane %v9116, 7
        %v9222 = vsel %vm1924, %v9221, %v9115
        %v9223 = vrot.slane %v9117, 6
        %v9224 = vsel %vm1927, %v9223, %v9222
        %v9225 = vrot.slane %v9118, 5
        %v9226 = vsel %vm1930, %v9225, %v9224
        %v9227 = vrot.slane %v9119, 4
        %v9228 = vsel %vm1933, %v9227, %v9226
        %v9229 = vrot.slane %v9120, 3
        %v9230 = vsel %vm1936, %v9229, %v9228
        %v9231 = vrot.slane %v9121, 2
        %v9232 = vsel %vm1939, %v9231, %v9230
        %v9233 = vrot.slane %v9122, 1
        %v9234 = vsel %vm1942, %v9233, %v9232
        %v9235 = vpack.c.b16 %v9150, %v9136
        %v9236 = vpack.c.b16 %v9178, %v9164
        %v9237 = vpack.c.b16 %v9206, %v9192
        %v9238 = vpack.c.b16 %v9234, %v9220
        %v9275 = vunpack.c.l.b16 %v8941
        %v9276 = vunpack.c.h.b16 %v8941
        %v9277 = vunpack.c.l.b16 %v8942
        %v9278 = vunpack.c.h.b16 %v8942
        %v9279 = vunpack.c.l.b16 %v8943
        %v9280 = vunpack.c.h.b16 %v8943
        %v9281 = vunpack.c.l.b16 %v8944
        %v9282 = vunpack.c.h.b16 %v8944
        %v9283 = vunpack.c.l.b16 %v8945
        %v9284 = vunpack.c.h.b16 %v8945
        %v9285 = vunpack.c.l.b16 %v8946
        %v9286 = vunpack.c.h.b16 %v8946
        %v9287 = vunpack.c.l.b16 %v8947
        %v9288 = vunpack.c.h.b16 %v8947
        %v9289 = vunpack.c.l.b16 %v8948
        %v9290 = vunpack.c.h.b16 %v8948
        %v9291 = vunpack.c.l.b16 %v8949
        %v9292 = vunpack.c.h.b16 %v8949
        %v9293 = vunpack.c.l.b16 %v8950
        %v9294 = vunpack.c.h.b16 %v8950
        %v9295 = vunpack.c.l.b16 %v8951
        %v9296 = vunpack.c.h.b16 %v8951
        %v9297 = vunpack.c.l.b16 %v8952
        %v9298 = vunpack.c.h.b16 %v8952
        %v9299 = vunpack.c.l.b16 %v8953
        %v9300 = vunpack.c.h.b16 %v8953
        %v9301 = vunpack.c.l.b16 %v8954
        %v9302 = vunpack.c.h.b16 %v8954
        %v9303 = vunpack.c.l.b16 %v8955
        %v9304 = vunpack.c.h.b16 %v8955
        %v9305 = vunpack.c.l.b16 %v8956
        %v9306 = vunpack.c.h.b16 %v8956
        %v9307 = vunpack.c.l.b16 %v8957
        %v9308 = vunpack.c.h.b16 %v8957
        %v9309 = vunpack.c.l.b16 %v8958
        %v9310 = vunpack.c.h.b16 %v8958
        %v9311 = vunpack.c.l.b16 %v8959
        %v9312 = vunpack.c.h.b16 %v8959
        %v9313 = vunpack.c.l.b16 %v8960
        %v9314 = vunpack.c.h.b16 %v8960
        %v9315 = vunpack.c.l.b16 %v8961
        %v9316 = vunpack.c.h.b16 %v8961
        %v9317 = vunpack.c.l.b16 %v8962
        %v9318 = vunpack.c.h.b16 %v8962
        %v9319 = vunpack.c.l.b16 %v8963
        %v9320 = vunpack.c.h.b16 %v8963
        %v9321 = vunpack.c.l.b16 %v8964
        %v9322 = vunpack.c.h.b16 %v8964
        %v9323 = vunpack.c.l.b16 %v8965
        %v9324 = vunpack.c.h.b16 %v8965
        %v9325 = vunpack.c.l.b16 %v8966
        %v9326 = vunpack.c.h.b16 %v8966
        %v9327 = vunpack.c.l.b16 %v8967
        %v9328 = vunpack.c.h.b16 %v8967
        %v9329 = vunpack.c.l.b16 %v8968
        %v9330 = vunpack.c.h.b16 %v8968
        %v9331 = vunpack.c.l.b16 %v8969
        %v9332 = vunpack.c.h.b16 %v8969
        %v9333 = vunpack.c.l.b16 %v8970
        %v9334 = vunpack.c.h.b16 %v8970
        %v9335 = vunpack.c.l.b16 %v8971
        %v9336 = vunpack.c.h.b16 %v8971
        %v9337 = vunpack.c.l.b16 %v8972
        %v9338 = vunpack.c.h.b16 %v8972
        %v9339 = vpack.c.b16 %v9279, %v9275
        %v9340 = vpack.c.b16 %v9280, %v9276
        %v9341 = vpack.c.b16 %v9281, %v9277
        %v9342 = vpack.c.b16 %v9282, %v9278
        %v9343 = vpack.c.b16 %v9287, %v9283
        %v9344 = vpack.c.b16 %v9288, %v9284
        %v9345 = vpack.c.b16 %v9289, %v9285
        %v9346 = vpack.c.b16 %v9290, %v9286
        %v9347 = vpack.c.b16 %v9295, %v9291
        %v9348 = vpack.c.b16 %v9296, %v9292
        %v9349 = vpack.c.b16 %v9297, %v9293
        %v9350 = vpack.c.b16 %v9298, %v9294
        %v9351 = vpack.c.b16 %v9303, %v9299
        %v9352 = vpack.c.b16 %v9304, %v9300
        %v9353 = vpack.c.b16 %v9305, %v9301
        %v9354 = vpack.c.b16 %v9306, %v9302
        %v9355 = vpack.c.b16 %v9311, %v9307
        %v9356 = vpack.c.b16 %v9312, %v9308
        %v9357 = vpack.c.b16 %v9313, %v9309
        %v9358 = vpack.c.b16 %v9314, %v9310
        %v9359 = vpack.c.b16 %v9319, %v9315
        %v9360 = vpack.c.b16 %v9320, %v9316
        %v9361 = vpack.c.b16 %v9321, %v9317
        %v9362 = vpack.c.b16 %v9322, %v9318
        %v9363 = vpack.c.b16 %v9327, %v9323
        %v9364 = vpack.c.b16 %v9328, %v9324
        %v9365 = vpack.c.b16 %v9329, %v9325
        %v9366 = vpack.c.b16 %v9330, %v9326
        %v9367 = vpack.c.b16 %v9335, %v9331
        %v9368 = vpack.c.b16 %v9336, %v9332
        %v9369 = vpack.c.b16 %v9337, %v9333
        %v9370 = vpack.c.b16 %v9338, %v9334
        %9403 = vmatprep.subr.bf16.mxu0 %v9368
        %9404 = vmatpush1.bf16.msra.mxu0 %v9367
        %9405 = vmatprep.subr.bf16.mxu0 %v9364
        %9406 = vmatpush1.bf16.msra.mxu0 %v9363
        %9407 = vmatprep.subr.bf16.mxu0 %v9360
        %9408 = vmatpush1.bf16.msra.mxu0 %v9359
        %9409 = vmatprep.subr.bf16.mxu0 %v9356
        %9410 = vmatpush1.bf16.msra.mxu0 %v9355
        %9411 = vmatprep.subr.bf16.mxu0 %v9352
        %9412 = vmatpush1.bf16.msra.mxu0 %v9351
        %9413 = vmatprep.subr.bf16.mxu0 %v9348
        %9414 = vmatpush1.bf16.msra.mxu0 %v9347
        %9415 = vmatprep.subr.bf16.mxu0 %v9344
        %9416 = vmatpush1.bf16.msra.mxu0 %v9343
        %9417 = vmatprep.subr.bf16.mxu0 %v9340
        %9418 = vmatpush1.bf16.msra.mxu0 %v9339
        %9419 = vmatprep.subr.bf16.mxu0 0
        %9420 = vmatpush2.bf16.msra.mxu0 0
        %9421 = vmatprep.subr.bf16.mxu0 0
        %9422 = vmatpush2.bf16.msra.mxu0 0
        %9423 = vmatprep.subr.bf16.mxu0 0
        %9424 = vmatpush2.bf16.msra.mxu0 0
        %9425 = vmatprep.subr.bf16.mxu0 0
        %9426 = vmatpush2.bf16.msra.mxu0 0
        %9427 = vmatprep.subr.bf16.mxu0 0
        %9428 = vmatpush2.bf16.msra.mxu0 0
        %9429 = vmatprep.subr.bf16.mxu0 0
        %9430 = vmatpush2.bf16.msra.mxu0 0
        %9431 = vmatprep.subr.bf16.mxu0 0
        %9432 = vmatpush2.bf16.msra.mxu0 0
        %9433 = vmatprep.subr.bf16.mxu0 0
        %9434 = vmatpush2.bf16.msra.mxu0 0
        %9435 = vmatprep.mubr.bf16.mxu0 0
        %9436 = vmatmul.mubr.bf16.gmra.mxu0 %v9235
        %v9437 = vpop.f32.mrf.mxu0
        %v9438 = vadd.f32 %v8978, %v9437
        %v9439 = vpop.f32.mrf.mxu0
        %v9440 = vadd.f32 %v8982, %v9439
        %v9441 = vpop.f32.mrf.mxu0
        %v9442 = vadd.f32 %v8978, %v9441
        %v9443 = vpop.f32.mrf.mxu0
        %v9444 = vadd.f32 %v8982, %v9443
        %9445 = vmatprep.mubr.bf16.mxu0 0
        %9446 = vmatmul.mubr.bf16.gmra.mxu0 %v9236
        %v9447 = vpop.f32.mrf.mxu0
        %v9448 = vadd.f32 %v8978, %v9447
        %v9449 = vpop.f32.mrf.mxu0
        %v9450 = vadd.f32 %v8982, %v9449
        %v9451 = vpop.f32.mrf.mxu0
        %v9452 = vadd.f32 %v8978, %v9451
        %v9453 = vpop.f32.mrf.mxu0
        %v9454 = vadd.f32 %v8982, %v9453
        %9455 = vmatprep.mubr.bf16.mxu0 0
        %9456 = vmatmul.mubr.bf16.gmra.mxu0 %v9237
        %v9457 = vpop.f32.mrf.mxu0
        %v9458 = vadd.f32 %v8978, %v9457
        %v9459 = vpop.f32.mrf.mxu0
        %v9460 = vadd.f32 %v8982, %v9459
        %v9461 = vpop.f32.mrf.mxu0
        %v9462 = vadd.f32 %v8978, %v9461
        %v9463 = vpop.f32.mrf.mxu0
        %v9464 = vadd.f32 %v8982, %v9463
        %9465 = vmatprep.mubr.bf16.mxu0 0
        %9466 = vmatmul.mubr.bf16.gmra.mxu0 %v9238
        %v9467 = vpop.f32.mrf.mxu0
        %v9468 = vadd.f32 %v8978, %v9467
        %v9469 = vpop.f32.mrf.mxu0
        %v9470 = vadd.f32 %v8982, %v9469
        %v9471 = vpop.f32.mrf.mxu0
        %v9472 = vadd.f32 %v8978, %v9471
        %v9473 = vpop.f32.mrf.mxu0
        %v9474 = vadd.f32 %v8982, %v9473
        %9475 = vdwg.mxu0
        %9476 = vmatprep.subr.bf16.mxu0 %v9370
        %9477 = vmatpush1.bf16.msra.mxu0 %v9369
        %9478 = vmatprep.subr.bf16.mxu0 %v9366
        %9479 = vmatpush1.bf16.msra.mxu0 %v9365
        %9480 = vmatprep.subr.bf16.mxu0 %v9362
        %9481 = vmatpush1.bf16.msra.mxu0 %v9361
        %9482 = vmatprep.subr.bf16.mxu0 %v9358
        %9483 = vmatpush1.bf16.msra.mxu0 %v9357
        %9484 = vmatprep.subr.bf16.mxu0 %v9354
        %9485 = vmatpush1.bf16.msra.mxu0 %v9353
        %9486 = vmatprep.subr.bf16.mxu0 %v9350
        %9487 = vmatpush1.bf16.msra.mxu0 %v9349
        %9488 = vmatprep.subr.bf16.mxu0 %v9346
        %9489 = vmatpush1.bf16.msra.mxu0 %v9345
        %9490 = vmatprep.subr.bf16.mxu0 %v9342
        %9491 = vmatpush1.bf16.msra.mxu0 %v9341
        %9492 = vmatprep.subr.bf16.mxu0 0
        %9493 = vmatpush2.bf16.msra.mxu0 0
        %9494 = vmatprep.subr.bf16.mxu0 0
        %9495 = vmatpush2.bf16.msra.mxu0 0
        %9496 = vmatprep.subr.bf16.mxu0 0
        %9497 = vmatpush2.bf16.msra.mxu0 0
        %9498 = vmatprep.subr.bf16.mxu0 0
        %9499 = vmatpush2.bf16.msra.mxu0 0
        %9500 = vmatprep.subr.bf16.mxu0 0
        %9501 = vmatpush2.bf16.msra.mxu0 0
        %9502 = vmatprep.subr.bf16.mxu0 0
        %9503 = vmatpush2.bf16.msra.mxu0 0
        %9504 = vmatprep.subr.bf16.mxu0 0
        %9505 = vmatpush2.bf16.msra.mxu0 0
        %9506 = vmatprep.subr.bf16.mxu0 0
        %9507 = vmatpush2.bf16.msra.mxu0 0
        %9508 = vmatprep.mubr.bf16.mxu0 0
        %9509 = vmatmul.mubr.bf16.gmra.mxu0 %v9235
        %v9510 = vpop.f32.mrf.mxu0
        %v9511 = vadd.f32 %v8986, %v9510
        %v9512 = vpop.f32.mrf.mxu0
        %v9513 = vadd.f32 %v8990, %v9512
        %v9514 = vpop.f32.mrf.mxu0
        %v9515 = vadd.f32 %v8986, %v9514
        %v9516 = vpop.f32.mrf.mxu0
        %v9517 = vadd.f32 %v8990, %v9516
        %9518 = vmatprep.mubr.bf16.mxu0 0
        %9519 = vmatmul.mubr.bf16.gmra.mxu0 %v9236
        %v9520 = vpop.f32.mrf.mxu0
        %v9521 = vadd.f32 %v8986, %v9520
        %v9522 = vpop.f32.mrf.mxu0
        %v9523 = vadd.f32 %v8990, %v9522
        %v9524 = vpop.f32.mrf.mxu0
        %v9525 = vadd.f32 %v8986, %v9524
        %v9526 = vpop.f32.mrf.mxu0
        %v9527 = vadd.f32 %v8990, %v9526
        %9528 = vmatprep.mubr.bf16.mxu0 0
        %9529 = vmatmul.mubr.bf16.gmra.mxu0 %v9237
        %v9530 = vpop.f32.mrf.mxu0
        %v9531 = vadd.f32 %v8986, %v9530
        %v9532 = vpop.f32.mrf.mxu0
        %v9533 = vadd.f32 %v8990, %v9532
        %v9534 = vpop.f32.mrf.mxu0
        %v9535 = vadd.f32 %v8986, %v9534
        %v9536 = vpop.f32.mrf.mxu0
        %v9537 = vadd.f32 %v8990, %v9536
        %9538 = vmatprep.mubr.bf16.mxu0 0
        %9539 = vmatmul.mubr.bf16.gmra.mxu0 %v9238
        %v9540 = vpop.f32.mrf.mxu0
        %v9541 = vadd.f32 %v8986, %v9540
        %v9542 = vpop.f32.mrf.mxu0
        %v9543 = vadd.f32 %v8990, %v9542
        %v9544 = vpop.f32.mrf.mxu0
        %v9545 = vadd.f32 %v8986, %v9544
        %v9546 = vpop.f32.mrf.mxu0
        %v9547 = vadd.f32 %v8990, %v9546
        %9548 = vdwg.mxu0
        %v9549 = vmul.f32 %v9438, 0.5
        %v9550 = vmul.f32 %v9440, 0.5
        %v9551 = vmul.f32 %v9511, 0.5
        %v9552 = vmul.f32 %v9513, 0.5
        %v9553 = vmul.f32 %v9442, 0.5
        %v9554 = vmul.f32 %v9444, 0.5
        %v9555 = vmul.f32 %v9515, 0.5
        %v9556 = vmul.f32 %v9517, 0.5
        %v9557 = vmul.f32 %v9448, 0.5
        %v9558 = vmul.f32 %v9450, 0.5
        %v9559 = vmul.f32 %v9521, 0.5
        %v9560 = vmul.f32 %v9523, 0.5
        %v9561 = vmul.f32 %v9452, 0.5
        %v9562 = vmul.f32 %v9454, 0.5
        %v9563 = vmul.f32 %v9525, 0.5
        %v9564 = vmul.f32 %v9527, 0.5
        %v9565 = vmul.f32 %v9458, 0.5
        %v9566 = vmul.f32 %v9460, 0.5
        %v9567 = vmul.f32 %v9531, 0.5
        %v9568 = vmul.f32 %v9533, 0.5
        %v9569 = vmul.f32 %v9462, 0.5
        %v9570 = vmul.f32 %v9464, 0.5
        %v9571 = vmul.f32 %v9535, 0.5
        %v9572 = vmul.f32 %v9537, 0.5
        %v9573 = vmul.f32 %v9468, 0.5
        %v9574 = vmul.f32 %v9470, 0.5
        %v9575 = vmul.f32 %v9541, 0.5
        %v9576 = vmul.f32 %v9543, 0.5
        %v9577 = vmul.f32 %v9472, 0.5
        %v9578 = vmul.f32 %v9474, 0.5
        %v9579 = vmul.f32 %v9545, 0.5
        %v9580 = vmul.f32 %v9547, 0.5
        %v9581 = vmul.f32 %v9438, 0.044715
        %v9582 = vmul.f32 %v9440, 0.044715
        %v9583 = vmul.f32 %v9511, 0.044715
        %v9584 = vmul.f32 %v9513, 0.044715
        %v9585 = vmul.f32 %v9442, 0.044715
        %v9586 = vmul.f32 %v9444, 0.044715
        %v9587 = vmul.f32 %v9515, 0.044715
        %v9588 = vmul.f32 %v9517, 0.044715
        %v9589 = vmul.f32 %v9448, 0.044715
        %v9590 = vmul.f32 %v9450, 0.044715
        %v9591 = vmul.f32 %v9521, 0.044715
        %v9592 = vmul.f32 %v9523, 0.044715
        %v9593 = vmul.f32 %v9452, 0.044715
        %v9594 = vmul.f32 %v9454, 0.044715
        %v9595 = vmul.f32 %v9525, 0.044715
        %v9596 = vmul.f32 %v9527, 0.044715
        %v9597 = vmul.f32 %v9458, 0.044715
        %v9598 = vmul.f32 %v9460, 0.044715
        %v9599 = vmul.f32 %v9531, 0.044715
        %v9600 = vmul.f32 %v9533, 0.044715
        %v9601 = vmul.f32 %v9462, 0.044715
        %v9602 = vmul.f32 %v9464, 0.044715
        %v9603 = vmul.f32 %v9535, 0.044715
        %v9604 = vmul.f32 %v9537, 0.044715
        %v9605 = vmul.f32 %v9468, 0.044715
        %v9606 = vmul.f32 %v9470, 0.044715
        %v9607 = vmul.f32 %v9541, 0.044715
        %v9608 = vmul.f32 %v9543, 0.044715
        %v9609 = vmul.f32 %v9472, 0.044715
        %v9610 = vmul.f32 %v9474, 0.044715
        %v9611 = vmul.f32 %v9545, 0.044715
        %v9612 = vmul.f32 %v9547, 0.044715
        %v9613 = vmul.f32 %v9581, %v9438
        %v9614 = vmul.f32 %v9582, %v9440
        %v9615 = vmul.f32 %v9583, %v9511
        %v9616 = vmul.f32 %v9584, %v9513
        %v9617 = vmul.f32 %v9585, %v9442
        %v9618 = vmul.f32 %v9586, %v9444
        %v9619 = vmul.f32 %v9587, %v9515
        %v9620 = vmul.f32 %v9588, %v9517
        %v9621 = vmul.f32 %v9589, %v9448
        %v9622 = vmul.f32 %v9590, %v9450
        %v9623 = vmul.f32 %v9591, %v9521
        %v9624 = vmul.f32 %v9592, %v9523
        %v9625 = vmul.f32 %v9593, %v9452
        %v9626 = vmul.f32 %v9594, %v9454
        %v9627 = vmul.f32 %v9595, %v9525
        %v9628 = vmul.f32 %v9596, %v9527
        %v9629 = vmul.f32 %v9597, %v9458
        %v9630 = vmul.f32 %v9598, %v9460
        %v9631 = vmul.f32 %v9599, %v9531
        %v9632 = vmul.f32 %v9600, %v9533
        %v9633 = vmul.f32 %v9601, %v9462
        %v9634 = vmul.f32 %v9602, %v9464
        %v9635 = vmul.f32 %v9603, %v9535
        %v9636 = vmul.f32 %v9604, %v9537
        %v9637 = vmul.f32 %v9605, %v9468
        %v9638 = vmul.f32 %v9606, %v9470
        %v9639 = vmul.f32 %v9607, %v9541
        %v9640 = vmul.f32 %v9608, %v9543
        %v9641 = vmul.f32 %v9609, %v9472
        %v9642 = vmul.f32 %v9610, %v9474
        %v9643 = vmul.f32 %v9611, %v9545
        %v9644 = vmul.f32 %v9612, %v9547
        %v9645 = vmul.f32 %v9613, %v9438
        %v9646 = vmul.f32 %v9614, %v9440
        %v9647 = vmul.f32 %v9615, %v9511
        %v9648 = vmul.f32 %v9616, %v9513
        %v9649 = vmul.f32 %v9617, %v9442
        %v9650 = vmul.f32 %v9618, %v9444
        %v9651 = vmul.f32 %v9619, %v9515
        %v9652 = vmul.f32 %v9620, %v9517
        %v9653 = vmul.f32 %v9621, %v9448
        %v9654 = vmul.f32 %v9622, %v9450
        %v9655 = vmul.f32 %v9623, %v9521
        %v9656 = vmul.f32 %v9624, %v9523
        %v9657 = vmul.f32 %v9625, %v9452
        %v9658 = vmul.f32 %v9626, %v9454
        %v9659 = vmul.f32 %v9627, %v9525
        %v9660 = vmul.f32 %v9628, %v9527
        %v9661 = vmul.f32 %v9629, %v9458
        %v9662 = vmul.f32 %v9630, %v9460
        %v9663 = vmul.f32 %v9631, %v9531
        %v9664 = vmul.f32 %v9632, %v9533
        %v9665 = vmul.f32 %v9633, %v9462
        %v9666 = vmul.f32 %v9634, %v9464
        %v9667 = vmul.f32 %v9635, %v9535
        %v9668 = vmul.f32 %v9636, %v9537
        %v9669 = vmul.f32 %v9637, %v9468
        %v9670 = vmul.f32 %v9638, %v9470
        %v9671 = vmul.f32 %v9639, %v9541
        %v9672 = vmul.f32 %v9640, %v9543
        %v9673 = vmul.f32 %v9641, %v9472
        %v9674 = vmul.f32 %v9642, %v9474
        %v9675 = vmul.f32 %v9643, %v9545
        %v9676 = vmul.f32 %v9644, %v9547
        %v9677 = vadd.f32 %v9438, %v9645
        %v9678 = vadd.f32 %v9440, %v9646
        %v9679 = vadd.f32 %v9511, %v9647
        %v9680 = vadd.f32 %v9513, %v9648
        %v9681 = vadd.f32 %v9442, %v9649
        %v9682 = vadd.f32 %v9444, %v9650
        %v9683 = vadd.f32 %v9515, %v9651
        %v9684 = vadd.f32 %v9517, %v9652
        %v9685 = vadd.f32 %v9448, %v9653
        %v9686 = vadd.f32 %v9450, %v9654
        %v9687 = vadd.f32 %v9521, %v9655
        %v9688 = vadd.f32 %v9523, %v9656
        %v9689 = vadd.f32 %v9452, %v9657
        %v9690 = vadd.f32 %v9454, %v9658
        %v9691 = vadd.f32 %v9525, %v9659
        %v9692 = vadd.f32 %v9527, %v9660
        %v9693 = vadd.f32 %v9458, %v9661
        %v9694 = vadd.f32 %v9460, %v9662
        %v9695 = vadd.f32 %v9531, %v9663
        %v9696 = vadd.f32 %v9533, %v9664
        %v9697 = vadd.f32 %v9462, %v9665
        %v9698 = vadd.f32 %v9464, %v9666
        %v9699 = vadd.f32 %v9535, %v9667
        %v9700 = vadd.f32 %v9537, %v9668
        %v9701 = vadd.f32 %v9468, %v9669
        %v9702 = vadd.f32 %v9470, %v9670
        %v9703 = vadd.f32 %v9541, %v9671
        %v9704 = vadd.f32 %v9543, %v9672
        %v9705 = vadd.f32 %v9472, %v9673
        %v9706 = vadd.f32 %v9474, %v9674
        %v9707 = vadd.f32 %v9545, %v9675
        %v9708 = vadd.f32 %v9547, %v9676
        %v9709 = vmul.f32 %v9677, 0.7978846
        %v9710 = vmul.f32 %v9678, 0.7978846
        %v9711 = vmul.f32 %v9679, 0.7978846
        %v9712 = vmul.f32 %v9680, 0.7978846
        %v9713 = vmul.f32 %v9681, 0.7978846
        %v9714 = vmul.f32 %v9682, 0.7978846
        %v9715 = vmul.f32 %v9683, 0.7978846
        %v9716 = vmul.f32 %v9684, 0.7978846
        %v9717 = vmul.f32 %v9685, 0.7978846
        %v9718 = vmul.f32 %v9686, 0.7978846
        %v9719 = vmul.f32 %v9687, 0.7978846
        %v9720 = vmul.f32 %v9688, 0.7978846
        %v9721 = vmul.f32 %v9689, 0.7978846
        %v9722 = vmul.f32 %v9690, 0.7978846
        %v9723 = vmul.f32 %v9691, 0.7978846
        %v9724 = vmul.f32 %v9692, 0.7978846
        %v9725 = vmul.f32 %v9693, 0.7978846
        %v9726 = vmul.f32 %v9694, 0.7978846
        %v9727 = vmul.f32 %v9695, 0.7978846
        %v9728 = vmul.f32 %v9696, 0.7978846
        %v9729 = vmul.f32 %v9697, 0.7978846
        %v9730 = vmul.f32 %v9698, 0.7978846
        %v9731 = vmul.f32 %v9699, 0.7978846
        %v9732 = vmul.f32 %v9700, 0.7978846
        %v9733 = vmul.f32 %v9701, 0.7978846
        %v9734 = vmul.f32 %v9702, 0.7978846
        %v9735 = vmul.f32 %v9703, 0.7978846
        %v9736 = vmul.f32 %v9704, 0.7978846
        %v9737 = vmul.f32 %v9705, 0.7978846
        %v9738 = vmul.f32 %v9706, 0.7978846
        %v9739 = vmul.f32 %v9707, 0.7978846
        %v9740 = vmul.f32 %v9708, 0.7978846
        %v9741 = vtanh.pop %v9709
        %v9742 = vtanh.pop %v9710
        %v9743 = vtanh.pop %v9711
        %v9744 = vtanh.pop %v9712
        %v9745 = vtanh.pop %v9713
        %v9746 = vtanh.pop %v9714
        %v9747 = vtanh.pop %v9715
        %v9748 = vtanh.pop %v9716
        %v9749 = vtanh.pop %v9717
        %v9750 = vtanh.pop %v9718
        %v9751 = vtanh.pop %v9719
        %v9752 = vtanh.pop %v9720
        %v9753 = vtanh.pop %v9721
        %v9754 = vtanh.pop %v9722
        %v9755 = vtanh.pop %v9723
        %v9756 = vtanh.pop %v9724
        %v9757 = vtanh.pop %v9725
        %v9758 = vtanh.pop %v9726
        %v9759 = vtanh.pop %v9727
        %v9760 = vtanh.pop %v9728
        %v9761 = vtanh.pop %v9729
        %v9762 = vtanh.pop %v9730
        %v9763 = vtanh.pop %v9731
        %v9764 = vtanh.pop %v9732
        %v9765 = vtanh.pop %v9733
        %v9766 = vtanh.pop %v9734
        %v9767 = vtanh.pop %v9735
        %v9768 = vtanh.pop %v9736
        %v9769 = vtanh.pop %v9737
        %v9770 = vtanh.pop %v9738
        %v9771 = vtanh.pop %v9739
        %v9772 = vtanh.pop %v9740
        %v9773 = vadd.f32 %v9741, 1.0
        %v9774 = vadd.f32 %v9742, 1.0
        %v9775 = vadd.f32 %v9743, 1.0
        %v9776 = vadd.f32 %v9744, 1.0
        %v9777 = vadd.f32 %v9745, 1.0
        %v9778 = vadd.f32 %v9746, 1.0
        %v9779 = vadd.f32 %v9747, 1.0
        %v9780 = vadd.f32 %v9748, 1.0
        %v9781 = vadd.f32 %v9749, 1.0
        %v9782 = vadd.f32 %v9750, 1.0
        %v9783 = vadd.f32 %v9751, 1.0
        %v9784 = vadd.f32 %v9752, 1.0
        %v9785 = vadd.f32 %v9753, 1.0
        %v9786 = vadd.f32 %v9754, 1.0
        %v9787 = vadd.f32 %v9755, 1.0
        %v9788 = vadd.f32 %v9756, 1.0
        %v9789 = vadd.f32 %v9757, 1.0
        %v9790 = vadd.f32 %v9758, 1.0
        %v9791 = vadd.f32 %v9759, 1.0
        %v9792 = vadd.f32 %v9760, 1.0
        %v9793 = vadd.f32 %v9761, 1.0
        %v9794 = vadd.f32 %v9762, 1.0
        %v9795 = vadd.f32 %v9763, 1.0
        %v9796 = vadd.f32 %v9764, 1.0
        %v9797 = vadd.f32 %v9765, 1.0
        %v9798 = vadd.f32 %v9766, 1.0
        %v9799 = vadd.f32 %v9767, 1.0
        %v9800 = vadd.f32 %v9768, 1.0
        %v9801 = vadd.f32 %v9769, 1.0
        %v9802 = vadd.f32 %v9770, 1.0
        %v9803 = vadd.f32 %v9771, 1.0
        %v9804 = vadd.f32 %v9772, 1.0
        %v9805 = vmul.f32 %v9549, %v9773
        %v9806 = vmul.f32 %v9550, %v9774
        %v9807 = vmul.f32 %v9551, %v9775
        %v9808 = vmul.f32 %v9552, %v9776
        %v9809 = vmul.f32 %v9553, %v9777
        %v9810 = vmul.f32 %v9554, %v9778
        %v9811 = vmul.f32 %v9555, %v9779
        %v9812 = vmul.f32 %v9556, %v9780
        %v9813 = vmul.f32 %v9557, %v9781
        %v9814 = vmul.f32 %v9558, %v9782
        %v9815 = vmul.f32 %v9559, %v9783
        %v9816 = vmul.f32 %v9560, %v9784
        %v9817 = vmul.f32 %v9561, %v9785
        %v9818 = vmul.f32 %v9562, %v9786
        %v9819 = vmul.f32 %v9563, %v9787
        %v9820 = vmul.f32 %v9564, %v9788
        %v9821 = vmul.f32 %v9565, %v9789
        %v9822 = vmul.f32 %v9566, %v9790
        %v9823 = vmul.f32 %v9567, %v9791
        %v9824 = vmul.f32 %v9568, %v9792
        %v9825 = vmul.f32 %v9569, %v9793
        %v9826 = vmul.f32 %v9570, %v9794
        %v9827 = vmul.f32 %v9571, %v9795
        %v9828 = vmul.f32 %v9572, %v9796
        %v9829 = vmul.f32 %v9573, %v9797
        %v9830 = vmul.f32 %v9574, %v9798
        %v9831 = vmul.f32 %v9575, %v9799
        %v9832 = vmul.f32 %v9576, %v9800
        %v9833 = vmul.f32 %v9577, %v9801
        %v9834 = vmul.f32 %v9578, %v9802
        %v9835 = vmul.f32 %v9579, %v9803
        %v9836 = vmul.f32 %v9580, %v9804
        %v9837 = vpack.c.bf16 %v9809, %v9805
        %v9838 = vpack.c.bf16 %v9810, %v9806
        %v9839 = vpack.c.bf16 %v9811, %v9807
        %v9840 = vpack.c.bf16 %v9812, %v9808
        %v9841 = vpack.c.bf16 %v9817, %v9813
        %v9842 = vpack.c.bf16 %v9818, %v9814
        %v9843 = vpack.c.bf16 %v9819, %v9815
        %v9844 = vpack.c.bf16 %v9820, %v9816
        %v9845 = vpack.c.bf16 %v9825, %v9821
        %v9846 = vpack.c.bf16 %v9826, %v9822
        %v9847 = vpack.c.bf16 %v9827, %v9823
        %v9848 = vpack.c.bf16 %v9828, %v9824
        %v9849 = vpack.c.bf16 %v9833, %v9829
        %v9850 = vpack.c.bf16 %v9834, %v9830
        %v9851 = vpack.c.bf16 %v9835, %v9831
        %v9852 = vpack.c.bf16 %v9836, %v9832
        %v9853 = vld [vmem:[#allocation10] sm:$0xf]
        %v9854 = vld [vmem:[#allocation10 + $0x4] sm:$0xf]
        %v9855 = vld [vmem:[#allocation10 + $0x8] sm:$0xf]
        %v9856 = vld [vmem:[#allocation10 + $0xc] sm:$0xf]
        %v9857 = vld [vmem:[#allocation10 + $0x10] sm:$0xf]
        %v9858 = vld [vmem:[#allocation10 + $0x14] sm:$0xf]
        %v9859 = vld [vmem:[#allocation10 + $0x18] sm:$0xf]
        %v9860 = vld [vmem:[#allocation10 + $0x1c] sm:$0xf]
        %v9861 = vld [vmem:[#allocation10 + $0x20] sm:$0xf]
        %v9862 = vld [vmem:[#allocation10 + $0x24] sm:$0xf]
        %v9863 = vld [vmem:[#allocation10 + $0x28] sm:$0xf]
        %v9864 = vld [vmem:[#allocation10 + $0x2c] sm:$0xf]
        %v9865 = vld [vmem:[#allocation10 + $0x30] sm:$0xf]
        %v9866 = vld [vmem:[#allocation10 + $0x34] sm:$0xf]
        %v9867 = vld [vmem:[#allocation10 + $0x38] sm:$0xf]
        %v9868 = vld [vmem:[#allocation10 + $0x3c] sm:$0xf]
        %v9869 = vld [vmem:[#allocation10 + $0x40] sm:$0xf]
        %v9870 = vld [vmem:[#allocation10 + $0x44] sm:$0xf]
        %v9871 = vld [vmem:[#allocation10 + $0x48] sm:$0xf]
        %v9872 = vld [vmem:[#allocation10 + $0x4c] sm:$0xf]
        %v9873 = vld [vmem:[#allocation10 + $0x50] sm:$0xf]
        %v9874 = vld [vmem:[#allocation10 + $0x54] sm:$0xf]
        %v9875 = vld [vmem:[#allocation10 + $0x58] sm:$0xf]
        %v9876 = vld [vmem:[#allocation10 + $0x5c] sm:$0xf]
        %v9877 = vld [vmem:[#allocation10 + $0x60] sm:$0xf]
        %v9878 = vld [vmem:[#allocation10 + $0x64] sm:$0xf]
        %v9879 = vld [vmem:[#allocation10 + $0x68] sm:$0xf]
        %v9880 = vld [vmem:[#allocation10 + $0x6c] sm:$0xf]
        %v9881 = vld [vmem:[#allocation10 + $0x70] sm:$0xf]
        %v9882 = vld [vmem:[#allocation10 + $0x74] sm:$0xf]
        %v9883 = vld [vmem:[#allocation10 + $0x78] sm:$0xf]
        %v9884 = vld [vmem:[#allocation10 + $0x7c] sm:$0xf]
        %v9885 = vld [vmem:[#allocation10 + $0x80] sm:$0xf]
        %v9886 = vld [vmem:[#allocation10 + $0x84] sm:$0xf]
        %v9887 = vld [vmem:[#allocation10 + $0x88] sm:$0xf]
        %v9888 = vld [vmem:[#allocation10 + $0x8c] sm:$0xf]
        %v9889 = vld [vmem:[#allocation10 + $0x90] sm:$0xf]
        %v9890 = vld [vmem:[#allocation10 + $0x94] sm:$0xf]
        %v9891 = vld [vmem:[#allocation10 + $0x98] sm:$0xf]
        %v9892 = vld [vmem:[#allocation10 + $0x9c] sm:$0xf]
        %v9893 = vld [vmem:[#allocation10 + $0xa0] sm:$0xf]
        %v9894 = vld [vmem:[#allocation10 + $0xa4] sm:$0xf]
        %v9895 = vld [vmem:[#allocation10 + $0xa8] sm:$0xf]
        %v9896 = vld [vmem:[#allocation10 + $0xac] sm:$0xf]
        %v9897 = vld [vmem:[#allocation10 + $0xb0] sm:$0xf]
        %v9898 = vld [vmem:[#allocation10 + $0xb4] sm:$0xf]
        %v9899 = vld [vmem:[#allocation10 + $0xb8] sm:$0xf]
        %v9900 = vld [vmem:[#allocation10 + $0xbc] sm:$0xf]
        %v9901 = vld [vmem:[#allocation10 + $0xc0] sm:$0xf]
        %v9902 = vld [vmem:[#allocation10 + $0xc4] sm:$0xf]
        %v9903 = vld [vmem:[#allocation10 + $0xc8] sm:$0xf]
        %v9904 = vld [vmem:[#allocation10 + $0xcc] sm:$0xf]
        %v9905 = vld [vmem:[#allocation10 + $0xd0] sm:$0xf]
        %v9906 = vld [vmem:[#allocation10 + $0xd4] sm:$0xf]
        %v9907 = vld [vmem:[#allocation10 + $0xd8] sm:$0xf]
        %v9908 = vld [vmem:[#allocation10 + $0xdc] sm:$0xf]
        %v9909 = vld [vmem:[#allocation10 + $0xe0] sm:$0xf]
        %v9910 = vld [vmem:[#allocation10 + $0xe4] sm:$0xf]
        %v9911 = vld [vmem:[#allocation10 + $0xe8] sm:$0xf]
        %v9912 = vld [vmem:[#allocation10 + $0xec] sm:$0xf]
        %v9913 = vld [vmem:[#allocation10 + $0xf0] sm:$0xf]
        %v9914 = vld [vmem:[#allocation10 + $0xf4] sm:$0xf]
        %v9915 = vld [vmem:[#allocation10 + $0xf8] sm:$0xf]
        %v9916 = vld [vmem:[#allocation10 + $0xfc] sm:$0xf]
        %v9917 = vld [vmem:[%s11] sm:$0x1]
        %v9919 = vlaneseq
        %v9920 = vshrl.u32 %v9919, 7
        %v9921 = vsub.s32 0, %v9920
        %v9922 = vrot.slane %v9917, %v9921
        %v9988 = vunpack.c.l.b16 %v9853
        %v9989 = vunpack.c.l.b16 %v9854
        %v9990 = vunpack.c.l.b16 %v9855
        %v9991 = vunpack.c.l.b16 %v9856
        %v9992 = vunpack.c.l.b16 %v9857
        %v9993 = vunpack.c.l.b16 %v9858
        %v9994 = vunpack.c.l.b16 %v9859
        %v9995 = vunpack.c.l.b16 %v9860
        %v9996 = vunpack.c.l.b16 %v9861
        %v9997 = vunpack.c.l.b16 %v9862
        %v9998 = vunpack.c.l.b16 %v9863
        %v9999 = vunpack.c.l.b16 %v9864
        %v10000 = vunpack.c.l.b16 %v9865
        %v10001 = vunpack.c.l.b16 %v9866
        %v10002 = vunpack.c.l.b16 %v9867
        %v10003 = vunpack.c.l.b16 %v9868
        %v10004 = vunpack.c.l.b16 %v9869
        %v10005 = vunpack.c.l.b16 %v9870
        %v10006 = vunpack.c.l.b16 %v9871
        %v10007 = vunpack.c.l.b16 %v9872
        %v10008 = vunpack.c.l.b16 %v9873
        %v10009 = vunpack.c.l.b16 %v9874
        %v10010 = vunpack.c.l.b16 %v9875
        %v10011 = vunpack.c.l.b16 %v9876
        %v10012 = vunpack.c.l.b16 %v9877
        %v10013 = vunpack.c.l.b16 %v9878
        %v10014 = vunpack.c.l.b16 %v9879
        %v10015 = vunpack.c.l.b16 %v9880
        %v10016 = vunpack.c.l.b16 %v9881
        %v10017 = vunpack.c.l.b16 %v9882
        %v10018 = vunpack.c.l.b16 %v9883
        %v10019 = vunpack.c.l.b16 %v9884
        %v10020 = vunpack.c.l.b16 %v9885
        %v10021 = vunpack.c.l.b16 %v9886
        %v10022 = vunpack.c.l.b16 %v9887
        %v10023 = vunpack.c.l.b16 %v9888
        %v10024 = vunpack.c.l.b16 %v9889
        %v10025 = vunpack.c.l.b16 %v9890
        %v10026 = vunpack.c.l.b16 %v9891
        %v10027 = vunpack.c.l.b16 %v9892
        %v10028 = vunpack.c.l.b16 %v9893
        %v10029 = vunpack.c.l.b16 %v9894
        %v10030 = vunpack.c.l.b16 %v9895
        %v10031 = vunpack.c.l.b16 %v9896
        %v10032 = vunpack.c.l.b16 %v9897
        %v10033 = vunpack.c.l.b16 %v9898
        %v10034 = vunpack.c.l.b16 %v9899
        %v10035 = vunpack.c.l.b16 %v9900
        %v10036 = vunpack.c.l.b16 %v9901
        %v10037 = vunpack.c.l.b16 %v9902
        %v10038 = vunpack.c.l.b16 %v9903
        %v10039 = vunpack.c.l.b16 %v9904
        %v10040 = vunpack.c.l.b16 %v9905
        %v10041 = vunpack.c.l.b16 %v9906
        %v10042 = vunpack.c.l.b16 %v9907
        %v10043 = vunpack.c.l.b16 %v9908
        %v10044 = vunpack.c.l.b16 %v9909
        %v10045 = vunpack.c.l.b16 %v9910
        %v10046 = vunpack.c.l.b16 %v9911
        %v10047 = vunpack.c.l.b16 %v9912
        %v10048 = vunpack.c.l.b16 %v9913
        %v10049 = vunpack.c.l.b16 %v9914
        %v10050 = vunpack.c.l.b16 %v9915
        %v10051 = vunpack.c.l.b16 %v9916
        %v10052 = vpack.c.b16 %v9989, %v9988
        %v10053 = vpack.c.b16 %v9991, %v9990
        %v10054 = vpack.c.b16 %v9993, %v9992
        %v10055 = vpack.c.b16 %v9995, %v9994
        %v10056 = vpack.c.b16 %v9997, %v9996
        %v10057 = vpack.c.b16 %v9999, %v9998
        %v10058 = vpack.c.b16 %v10001, %v10000
        %v10059 = vpack.c.b16 %v10003, %v10002
        %v10060 = vpack.c.b16 %v10005, %v10004
        %v10061 = vpack.c.b16 %v10007, %v10006
        %v10062 = vpack.c.b16 %v10009, %v10008
        %v10063 = vpack.c.b16 %v10011, %v10010
        %v10064 = vpack.c.b16 %v10013, %v10012
        %v10065 = vpack.c.b16 %v10015, %v10014
        %v10066 = vpack.c.b16 %v10017, %v10016
        %v10067 = vpack.c.b16 %v10019, %v10018
        %v10068 = vpack.c.b16 %v10021, %v10020
        %v10069 = vpack.c.b16 %v10023, %v10022
        %v10070 = vpack.c.b16 %v10025, %v10024
        %v10071 = vpack.c.b16 %v10027, %v10026
        %v10072 = vpack.c.b16 %v10029, %v10028
        %v10073 = vpack.c.b16 %v10031, %v10030
        %v10074 = vpack.c.b16 %v10033, %v10032
        %v10075 = vpack.c.b16 %v10035, %v10034
        %v10076 = vpack.c.b16 %v10037, %v10036
        %v10077 = vpack.c.b16 %v10039, %v10038
        %v10078 = vpack.c.b16 %v10041, %v10040
        %v10079 = vpack.c.b16 %v10043, %v10042
        %v10080 = vpack.c.b16 %v10045, %v10044
        %v10081 = vpack.c.b16 %v10047, %v10046
        %v10082 = vpack.c.b16 %v10049, %v10048
        %v10083 = vpack.c.b16 %v10051, %v10050
        %10116 = vmatprep.subr.bf16.mxu0 0
        %10117 = vmatpush1.bf16.msra.mxu0 %v10059
        %10118 = vmatprep.subr.bf16.mxu0 0
        %10119 = vmatpush1.bf16.msra.mxu0 %v10058
        %10120 = vmatprep.subr.bf16.mxu0 0
        %10121 = vmatpush1.bf16.msra.mxu0 %v10057
        %10122 = vmatprep.subr.bf16.mxu0 0
        %10123 = vmatpush1.bf16.msra.mxu0 %v10056
        %10124 = vmatprep.subr.bf16.mxu0 0
        %10125 = vmatpush1.bf16.msra.mxu0 %v10055
        %10126 = vmatprep.subr.bf16.mxu0 0
        %10127 = vmatpush1.bf16.msra.mxu0 %v10054
        %10128 = vmatprep.subr.bf16.mxu0 0
        %10129 = vmatpush1.bf16.msra.mxu0 %v10053
        %10130 = vmatprep.subr.bf16.mxu0 0
        %10131 = vmatpush1.bf16.msra.mxu0 %v10052
        %10132 = vmatprep.subr.bf16.mxu0 0
        %10133 = vmatpush2.bf16.msra.mxu0 %v10067
        %10134 = vmatprep.subr.bf16.mxu0 0
        %10135 = vmatpush2.bf16.msra.mxu0 %v10066
        %10136 = vmatprep.subr.bf16.mxu0 0
        %10137 = vmatpush2.bf16.msra.mxu0 %v10065
        %10138 = vmatprep.subr.bf16.mxu0 0
        %10139 = vmatpush2.bf16.msra.mxu0 %v10064
        %10140 = vmatprep.subr.bf16.mxu0 0
        %10141 = vmatpush2.bf16.msra.mxu0 %v10063
        %10142 = vmatprep.subr.bf16.mxu0 0
        %10143 = vmatpush2.bf16.msra.mxu0 %v10062
        %10144 = vmatprep.subr.bf16.mxu0 0
        %10145 = vmatpush2.bf16.msra.mxu0 %v10061
        %10146 = vmatprep.subr.bf16.mxu0 0
        %10147 = vmatpush2.bf16.msra.mxu0 %v10060
        %10148 = vmatprep.mubr.bf16.mxu0 %v9838
        %10149 = vmatmul.mubr.bf16.gmra.mxu0 %v9837
        %v10150 = vpop.f32.mrf.mxu0
        %v10151 = vadd.f32 %v9922, %v10150
        %v10152 = vpop.f32.mrf.mxu0
        %v10153 = vpop.f32.mrf.mxu0
        %v10154 = vadd.f32 %v9922, %v10153
        %v10155 = vpop.f32.mrf.mxu0
        %10156 = vmatprep.mubr.bf16.mxu0 %v9842
        %10157 = vmatmul.mubr.bf16.gmra.mxu0 %v9841
        %v10158 = vpop.f32.mrf.mxu0
        %v10159 = vadd.f32 %v9922, %v10158
        %v10160 = vpop.f32.mrf.mxu0
        %v10161 = vpop.f32.mrf.mxu0
        %v10162 = vadd.f32 %v9922, %v10161
        %v10163 = vpop.f32.mrf.mxu0
        %10164 = vmatprep.mubr.bf16.mxu0 %v9846
        %10165 = vmatmul.mubr.bf16.gmra.mxu0 %v9845
        %v10166 = vpop.f32.mrf.mxu0
        %v10167 = vadd.f32 %v9922, %v10166
        %v10168 = vpop.f32.mrf.mxu0
        %v10169 = vpop.f32.mrf.mxu0
        %v10170 = vadd.f32 %v9922, %v10169
        %v10171 = vpop.f32.mrf.mxu0
        %10172 = vmatprep.mubr.bf16.mxu0 %v9850
        %10173 = vmatmul.mubr.bf16.gmra.mxu0 %v9849
        %v10174 = vpop.f32.mrf.mxu0
        %v10175 = vadd.f32 %v9922, %v10174
        %v10176 = vpop.f32.mrf.mxu0
        %v10177 = vpop.f32.mrf.mxu0
        %v10178 = vadd.f32 %v9922, %v10177
        %v10179 = vpop.f32.mrf.mxu0
        %10180 = vdwg.mxu0
        %10181 = vmatprep.subr.bf16.mxu0 0
        %10182 = vmatpush1.bf16.msra.mxu0 %v10075
        %10183 = vmatprep.subr.bf16.mxu0 0
        %10184 = vmatpush1.bf16.msra.mxu0 %v10074
        %10185 = vmatprep.subr.bf16.mxu0 0
        %10186 = vmatpush1.bf16.msra.mxu0 %v10073
        %10187 = vmatprep.subr.bf16.mxu0 0
        %10188 = vmatpush1.bf16.msra.mxu0 %v10072
        %10189 = vmatprep.subr.bf16.mxu0 0
        %10190 = vmatpush1.bf16.msra.mxu0 %v10071
        %10191 = vmatprep.subr.bf16.mxu0 0
        %10192 = vmatpush1.bf16.msra.mxu0 %v10070
        %10193 = vmatprep.subr.bf16.mxu0 0
        %10194 = vmatpush1.bf16.msra.mxu0 %v10069
        %10195 = vmatprep.subr.bf16.mxu0 0
        %10196 = vmatpush1.bf16.msra.mxu0 %v10068
        %10197 = vmatprep.subr.bf16.mxu0 0
        %10198 = vmatpush2.bf16.msra.mxu0 %v10083
        %10199 = vmatprep.subr.bf16.mxu0 0
        %10200 = vmatpush2.bf16.msra.mxu0 %v10082
        %10201 = vmatprep.subr.bf16.mxu0 0
        %10202 = vmatpush2.bf16.msra.mxu0 %v10081
        %10203 = vmatprep.subr.bf16.mxu0 0
        %10204 = vmatpush2.bf16.msra.mxu0 %v10080
        %10205 = vmatprep.subr.bf16.mxu0 0
        %10206 = vmatpush2.bf16.msra.mxu0 %v10079
        %10207 = vmatprep.subr.bf16.mxu0 0
        %10208 = vmatpush2.bf16.msra.mxu0 %v10078
        %10209 = vmatprep.subr.bf16.mxu0 0
        %10210 = vmatpush2.bf16.msra.mxu0 %v10077
        %10211 = vmatprep.subr.bf16.mxu0 0
        %10212 = vmatpush2.bf16.msra.mxu0 %v10076
        %10213 = vmatprep.mubr.bf16.mxu0 %v9840
        %10214 = vmatmul.mubr.bf16.gmra.mxu0 %v9839
        %v10215 = vpop.f32.mrf.mxu0
        %v10216 = vadd.f32 %v10151, %v10215
        %v10217 = vpop.f32.mrf.mxu0
        %v10218 = vpop.f32.mrf.mxu0
        %v10219 = vadd.f32 %v10154, %v10218
        %v10220 = vpop.f32.mrf.mxu0
        %10221 = vmatprep.mubr.bf16.mxu0 %v9844
        %10222 = vmatmul.mubr.bf16.gmra.mxu0 %v9843
        %v10223 = vpop.f32.mrf.mxu0
        %v10224 = vadd.f32 %v10159, %v10223
        %v10225 = vpop.f32.mrf.mxu0
        %v10226 = vpop.f32.mrf.mxu0
        %v10227 = vadd.f32 %v10162, %v10226
        %v10228 = vpop.f32.mrf.mxu0
        %10229 = vmatprep.mubr.bf16.mxu0 %v9848
        %10230 = vmatmul.mubr.bf16.gmra.mxu0 %v9847
        %v10231 = vpop.f32.mrf.mxu0
        %v10232 = vadd.f32 %v10167, %v10231
        %v10233 = vpop.f32.mrf.mxu0
        %v10234 = vpop.f32.mrf.mxu0
        %v10235 = vadd.f32 %v10170, %v10234
        %v10236 = vpop.f32.mrf.mxu0
        %10237 = vmatprep.mubr.bf16.mxu0 %v9852
        %10238 = vmatmul.mubr.bf16.gmra.mxu0 %v9851
        %v10239 = vpop.f32.mrf.mxu0
        %v10240 = vadd.f32 %v10175, %v10239
        %v10241 = vpop.f32.mrf.mxu0
        %v10242 = vpop.f32.mrf.mxu0
        %v10243 = vadd.f32 %v10178, %v10242
        %v10244 = vpop.f32.mrf.mxu0
        %10245 = vdwg.mxu0
        %v10254 = vrot.slane %v10216, 1
        %v10255 = vrot.slane %v10216, 2
        %v10256 = vrot.slane %v10216, 3
        %v10257 = vrot.slane %v10216, 4
        %v10258 = vrot.slane %v10216, 5
        %v10259 = vrot.slane %v10216, 6
        %v10260 = vrot.slane %v10216, 7
        %v10261 = vrot.slane %v10219, 1
        %v10262 = vrot.slane %v10219, 2
        %v10263 = vrot.slane %v10219, 3
        %v10264 = vrot.slane %v10219, 4
        %v10265 = vrot.slane %v10219, 5
        %v10266 = vrot.slane %v10219, 6
        %v10267 = vrot.slane %v10219, 7
        %v10268 = vrot.slane %v10224, 1
        %v10269 = vrot.slane %v10224, 2
        %v10270 = vrot.slane %v10224, 3
        %v10271 = vrot.slane %v10224, 4
        %v10272 = vrot.slane %v10224, 5
        %v10273 = vrot.slane %v10224, 6
        %v10274 = vrot.slane %v10224, 7
        %v10275 = vrot.slane %v10227, 1
        %v10276 = vrot.slane %v10227, 2
        %v10277 = vrot.slane %v10227, 3
        %v10278 = vrot.slane %v10227, 4
        %v10279 = vrot.slane %v10227, 5
        %v10280 = vrot.slane %v10227, 6
        %v10281 = vrot.slane %v10227, 7
        %v10282 = vrot.slane %v10232, 1
        %v10283 = vrot.slane %v10232, 2
        %v10284 = vrot.slane %v10232, 3
        %v10285 = vrot.slane %v10232, 4
        %v10286 = vrot.slane %v10232, 5
        %v10287 = vrot.slane %v10232, 6
        %v10288 = vrot.slane %v10232, 7
        %v10289 = vrot.slane %v10235, 1
        %v10290 = vrot.slane %v10235, 2
        %v10291 = vrot.slane %v10235, 3
        %v10292 = vrot.slane %v10235, 4
        %v10293 = vrot.slane %v10235, 5
        %v10294 = vrot.slane %v10235, 6
        %v10295 = vrot.slane %v10235, 7
        %v10296 = vrot.slane %v10240, 1
        %v10297 = vrot.slane %v10240, 2
        %v10298 = vrot.slane %v10240, 3
        %v10299 = vrot.slane %v10240, 4
        %v10300 = vrot.slane %v10240, 5
        %v10301 = vrot.slane %v10240, 6
        %v10302 = vrot.slane %v10240, 7
        %v10303 = vrot.slane %v10243, 1
        %v10304 = vrot.slane %v10243, 2
        %v10305 = vrot.slane %v10243, 3
        %v10306 = vrot.slane %v10243, 4
        %v10307 = vrot.slane %v10243, 5
        %v10308 = vrot.slane %v10243, 6
        %v10309 = vrot.slane %v10243, 7
        %v10374 = vadd.f32 %v8813, %v10216
        %v10375 = vadd.f32 %v8814, %v10254
        %v10376 = vadd.f32 %v8815, %v10255
        %v10377 = vadd.f32 %v8816, %v10256
        %v10378 = vadd.f32 %v8817, %v10257
        %v10379 = vadd.f32 %v8818, %v10258
        %v10380 = vadd.f32 %v8819, %v10259
        %v10381 = vadd.f32 %v8820, %v10260
        %v10382 = vadd.f32 %v8821, %v10219
        %v10383 = vadd.f32 %v8822, %v10261
        %v10384 = vadd.f32 %v8823, %v10262
        %v10385 = vadd.f32 %v8824, %v10263
        %v10386 = vadd.f32 %v8825, %v10264
        %v10387 = vadd.f32 %v8826, %v10265
        %v10388 = vadd.f32 %v8827, %v10266
        %v10389 = vadd.f32 %v8828, %v10267
        %v10390 = vadd.f32 %v8829, %v10224
        %v10391 = vadd.f32 %v8830, %v10268
        %v10392 = vadd.f32 %v8831, %v10269
        %v10393 = vadd.f32 %v8832, %v10270
        %v10394 = vadd.f32 %v8833, %v10271
        %v10395 = vadd.f32 %v8834, %v10272
        %v10396 = vadd.f32 %v8835, %v10273
        %v10397 = vadd.f32 %v8836, %v10274
        %v10398 = vadd.f32 %v8837, %v10227
        %v10399 = vadd.f32 %v8838, %v10275
        %v10400 = vadd.f32 %v8839, %v10276
        %v10401 = vadd.f32 %v8840, %v10277
        %v10402 = vadd.f32 %v8841, %v10278
        %v10403 = vadd.f32 %v8842, %v10279
        %v10404 = vadd.f32 %v8843, %v10280
        %v10405 = vadd.f32 %v8844, %v10281
        %v10406 = vadd.f32 %v8845, %v10232
        %v10407 = vadd.f32 %v8846, %v10282
        %v10408 = vadd.f32 %v8847, %v10283
        %v10409 = vadd.f32 %v8848, %v10284
        %v10410 = vadd.f32 %v8849, %v10285
        %v10411 = vadd.f32 %v8850, %v10286
        %v10412 = vadd.f32 %v8851, %v10287
        %v10413 = vadd.f32 %v8852, %v10288
        %v10414 = vadd.f32 %v8853, %v10235
        %v10415 = vadd.f32 %v8854, %v10289
        %v10416 = vadd.f32 %v8855, %v10290
        %v10417 = vadd.f32 %v8856, %v10291
        %v10418 = vadd.f32 %v8857, %v10292
        %v10419 = vadd.f32 %v8858, %v10293
        %v10420 = vadd.f32 %v8859, %v10294
        %v10421 = vadd.f32 %v8860, %v10295
        %v10422 = vadd.f32 %v8861, %v10240
        %v10423 = vadd.f32 %v8862, %v10296
        %v10424 = vadd.f32 %v8863, %v10297
        %v10425 = vadd.f32 %v8864, %v10298
        %v10426 = vadd.f32 %v8865, %v10299
        %v10427 = vadd.f32 %v8866, %v10300
        %v10428 = vadd.f32 %v8867, %v10301
        %v10429 = vadd.f32 %v8868, %v10302
        %v10430 = vadd.f32 %v8869, %v10243
        %v10431 = vadd.f32 %v8870, %v10303
        %v10432 = vadd.f32 %v8871, %v10304
        %v10433 = vadd.f32 %v8872, %v10305
        %v10434 = vadd.f32 %v8873, %v10306
        %v10435 = vadd.f32 %v8874, %v10307
        %v10436 = vadd.f32 %v8875, %v10308
        %v10437 = vadd.f32 %v8876, %v10309
        %v10438 = vld [vmem:[%s12 + $0x4] sm:$0x1]
        %v10439 = vld [vmem:[%s12 + $0x5] sm:$0x1]
        %v10504 = vrot.slane %v10375, 7
        %v10505 = vsel %vm1924, %v10504, %v10374
        %v10506 = vrot.slane %v10376, 6
        %v10507 = vsel %vm1927, %v10506, %v10505
        %v10508 = vrot.slane %v10377, 5
        %v10509 = vsel %vm1930, %v10508, %v10507
        %v10510 = vrot.slane %v10378, 4
        %v10511 = vsel %vm1933, %v10510, %v10509
        %v10512 = vrot.slane %v10379, 3
        %v10513 = vsel %vm1936, %v10512, %v10511
        %v10514 = vrot.slane %v10380, 2
        %v10515 = vsel %vm1939, %v10514, %v10513
        %v10516 = vrot.slane %v10381, 1
        %v10517 = vsel %vm1942, %v10516, %v10515
        %v10518 = vrot.slane %v10383, 7
        %v10519 = vsel %vm1924, %v10518, %v10382
        %v10520 = vrot.slane %v10384, 6
        %v10521 = vsel %vm1927, %v10520, %v10519
        %v10522 = vrot.slane %v10385, 5
        %v10523 = vsel %vm1930, %v10522, %v10521
        %v10524 = vrot.slane %v10386, 4
        %v10525 = vsel %vm1933, %v10524, %v10523
        %v10526 = vrot.slane %v10387, 3
        %v10527 = vsel %vm1936, %v10526, %v10525
        %v10528 = vrot.slane %v10388, 2
        %v10529 = vsel %vm1939, %v10528, %v10527
        %v10530 = vrot.slane %v10389, 1
        %v10531 = vsel %vm1942, %v10530, %v10529
        %v10532 = vrot.slane %v10391, 7
        %v10533 = vsel %vm1924, %v10532, %v10390
        %v10534 = vrot.slane %v10392, 6
        %v10535 = vsel %vm1927, %v10534, %v10533
        %v10536 = vrot.slane %v10393, 5
        %v10537 = vsel %vm1930, %v10536, %v10535
        %v10538 = vrot.slane %v10394, 4
        %v10539 = vsel %vm1933, %v10538, %v10537
        %v10540 = vrot.slane %v10395, 3
        %v10541 = vsel %vm1936, %v10540, %v10539
        %v10542 = vrot.slane %v10396, 2
        %v10543 = vsel %vm1939, %v10542, %v10541
        %v10544 = vrot.slane %v10397, 1
        %v10545 = vsel %vm1942, %v10544, %v10543
        %v10546 = vrot.slane %v10399, 7
        %v10547 = vsel %vm1924, %v10546, %v10398
        %v10548 = vrot.slane %v10400, 6
        %v10549 = vsel %vm1927, %v10548, %v10547
        %v10550 = vrot.slane %v10401, 5
        %v10551 = vsel %vm1930, %v10550, %v10549
        %v10552 = vrot.slane %v10402, 4
        %v10553 = vsel %vm1933, %v10552, %v10551
        %v10554 = vrot.slane %v10403, 3
        %v10555 = vsel %vm1936, %v10554, %v10553
        %v10556 = vrot.slane %v10404, 2
        %v10557 = vsel %vm1939, %v10556, %v10555
        %v10558 = vrot.slane %v10405, 1
        %v10559 = vsel %vm1942, %v10558, %v10557
        %v10560 = vrot.slane %v10407, 7
        %v10561 = vsel %vm1924, %v10560, %v10406
        %v10562 = vrot.slane %v10408, 6
        %v10563 = vsel %vm1927, %v10562, %v10561
        %v10564 = vrot.slane %v10409, 5
        %v10565 = vsel %vm1930, %v10564, %v10563
        %v10566 = vrot.slane %v10410, 4
        %v10567 = vsel %vm1933, %v10566, %v10565
        %v10568 = vrot.slane %v10411, 3
        %v10569 = vsel %vm1936, %v10568, %v10567
        %v10570 = vrot.slane %v10412, 2
        %v10571 = vsel %vm1939, %v10570, %v10569
        %v10572 = vrot.slane %v10413, 1
        %v10573 = vsel %vm1942, %v10572, %v10571
        %v10574 = vrot.slane %v10415, 7
        %v10575 = vsel %vm1924, %v10574, %v10414
        %v10576 = vrot.slane %v10416, 6
        %v10577 = vsel %vm1927, %v10576, %v10575
        %v10578 = vrot.slane %v10417, 5
        %v10579 = vsel %vm1930, %v10578, %v10577
        %v10580 = vrot.slane %v10418, 4
        %v10581 = vsel %vm1933, %v10580, %v10579
        %v10582 = vrot.slane %v10419, 3
        %v10583 = vsel %vm1936, %v10582, %v10581
        %v10584 = vrot.slane %v10420, 2
        %v10585 = vsel %vm1939, %v10584, %v10583
        %v10586 = vrot.slane %v10421, 1
        %v10587 = vsel %vm1942, %v10586, %v10585
        %v10588 = vrot.slane %v10423, 7
        %v10589 = vsel %vm1924, %v10588, %v10422
        %v10590 = vrot.slane %v10424, 6
        %v10591 = vsel %vm1927, %v10590, %v10589
        %v10592 = vrot.slane %v10425, 5
        %v10593 = vsel %vm1930, %v10592, %v10591
        %v10594 = vrot.slane %v10426, 4
        %v10595 = vsel %vm1933, %v10594, %v10593
        %v10596 = vrot.slane %v10427, 3
        %v10597 = vsel %vm1936, %v10596, %v10595
        %v10598 = vrot.slane %v10428, 2
        %v10599 = vsel %vm1939, %v10598, %v10597
        %v10600 = vrot.slane %v10429, 1
        %v10601 = vsel %vm1942, %v10600, %v10599
        %v10602 = vrot.slane %v10431, 7
        %v10603 = vsel %vm1924, %v10602, %v10430
        %v10604 = vrot.slane %v10432, 6
        %v10605 = vsel %vm1927, %v10604, %v10603
        %v10606 = vrot.slane %v10433, 5
        %v10607 = vsel %vm1930, %v10606, %v10605
        %v10608 = vrot.slane %v10434, 4
        %v10609 = vsel %vm1933, %v10608, %v10607
        %v10610 = vrot.slane %v10435, 3
        %v10611 = vsel %vm1936, %v10610, %v10609
        %v10612 = vrot.slane %v10436, 2
        %v10613 = vsel %vm1939, %v10612, %v10611
        %v10614 = vrot.slane %v10437, 1
        %v10615 = vsel %vm1942, %v10614, %v10613
        %10624 = vadd.xlane.f32.xlu0 %v10517
        %v10625 = vpop.xlane.xlu0 %10624
        %10626 = vadd.xlane.f32.xlu0 %v10531
        %v10627 = vpop.xlane.xlu0 %10626
        %10628 = vadd.xlane.f32.xlu0 %v10545
        %v10629 = vpop.xlane.xlu0 %10628
        %10630 = vadd.xlane.f32.xlu0 %v10559
        %v10631 = vpop.xlane.xlu0 %10630
        %10632 = vadd.xlane.f32.xlu0 %v10573
        %v10633 = vpop.xlane.xlu0 %10632
        %10634 = vadd.xlane.f32.xlu0 %v10587
        %v10635 = vpop.xlane.xlu0 %10634
        %10636 = vadd.xlane.f32.xlu0 %v10601
        %v10637 = vpop.xlane.xlu0 %10636
        %10638 = vadd.xlane.f32.xlu0 %v10615
        %v10639 = vpop.xlane.xlu0 %10638
        %v10640 = vmul.f32 %v10625, %v1018
        %v10641 = vmul.f32 %v10627, %v1018
        %v10642 = vmul.f32 %v10629, %v1018
        %v10643 = vmul.f32 %v10631, %v1018
        %v10644 = vmul.f32 %v10633, %v1018
        %v10645 = vmul.f32 %v10635, %v1018
        %v10646 = vmul.f32 %v10637, %v1018
        %v10647 = vmul.f32 %v10639, %v1018
        %v10648 = vmul.f32 %v10374, %v10374
        %v10649 = vmul.f32 %v10375, %v10375
        %v10650 = vmul.f32 %v10376, %v10376
        %v10651 = vmul.f32 %v10377, %v10377
        %v10652 = vmul.f32 %v10378, %v10378
        %v10653 = vmul.f32 %v10379, %v10379
        %v10654 = vmul.f32 %v10380, %v10380
        %v10655 = vmul.f32 %v10381, %v10381
        %v10656 = vmul.f32 %v10382, %v10382
        %v10657 = vmul.f32 %v10383, %v10383
        %v10658 = vmul.f32 %v10384, %v10384
        %v10659 = vmul.f32 %v10385, %v10385
        %v10660 = vmul.f32 %v10386, %v10386
        %v10661 = vmul.f32 %v10387, %v10387
        %v10662 = vmul.f32 %v10388, %v10388
        %v10663 = vmul.f32 %v10389, %v10389
        %v10664 = vmul.f32 %v10390, %v10390
        %v10665 = vmul.f32 %v10391, %v10391
        %v10666 = vmul.f32 %v10392, %v10392
        %v10667 = vmul.f32 %v10393, %v10393
        %v10668 = vmul.f32 %v10394, %v10394
        %v10669 = vmul.f32 %v10395, %v10395
        %v10670 = vmul.f32 %v10396, %v10396
        %v10671 = vmul.f32 %v10397, %v10397
        %v10672 = vmul.f32 %v10398, %v10398
        %v10673 = vmul.f32 %v10399, %v10399
        %v10674 = vmul.f32 %v10400, %v10400
        %v10675 = vmul.f32 %v10401, %v10401
        %v10676 = vmul.f32 %v10402, %v10402
        %v10677 = vmul.f32 %v10403, %v10403
        %v10678 = vmul.f32 %v10404, %v10404
        %v10679 = vmul.f32 %v10405, %v10405
        %v10680 = vmul.f32 %v10406, %v10406
        %v10681 = vmul.f32 %v10407, %v10407
        %v10682 = vmul.f32 %v10408, %v10408
        %v10683 = vmul.f32 %v10409, %v10409
        %v10684 = vmul.f32 %v10410, %v10410
        %v10685 = vmul.f32 %v10411, %v10411
        %v10686 = vmul.f32 %v10412, %v10412
        %v10687 = vmul.f32 %v10413, %v10413
        %v10688 = vmul.f32 %v10414, %v10414
        %v10689 = vmul.f32 %v10415, %v10415
        %v10690 = vmul.f32 %v10416, %v10416
        %v10691 = vmul.f32 %v10417, %v10417
        %v10692 = vmul.f32 %v10418, %v10418
        %v10693 = vmul.f32 %v10419, %v10419
        %v10694 = vmul.f32 %v10420, %v10420
        %v10695 = vmul.f32 %v10421, %v10421
        %v10696 = vmul.f32 %v10422, %v10422
        %v10697 = vmul.f32 %v10423, %v10423
        %v10698 = vmul.f32 %v10424, %v10424
        %v10699 = vmul.f32 %v10425, %v10425
        %v10700 = vmul.f32 %v10426, %v10426
        %v10701 = vmul.f32 %v10427, %v10427
        %v10702 = vmul.f32 %v10428, %v10428
        %v10703 = vmul.f32 %v10429, %v10429
        %v10704 = vmul.f32 %v10430, %v10430
        %v10705 = vmul.f32 %v10431, %v10431
        %v10706 = vmul.f32 %v10432, %v10432
        %v10707 = vmul.f32 %v10433, %v10433
        %v10708 = vmul.f32 %v10434, %v10434
        %v10709 = vmul.f32 %v10435, %v10435
        %v10710 = vmul.f32 %v10436, %v10436
        %v10711 = vmul.f32 %v10437, %v10437
        %v10776 = vrot.slane %v10649, 7
        %v10777 = vsel %vm1924, %v10776, %v10648
        %v10778 = vrot.slane %v10650, 6
        %v10779 = vsel %vm1927, %v10778, %v10777
        %v10780 = vrot.slane %v10651, 5
        %v10781 = vsel %vm1930, %v10780, %v10779
        %v10782 = vrot.slane %v10652, 4
        %v10783 = vsel %vm1933, %v10782, %v10781
        %v10784 = vrot.slane %v10653, 3
        %v10785 = vsel %vm1936, %v10784, %v10783
        %v10786 = vrot.slane %v10654, 2
        %v10787 = vsel %vm1939, %v10786, %v10785
        %v10788 = vrot.slane %v10655, 1
        %v10789 = vsel %vm1942, %v10788, %v10787
        %v10790 = vrot.slane %v10657, 7
        %v10791 = vsel %vm1924, %v10790, %v10656
        %v10792 = vrot.slane %v10658, 6
        %v10793 = vsel %vm1927, %v10792, %v10791
        %v10794 = vrot.slane %v10659, 5
        %v10795 = vsel %vm1930, %v10794, %v10793
        %v10796 = vrot.slane %v10660, 4
        %v10797 = vsel %vm1933, %v10796, %v10795
        %v10798 = vrot.slane %v10661, 3
        %v10799 = vsel %vm1936, %v10798, %v10797
        %v10800 = vrot.slane %v10662, 2
        %v10801 = vsel %vm1939, %v10800, %v10799
        %v10802 = vrot.slane %v10663, 1
        %v10803 = vsel %vm1942, %v10802, %v10801
        %v10804 = vrot.slane %v10665, 7
        %v10805 = vsel %vm1924, %v10804, %v10664
        %v10806 = vrot.slane %v10666, 6
        %v10807 = vsel %vm1927, %v10806, %v10805
        %v10808 = vrot.slane %v10667, 5
        %v10809 = vsel %vm1930, %v10808, %v10807
        %v10810 = vrot.slane %v10668, 4
        %v10811 = vsel %vm1933, %v10810, %v10809
        %v10812 = vrot.slane %v10669, 3
        %v10813 = vsel %vm1936, %v10812, %v10811
        %v10814 = vrot.slane %v10670, 2
        %v10815 = vsel %vm1939, %v10814, %v10813
        %v10816 = vrot.slane %v10671, 1
        %v10817 = vsel %vm1942, %v10816, %v10815
        %v10818 = vrot.slane %v10673, 7
        %v10819 = vsel %vm1924, %v10818, %v10672
        %v10820 = vrot.slane %v10674, 6
        %v10821 = vsel %vm1927, %v10820, %v10819
        %v10822 = vrot.slane %v10675, 5
        %v10823 = vsel %vm1930, %v10822, %v10821
        %v10824 = vrot.slane %v10676, 4
        %v10825 = vsel %vm1933, %v10824, %v10823
        %v10826 = vrot.slane %v10677, 3
        %v10827 = vsel %vm1936, %v10826, %v10825
        %v10828 = vrot.slane %v10678, 2
        %v10829 = vsel %vm1939, %v10828, %v10827
        %v10830 = vrot.slane %v10679, 1
        %v10831 = vsel %vm1942, %v10830, %v10829
        %v10832 = vrot.slane %v10681, 7
        %v10833 = vsel %vm1924, %v10832, %v10680
        %v10834 = vrot.slane %v10682, 6
        %v10835 = vsel %vm1927, %v10834, %v10833
        %v10836 = vrot.slane %v10683, 5
        %v10837 = vsel %vm1930, %v10836, %v10835
        %v10838 = vrot.slane %v10684, 4
        %v10839 = vsel %vm1933, %v10838, %v10837
        %v10840 = vrot.slane %v10685, 3
        %v10841 = vsel %vm1936, %v10840, %v10839
        %v10842 = vrot.slane %v10686, 2
        %v10843 = vsel %vm1939, %v10842, %v10841
        %v10844 = vrot.slane %v10687, 1
        %v10845 = vsel %vm1942, %v10844, %v10843
        %v10846 = vrot.slane %v10689, 7
        %v10847 = vsel %vm1924, %v10846, %v10688
        %v10848 = vrot.slane %v10690, 6
        %v10849 = vsel %vm1927, %v10848, %v10847
        %v10850 = vrot.slane %v10691, 5
        %v10851 = vsel %vm1930, %v10850, %v10849
        %v10852 = vrot.slane %v10692, 4
        %v10853 = vsel %vm1933, %v10852, %v10851
        %v10854 = vrot.slane %v10693, 3
        %v10855 = vsel %vm1936, %v10854, %v10853
        %v10856 = vrot.slane %v10694, 2
        %v10857 = vsel %vm1939, %v10856, %v10855
        %v10858 = vrot.slane %v10695, 1
        %v10859 = vsel %vm1942, %v10858, %v10857
        %v10860 = vrot.slane %v10697, 7
        %v10861 = vsel %vm1924, %v10860, %v10696
        %v10862 = vrot.slane %v10698, 6
        %v10863 = vsel %vm1927, %v10862, %v10861
        %v10864 = vrot.slane %v10699, 5
        %v10865 = vsel %vm1930, %v10864, %v10863
        %v10866 = vrot.slane %v10700, 4
        %v10867 = vsel %vm1933, %v10866, %v10865
        %v10868 = vrot.slane %v10701, 3
        %v10869 = vsel %vm1936, %v10868, %v10867
        %v10870 = vrot.slane %v10702, 2
        %v10871 = vsel %vm1939, %v10870, %v10869
        %v10872 = vrot.slane %v10703, 1
        %v10873 = vsel %vm1942, %v10872, %v10871
        %v10874 = vrot.slane %v10705, 7
        %v10875 = vsel %vm1924, %v10874, %v10704
        %v10876 = vrot.slane %v10706, 6
        %v10877 = vsel %vm1927, %v10876, %v10875
        %v10878 = vrot.slane %v10707, 5
        %v10879 = vsel %vm1930, %v10878, %v10877
        %v10880 = vrot.slane %v10708, 4
        %v10881 = vsel %vm1933, %v10880, %v10879
        %v10882 = vrot.slane %v10709, 3
        %v10883 = vsel %vm1936, %v10882, %v10881
        %v10884 = vrot.slane %v10710, 2
        %v10885 = vsel %vm1939, %v10884, %v10883
        %v10886 = vrot.slane %v10711, 1
        %v10887 = vsel %vm1942, %v10886, %v10885
        %10896 = vadd.xlane.f32.xlu0 %v10789
        %v10897 = vpop.xlane.xlu0 %10896
        %10898 = vadd.xlane.f32.xlu0 %v10803
        %v10899 = vpop.xlane.xlu0 %10898
        %10900 = vadd.xlane.f32.xlu0 %v10817
        %v10901 = vpop.xlane.xlu0 %10900
        %10902 = vadd.xlane.f32.xlu0 %v10831
        %v10903 = vpop.xlane.xlu0 %10902
        %10904 = vadd.xlane.f32.xlu0 %v10845
        %v10905 = vpop.xlane.xlu0 %10904
        %10906 = vadd.xlane.f32.xlu0 %v10859
        %v10907 = vpop.xlane.xlu0 %10906
        %10908 = vadd.xlane.f32.xlu0 %v10873
        %v10909 = vpop.xlane.xlu0 %10908
        %10910 = vadd.xlane.f32.xlu0 %v10887
        %v10911 = vpop.xlane.xlu0 %10910
        %v10912 = vmul.f32 %v10897, %v1018
        %v10913 = vmul.f32 %v10899, %v1018
        %v10914 = vmul.f32 %v10901, %v1018
        %v10915 = vmul.f32 %v10903, %v1018
        %v10916 = vmul.f32 %v10905, %v1018
        %v10917 = vmul.f32 %v10907, %v1018
        %v10918 = vmul.f32 %v10909, %v1018
        %v10919 = vmul.f32 %v10911, %v1018
        %v10920 = vmul.f32 %v10640, %v10640
        %v10921 = vmul.f32 %v10641, %v10641
        %v10922 = vmul.f32 %v10642, %v10642
        %v10923 = vmul.f32 %v10643, %v10643
        %v10924 = vmul.f32 %v10644, %v10644
        %v10925 = vmul.f32 %v10645, %v10645
        %v10926 = vmul.f32 %v10646, %v10646
        %v10927 = vmul.f32 %v10647, %v10647
        %v10928 = vsub.f32 %v10912, %v10920
        %v10929 = vsub.f32 %v10913, %v10921
        %v10930 = vsub.f32 %v10914, %v10922
        %v10931 = vsub.f32 %v10915, %v10923
        %v10932 = vsub.f32 %v10916, %v10924
        %v10933 = vsub.f32 %v10917, %v10925
        %v10934 = vsub.f32 %v10918, %v10926
        %v10935 = vsub.f32 %v10919, %v10927
        %v10944 = vrot.slane %v10640, 1
        %v10945 = vrot.slane %v10640, 2
        %v10946 = vrot.slane %v10640, 3
        %v10947 = vrot.slane %v10640, 4
        %v10948 = vrot.slane %v10640, 5
        %v10949 = vrot.slane %v10640, 6
        %v10950 = vrot.slane %v10640, 7
        %v10951 = vrot.slane %v10641, 1
        %v10952 = vrot.slane %v10641, 2
        %v10953 = vrot.slane %v10641, 3
        %v10954 = vrot.slane %v10641, 4
        %v10955 = vrot.slane %v10641, 5
        %v10956 = vrot.slane %v10641, 6
        %v10957 = vrot.slane %v10641, 7
        %v10958 = vrot.slane %v10642, 1
        %v10959 = vrot.slane %v10642, 2
        %v10960 = vrot.slane %v10642, 3
        %v10961 = vrot.slane %v10642, 4
        %v10962 = vrot.slane %v10642, 5
        %v10963 = vrot.slane %v10642, 6
        %v10964 = vrot.slane %v10642, 7
        %v10965 = vrot.slane %v10643, 1
        %v10966 = vrot.slane %v10643, 2
        %v10967 = vrot.slane %v10643, 3
        %v10968 = vrot.slane %v10643, 4
        %v10969 = vrot.slane %v10643, 5
        %v10970 = vrot.slane %v10643, 6
        %v10971 = vrot.slane %v10643, 7
        %v10972 = vrot.slane %v10644, 1
        %v10973 = vrot.slane %v10644, 2
        %v10974 = vrot.slane %v10644, 3
        %v10975 = vrot.slane %v10644, 4
        %v10976 = vrot.slane %v10644, 5
        %v10977 = vrot.slane %v10644, 6
        %v10978 = vrot.slane %v10644, 7
        %v10979 = vrot.slane %v10645, 1
        %v10980 = vrot.slane %v10645, 2
        %v10981 = vrot.slane %v10645, 3
        %v10982 = vrot.slane %v10645, 4
        %v10983 = vrot.slane %v10645, 5
        %v10984 = vrot.slane %v10645, 6
        %v10985 = vrot.slane %v10645, 7
        %v10986 = vrot.slane %v10646, 1
        %v10987 = vrot.slane %v10646, 2
        %v10988 = vrot.slane %v10646, 3
        %v10989 = vrot.slane %v10646, 4
        %v10990 = vrot.slane %v10646, 5
        %v10991 = vrot.slane %v10646, 6
        %v10992 = vrot.slane %v10646, 7
        %v10993 = vrot.slane %v10647, 1
        %v10994 = vrot.slane %v10647, 2
        %v10995 = vrot.slane %v10647, 3
        %v10996 = vrot.slane %v10647, 4
        %v10997 = vrot.slane %v10647, 5
        %v10998 = vrot.slane %v10647, 6
        %v10999 = vrot.slane %v10647, 7
        %v11064 = vsub.f32 %v10374, %v10640
        %v11065 = vsub.f32 %v10375, %v10944
        %v11066 = vsub.f32 %v10376, %v10945
        %v11067 = vsub.f32 %v10377, %v10946
        %v11068 = vsub.f32 %v10378, %v10947
        %v11069 = vsub.f32 %v10379, %v10948
        %v11070 = vsub.f32 %v10380, %v10949
        %v11071 = vsub.f32 %v10381, %v10950
        %v11072 = vsub.f32 %v10382, %v10641
        %v11073 = vsub.f32 %v10383, %v10951
        %v11074 = vsub.f32 %v10384, %v10952
        %v11075 = vsub.f32 %v10385, %v10953
        %v11076 = vsub.f32 %v10386, %v10954
        %v11077 = vsub.f32 %v10387, %v10955
        %v11078 = vsub.f32 %v10388, %v10956
        %v11079 = vsub.f32 %v10389, %v10957
        %v11080 = vsub.f32 %v10390, %v10642
        %v11081 = vsub.f32 %v10391, %v10958
        %v11082 = vsub.f32 %v10392, %v10959
        %v11083 = vsub.f32 %v10393, %v10960
        %v11084 = vsub.f32 %v10394, %v10961
        %v11085 = vsub.f32 %v10395, %v10962
        %v11086 = vsub.f32 %v10396, %v10963
        %v11087 = vsub.f32 %v10397, %v10964
        %v11088 = vsub.f32 %v10398, %v10643
        %v11089 = vsub.f32 %v10399, %v10965
        %v11090 = vsub.f32 %v10400, %v10966
        %v11091 = vsub.f32 %v10401, %v10967
        %v11092 = vsub.f32 %v10402, %v10968
        %v11093 = vsub.f32 %v10403, %v10969
        %v11094 = vsub.f32 %v10404, %v10970
        %v11095 = vsub.f32 %v10405, %v10971
        %v11096 = vsub.f32 %v10406, %v10644
        %v11097 = vsub.f32 %v10407, %v10972
        %v11098 = vsub.f32 %v10408, %v10973
        %v11099 = vsub.f32 %v10409, %v10974
        %v11100 = vsub.f32 %v10410, %v10975
        %v11101 = vsub.f32 %v10411, %v10976
        %v11102 = vsub.f32 %v10412, %v10977
        %v11103 = vsub.f32 %v10413, %v10978
        %v11104 = vsub.f32 %v10414, %v10645
        %v11105 = vsub.f32 %v10415, %v10979
        %v11106 = vsub.f32 %v10416, %v10980
        %v11107 = vsub.f32 %v10417, %v10981
        %v11108 = vsub.f32 %v10418, %v10982
        %v11109 = vsub.f32 %v10419, %v10983
        %v11110 = vsub.f32 %v10420, %v10984
        %v11111 = vsub.f32 %v10421, %v10985
        %v11112 = vsub.f32 %v10422, %v10646
        %v11113 = vsub.f32 %v10423, %v10986
        %v11114 = vsub.f32 %v10424, %v10987
        %v11115 = vsub.f32 %v10425, %v10988
        %v11116 = vsub.f32 %v10426, %v10989
        %v11117 = vsub.f32 %v10427, %v10990
        %v11118 = vsub.f32 %v10428, %v10991
        %v11119 = vsub.f32 %v10429, %v10992
        %v11120 = vsub.f32 %v10430, %v10647
        %v11121 = vsub.f32 %v10431, %v10993
        %v11122 = vsub.f32 %v10432, %v10994
        %v11123 = vsub.f32 %v10433, %v10995
        %v11124 = vsub.f32 %v10434, %v10996
        %v11125 = vsub.f32 %v10435, %v10997
        %v11126 = vsub.f32 %v10436, %v10998
        %v11127 = vsub.f32 %v10437, %v10999
        %v11128 = vadd.f32 %v10928, 1e-12
        %v11129 = vadd.f32 %v10929, 1e-12
        %v11130 = vadd.f32 %v10930, 1e-12
        %v11131 = vadd.f32 %v10931, 1e-12
        %v11132 = vadd.f32 %v10932, 1e-12
        %v11133 = vadd.f32 %v10933, 1e-12
        %v11134 = vadd.f32 %v10934, 1e-12
        %v11135 = vadd.f32 %v10935, 1e-12
        %v11136 = vrsqrt.pop %v11128
        %v11137 = vrsqrt.pop %v11129
        %v11138 = vrsqrt.pop %v11130
        %v11139 = vrsqrt.pop %v11131
        %v11140 = vrsqrt.pop %v11132
        %v11141 = vrsqrt.pop %v11133
        %v11142 = vrsqrt.pop %v11134
        %v11143 = vrsqrt.pop %v11135
        %v11152 = vrot.slane %v11136, 1
        %v11153 = vrot.slane %v11136, 2
        %v11154 = vrot.slane %v11136, 3
        %v11155 = vrot.slane %v11136, 4
        %v11156 = vrot.slane %v11136, 5
        %v11157 = vrot.slane %v11136, 6
        %v11158 = vrot.slane %v11136, 7
        %v11159 = vrot.slane %v11137, 1
        %v11160 = vrot.slane %v11137, 2
        %v11161 = vrot.slane %v11137, 3
        %v11162 = vrot.slane %v11137, 4
        %v11163 = vrot.slane %v11137, 5
        %v11164 = vrot.slane %v11137, 6
        %v11165 = vrot.slane %v11137, 7
        %v11166 = vrot.slane %v11138, 1
        %v11167 = vrot.slane %v11138, 2
        %v11168 = vrot.slane %v11138, 3
        %v11169 = vrot.slane %v11138, 4
        %v11170 = vrot.slane %v11138, 5
        %v11171 = vrot.slane %v11138, 6
        %v11172 = vrot.slane %v11138, 7
        %v11173 = vrot.slane %v11139, 1
        %v11174 = vrot.slane %v11139, 2
        %v11175 = vrot.slane %v11139, 3
        %v11176 = vrot.slane %v11139, 4
        %v11177 = vrot.slane %v11139, 5
        %v11178 = vrot.slane %v11139, 6
        %v11179 = vrot.slane %v11139, 7
        %v11180 = vrot.slane %v11140, 1
        %v11181 = vrot.slane %v11140, 2
        %v11182 = vrot.slane %v11140, 3
        %v11183 = vrot.slane %v11140, 4
        %v11184 = vrot.slane %v11140, 5
        %v11185 = vrot.slane %v11140, 6
        %v11186 = vrot.slane %v11140, 7
        %v11187 = vrot.slane %v11141, 1
        %v11188 = vrot.slane %v11141, 2
        %v11189 = vrot.slane %v11141, 3
        %v11190 = vrot.slane %v11141, 4
        %v11191 = vrot.slane %v11141, 5
        %v11192 = vrot.slane %v11141, 6
        %v11193 = vrot.slane %v11141, 7
        %v11194 = vrot.slane %v11142, 1
        %v11195 = vrot.slane %v11142, 2
        %v11196 = vrot.slane %v11142, 3
        %v11197 = vrot.slane %v11142, 4
        %v11198 = vrot.slane %v11142, 5
        %v11199 = vrot.slane %v11142, 6
        %v11200 = vrot.slane %v11142, 7
        %v11201 = vrot.slane %v11143, 1
        %v11202 = vrot.slane %v11143, 2
        %v11203 = vrot.slane %v11143, 3
        %v11204 = vrot.slane %v11143, 4
        %v11205 = vrot.slane %v11143, 5
        %v11206 = vrot.slane %v11143, 6
        %v11207 = vrot.slane %v11143, 7
        %v11272 = vmul.f32 %v11064, %v11136
        %v11273 = vmul.f32 %v11065, %v11152
        %v11274 = vmul.f32 %v11066, %v11153
        %v11275 = vmul.f32 %v11067, %v11154
        %v11276 = vmul.f32 %v11068, %v11155
        %v11277 = vmul.f32 %v11069, %v11156
        %v11278 = vmul.f32 %v11070, %v11157
        %v11279 = vmul.f32 %v11071, %v11158
        %v11280 = vmul.f32 %v11072, %v11137
        %v11281 = vmul.f32 %v11073, %v11159
        %v11282 = vmul.f32 %v11074, %v11160
        %v11283 = vmul.f32 %v11075, %v11161
        %v11284 = vmul.f32 %v11076, %v11162
        %v11285 = vmul.f32 %v11077, %v11163
        %v11286 = vmul.f32 %v11078, %v11164
        %v11287 = vmul.f32 %v11079, %v11165
        %v11288 = vmul.f32 %v11080, %v11138
        %v11289 = vmul.f32 %v11081, %v11166
        %v11290 = vmul.f32 %v11082, %v11167
        %v11291 = vmul.f32 %v11083, %v11168
        %v11292 = vmul.f32 %v11084, %v11169
        %v11293 = vmul.f32 %v11085, %v11170
        %v11294 = vmul.f32 %v11086, %v11171
        %v11295 = vmul.f32 %v11087, %v11172
        %v11296 = vmul.f32 %v11088, %v11139
        %v11297 = vmul.f32 %v11089, %v11173
        %v11298 = vmul.f32 %v11090, %v11174
        %v11299 = vmul.f32 %v11091, %v11175
        %v11300 = vmul.f32 %v11092, %v11176
        %v11301 = vmul.f32 %v11093, %v11177
        %v11302 = vmul.f32 %v11094, %v11178
        %v11303 = vmul.f32 %v11095, %v11179
        %v11304 = vmul.f32 %v11096, %v11140
        %v11305 = vmul.f32 %v11097, %v11180
        %v11306 = vmul.f32 %v11098, %v11181
        %v11307 = vmul.f32 %v11099, %v11182
        %v11308 = vmul.f32 %v11100, %v11183
        %v11309 = vmul.f32 %v11101, %v11184
        %v11310 = vmul.f32 %v11102, %v11185
        %v11311 = vmul.f32 %v11103, %v11186
        %v11312 = vmul.f32 %v11104, %v11141
        %v11313 = vmul.f32 %v11105, %v11187
        %v11314 = vmul.f32 %v11106, %v11188
        %v11315 = vmul.f32 %v11107, %v11189
        %v11316 = vmul.f32 %v11108, %v11190
        %v11317 = vmul.f32 %v11109, %v11191
        %v11318 = vmul.f32 %v11110, %v11192
        %v11319 = vmul.f32 %v11111, %v11193
        %v11320 = vmul.f32 %v11112, %v11142
        %v11321 = vmul.f32 %v11113, %v11194
        %v11322 = vmul.f32 %v11114, %v11195
        %v11323 = vmul.f32 %v11115, %v11196
        %v11324 = vmul.f32 %v11116, %v11197
        %v11325 = vmul.f32 %v11117, %v11198
        %v11326 = vmul.f32 %v11118, %v11199
        %v11327 = vmul.f32 %v11119, %v11200
        %v11328 = vmul.f32 %v11120, %v11143
        %v11329 = vmul.f32 %v11121, %v11201
        %v11330 = vmul.f32 %v11122, %v11202
        %v11331 = vmul.f32 %v11123, %v11203
        %v11332 = vmul.f32 %v11124, %v11204
        %v11333 = vmul.f32 %v11125, %v11205
        %v11334 = vmul.f32 %v11126, %v11206
        %v11335 = vmul.f32 %v11127, %v11207
        %v11336 = vlaneseq
        %v11337 = vshrl.u32 %v11336, 7
        %v11338 = vsub.s32 0, %v11337
        %v11339 = vrot.slane %v10438, %v11338
        %v11340 = vmul.f32 %v11272, %v11339
        %v11341 = vmul.f32 %v11273, %v11339
        %v11342 = vmul.f32 %v11274, %v11339
        %v11343 = vmul.f32 %v11275, %v11339
        %v11344 = vmul.f32 %v11276, %v11339
        %v11345 = vmul.f32 %v11277, %v11339
        %v11346 = vmul.f32 %v11278, %v11339
        %v11347 = vmul.f32 %v11279, %v11339
        %v11348 = vmul.f32 %v11280, %v11339
        %v11349 = vmul.f32 %v11281, %v11339
        %v11350 = vmul.f32 %v11282, %v11339
        %v11351 = vmul.f32 %v11283, %v11339
        %v11352 = vmul.f32 %v11284, %v11339
        %v11353 = vmul.f32 %v11285, %v11339
        %v11354 = vmul.f32 %v11286, %v11339
        %v11355 = vmul.f32 %v11287, %v11339
        %v11356 = vmul.f32 %v11288, %v11339
        %v11357 = vmul.f32 %v11289, %v11339
        %v11358 = vmul.f32 %v11290, %v11339
        %v11359 = vmul.f32 %v11291, %v11339
        %v11360 = vmul.f32 %v11292, %v11339
        %v11361 = vmul.f32 %v11293, %v11339
        %v11362 = vmul.f32 %v11294, %v11339
        %v11363 = vmul.f32 %v11295, %v11339
        %v11364 = vmul.f32 %v11296, %v11339
        %v11365 = vmul.f32 %v11297, %v11339
        %v11366 = vmul.f32 %v11298, %v11339
        %v11367 = vmul.f32 %v11299, %v11339
        %v11368 = vmul.f32 %v11300, %v11339
        %v11369 = vmul.f32 %v11301, %v11339
        %v11370 = vmul.f32 %v11302, %v11339
        %v11371 = vmul.f32 %v11303, %v11339
        %v11372 = vmul.f32 %v11304, %v11339
        %v11373 = vmul.f32 %v11305, %v11339
        %v11374 = vmul.f32 %v11306, %v11339
        %v11375 = vmul.f32 %v11307, %v11339
        %v11376 = vmul.f32 %v11308, %v11339
        %v11377 = vmul.f32 %v11309, %v11339
        %v11378 = vmul.f32 %v11310, %v11339
        %v11379 = vmul.f32 %v11311, %v11339
        %v11380 = vmul.f32 %v11312, %v11339
        %v11381 = vmul.f32 %v11313, %v11339
        %v11382 = vmul.f32 %v11314, %v11339
        %v11383 = vmul.f32 %v11315, %v11339
        %v11384 = vmul.f32 %v11316, %v11339
        %v11385 = vmul.f32 %v11317, %v11339
        %v11386 = vmul.f32 %v11318, %v11339
        %v11387 = vmul.f32 %v11319, %v11339
        %v11388 = vmul.f32 %v11320, %v11339
        %v11389 = vmul.f32 %v11321, %v11339
        %v11390 = vmul.f32 %v11322, %v11339
        %v11391 = vmul.f32 %v11323, %v11339
        %v11392 = vmul.f32 %v11324, %v11339
        %v11393 = vmul.f32 %v11325, %v11339
        %v11394 = vmul.f32 %v11326, %v11339
        %v11395 = vmul.f32 %v11327, %v11339
        %v11396 = vmul.f32 %v11328, %v11339
        %v11397 = vmul.f32 %v11329, %v11339
        %v11398 = vmul.f32 %v11330, %v11339
        %v11399 = vmul.f32 %v11331, %v11339
        %v11400 = vmul.f32 %v11332, %v11339
        %v11401 = vmul.f32 %v11333, %v11339
        %v11402 = vmul.f32 %v11334, %v11339
        %v11403 = vmul.f32 %v11335, %v11339
        %v11404 = vlaneseq
        %v11405 = vshrl.u32 %v11404, 7
        %v11406 = vsub.s32 0, %v11405
        %v11407 = vrot.slane %v10439, %v11406
        %v11408 = vadd.f32 %v11340, %v11407
        %v11409 = vadd.f32 %v11341, %v11407
        %v11410 = vadd.f32 %v11342, %v11407
        %v11411 = vadd.f32 %v11343, %v11407
        %v11412 = vadd.f32 %v11344, %v11407
        %v11413 = vadd.f32 %v11345, %v11407
        %v11414 = vadd.f32 %v11346, %v11407
        %v11415 = vadd.f32 %v11347, %v11407
        %v11416 = vadd.f32 %v11348, %v11407
        %v11417 = vadd.f32 %v11349, %v11407
        %v11418 = vadd.f32 %v11350, %v11407
        %v11419 = vadd.f32 %v11351, %v11407
        %v11420 = vadd.f32 %v11352, %v11407
        %v11421 = vadd.f32 %v11353, %v11407
        %v11422 = vadd.f32 %v11354, %v11407
        %v11423 = vadd.f32 %v11355, %v11407
        %v11424 = vadd.f32 %v11356, %v11407
        %v11425 = vadd.f32 %v11357, %v11407
        %v11426 = vadd.f32 %v11358, %v11407
        %v11427 = vadd.f32 %v11359, %v11407
        %v11428 = vadd.f32 %v11360, %v11407
        %v11429 = vadd.f32 %v11361, %v11407
        %v11430 = vadd.f32 %v11362, %v11407
        %v11431 = vadd.f32 %v11363, %v11407
        %v11432 = vadd.f32 %v11364, %v11407
        %v11433 = vadd.f32 %v11365, %v11407
        %v11434 = vadd.f32 %v11366, %v11407
        %v11435 = vadd.f32 %v11367, %v11407
        %v11436 = vadd.f32 %v11368, %v11407
        %v11437 = vadd.f32 %v11369, %v11407
        %v11438 = vadd.f32 %v11370, %v11407
        %v11439 = vadd.f32 %v11371, %v11407
        %v11440 = vadd.f32 %v11372, %v11407
        %v11441 = vadd.f32 %v11373, %v11407
        %v11442 = vadd.f32 %v11374, %v11407
        %v11443 = vadd.f32 %v11375, %v11407
        %v11444 = vadd.f32 %v11376, %v11407
        %v11445 = vadd.f32 %v11377, %v11407
        %v11446 = vadd.f32 %v11378, %v11407
        %v11447 = vadd.f32 %v11379, %v11407
        %v11448 = vadd.f32 %v11380, %v11407
        %v11449 = vadd.f32 %v11381, %v11407
        %v11450 = vadd.f32 %v11382, %v11407
        %v11451 = vadd.f32 %v11383, %v11407
        %v11452 = vadd.f32 %v11384, %v11407
        %v11453 = vadd.f32 %v11385, %v11407
        %v11454 = vadd.f32 %v11386, %v11407
        %v11455 = vadd.f32 %v11387, %v11407
        %v11456 = vadd.f32 %v11388, %v11407
        %v11457 = vadd.f32 %v11389, %v11407
        %v11458 = vadd.f32 %v11390, %v11407
        %v11459 = vadd.f32 %v11391, %v11407
        %v11460 = vadd.f32 %v11392, %v11407
        %v11461 = vadd.f32 %v11393, %v11407
        %v11462 = vadd.f32 %v11394, %v11407
        %v11463 = vadd.f32 %v11395, %v11407
        %v11464 = vadd.f32 %v11396, %v11407
        %v11465 = vadd.f32 %v11397, %v11407
        %v11466 = vadd.f32 %v11398, %v11407
        %v11467 = vadd.f32 %v11399, %v11407
        %v11468 = vadd.f32 %v11400, %v11407
        %v11469 = vadd.f32 %v11401, %v11407
        %v11470 = vadd.f32 %v11402, %v11407
        %v11471 = vadd.f32 %v11403, %v11407
        %v11472 = vld [vmem:[%s713] sm:$0xff]
        %v11473 = vld [vmem:[%s713 + $0x8] sm:$0xff]
        %v11474 = vld [vmem:[%s713 + $0x10] sm:$0xff]
        %v11475 = vld [vmem:[%s713 + $0x18] sm:$0xff]
        %v11476 = vld [vmem:[%s713 + $0x20] sm:$0xff]
        %v11477 = vld [vmem:[%s713 + $0x28] sm:$0xff]
        %v11478 = vld [vmem:[%s713 + $0x30] sm:$0xff]
        %v11479 = vld [vmem:[%s713 + $0x38] sm:$0xff]
        %v11480 = vld [vmem:[#allocation13] sm:$0xf]
        %v11481 = vld [vmem:[#allocation13 + $0x4] sm:$0xf]
        %v11482 = vld [vmem:[#allocation13 + $0x8] sm:$0xf]
        %v11483 = vld [vmem:[#allocation13 + $0xc] sm:$0xf]
        %v11484 = vld [vmem:[#allocation13 + $0x10] sm:$0xf]
        %v11485 = vld [vmem:[#allocation13 + $0x14] sm:$0xf]
        %v11486 = vld [vmem:[#allocation13 + $0x18] sm:$0xf]
        %v11487 = vld [vmem:[#allocation13 + $0x1c] sm:$0xf]
        %v11488 = vld [vmem:[#allocation13 + $0x20] sm:$0xf]
        %v11489 = vld [vmem:[#allocation13 + $0x24] sm:$0xf]
        %v11490 = vld [vmem:[#allocation13 + $0x28] sm:$0xf]
        %v11491 = vld [vmem:[#allocation13 + $0x2c] sm:$0xf]
        %v11492 = vld [vmem:[#allocation13 + $0x30] sm:$0xf]
        %v11493 = vld [vmem:[#allocation13 + $0x34] sm:$0xf]
        %v11494 = vld [vmem:[#allocation13 + $0x38] sm:$0xf]
        %v11495 = vld [vmem:[#allocation13 + $0x3c] sm:$0xf]
        %v11496 = vld [vmem:[#allocation13 + $0x40] sm:$0xf]
        %v11497 = vld [vmem:[#allocation13 + $0x44] sm:$0xf]
        %v11498 = vld [vmem:[#allocation13 + $0x48] sm:$0xf]
        %v11499 = vld [vmem:[#allocation13 + $0x4c] sm:$0xf]
        %v11500 = vld [vmem:[#allocation13 + $0x50] sm:$0xf]
        %v11501 = vld [vmem:[#allocation13 + $0x54] sm:$0xf]
        %v11502 = vld [vmem:[#allocation13 + $0x58] sm:$0xf]
        %v11503 = vld [vmem:[#allocation13 + $0x5c] sm:$0xf]
        %v11504 = vld [vmem:[#allocation13 + $0x60] sm:$0xf]
        %v11505 = vld [vmem:[#allocation13 + $0x64] sm:$0xf]
        %v11506 = vld [vmem:[#allocation13 + $0x68] sm:$0xf]
        %v11507 = vld [vmem:[#allocation13 + $0x6c] sm:$0xf]
        %v11508 = vld [vmem:[#allocation13 + $0x70] sm:$0xf]
        %v11509 = vld [vmem:[#allocation13 + $0x74] sm:$0xf]
        %v11510 = vld [vmem:[#allocation13 + $0x78] sm:$0xf]
        %v11511 = vld [vmem:[#allocation13 + $0x7c] sm:$0xf]
        %v11512 = vld [vmem:[%s730] sm:$0xff]
        %v11513 = vld [vmem:[%s730 + $0x8] sm:$0xff]
        %v11514 = vld [vmem:[%s730 + $0x10] sm:$0xff]
        %v11515 = vld [vmem:[%s730 + $0x18] sm:$0xff]
        %v11516 = vld [vmem:[%s730 + $0x20] sm:$0xff]
        %v11517 = vld [vmem:[%s730 + $0x28] sm:$0xff]
        %v11518 = vld [vmem:[%s730 + $0x30] sm:$0xff]
        %v11519 = vld [vmem:[%s730 + $0x38] sm:$0xff]
        %v11528 = vrot.slane %v11512, 1
        %v11529 = vrot.slane %v11512, 2
        %v11530 = vrot.slane %v11512, 3
        %v11531 = vrot.slane %v11512, 4
        %v11532 = vrot.slane %v11512, 5
        %v11533 = vrot.slane %v11512, 6
        %v11534 = vrot.slane %v11512, 7
        %v11535 = vrot.slane %v11513, 1
        %v11536 = vrot.slane %v11513, 2
        %v11537 = vrot.slane %v11513, 3
        %v11538 = vrot.slane %v11513, 4
        %v11539 = vrot.slane %v11513, 5
        %v11540 = vrot.slane %v11513, 6
        %v11541 = vrot.slane %v11513, 7
        %v11542 = vrot.slane %v11514, 1
        %v11543 = vrot.slane %v11514, 2
        %v11544 = vrot.slane %v11514, 3
        %v11545 = vrot.slane %v11514, 4
        %v11546 = vrot.slane %v11514, 5
        %v11547 = vrot.slane %v11514, 6
        %v11548 = vrot.slane %v11514, 7
        %v11549 = vrot.slane %v11515, 1
        %v11550 = vrot.slane %v11515, 2
        %v11551 = vrot.slane %v11515, 3
        %v11552 = vrot.slane %v11515, 4
        %v11553 = vrot.slane %v11515, 5
        %v11554 = vrot.slane %v11515, 6
        %v11555 = vrot.slane %v11515, 7
        %v11556 = vrot.slane %v11516, 1
        %v11557 = vrot.slane %v11516, 2
        %v11558 = vrot.slane %v11516, 3
        %v11559 = vrot.slane %v11516, 4
        %v11560 = vrot.slane %v11516, 5
        %v11561 = vrot.slane %v11516, 6
        %v11562 = vrot.slane %v11516, 7
        %v11563 = vrot.slane %v11517, 1
        %v11564 = vrot.slane %v11517, 2
        %v11565 = vrot.slane %v11517, 3
        %v11566 = vrot.slane %v11517, 4
        %v11567 = vrot.slane %v11517, 5
        %v11568 = vrot.slane %v11517, 6
        %v11569 = vrot.slane %v11517, 7
        %v11570 = vrot.slane %v11518, 1
        %v11571 = vrot.slane %v11518, 2
        %v11572 = vrot.slane %v11518, 3
        %v11573 = vrot.slane %v11518, 4
        %v11574 = vrot.slane %v11518, 5
        %v11575 = vrot.slane %v11518, 6
        %v11576 = vrot.slane %v11518, 7
        %v11577 = vrot.slane %v11519, 1
        %v11578 = vrot.slane %v11519, 2
        %v11579 = vrot.slane %v11519, 3
        %v11580 = vrot.slane %v11519, 4
        %v11581 = vrot.slane %v11519, 5
        %v11582 = vrot.slane %v11519, 6
        %v11583 = vrot.slane %v11519, 7
        %v11648 = vmul.f32 %v11408, %v11512
        %v11649 = vmul.f32 %v11409, %v11528
        %v11650 = vmul.f32 %v11410, %v11529
        %v11651 = vmul.f32 %v11411, %v11530
        %v11652 = vmul.f32 %v11412, %v11531
        %v11653 = vmul.f32 %v11413, %v11532
        %v11654 = vmul.f32 %v11414, %v11533
        %v11655 = vmul.f32 %v11415, %v11534
        %v11656 = vmul.f32 %v11416, %v11513
        %v11657 = vmul.f32 %v11417, %v11535
        %v11658 = vmul.f32 %v11418, %v11536
        %v11659 = vmul.f32 %v11419, %v11537
        %v11660 = vmul.f32 %v11420, %v11538
        %v11661 = vmul.f32 %v11421, %v11539
        %v11662 = vmul.f32 %v11422, %v11540
        %v11663 = vmul.f32 %v11423, %v11541
        %v11664 = vmul.f32 %v11424, %v11514
        %v11665 = vmul.f32 %v11425, %v11542
        %v11666 = vmul.f32 %v11426, %v11543
        %v11667 = vmul.f32 %v11427, %v11544
        %v11668 = vmul.f32 %v11428, %v11545
        %v11669 = vmul.f32 %v11429, %v11546
        %v11670 = vmul.f32 %v11430, %v11547
        %v11671 = vmul.f32 %v11431, %v11548
        %v11672 = vmul.f32 %v11432, %v11515
        %v11673 = vmul.f32 %v11433, %v11549
        %v11674 = vmul.f32 %v11434, %v11550
        %v11675 = vmul.f32 %v11435, %v11551
        %v11676 = vmul.f32 %v11436, %v11552
        %v11677 = vmul.f32 %v11437, %v11553
        %v11678 = vmul.f32 %v11438, %v11554
        %v11679 = vmul.f32 %v11439, %v11555
        %v11680 = vmul.f32 %v11440, %v11516
        %v11681 = vmul.f32 %v11441, %v11556
        %v11682 = vmul.f32 %v11442, %v11557
        %v11683 = vmul.f32 %v11443, %v11558
        %v11684 = vmul.f32 %v11444, %v11559
        %v11685 = vmul.f32 %v11445, %v11560
        %v11686 = vmul.f32 %v11446, %v11561
        %v11687 = vmul.f32 %v11447, %v11562
        %v11688 = vmul.f32 %v11448, %v11517
        %v11689 = vmul.f32 %v11449, %v11563
        %v11690 = vmul.f32 %v11450, %v11564
        %v11691 = vmul.f32 %v11451, %v11565
        %v11692 = vmul.f32 %v11452, %v11566
        %v11693 = vmul.f32 %v11453, %v11567
        %v11694 = vmul.f32 %v11454, %v11568
        %v11695 = vmul.f32 %v11455, %v11569
        %v11696 = vmul.f32 %v11456, %v11518
        %v11697 = vmul.f32 %v11457, %v11570
        %v11698 = vmul.f32 %v11458, %v11571
        %v11699 = vmul.f32 %v11459, %v11572
        %v11700 = vmul.f32 %v11460, %v11573
        %v11701 = vmul.f32 %v11461, %v11574
        %v11702 = vmul.f32 %v11462, %v11575
        %v11703 = vmul.f32 %v11463, %v11576
        %v11704 = vmul.f32 %v11464, %v11519
        %v11705 = vmul.f32 %v11465, %v11577
        %v11706 = vmul.f32 %v11466, %v11578
        %v11707 = vmul.f32 %v11467, %v11579
        %v11708 = vmul.f32 %v11468, %v11580
        %v11709 = vmul.f32 %v11469, %v11581
        %v11710 = vmul.f32 %v11470, %v11582
        %v11711 = vmul.f32 %v11471, %v11583
        %v11712 = vpack.c.bf16 %v11648, %v11648
        %v11713 = vpack.c.bf16 %v11649, %v11649
        %v11714 = vpack.c.bf16 %v11650, %v11650
        %v11715 = vpack.c.bf16 %v11651, %v11651
        %v11716 = vpack.c.bf16 %v11652, %v11652
        %v11717 = vpack.c.bf16 %v11653, %v11653
        %v11718 = vpack.c.bf16 %v11654, %v11654
        %v11719 = vpack.c.bf16 %v11655, %v11655
        %v11720 = vpack.c.bf16 %v11656, %v11656
        %v11721 = vpack.c.bf16 %v11657, %v11657
        %v11722 = vpack.c.bf16 %v11658, %v11658
        %v11723 = vpack.c.bf16 %v11659, %v11659
        %v11724 = vpack.c.bf16 %v11660, %v11660
        %v11725 = vpack.c.bf16 %v11661, %v11661
        %v11726 = vpack.c.bf16 %v11662, %v11662
        %v11727 = vpack.c.bf16 %v11663, %v11663
        %v11728 = vpack.c.bf16 %v11664, %v11664
        %v11729 = vpack.c.bf16 %v11665, %v11665
        %v11730 = vpack.c.bf16 %v11666, %v11666
        %v11731 = vpack.c.bf16 %v11667, %v11667
        %v11732 = vpack.c.bf16 %v11668, %v11668
        %v11733 = vpack.c.bf16 %v11669, %v11669
        %v11734 = vpack.c.bf16 %v11670, %v11670
        %v11735 = vpack.c.bf16 %v11671, %v11671
        %v11736 = vpack.c.bf16 %v11672, %v11672
        %v11737 = vpack.c.bf16 %v11673, %v11673
        %v11738 = vpack.c.bf16 %v11674, %v11674
        %v11739 = vpack.c.bf16 %v11675, %v11675
        %v11740 = vpack.c.bf16 %v11676, %v11676
        %v11741 = vpack.c.bf16 %v11677, %v11677
        %v11742 = vpack.c.bf16 %v11678, %v11678
        %v11743 = vpack.c.bf16 %v11679, %v11679
        %v11744 = vpack.c.bf16 %v11680, %v11680
        %v11745 = vpack.c.bf16 %v11681, %v11681
        %v11746 = vpack.c.bf16 %v11682, %v11682
        %v11747 = vpack.c.bf16 %v11683, %v11683
        %v11748 = vpack.c.bf16 %v11684, %v11684
        %v11749 = vpack.c.bf16 %v11685, %v11685
        %v11750 = vpack.c.bf16 %v11686, %v11686
        %v11751 = vpack.c.bf16 %v11687, %v11687
        %v11752 = vpack.c.bf16 %v11688, %v11688
        %v11753 = vpack.c.bf16 %v11689, %v11689
        %v11754 = vpack.c.bf16 %v11690, %v11690
        %v11755 = vpack.c.bf16 %v11691, %v11691
        %v11756 = vpack.c.bf16 %v11692, %v11692
        %v11757 = vpack.c.bf16 %v11693, %v11693
        %v11758 = vpack.c.bf16 %v11694, %v11694
        %v11759 = vpack.c.bf16 %v11695, %v11695
        %v11760 = vpack.c.bf16 %v11696, %v11696
        %v11761 = vpack.c.bf16 %v11697, %v11697
        %v11762 = vpack.c.bf16 %v11698, %v11698
        %v11763 = vpack.c.bf16 %v11699, %v11699
        %v11764 = vpack.c.bf16 %v11700, %v11700
        %v11765 = vpack.c.bf16 %v11701, %v11701
        %v11766 = vpack.c.bf16 %v11702, %v11702
        %v11767 = vpack.c.bf16 %v11703, %v11703
        %v11768 = vpack.c.bf16 %v11704, %v11704
        %v11769 = vpack.c.bf16 %v11705, %v11705
        %v11770 = vpack.c.bf16 %v11706, %v11706
        %v11771 = vpack.c.bf16 %v11707, %v11707
        %v11772 = vpack.c.bf16 %v11708, %v11708
        %v11773 = vpack.c.bf16 %v11709, %v11709
        %v11774 = vpack.c.bf16 %v11710, %v11710
        %v11775 = vpack.c.bf16 %v11711, %v11711
        %v11776 = vld [vmem:[#allocation14] sm:$0xf]
        %v11777 = vld [vmem:[#allocation14 + $0x4] sm:$0xf]
        %v11778 = vld [vmem:[#allocation14 + $0x8] sm:$0xf]
        %v11779 = vld [vmem:[#allocation14 + $0xc] sm:$0xf]
        %v11780 = vld [vmem:[#allocation14 + $0x10] sm:$0xf]
        %v11781 = vld [vmem:[#allocation14 + $0x14] sm:$0xf]
        %v11782 = vld [vmem:[#allocation14 + $0x18] sm:$0xf]
        %v11783 = vld [vmem:[#allocation14 + $0x1c] sm:$0xf]
        %v11784 = vld [vmem:[#allocation14 + $0x20] sm:$0xf]
        %v11785 = vld [vmem:[#allocation14 + $0x24] sm:$0xf]
        %v11786 = vld [vmem:[#allocation14 + $0x28] sm:$0xf]
        %v11787 = vld [vmem:[#allocation14 + $0x2c] sm:$0xf]
        %v11788 = vld [vmem:[#allocation14 + $0x30] sm:$0xf]
        %v11789 = vld [vmem:[#allocation14 + $0x34] sm:$0xf]
        %v11790 = vld [vmem:[#allocation14 + $0x38] sm:$0xf]
        %v11791 = vld [vmem:[#allocation14 + $0x3c] sm:$0xf]
        %v11856 = vunpack.c.l.b16 %v11712
        %v11857 = vunpack.c.l.b16 %v11713
        %v11858 = vunpack.c.l.b16 %v11714
        %v11859 = vunpack.c.l.b16 %v11715
        %v11860 = vunpack.c.l.b16 %v11716
        %v11861 = vunpack.c.l.b16 %v11717
        %v11862 = vunpack.c.l.b16 %v11718
        %v11863 = vunpack.c.l.b16 %v11719
        %v11864 = vunpack.c.l.b16 %v11720
        %v11865 = vunpack.c.l.b16 %v11721
        %v11866 = vunpack.c.l.b16 %v11722
        %v11867 = vunpack.c.l.b16 %v11723
        %v11868 = vunpack.c.l.b16 %v11724
        %v11869 = vunpack.c.l.b16 %v11725
        %v11870 = vunpack.c.l.b16 %v11726
        %v11871 = vunpack.c.l.b16 %v11727
        %v11872 = vunpack.c.l.b16 %v11728
        %v11873 = vunpack.c.l.b16 %v11729
        %v11874 = vunpack.c.l.b16 %v11730
        %v11875 = vunpack.c.l.b16 %v11731
        %v11876 = vunpack.c.l.b16 %v11732
        %v11877 = vunpack.c.l.b16 %v11733
        %v11878 = vunpack.c.l.b16 %v11734
        %v11879 = vunpack.c.l.b16 %v11735
        %v11880 = vunpack.c.l.b16 %v11736
        %v11881 = vunpack.c.l.b16 %v11737
        %v11882 = vunpack.c.l.b16 %v11738
        %v11883 = vunpack.c.l.b16 %v11739
        %v11884 = vunpack.c.l.b16 %v11740
        %v11885 = vunpack.c.l.b16 %v11741
        %v11886 = vunpack.c.l.b16 %v11742
        %v11887 = vunpack.c.l.b16 %v11743
        %v11888 = vunpack.c.l.b16 %v11744
        %v11889 = vunpack.c.l.b16 %v11745
        %v11890 = vunpack.c.l.b16 %v11746
        %v11891 = vunpack.c.l.b16 %v11747
        %v11892 = vunpack.c.l.b16 %v11748
        %v11893 = vunpack.c.l.b16 %v11749
        %v11894 = vunpack.c.l.b16 %v11750
        %v11895 = vunpack.c.l.b16 %v11751
        %v11896 = vunpack.c.l.b16 %v11752
        %v11897 = vunpack.c.l.b16 %v11753
        %v11898 = vunpack.c.l.b16 %v11754
        %v11899 = vunpack.c.l.b16 %v11755
        %v11900 = vunpack.c.l.b16 %v11756
        %v11901 = vunpack.c.l.b16 %v11757
        %v11902 = vunpack.c.l.b16 %v11758
        %v11903 = vunpack.c.l.b16 %v11759
        %v11904 = vunpack.c.l.b16 %v11760
        %v11905 = vunpack.c.l.b16 %v11761
        %v11906 = vunpack.c.l.b16 %v11762
        %v11907 = vunpack.c.l.b16 %v11763
        %v11908 = vunpack.c.l.b16 %v11764
        %v11909 = vunpack.c.l.b16 %v11765
        %v11910 = vunpack.c.l.b16 %v11766
        %v11911 = vunpack.c.l.b16 %v11767
        %v11912 = vunpack.c.l.b16 %v11768
        %v11913 = vunpack.c.l.b16 %v11769
        %v11914 = vunpack.c.l.b16 %v11770
        %v11915 = vunpack.c.l.b16 %v11771
        %v11916 = vunpack.c.l.b16 %v11772
        %v11917 = vunpack.c.l.b16 %v11773
        %v11918 = vunpack.c.l.b16 %v11774
        %v11919 = vunpack.c.l.b16 %v11775
        %v11920 = vrot.slane %v11857, 7
        %v11921 = vsel %vm1924, %v11920, %v11856
        %v11922 = vrot.slane %v11858, 6
        %v11923 = vsel %vm1927, %v11922, %v11921
        %v11924 = vrot.slane %v11859, 5
        %v11925 = vsel %vm1930, %v11924, %v11923
        %v11926 = vrot.slane %v11860, 4
        %v11927 = vsel %vm1933, %v11926, %v11925
        %v11928 = vrot.slane %v11861, 3
        %v11929 = vsel %vm1936, %v11928, %v11927
        %v11930 = vrot.slane %v11862, 2
        %v11931 = vsel %vm1939, %v11930, %v11929
        %v11932 = vrot.slane %v11863, 1
        %v11933 = vsel %vm1942, %v11932, %v11931
        %v11934 = vrot.slane %v11865, 7
        %v11935 = vsel %vm1924, %v11934, %v11864
        %v11936 = vrot.slane %v11866, 6
        %v11937 = vsel %vm1927, %v11936, %v11935
        %v11938 = vrot.slane %v11867, 5
        %v11939 = vsel %vm1930, %v11938, %v11937
        %v11940 = vrot.slane %v11868, 4
        %v11941 = vsel %vm1933, %v11940, %v11939
        %v11942 = vrot.slane %v11869, 3
        %v11943 = vsel %vm1936, %v11942, %v11941
        %v11944 = vrot.slane %v11870, 2
        %v11945 = vsel %vm1939, %v11944, %v11943
        %v11946 = vrot.slane %v11871, 1
        %v11947 = vsel %vm1942, %v11946, %v11945
        %v11948 = vrot.slane %v11873, 7
        %v11949 = vsel %vm1924, %v11948, %v11872
        %v11950 = vrot.slane %v11874, 6
        %v11951 = vsel %vm1927, %v11950, %v11949
        %v11952 = vrot.slane %v11875, 5
        %v11953 = vsel %vm1930, %v11952, %v11951
        %v11954 = vrot.slane %v11876, 4
        %v11955 = vsel %vm1933, %v11954, %v11953
        %v11956 = vrot.slane %v11877, 3
        %v11957 = vsel %vm1936, %v11956, %v11955
        %v11958 = vrot.slane %v11878, 2
        %v11959 = vsel %vm1939, %v11958, %v11957
        %v11960 = vrot.slane %v11879, 1
        %v11961 = vsel %vm1942, %v11960, %v11959
        %v11962 = vrot.slane %v11881, 7
        %v11963 = vsel %vm1924, %v11962, %v11880
        %v11964 = vrot.slane %v11882, 6
        %v11965 = vsel %vm1927, %v11964, %v11963
        %v11966 = vrot.slane %v11883, 5
        %v11967 = vsel %vm1930, %v11966, %v11965
        %v11968 = vrot.slane %v11884, 4
        %v11969 = vsel %vm1933, %v11968, %v11967
        %v11970 = vrot.slane %v11885, 3
        %v11971 = vsel %vm1936, %v11970, %v11969
        %v11972 = vrot.slane %v11886, 2
        %v11973 = vsel %vm1939, %v11972, %v11971
        %v11974 = vrot.slane %v11887, 1
        %v11975 = vsel %vm1942, %v11974, %v11973
        %v11976 = vrot.slane %v11889, 7
        %v11977 = vsel %vm1924, %v11976, %v11888
        %v11978 = vrot.slane %v11890, 6
        %v11979 = vsel %vm1927, %v11978, %v11977
        %v11980 = vrot.slane %v11891, 5
        %v11981 = vsel %vm1930, %v11980, %v11979
        %v11982 = vrot.slane %v11892, 4
        %v11983 = vsel %vm1933, %v11982, %v11981
        %v11984 = vrot.slane %v11893, 3
        %v11985 = vsel %vm1936, %v11984, %v11983
        %v11986 = vrot.slane %v11894, 2
        %v11987 = vsel %vm1939, %v11986, %v11985
        %v11988 = vrot.slane %v11895, 1
        %v11989 = vsel %vm1942, %v11988, %v11987
        %v11990 = vrot.slane %v11897, 7
        %v11991 = vsel %vm1924, %v11990, %v11896
        %v11992 = vrot.slane %v11898, 6
        %v11993 = vsel %vm1927, %v11992, %v11991
        %v11994 = vrot.slane %v11899, 5
        %v11995 = vsel %vm1930, %v11994, %v11993
        %v11996 = vrot.slane %v11900, 4
        %v11997 = vsel %vm1933, %v11996, %v11995
        %v11998 = vrot.slane %v11901, 3
        %v11999 = vsel %vm1936, %v11998, %v11997
        %v12000 = vrot.slane %v11902, 2
        %v12001 = vsel %vm1939, %v12000, %v11999
        %v12002 = vrot.slane %v11903, 1
        %v12003 = vsel %vm1942, %v12002, %v12001
        %v12004 = vrot.slane %v11905, 7
        %v12005 = vsel %vm1924, %v12004, %v11904
        %v12006 = vrot.slane %v11906, 6
        %v12007 = vsel %vm1927, %v12006, %v12005
        %v12008 = vrot.slane %v11907, 5
        %v12009 = vsel %vm1930, %v12008, %v12007
        %v12010 = vrot.slane %v11908, 4
        %v12011 = vsel %vm1933, %v12010, %v12009
        %v12012 = vrot.slane %v11909, 3
        %v12013 = vsel %vm1936, %v12012, %v12011
        %v12014 = vrot.slane %v11910, 2
        %v12015 = vsel %vm1939, %v12014, %v12013
        %v12016 = vrot.slane %v11911, 1
        %v12017 = vsel %vm1942, %v12016, %v12015
        %v12018 = vrot.slane %v11913, 7
        %v12019 = vsel %vm1924, %v12018, %v11912
        %v12020 = vrot.slane %v11914, 6
        %v12021 = vsel %vm1927, %v12020, %v12019
        %v12022 = vrot.slane %v11915, 5
        %v12023 = vsel %vm1930, %v12022, %v12021
        %v12024 = vrot.slane %v11916, 4
        %v12025 = vsel %vm1933, %v12024, %v12023
        %v12026 = vrot.slane %v11917, 3
        %v12027 = vsel %vm1936, %v12026, %v12025
        %v12028 = vrot.slane %v11918, 2
        %v12029 = vsel %vm1939, %v12028, %v12027
        %v12030 = vrot.slane %v11919, 1
        %v12031 = vsel %vm1942, %v12030, %v12029
        %v12032 = vpack.c.b16 %v11947, %v11933
        %v12033 = vpack.c.b16 %v11975, %v11961
        %v12034 = vpack.c.b16 %v12003, %v11989
        %v12035 = vpack.c.b16 %v12031, %v12017
        %v12056 = vunpack.c.l.b16 %v11776
        %v12057 = vunpack.c.l.b16 %v11777
        %v12058 = vunpack.c.l.b16 %v11778
        %v12059 = vunpack.c.l.b16 %v11779
        %v12060 = vunpack.c.l.b16 %v11780
        %v12061 = vunpack.c.l.b16 %v11781
        %v12062 = vunpack.c.l.b16 %v11782
        %v12063 = vunpack.c.l.b16 %v11783
        %v12064 = vunpack.c.l.b16 %v11784
        %v12065 = vunpack.c.l.b16 %v11785
        %v12066 = vunpack.c.l.b16 %v11786
        %v12067 = vunpack.c.l.b16 %v11787
        %v12068 = vunpack.c.l.b16 %v11788
        %v12069 = vunpack.c.l.b16 %v11789
        %v12070 = vunpack.c.l.b16 %v11790
        %v12071 = vunpack.c.l.b16 %v11791
        %v12072 = vpack.c.b16 %v12057, %v12056
        %v12073 = vpack.c.b16 %v12059, %v12058
        %v12074 = vpack.c.b16 %v12061, %v12060
        %v12075 = vpack.c.b16 %v12063, %v12062
        %v12076 = vpack.c.b16 %v12065, %v12064
        %v12077 = vpack.c.b16 %v12067, %v12066
        %v12078 = vpack.c.b16 %v12069, %v12068
        %v12079 = vpack.c.b16 %v12071, %v12070
        %12088 = vmatprep.subr.bf16.mxu0 0
        %12089 = vmatpush1.bf16.msra.mxu0 %v12079
        %12090 = vmatprep.subr.bf16.mxu0 0
        %12091 = vmatpush1.bf16.msra.mxu0 %v12078
        %12092 = vmatprep.subr.bf16.mxu0 0
        %12093 = vmatpush1.bf16.msra.mxu0 %v12077
        %12094 = vmatprep.subr.bf16.mxu0 0
        %12095 = vmatpush1.bf16.msra.mxu0 %v12076
        %12096 = vmatprep.subr.bf16.mxu0 0
        %12097 = vmatpush1.bf16.msra.mxu0 %v12075
        %12098 = vmatprep.subr.bf16.mxu0 0
        %12099 = vmatpush1.bf16.msra.mxu0 %v12074
        %12100 = vmatprep.subr.bf16.mxu0 0
        %12101 = vmatpush1.bf16.msra.mxu0 %v12073
        %12102 = vmatprep.subr.bf16.mxu0 0
        %12103 = vmatpush1.bf16.msra.mxu0 %v12072
        %12104 = vmatprep.subr.bf16.mxu0 0
        %12105 = vmatpush2.bf16.msra.mxu0 0
        %12106 = vmatprep.subr.bf16.mxu0 0
        %12107 = vmatpush2.bf16.msra.mxu0 0
        %12108 = vmatprep.subr.bf16.mxu0 0
        %12109 = vmatpush2.bf16.msra.mxu0 0
        %12110 = vmatprep.subr.bf16.mxu0 0
        %12111 = vmatpush2.bf16.msra.mxu0 0
        %12112 = vmatprep.subr.bf16.mxu0 0
        %12113 = vmatpush2.bf16.msra.mxu0 0
        %12114 = vmatprep.subr.bf16.mxu0 0
        %12115 = vmatpush2.bf16.msra.mxu0 0
        %12116 = vmatprep.subr.bf16.mxu0 0
        %12117 = vmatpush2.bf16.msra.mxu0 0
        %12118 = vmatprep.subr.bf16.mxu0 0
        %12119 = vmatpush2.bf16.msra.mxu0 0
        %12120 = vmatprep.mubr.bf16.mxu0 0
        %12121 = vmatmul.mubr.bf16.gmra.mxu0 %v12032
        %v12122 = vpop.f32.mrf.mxu0
        %v12123 = vadd.f32 0.0, %v12122
        %v12124 = vpop.f32.mrf.mxu0
        %v12125 = vpop.f32.mrf.mxu0
        %v12126 = vadd.f32 0.0, %v12125
        %v12127 = vpop.f32.mrf.mxu0
        %12128 = vmatprep.mubr.bf16.mxu0 0
        %12129 = vmatmul.mubr.bf16.gmra.mxu0 %v12033
        %v12130 = vpop.f32.mrf.mxu0
        %v12131 = vadd.f32 0.0, %v12130
        %v12132 = vpop.f32.mrf.mxu0
        %v12133 = vpop.f32.mrf.mxu0
        %v12134 = vadd.f32 0.0, %v12133
        %v12135 = vpop.f32.mrf.mxu0
        %12136 = vmatprep.mubr.bf16.mxu0 0
        %12137 = vmatmul.mubr.bf16.gmra.mxu0 %v12034
        %v12138 = vpop.f32.mrf.mxu0
        %v12139 = vadd.f32 0.0, %v12138
        %v12140 = vpop.f32.mrf.mxu0
        %v12141 = vpop.f32.mrf.mxu0
        %v12142 = vadd.f32 0.0, %v12141
        %v12143 = vpop.f32.mrf.mxu0
        %12144 = vmatprep.mubr.bf16.mxu0 0
        %12145 = vmatmul.mubr.bf16.gmra.mxu0 %v12035
        %v12146 = vpop.f32.mrf.mxu0
        %v12147 = vadd.f32 0.0, %v12146
        %v12148 = vpop.f32.mrf.mxu0
        %v12149 = vpop.f32.mrf.mxu0
        %v12150 = vadd.f32 0.0, %v12149
        %v12151 = vpop.f32.mrf.mxu0
        %12152 = vdwg.mxu0
        %v12161 = vunpack.c.l.b16 %v11472
        %v12162 = vunpack.c.h.b16 %v11472
        %v12163 = vunpack.c.l.b16 %v11473
        %v12164 = vunpack.c.h.b16 %v11473
        %v12165 = vunpack.c.l.b16 %v11474
        %v12166 = vunpack.c.h.b16 %v11474
        %v12167 = vunpack.c.l.b16 %v11475
        %v12168 = vunpack.c.h.b16 %v11475
        %v12169 = vunpack.c.l.b16 %v11476
        %v12170 = vunpack.c.h.b16 %v11476
        %v12171 = vunpack.c.l.b16 %v11477
        %v12172 = vunpack.c.h.b16 %v11477
        %v12173 = vunpack.c.l.b16 %v11478
        %v12174 = vunpack.c.h.b16 %v11478
        %v12175 = vunpack.c.l.b16 %v11479
        %v12176 = vunpack.c.h.b16 %v11479
        %v12177 = vpack.c.b16 %v12163, %v12161
        %v12178 = vpack.c.b16 %v12164, %v12162
        %v12179 = vpack.c.b16 %v12167, %v12165
        %v12180 = vpack.c.b16 %v12168, %v12166
        %v12181 = vpack.c.b16 %v12171, %v12169
        %v12182 = vpack.c.b16 %v12172, %v12170
        %v12183 = vpack.c.b16 %v12175, %v12173
        %v12184 = vpack.c.b16 %v12176, %v12174
        %v12225 = vunpack.c.l.b16 %v11480
        %v12226 = vunpack.c.l.b16 %v11481
        %v12227 = vunpack.c.l.b16 %v11482
        %v12228 = vunpack.c.l.b16 %v11483
        %v12229 = vunpack.c.l.b16 %v11484
        %v12230 = vunpack.c.l.b16 %v11485
        %v12231 = vunpack.c.l.b16 %v11486
        %v12232 = vunpack.c.l.b16 %v11487
        %v12233 = vunpack.c.l.b16 %v11488
        %v12234 = vunpack.c.l.b16 %v11489
        %v12235 = vunpack.c.l.b16 %v11490
        %v12236 = vunpack.c.l.b16 %v11491
        %v12237 = vunpack.c.l.b16 %v11492
        %v12238 = vunpack.c.l.b16 %v11493
        %v12239 = vunpack.c.l.b16 %v11494
        %v12240 = vunpack.c.l.b16 %v11495
        %v12241 = vunpack.c.l.b16 %v11496
        %v12242 = vunpack.c.l.b16 %v11497
        %v12243 = vunpack.c.l.b16 %v11498
        %v12244 = vunpack.c.l.b16 %v11499
        %v12245 = vunpack.c.l.b16 %v11500
        %v12246 = vunpack.c.l.b16 %v11501
        %v12247 = vunpack.c.l.b16 %v11502
        %v12248 = vunpack.c.l.b16 %v11503
        %v12249 = vunpack.c.l.b16 %v11504
        %v12250 = vunpack.c.l.b16 %v11505
        %v12251 = vunpack.c.l.b16 %v11506
        %v12252 = vunpack.c.l.b16 %v11507
        %v12253 = vunpack.c.l.b16 %v11508
        %v12254 = vunpack.c.l.b16 %v11509
        %v12255 = vunpack.c.l.b16 %v11510
        %v12256 = vunpack.c.l.b16 %v11511
        %v12257 = vpack.c.b16 %v12226, %v12225
        %v12258 = vpack.c.b16 %v12228, %v12227
        %v12259 = vpack.c.b16 %v12230, %v12229
        %v12260 = vpack.c.b16 %v12232, %v12231
        %v12261 = vpack.c.b16 %v12234, %v12233
        %v12262 = vpack.c.b16 %v12236, %v12235
        %v12263 = vpack.c.b16 %v12238, %v12237
        %v12264 = vpack.c.b16 %v12240, %v12239
        %v12265 = vpack.c.b16 %v12242, %v12241
        %v12266 = vpack.c.b16 %v12244, %v12243
        %v12267 = vpack.c.b16 %v12246, %v12245
        %v12268 = vpack.c.b16 %v12248, %v12247
        %v12269 = vpack.c.b16 %v12250, %v12249
        %v12270 = vpack.c.b16 %v12252, %v12251
        %v12271 = vpack.c.b16 %v12254, %v12253
        %v12272 = vpack.c.b16 %v12256, %v12255
        %12289 = vmatprep.subr.bf16.mxu0 0
        %12290 = vmatpush1.bf16.msra.mxu0 %v12264
        %12291 = vmatprep.subr.bf16.mxu0 0
        %12292 = vmatpush1.bf16.msra.mxu0 %v12263
        %12293 = vmatprep.subr.bf16.mxu0 0
        %12294 = vmatpush1.bf16.msra.mxu0 %v12262
        %12295 = vmatprep.subr.bf16.mxu0 0
        %12296 = vmatpush1.bf16.msra.mxu0 %v12261
        %12297 = vmatprep.subr.bf16.mxu0 0
        %12298 = vmatpush1.bf16.msra.mxu0 %v12260
        %12299 = vmatprep.subr.bf16.mxu0 0
        %12300 = vmatpush1.bf16.msra.mxu0 %v12259
        %12301 = vmatprep.subr.bf16.mxu0 0
        %12302 = vmatpush1.bf16.msra.mxu0 %v12258
        %12303 = vmatprep.subr.bf16.mxu0 0
        %12304 = vmatpush1.bf16.msra.mxu0 %v12257
        %12305 = vmatprep.subr.bf16.mxu0 0
        %12306 = vmatpush2.bf16.msra.mxu0 %v12272
        %12307 = vmatprep.subr.bf16.mxu0 0
        %12308 = vmatpush2.bf16.msra.mxu0 %v12271
        %12309 = vmatprep.subr.bf16.mxu0 0
        %12310 = vmatpush2.bf16.msra.mxu0 %v12270
        %12311 = vmatprep.subr.bf16.mxu0 0
        %12312 = vmatpush2.bf16.msra.mxu0 %v12269
        %12313 = vmatprep.subr.bf16.mxu0 0
        %12314 = vmatpush2.bf16.msra.mxu0 %v12268
        %12315 = vmatprep.subr.bf16.mxu0 0
        %12316 = vmatpush2.bf16.msra.mxu0 %v12267
        %12317 = vmatprep.subr.bf16.mxu0 0
        %12318 = vmatpush2.bf16.msra.mxu0 %v12266
        %12319 = vmatprep.subr.bf16.mxu0 0
        %12320 = vmatpush2.bf16.msra.mxu0 %v12265
        %12321 = vmatprep.mubr.bf16.mxu0 %v12178
        %12322 = vmatmul.mubr.bf16.gmra.mxu0 %v12177
        %v12323 = vpop.f32.mrf.mxu0
        %v12324 = vadd.f32 %v12123, %v12323
        %v12325 = vpop.f32.mrf.mxu0
        %v12326 = vpop.f32.mrf.mxu0
        %v12327 = vadd.f32 %v12126, %v12326
        %v12328 = vpop.f32.mrf.mxu0
        %12329 = vmatprep.mubr.bf16.mxu0 %v12180
        %12330 = vmatmul.mubr.bf16.gmra.mxu0 %v12179
        %v12331 = vpop.f32.mrf.mxu0
        %v12332 = vadd.f32 %v12131, %v12331
        %v12333 = vpop.f32.mrf.mxu0
        %v12334 = vpop.f32.mrf.mxu0
        %v12335 = vadd.f32 %v12134, %v12334
        %v12336 = vpop.f32.mrf.mxu0
        %12337 = vmatprep.mubr.bf16.mxu0 %v12182
        %12338 = vmatmul.mubr.bf16.gmra.mxu0 %v12181
        %v12339 = vpop.f32.mrf.mxu0
        %v12340 = vadd.f32 %v12139, %v12339
        %v12341 = vpop.f32.mrf.mxu0
        %v12342 = vpop.f32.mrf.mxu0
        %v12343 = vadd.f32 %v12142, %v12342
        %v12344 = vpop.f32.mrf.mxu0
        %12345 = vmatprep.mubr.bf16.mxu0 %v12184
        %12346 = vmatmul.mubr.bf16.gmra.mxu0 %v12183
        %v12347 = vpop.f32.mrf.mxu0
        %v12348 = vadd.f32 %v12147, %v12347
        %v12349 = vpop.f32.mrf.mxu0
        %v12350 = vpop.f32.mrf.mxu0
        %v12351 = vadd.f32 %v12150, %v12350
        %v12352 = vpop.f32.mrf.mxu0
        %12353 = vdwg.mxu0
        %v12354 = vld [vmem:[%s739] sm:$0xff]
        %v12355 = vld [vmem:[%s739 + $0x8] sm:$0xff]
        %v12356 = vld [vmem:[%s739 + $0x10] sm:$0xff]
        %v12357 = vld [vmem:[%s739 + $0x18] sm:$0xff]
        %v12358 = vld [vmem:[%s739 + $0x20] sm:$0xff]
        %v12359 = vld [vmem:[%s739 + $0x28] sm:$0xff]
        %v12360 = vld [vmem:[%s739 + $0x30] sm:$0xff]
        %v12361 = vld [vmem:[%s739 + $0x38] sm:$0xff]
        %v12362 = vadd.f32 %v12324, %v12354
        %v12363 = vadd.f32 %v12327, %v12355
        %v12364 = vadd.f32 %v12332, %v12356
        %v12365 = vadd.f32 %v12335, %v12357
        %v12366 = vadd.f32 %v12340, %v12358
        %v12367 = vadd.f32 %v12343, %v12359
        %v12368 = vadd.f32 %v12348, %v12360
        %v12369 = vadd.f32 %v12351, %v12361
        %12370 = vst [vmem:[%s811] sm:$0xff] %v12362
        %12371 = vst [vmem:[%s811 + $0x8] sm:$0xff] %v12363
        %12372 = vst [vmem:[%s811 + $0x10] sm:$0xff] %v12364
        %12373 = vst [vmem:[%s811 + $0x18] sm:$0xff] %v12365
        %12374 = vst [vmem:[%s811 + $0x20] sm:$0xff] %v12366
        %12375 = vst [vmem:[%s811 + $0x28] sm:$0xff] %v12367
        %12376 = vst [vmem:[%s811 + $0x30] sm:$0xff] %v12368
        %12377 = vst [vmem:[%s811 + $0x38] sm:$0xff] %v12369
        %s12378 = sand.u32 %s452, 1
        %s12379 = scalar_lea.sflag [#allocation4], %s12378
        %s12380 = sand.u32 %s452, 1
        %s12381 = smul.addr %s12380, 64
        %s12382 = scalar_lea.vmem [#allocation18], %s12381
        // Predicated region
        $region133: #{tpu_custom_call.1} parent=91 // pred_check
          %p12383 = pneg %p462
        $region134: #{tpu_custom_call.1} parent=91 // pred_check_branch
          %12385 = sbr.rel (%p12383) target = $region136
        $region135: #{tpu_custom_call.1} parent=91 // pred_region
          %s12386 = smul.u32 8, %s41
          %s12388 = ssub.s32 1024, 1024
          %12389 = vsyncadd %s12379, %s12388
          %s12390 = smul.addr %s12386, 128
          %s12391 = scalar_lea.hbm %s18, %s12390
          %s12392 = sshll.u32 %s12382, 4
          %s12393 = int_to_ptr.vmem [resolvable:$true] %s12392
          %12398 = dma.vmem_to_hbm [thread:$0]  %s12393, 1024, %s12391, %s12379, 128, 128, 8
        $region136: #{tpu_custom_call.1} parent=91 // pred_fallthru
          _
      $region92: #{tpu_custom_call.1} parent=5 // pred_fallthru
        _
      %p12399 = scmp.le.s32.totalorder 2, %s36
      // Predicated region
      $region137: #{tpu_custom_call.1} parent=5 // pred_check
        %p12400 = pneg %p12399
      $region138: #{tpu_custom_call.1} parent=5 // pred_check_branch
        %12402 = sbr.rel (%p12400) target = $region140
      $region139: #{tpu_custom_call.1} parent=5 // pred_region
        %s12403 = ssub.s32 %s36, 2
        // Predicated region
        $region141: #{tpu_custom_call.1} parent=139 // pred_check
          %p12404 = pneg %p468
        $region142: #{tpu_custom_call.1} parent=139 // pred_check_branch
          %12406 = sbr.rel (%p12404) target = $region144
        $region143: #{tpu_custom_call.1} parent=139 // pred_region
          %s12407 = sand.u32 %s453, 1
          %s12408 = scalar_lea.sflag [#allocation4], %s12407
          %s12409 = sand.u32 %s453, 1
          %s12410 = smul.addr %s12409, 64
          %s12411 = scalar_lea.vmem [#allocation18], %s12410
          %12412 = dma.done %s12408, 1024
        $region144: #{tpu_custom_call.1} parent=139 // pred_fallthru
          _
      $region140: #{tpu_custom_call.1} parent=5 // pred_fallthru
        _
    $region6: #{tpu_custom_call.1} parent=1 // loop_footer
      %s40 = sadd.s32 1, %s36
    $region7: #{tpu_custom_call.1} parent=1 // loop_footer_branch
      %35 = sbr.rel target = $region3
    $region8: #{tpu_custom_call.1} parent=1 // loop_exit
      _
    %12413 = vsyncpa [#allocation3], 1
    %s12414 = scalar_lea.sflag [#allocation3], 1
    %12415 = vsyncpa %s12414, 1
    %12416 = vsyncpa [#allocation6], 1
    %12417 = vsyncpa [#allocation9], 1
    %12418 = vsyncpa [#allocation12], 1
    %s12419 = scalar_lea.sflag [#allocation12], 1
    %12420 = vsyncpa %s12419, 1
    %12421 = vsyncpa [#allocation15], 1
    %12422 = vsyncpa [#allocation4], 1
    %s12423 = scalar_lea.sflag [#allocation4], 1
    %12424 = vsyncpa %s12423, 1

</llo_original>
